<compile_context>
chip_gen: v6e
topology: v6e:2x2x1
jax: 0.10.0
libtpu: 0.0.40
codegen_flags: <defaults>
</compile_context>

<pallas_src>
import jax
import jax.numpy as jnp
from jax.experimental import pallas as pl
from jax.experimental.pallas import tpu as pltpu


# ------------------------------ tiling helpers ------------------------------

def _pick_tile(M, target, mult):
    """Largest multiple of `mult` that divides M and is <= target (else M)."""
    best = None
    t = mult
    while t <= min(M, target):
        if M % t == 0:
            best = t
        t += mult
    return best if best is not None else M


# ----------------------------- Pallas kernels -------------------------------

def _conv_pool_kernel(cols_ref, w_ref, b_ref, o_ref):
    """bf16 im2col matmul + fused 2x2 max-pool + bias + ReLU.

    cols_ref is (4, tmo, K): leading dim enumerates the 4 positions of each
    2x2 pooling window, so the pool is 3 elementwise VPU maxes.  Bias/ReLU are
    applied after the max (monotone => same result, 4x fewer VPU ops).
    """
    w = w_ref[...]

    def mm(g):
        return jnp.dot(cols_ref[g], w, preferred_element_type=jnp.float32)

    pooled = jnp.maximum(jnp.maximum(mm(0), mm(1)), jnp.maximum(mm(2), mm(3)))
    o_ref[...] = jnp.maximum(pooled + b_ref[...], 0.0).astype(o_ref.dtype)


def _fc_fused_kernel(x_ref, w1_ref, b1_ref, w2_ref, b2_ref, w3_ref, b3_ref,
                     o_ref, acc_ref):
    """fc1 (K-tiled, f32 accumulator) -> ReLU -> fc2 -> ReLU -> fc3, fused."""
    k = pl.program_id(0)

    @pl.when(k == 0)
    def _():
        acc_ref[...] = jnp.zeros_like(acc_ref)

    acc_ref[...] += jnp.dot(x_ref[...], w1_ref[...],
                            preferred_element_type=jnp.float32)

    @pl.when(k == pl.num_programs(0) - 1)
    def _():
        h1 = jnp.maximum(acc_ref[...] + b1_ref[...], 0.0)
        h2 = jnp.dot(h1.astype(jnp.bfloat16), w2_ref[...],
                     preferred_element_type=jnp.float32) + b2_ref[...]
        h2 = jnp.maximum(h2, 0.0)
        out = jnp.dot(h2.astype(jnp.bfloat16), w3_ref[...],
                      preferred_element_type=jnp.float32) + b3_ref[...]
        o_ref[...] = out.astype(o_ref.dtype)


# ------------------------------- conv stage ---------------------------------

def _im2col_pool_groups(x_nhwc):
    """3x3/pad-1 patches, feature order (c, kh, kw).

    Returns [4, B*Ho*Wo, C*9]: leading dim = (dh, dw) position inside each
    2x2 pooling window; rows ordered (b, ho, wo).
    """
    B, H, W, C = x_nhwc.shape
    xp = jnp.pad(x_nhwc, ((0, 0), (1, 1), (1, 1), (0, 0)))
    pats = jnp.stack([xp[:, kh:kh + H, kw:kw + W, :]
                      for kh in range(3) for kw in range(3)], axis=-1)  # [B,H,W,C,9]
    pats = pats.reshape(B, H // 2, 2, W // 2, 2, C * 9)                 # [B,Ho,dh,Wo,dw,K]
    pats = pats.transpose(2, 4, 0, 1, 3, 5)                             # [dh,dw,B,Ho,Wo,K]
    return pats.reshape(4, B * (H // 2) * (W // 2), C * 9)


def conv3x3_relu_pool(x_nhwc, w_oihw, b, *, target_tmo=1024):
    """conv3x3 (stride 1, pad 1) + ReLU + 2x2/2 max-pool -> pooled NHWC (bf16)."""
    B, H, W, C = x_nhwc.shape
    OC = w_oihw.shape[0]
    OCp = 128 * pl.cdiv(OC, 128)
    K = C * 9
    Ho, Wo = H // 2, W // 2

    cols = _im2col_pool_groups(x_nhwc).astype(jnp.bfloat16)   # [4, Mo, K]
    Mo = cols.shape[1]

    w_mat = jnp.pad(w_oihw.reshape(OC, K).T,
                    ((0, 0), (0, OCp - OC))).astype(jnp.bfloat16)       # [K, OCp]
    b_pad = jnp.pad(b, (0, OCp - OC)).reshape(1, OCp).astype(jnp.float32)

    tmo = _pick_tile(Mo, target_tmo, 16)   # multiple of 16: bf16 sublane packing
    grid = (Mo // tmo,)

    out = pl.pallas_call(
        _conv_pool_kernel,
        out_shape=jax.ShapeDtypeStruct((Mo, OCp), jnp.bfloat16),
        grid_spec=pltpu.PrefetchScalarGridSpec(
            num_scalar_prefetch=0,
            grid=grid,
            in_specs=[
                pl.BlockSpec((4, tmo, K), lambda i: (0, i, 0)),
                pl.BlockSpec((K, OCp), lambda i: (0, 0)),
                pl.BlockSpec((1, OCp), lambda i: (0, 0)),
            ],
            out_specs=pl.BlockSpec((tmo, OCp), lambda i: (i, 0)),
        ),
        compiler_params=pltpu.CompilerParams(
            dimension_semantics=("parallel",)),
    )(cols, w_mat, b_pad)

    return out.reshape(B, Ho, Wo, OCp)[..., :OC]     # pooled NHWC, bf16


# -------------------------------- fc head -----------------------------------

def fc_head(flat, p, *, target_tk=512):
    """Fused fc1 -> ReLU -> fc2 -> ReLU -> fc3."""
    B, K1 = flat.shape
    H = p["fc1_w"].shape[1]
    N = p["fc3_w"].shape[1]
    Np = 128 * pl.cdiv(N, 128)
    Mp = 8 * pl.cdiv(B, 8)

    x = jnp.pad(flat, ((0, Mp - B), (0, 0))).astype(jnp.bfloat16)
    w1 = p["fc1_w"].astype(jnp.bfloat16)
    b1 = p["fc1_b"].reshape(1, H).astype(jnp.float32)
    w2 = p["fc2_w"].astype(jnp.bfloat16)
    b2 = p["fc2_b"].reshape(1, H).astype(jnp.float32)
    w3 = jnp.pad(p["fc3_w"], ((0, 0), (0, Np - N))).astype(jnp.bfloat16)
    b3 = jnp.pad(p["fc3_b"], (0, Np - N)).reshape(1, Np).astype(jnp.float32)

    tk = _pick_tile(K1, target_tk, 128)
    grid = (K1 // tk,)

    out = pl.pallas_call(
        _fc_fused_kernel,
        out_shape=jax.ShapeDtypeStruct((Mp, Np), jnp.float32),
        grid_spec=pltpu.PrefetchScalarGridSpec(
            num_scalar_prefetch=0,
            grid=grid,
            in_specs=[
                pl.BlockSpec((Mp, tk), lambda k: (0, k)),   # x (K-tiled)
                pl.BlockSpec((tk, H), lambda k: (k, 0)),    # fc1_w (K-tiled, streamed)
                pl.BlockSpec((1, H), lambda k: (0, 0)),     # fc1_b (resident)
                pl.BlockSpec((H, H), lambda k: (0, 0)),     # fc2_w (resident)
                pl.BlockSpec((1, H), lambda k: (0, 0)),     # fc2_b
                pl.BlockSpec((H, Np), lambda k: (0, 0)),    # fc3_w (N padded to 128)
                pl.BlockSpec((1, Np), lambda k: (0, 0)),    # fc3_b
            ],
            out_specs=pl.BlockSpec((Mp, Np), lambda k: (0, 0)),
            scratch_shapes=[pltpu.VMEM((Mp, H), jnp.float32)],
        ),
        compiler_params=pltpu.CompilerParams(
            dimension_semantics=("arbitrary",),
            vmem_limit_bytes=32 * 1024 * 1024),
    )(x, w1, b1, w2, b2, w3, b3)

    return out[:B, :N]


# ------------------------------ full forward --------------------------------

def cnn_forward(x_nchw, p):
    y = conv3x3_relu_pool(jnp.transpose(x_nchw, (0, 2, 3, 1)),
                          p["conv1_w"], p["conv1_b"])        # [B,16,16,16w] NHWC
    y = conv3x3_relu_pool(y, p["conv2_w"], p["conv2_b"])     # [B, 8, 8,32w] NHWC
    # PyTorch flattens NCHW -> feature order (C, H, W)
    flat = jnp.transpose(y, (0, 3, 1, 2)).reshape(y.shape[0], -1)
    return fc_head(flat, p)                                  # [B, 10]


# -------------------------- deterministic params ----------------------------

def init_params(key, widen_factor=1):
    ks = jax.random.split(key, 10)

    def u(k, shape, fan_in):
        bound = 1.0 / (fan_in ** 0.5)
        return jax.random.uniform(k, shape, jnp.float32, -bound, bound)

    c1, c2 = 16 * widen_factor, 32 * widen_factor
    hid = 1024 * widen_factor
    return {
        "conv1_w": u(ks[0], (c1, 3, 3, 3), 3 * 9),     # OIHW
        "conv1_b": u(ks[1], (c1,), 3 * 9),
        "conv2_w": u(ks[2], (c2, c1, 3, 3), c1 * 9),   # OIHW
        "conv2_b": u(ks[3], (c2,), c1 * 9),
        "fc1_w": u(ks[4], (8 * 8 * c2, hid), 8 * 8 * c2),  # [in, out]
        "fc1_b": u(ks[5], (hid,), 8 * 8 * c2),
        "fc2_w": u(ks[6], (hid, hid), hid),
        "fc2_b": u(ks[7], (hid,), hid),
        "fc3_w": u(ks[8], (hid, 10), hid),
        "fc3_b": u(ks[9], (10,), hid),
    }


# ------------------------------ pure-JAX ref ---------------------------------

def reference_forward(x, p):
    def conv(x, w, b):
        y = jax.lax.conv_general_dilated(
            x, w, window_strides=(1, 1), padding=((1, 1), (1, 1)),
            dimension_numbers=("NCHW", "OIHW", "NCHW"))
        return jax.nn.relu(y + b[None, :, None, None])

    def pool(x):
        B, C, H, W = x.shape
        return jnp.max(x.reshape(B, C, H // 2, 2, W // 2, 2), axis=(3, 5))

    y = pool(conv(x, p["conv1_w"], p["conv1_b"]))
    y = pool(conv(y, p["conv2_w"], p["conv2_b"]))
    flat = y.reshape(y.shape[0], -1)
    h = jax.nn.relu(flat @ p["fc1_w"] + p["fc1_b"])
    h = jax.nn.relu(h @ p["fc2_w"] + p["fc2_b"])
    return h @ p["fc3_w"] + p["fc3_b"]


# ----------------------------------- main ------------------------------------

if __name__ == "__main__":
    key = jax.random.PRNGKey(0)
    k_params, k_x = jax.random.split(key)
    params = init_params(k_params, widen_factor=1)

    # Input spatial size fixed at 32x32 by fc1 expecting 8*8*32 features.
    x = jax.random.normal(k_x, (2, 3, 32, 32), dtype=jnp.float32)

    fwd = jax.jit(cnn_forward)
    out = jax.block_until_ready(fwd(x, params))
    assert out.shape == (2, 10), out.shape

    ref = jax.block_until_ready(reference_forward(x, params))
    max_err = float(jnp.max(jnp.abs(out.astype(jnp.float32) - ref)))
    # bf16 MXU inputs with f32 accumulation: comfortably within this bound.
    assert max_err < 3e-2, f"mismatch vs reference: {max_err}"

    print("KERNEL_OK")
</pallas_src>

<mosaic_0001>
module attributes {stable_mosaic.version = 11 : i64} {
  func.func @_conv_pool_kernel(%arg0: i32, %arg1: memref<4x512x27xbf16, #tpu.memory_space<vmem>>, %arg2: memref<27x128xbf16, #tpu.memory_space<vmem>>, %arg3: memref<1x128xf32, #tpu.memory_space<vmem>>, %arg4: memref<512x128xbf16, #tpu.memory_space<vmem>>) attributes {dimension_semantics = [#tpu.dimension_semantics<parallel>], iteration_bounds = array<i64: 1>, scalar_prefetch = 0 : i64, scratch_operands = 0 : i64, tpu.core_type = #tpu.core_type<tc>, window_params = [{transform_indices = @transform_0, window_bounds = array<i64: 4, 512, 27>}, {pipeline_mode = #tpu.pipeline_mode<synchronous>, transform_indices = @transform_1, window_bounds = array<i64: 27, 128>}, {pipeline_mode = #tpu.pipeline_mode<synchronous>, transform_indices = @transform_2, window_bounds = array<i64: 1, 128>}, {transform_indices = @transform_3, window_bounds = array<i64: 512, 128>}]} {
    %c0 = arith.constant 0 : index
    %c0_0 = arith.constant 0 : index
    %0 = vector.load %arg2[%c0, %c0_0] : memref<27x128xbf16, #tpu.memory_space<vmem>>, vector<27x128xbf16>
    %c0_1 = arith.constant 0 : index
    %c0_2 = arith.constant 0 : index
    %c0_3 = arith.constant 0 : index
    %1 = vector.load %arg1[%c0_1, %c0_2, %c0_3] : memref<4x512x27xbf16, #tpu.memory_space<vmem>>, vector<1x512x27xbf16>
    %2 = vector.shape_cast %1 : vector<1x512x27xbf16> to vector<512x27xbf16>
    %cst = arith.constant dense<0.000000e+00> : vector<512x128xf32>
    %3 = tpu.matmul %2, %0, %cst {dimension_numbers = #tpu.dot_dimension_numbers<[1], [0], [0], [1], [0, 0, 1, 1], [], []>} : vector<512x27xbf16>, vector<27x128xbf16>, vector<512x128xf32> -> vector<512x128xf32>
    %c1 = arith.constant 1 : index
    %c0_4 = arith.constant 0 : index
    %c0_5 = arith.constant 0 : index
    %4 = vector.load %arg1[%c1, %c0_4, %c0_5] : memref<4x512x27xbf16, #tpu.memory_space<vmem>>, vector<1x512x27xbf16>
    %5 = vector.shape_cast %4 : vector<1x512x27xbf16> to vector<512x27xbf16>
    %cst_6 = arith.constant dense<0.000000e+00> : vector<512x128xf32>
    %6 = tpu.matmul %5, %0, %cst_6 {dimension_numbers = #tpu.dot_dimension_numbers<[1], [0], [0], [1], [0, 0, 1, 1], [], []>} : vector<512x27xbf16>, vector<27x128xbf16>, vector<512x128xf32> -> vector<512x128xf32>
    %7 = arith.maximumf %3, %6 : vector<512x128xf32>
    %c2 = arith.constant 2 : index
    %c0_7 = arith.constant 0 : index
    %c0_8 = arith.constant 0 : index
    %8 = vector.load %arg1[%c2, %c0_7, %c0_8] : memref<4x512x27xbf16, #tpu.memory_space<vmem>>, vector<1x512x27xbf16>
    %9 = vector.shape_cast %8 : vector<1x512x27xbf16> to vector<512x27xbf16>
    %cst_9 = arith.constant dense<0.000000e+00> : vector<512x128xf32>
    %10 = tpu.matmul %9, %0, %cst_9 {dimension_numbers = #tpu.dot_dimension_numbers<[1], [0], [0], [1], [0, 0, 1, 1], [], []>} : vector<512x27xbf16>, vector<27x128xbf16>, vector<512x128xf32> -> vector<512x128xf32>
    %c3 = arith.constant 3 : index
    %c0_10 = arith.constant 0 : index
    %c0_11 = arith.constant 0 : index
    %11 = vector.load %arg1[%c3, %c0_10, %c0_11] : memref<4x512x27xbf16, #tpu.memory_space<vmem>>, vector<1x512x27xbf16>
    %12 = vector.shape_cast %11 : vector<1x512x27xbf16> to vector<512x27xbf16>
    %cst_12 = arith.constant dense<0.000000e+00> : vector<512x128xf32>
    %13 = tpu.matmul %12, %0, %cst_12 {dimension_numbers = #tpu.dot_dimension_numbers<[1], [0], [0], [1], [0, 0, 1, 1], [], []>} : vector<512x27xbf16>, vector<27x128xbf16>, vector<512x128xf32> -> vector<512x128xf32>
    %14 = arith.maximumf %10, %13 : vector<512x128xf32>
    %15 = arith.maximumf %7, %14 : vector<512x128xf32>
    %c0_13 = arith.constant 0 : index
    %c0_14 = arith.constant 0 : index
    %16 = vector.load %arg3[%c0_13, %c0_14] : memref<1x128xf32, #tpu.memory_space<vmem>>, vector<1x128xf32>
    %17 = vector.broadcast %16 : vector<1x128xf32> to vector<512x128xf32>
    %18 = arith.addf %15, %17 : vector<512x128xf32>
    %cst_15 = arith.constant 0.000000e+00 : f32
    %19 = vector.broadcast %cst_15 : f32 to vector<512x128xf32>
    %20 = arith.maximumf %18, %19 : vector<512x128xf32>
    %21 = arith.truncf %20 : vector<512x128xf32> to vector<512x128xbf16>
    %c0_16 = arith.constant 0 : index
    %c0_17 = arith.constant 0 : index
    %22 = vector.load %arg4[%c0_16, %c0_17] : memref<512x128xbf16, #tpu.memory_space<vmem>>, vector<512x128xbf16>
    tpu.vector_store %arg4[%c0_16, %c0_17], %21 {strides = array<i32>} : memref<512x128xbf16, #tpu.memory_space<vmem>>, vector<512x128xbf16>,
    return
  }
  func.func @transform_0(%arg0: i32) -> (i32, i32, i32) {
    %c0_i32 = arith.constant 0 : i32
    %c0_i32_0 = arith.constant 0 : i32
    %c0_i32_1 = arith.constant 0 : i32
    return %c0_i32, %arg0, %c0_i32_0 : i32, i32, i32
  }
  func.func @transform_1(%arg0: i32) -> (i32, i32) {
    %c0_i32 = arith.constant 0 : i32
    %c0_i32_0 = arith.constant 0 : i32
    %c0_i32_1 = arith.constant 0 : i32
    return %c0_i32, %c0_i32_0 : i32, i32
  }
  func.func @transform_2(%arg0: i32) -> (i32, i32) {
    %c0_i32 = arith.constant 0 : i32
    %c0_i32_0 = arith.constant 0 : i32
    %c0_i32_1 = arith.constant 0 : i32
    return %c0_i32, %c0_i32_0 : i32, i32
  }
  func.func @transform_3(%arg0: i32) -> (i32, i32) {
    %c0_i32 = arith.constant 0 : i32
    %c0_i32_0 = arith.constant 0 : i32
    return %arg0, %c0_i32 : i32, i32
  }
}

module attributes {stable_mosaic.version = 11 : i64} {
  func.func @_conv_pool_kernel(%arg0: i32, %arg1: memref<4x128x144xbf16, #tpu.memory_space<vmem>>, %arg2: memref<144x128xbf16, #tpu.memory_space<vmem>>, %arg3: memref<1x128xf32, #tpu.memory_space<vmem>>, %arg4: memref<128x128xbf16, #tpu.memory_space<vmem>>) attributes {dimension_semantics = [#tpu.dimension_semantics<parallel>], iteration_bounds = array<i64: 1>, scalar_prefetch = 0 : i64, scratch_operands = 0 : i64, tpu.core_type = #tpu.core_type<tc>, window_params = [{transform_indices = @transform_0, window_bounds = array<i64: 4, 128, 144>}, {pipeline_mode = #tpu.pipeline_mode<synchronous>, transform_indices = @transform_1, window_bounds = array<i64: 144, 128>}, {pipeline_mode = #tpu.pipeline_mode<synchronous>, transform_indices = @transform_2, window_bounds = array<i64: 1, 128>}, {transform_indices = @transform_3, window_bounds = array<i64: 128, 128>}]} {
    %c0 = arith.constant 0 : index
    %c0_0 = arith.constant 0 : index
    %0 = vector.load %arg2[%c0, %c0_0] : memref<144x128xbf16, #tpu.memory_space<vmem>>, vector<144x128xbf16>
    %c0_1 = arith.constant 0 : index
    %c0_2 = arith.constant 0 : index
    %c0_3 = arith.constant 0 : index
    %1 = vector.load %arg1[%c0_1, %c0_2, %c0_3] : memref<4x128x144xbf16, #tpu.memory_space<vmem>>, vector<1x128x144xbf16>
    %2 = vector.shape_cast %1 : vector<1x128x144xbf16> to vector<128x144xbf16>
    %cst = arith.constant dense<0.000000e+00> : vector<128x128xf32>
    %3 = tpu.matmul %2, %0, %cst {dimension_numbers = #tpu.dot_dimension_numbers<[1], [0], [0], [1], [0, 0, 1, 1], [], []>} : vector<128x144xbf16>, vector<144x128xbf16>, vector<128x128xf32> -> vector<128x128xf32>
    %c1 = arith.constant 1 : index
    %c0_4 = arith.constant 0 : index
    %c0_5 = arith.constant 0 : index
    %4 = vector.load %arg1[%c1, %c0_4, %c0_5] : memref<4x128x144xbf16, #tpu.memory_space<vmem>>, vector<1x128x144xbf16>
    %5 = vector.shape_cast %4 : vector<1x128x144xbf16> to vector<128x144xbf16>
    %cst_6 = arith.constant dense<0.000000e+00> : vector<128x128xf32>
    %6 = tpu.matmul %5, %0, %cst_6 {dimension_numbers = #tpu.dot_dimension_numbers<[1], [0], [0], [1], [0, 0, 1, 1], [], []>} : vector<128x144xbf16>, vector<144x128xbf16>, vector<128x128xf32> -> vector<128x128xf32>
    %7 = arith.maximumf %3, %6 : vector<128x128xf32>
    %c2 = arith.constant 2 : index
    %c0_7 = arith.constant 0 : index
    %c0_8 = arith.constant 0 : index
    %8 = vector.load %arg1[%c2, %c0_7, %c0_8] : memref<4x128x144xbf16, #tpu.memory_space<vmem>>, vector<1x128x144xbf16>
    %9 = vector.shape_cast %8 : vector<1x128x144xbf16> to vector<128x144xbf16>
    %cst_9 = arith.constant dense<0.000000e+00> : vector<128x128xf32>
    %10 = tpu.matmul %9, %0, %cst_9 {dimension_numbers = #tpu.dot_dimension_numbers<[1], [0], [0], [1], [0, 0, 1, 1], [], []>} : vector<128x144xbf16>, vector<144x128xbf16>, vector<128x128xf32> -> vector<128x128xf32>
    %c3 = arith.constant 3 : index
    %c0_10 = arith.constant 0 : index
    %c0_11 = arith.constant 0 : index
    %11 = vector.load %arg1[%c3, %c0_10, %c0_11] : memref<4x128x144xbf16, #tpu.memory_space<vmem>>, vector<1x128x144xbf16>
    %12 = vector.shape_cast %11 : vector<1x128x144xbf16> to vector<128x144xbf16>
    %cst_12 = arith.constant dense<0.000000e+00> : vector<128x128xf32>
    %13 = tpu.matmul %12, %0, %cst_12 {dimension_numbers = #tpu.dot_dimension_numbers<[1], [0], [0], [1], [0, 0, 1, 1], [], []>} : vector<128x144xbf16>, vector<144x128xbf16>, vector<128x128xf32> -> vector<128x128xf32>
    %14 = arith.maximumf %10, %13 : vector<128x128xf32>
    %15 = arith.maximumf %7, %14 : vector<128x128xf32>
    %c0_13 = arith.constant 0 : index
    %c0_14 = arith.constant 0 : index
    %16 = vector.load %arg3[%c0_13, %c0_14] : memref<1x128xf32, #tpu.memory_space<vmem>>, vector<1x128xf32>
    %17 = vector.broadcast %16 : vector<1x128xf32> to vector<128x128xf32>
    %18 = arith.addf %15, %17 : vector<128x128xf32>
    %cst_15 = arith.constant 0.000000e+00 : f32
    %19 = vector.broadcast %cst_15 : f32 to vector<128x128xf32>
    %20 = arith.maximumf %18, %19 : vector<128x128xf32>
    %21 = arith.truncf %20 : vector<128x128xf32> to vector<128x128xbf16>
    %c0_16 = arith.constant 0 : index
    %c0_17 = arith.constant 0 : index
    %22 = vector.load %arg4[%c0_16, %c0_17] : memref<128x128xbf16, #tpu.memory_space<vmem>>, vector<128x128xbf16>
    tpu.vector_store %arg4[%c0_16, %c0_17], %21 {strides = array<i32>} : memref<128x128xbf16, #tpu.memory_space<vmem>>, vector<128x128xbf16>,
    return
  }
  func.func @transform_0(%arg0: i32) -> (i32, i32, i32) {
    %c0_i32 = arith.constant 0 : i32
    %c0_i32_0 = arith.constant 0 : i32
    %c0_i32_1 = arith.constant 0 : i32
    return %c0_i32, %arg0, %c0_i32_0 : i32, i32, i32
  }
  func.func @transform_1(%arg0: i32) -> (i32, i32) {
    %c0_i32 = arith.constant 0 : i32
    %c0_i32_0 = arith.constant 0 : i32
    %c0_i32_1 = arith.constant 0 : i32
    return %c0_i32, %c0_i32_0 : i32, i32
  }
  func.func @transform_2(%arg0: i32) -> (i32, i32) {
    %c0_i32 = arith.constant 0 : i32
    %c0_i32_0 = arith.constant 0 : i32
    %c0_i32_1 = arith.constant 0 : i32
    return %c0_i32, %c0_i32_0 : i32, i32
  }
  func.func @transform_3(%arg0: i32) -> (i32, i32) {
    %c0_i32 = arith.constant 0 : i32
    %c0_i32_0 = arith.constant 0 : i32
    return %arg0, %c0_i32 : i32, i32
  }
}

module attributes {stable_mosaic.version = 11 : i64} {
  func.func @_fc_fused_kernel(%arg0: i32, %arg1: memref<8x512xbf16, #tpu.memory_space<vmem>>, %arg2: memref<512x1024xbf16, #tpu.memory_space<vmem>>, %arg3: memref<1x1024xf32, #tpu.memory_space<vmem>>, %arg4: memref<1024x1024xbf16, #tpu.memory_space<vmem>>, %arg5: memref<1x1024xf32, #tpu.memory_space<vmem>>, %arg6: memref<1024x128xbf16, #tpu.memory_space<vmem>>, %arg7: memref<1x128xf32, #tpu.memory_space<vmem>>, %arg8: memref<8x128xf32, #tpu.memory_space<vmem>>, %arg9: memref<8x1024xf32, #tpu.memory_space<vmem>>) attributes {dimension_semantics = [#tpu.dimension_semantics<arbitrary>], iteration_bounds = array<i64: 4>, scalar_prefetch = 0 : i64, scratch_operands = 1 : i64, tpu.core_type = #tpu.core_type<tc>, window_params = [{transform_indices = @transform_0, window_bounds = array<i64: 8, 512>}, {transform_indices = @transform_1, window_bounds = array<i64: 512, 1024>}, {pipeline_mode = #tpu.pipeline_mode<synchronous>, transform_indices = @transform_2, window_bounds = array<i64: 1, 1024>}, {pipeline_mode = #tpu.pipeline_mode<synchronous>, transform_indices = @transform_3, window_bounds = array<i64: 1024, 1024>}, {pipeline_mode = #tpu.pipeline_mode<synchronous>, transform_indices = @transform_4, window_bounds = array<i64: 1, 1024>}, {pipeline_mode = #tpu.pipeline_mode<synchronous>, transform_indices = @transform_5, window_bounds = array<i64: 1024, 128>}, {pipeline_mode = #tpu.pipeline_mode<synchronous>, transform_indices = @transform_6, window_bounds = array<i64: 1, 128>}, {pipeline_mode = #tpu.pipeline_mode<synchronous>, transform_indices = @transform_7, window_bounds = array<i64: 8, 128>}]} {
    %c0_i32 = arith.constant 0 : i32
    %0 = arith.cmpi eq, %arg0, %c0_i32 : i32
    %1 = arith.extui %0 : i1 to i32
    %c0_i32_0 = arith.constant 0 : i32
    %2 = arith.cmpi ne, %1, %c0_i32_0 : i32
    scf.if %2 {
      %cst_9 = arith.constant 0.000000e+00 : f32
      %12 = vector.broadcast %cst_9 : f32 to vector<8x1024xf32>
      %c0_10 = arith.constant 0 : index
      %c0_11 = arith.constant 0 : index
      %13 = vector.load %arg9[%c0_10, %c0_11] : memref<8x1024xf32, #tpu.memory_space<vmem>>, vector<8x1024xf32>
      tpu.vector_store %arg9[%c0_10, %c0_11], %12 {strides = array<i32>} : memref<8x1024xf32, #tpu.memory_space<vmem>>, vector<8x1024xf32>,
    } else {
    }
    %c0 = arith.constant 0 : index
    %c0_1 = arith.constant 0 : index
    %3 = vector.load %arg9[%c0, %c0_1] : memref<8x1024xf32, #tpu.memory_space<vmem>>, vector<8x1024xf32>
    %c0_2 = arith.constant 0 : index
    %c0_3 = arith.constant 0 : index
    %4 = vector.load %arg1[%c0_2, %c0_3] : memref<8x512xbf16, #tpu.memory_space<vmem>>, vector<8x512xbf16>
    %c0_4 = arith.constant 0 : index
    %c0_5 = arith.constant 0 : index
    %5 = vector.load %arg2[%c0_4, %c0_5] : memref<512x1024xbf16, #tpu.memory_space<vmem>>, vector<512x1024xbf16>
    %cst = arith.constant dense<0.000000e+00> : vector<8x1024xf32>
    %6 = tpu.matmul %4, %5, %cst {dimension_numbers = #tpu.dot_dimension_numbers<[1], [0], [0], [1], [0, 0, 1, 1], [], []>} : vector<8x512xbf16>, vector<512x1024xbf16>, vector<8x1024xf32> -> vector<8x1024xf32>
    %7 = arith.addf %3, %6 : vector<8x1024xf32>
    %c0_6 = arith.constant 0 : index
    %c0_7 = arith.constant 0 : index
    %8 = vector.load %arg9[%c0_6, %c0_7] : memref<8x1024xf32, #tpu.memory_space<vmem>>, vector<8x1024xf32>
    tpu.vector_store %arg9[%c0_6, %c0_7], %7 {strides = array<i32>} : memref<8x1024xf32, #tpu.memory_space<vmem>>, vector<8x1024xf32>,
    %c3_i32 = arith.constant 3 : i32
    %9 = arith.cmpi eq, %arg0, %c3_i32 : i32
    %10 = arith.extui %9 : i1 to i32
    %c0_i32_8 = arith.constant 0 : i32
    %11 = arith.cmpi ne, %10, %c0_i32_8 : i32
    scf.if %11 {
      %c0_9 = arith.constant 0 : index
      %c0_10 = arith.constant 0 : index
      %12 = vector.load %arg9[%c0_9, %c0_10] : memref<8x1024xf32, #tpu.memory_space<vmem>>, vector<8x1024xf32>
      %c0_11 = arith.constant 0 : index
      %c0_12 = arith.constant 0 : index
      %13 = vector.load %arg3[%c0_11, %c0_12] : memref<1x1024xf32, #tpu.memory_space<vmem>>, vector<1x1024xf32>
      %14 = vector.broadcast %13 : vector<1x1024xf32> to vector<8x1024xf32>
      %15 = arith.addf %12, %14 : vector<8x1024xf32>
      %cst_13 = arith.constant 0.000000e+00 : f32
      %16 = vector.broadcast %cst_13 : f32 to vector<8x1024xf32>
      %17 = arith.maximumf %15, %16 : vector<8x1024xf32>
      %18 = arith.truncf %17 : vector<8x1024xf32> to vector<8x1024xbf16>
      %c0_14 = arith.constant 0 : index
      %c0_15 = arith.constant 0 : index
      %19 = vector.load %arg4[%c0_14, %c0_15] : memref<1024x1024xbf16, #tpu.memory_space<vmem>>, vector<1024x1024xbf16>
      %cst_16 = arith.constant dense<0.000000e+00> : vector<8x1024xf32>
      %20 = tpu.matmul %18, %19, %cst_16 {dimension_numbers = #tpu.dot_dimension_numbers<[1], [0], [0], [1], [0, 0, 1, 1], [], []>} : vector<8x1024xbf16>, vector<1024x1024xbf16>, vector<8x1024xf32> -> vector<8x1024xf32>
      %c0_17 = arith.constant 0 : index
      %c0_18 = arith.constant 0 : index
      %21 = vector.load %arg5[%c0_17, %c0_18] : memref<1x1024xf32, #tpu.memory_space<vmem>>, vector<1x1024xf32>
      %22 = vector.broadcast %21 : vector<1x1024xf32> to vector<8x1024xf32>
      %23 = arith.addf %20, %22 : vector<8x1024xf32>
      %cst_19 = arith.constant 0.000000e+00 : f32
      %24 = vector.broadcast %cst_19 : f32 to vector<8x1024xf32>
      %25 = arith.maximumf %23, %24 : vector<8x1024xf32>
      %26 = arith.truncf %25 : vector<8x1024xf32> to vector<8x1024xbf16>
      %c0_20 = arith.constant 0 : index
      %c0_21 = arith.constant 0 : index
      %27 = vector.load %arg6[%c0_20, %c0_21] : memref<1024x128xbf16, #tpu.memory_space<vmem>>, vector<1024x128xbf16>
      %cst_22 = arith.constant dense<0.000000e+00> : vector<8x128xf32>
      %28 = tpu.matmul %26, %27, %cst_22 {dimension_numbers = #tpu.dot_dimension_numbers<[1], [0], [0], [1], [0, 0, 1, 1], [], []>} : vector<8x1024xbf16>, vector<1024x128xbf16>, vector<8x128xf32> -> vector<8x128xf32>
      %c0_23 = arith.constant 0 : index
      %c0_24 = arith.constant 0 : index
      %29 = vector.load %arg7[%c0_23, %c0_24] : memref<1x128xf32, #tpu.memory_space<vmem>>, vector<1x128xf32>
      %30 = vector.broadcast %29 : vector<1x128xf32> to vector<8x128xf32>
      %31 = arith.addf %28, %30 : vector<8x128xf32>
      %c0_25 = arith.constant 0 : index
      %c0_26 = arith.constant 0 : index
      %32 = vector.load %arg8[%c0_25, %c0_26] : memref<8x128xf32, #tpu.memory_space<vmem>>, vector<8x128xf32>
      tpu.vector_store %arg8[%c0_25, %c0_26], %31 {strides = array<i32>} : memref<8x128xf32, #tpu.memory_space<vmem>>, vector<8x128xf32>,
    } else {
    }
    return
  }
  func.func @transform_0(%arg0: i32) -> (i32, i32) {
    %c0_i32 = arith.constant 0 : i32
    %c0_i32_0 = arith.constant 0 : i32
    return %c0_i32, %arg0 : i32, i32
  }
  func.func @transform_1(%arg0: i32) -> (i32, i32) {
    %c0_i32 = arith.constant 0 : i32
    %c0_i32_0 = arith.constant 0 : i32
    return %arg0, %c0_i32 : i32, i32
  }
  func.func @transform_2(%arg0: i32) -> (i32, i32) {
    %c0_i32 = arith.constant 0 : i32
    %c0_i32_0 = arith.constant 0 : i32
    %c0_i32_1 = arith.constant 0 : i32
    return %c0_i32, %c0_i32_0 : i32, i32
  }
  func.func @transform_3(%arg0: i32) -> (i32, i32) {
    %c0_i32 = arith.constant 0 : i32
    %c0_i32_0 = arith.constant 0 : i32
    %c0_i32_1 = arith.constant 0 : i32
    return %c0_i32, %c0_i32_0 : i32, i32
  }
  func.func @transform_4(%arg0: i32) -> (i32, i32) {
    %c0_i32 = arith.constant 0 : i32
    %c0_i32_0 = arith.constant 0 : i32
    %c0_i32_1 = arith.constant 0 : i32
    return %c0_i32, %c0_i32_0 : i32, i32
  }
  func.func @transform_5(%arg0: i32) -> (i32, i32) {
    %c0_i32 = arith.constant 0 : i32
    %c0_i32_0 = arith.constant 0 : i32
    %c0_i32_1 = arith.constant 0 : i32
    return %c0_i32, %c0_i32_0 : i32, i32
  }
  func.func @transform_6(%arg0: i32) -> (i32, i32) {
    %c0_i32 = arith.constant 0 : i32
    %c0_i32_0 = arith.constant 0 : i32
    %c0_i32_1 = arith.constant 0 : i32
    return %c0_i32, %c0_i32_0 : i32, i32
  }
  func.func @transform_7(%arg0: i32) -> (i32, i32) {
    %c0_i32 = arith.constant 0 : i32
    %c0_i32_0 = arith.constant 0 : i32
    %c0_i32_1 = arith.constant 0 : i32
    return %c0_i32, %c0_i32_0 : i32, i32
  }
}

</mosaic_0001>

<llo_original>
// kernel: cnn_forward.3
$region0: #{cnn_forward.3}
  #allocation0 [shape = 'u32[]', space=smem, size = 0x4, offset = 0x4, fixed_abs, tag = 'smem constant byte address 0x4 - core index']
  #allocation1 [shape = 'u32[144,128]{1,0:T(1,128)}', space=vmem, size = 0x12000, scoped, tag = 'internal scratch']
  %s0 = inlined_call_operand.vmem [shape: bf16[4,512,27], index: 0, kind: input, shape index: {}]
  %s1 = inlined_call_operand.vmem [shape: bf16[27,128], index: 1, kind: input, shape index: {}]
  %s2 = inlined_call_operand.vmem [shape: f32[1,128], index: 2, kind: input, shape index: {}]
  %s3 = inlined_call_operand.vmem [shape: bf16[512,128], index: 3, kind: output, shape index: {}]
  %s4 = sld [smem:[#allocation0]]
  $region22: #{cnn_forward.3} parent=0
    _
  %s6 = ssub.s32 1, %s4
  %s7 = scalar_select 0, %s6, %s4
  // Predicated region
  $region2: #{cnn_forward.3} parent=0 // pred_check
    _
  $region3: #{cnn_forward.3} parent=0 // pred_check_branch
    %9 = sbr.rel (0) target = $region5
  $region4: #{cnn_forward.3} parent=0 // pred_region
    _
  $region5: #{cnn_forward.3} parent=0 // pred_fallthru
    _
  // Predicated region
  $region6: #{cnn_forward.3} parent=0 // pred_check
    _
  $region7: #{cnn_forward.3} parent=0 // pred_check_branch
    %11 = sbr.rel (0) target = $region9
  $region8: #{cnn_forward.3} parent=0 // pred_region
    _
  $region9: #{cnn_forward.3} parent=0 // pred_fallthru
    _
  // Predicated region
  $region10: #{cnn_forward.3} parent=0 // pred_check
    _
  $region11: #{cnn_forward.3} parent=0 // pred_check_branch
    %13 = sbr.rel (0) target = $region13
  $region12: #{cnn_forward.3} parent=0 // pred_region
    _
  $region13: #{cnn_forward.3} parent=0 // pred_fallthru
    _
  %v15 = vld [vmem:[%s1] sm:$0xf]
  %v16 = vld [vmem:[%s1 + $0x4] sm:$0xf]
  %v17 = vld [vmem:[%s1 + $0x8] sm:$0xf]
  %v18 = vld [vmem:[%s1 + $0xc] sm:$0x3]
  %v19 = vld [vmem:[%s0] sm:$0xf]
  %v20 = vld [vmem:[%s0 + $0x4] sm:$0xf]
  %v21 = vld [vmem:[%s0 + $0x8] sm:$0xf]
  %v22 = vld [vmem:[%s0 + $0xc] sm:$0xf]
  %v23 = vld [vmem:[%s0 + $0x10] sm:$0xf]
  %v24 = vld [vmem:[%s0 + $0x14] sm:$0xf]
  %v25 = vld [vmem:[%s0 + $0x18] sm:$0xf]
  %v26 = vld [vmem:[%s0 + $0x1c] sm:$0xf]
  %v27 = vld [vmem:[%s0 + $0x20] sm:$0xf]
  %v28 = vld [vmem:[%s0 + $0x24] sm:$0xf]
  %v29 = vld [vmem:[%s0 + $0x28] sm:$0xf]
  %v30 = vld [vmem:[%s0 + $0x2c] sm:$0xf]
  %v31 = vld [vmem:[%s0 + $0x30] sm:$0xf]
  %v32 = vld [vmem:[%s0 + $0x34] sm:$0xf]
  %v33 = vld [vmem:[%s0 + $0x38] sm:$0xf]
  %v34 = vld [vmem:[%s0 + $0x3c] sm:$0xf]
  %v35 = vld [vmem:[%s0 + $0x40] sm:$0xf]
  %v36 = vld [vmem:[%s0 + $0x44] sm:$0xf]
  %v37 = vld [vmem:[%s0 + $0x48] sm:$0xf]
  %v38 = vld [vmem:[%s0 + $0x4c] sm:$0xf]
  %v39 = vld [vmem:[%s0 + $0x50] sm:$0xf]
  %v40 = vld [vmem:[%s0 + $0x54] sm:$0xf]
  %v41 = vld [vmem:[%s0 + $0x58] sm:$0xf]
  %v42 = vld [vmem:[%s0 + $0x5c] sm:$0xf]
  %v43 = vld [vmem:[%s0 + $0x60] sm:$0xf]
  %v44 = vld [vmem:[%s0 + $0x64] sm:$0xf]
  %v45 = vld [vmem:[%s0 + $0x68] sm:$0xf]
  %v46 = vld [vmem:[%s0 + $0x6c] sm:$0xf]
  %v47 = vld [vmem:[%s0 + $0x70] sm:$0xf]
  %v48 = vld [vmem:[%s0 + $0x74] sm:$0xf]
  %v49 = vld [vmem:[%s0 + $0x78] sm:$0xf]
  %v50 = vld [vmem:[%s0 + $0x7c] sm:$0xf]
  %v51 = vld [vmem:[%s0 + $0x80] sm:$0xf]
  %v52 = vld [vmem:[%s0 + $0x84] sm:$0xf]
  %v53 = vld [vmem:[%s0 + $0x88] sm:$0xf]
  %v54 = vld [vmem:[%s0 + $0x8c] sm:$0xf]
  %v55 = vld [vmem:[%s0 + $0x90] sm:$0xf]
  %v56 = vld [vmem:[%s0 + $0x94] sm:$0xf]
  %v57 = vld [vmem:[%s0 + $0x98] sm:$0xf]
  %v58 = vld [vmem:[%s0 + $0x9c] sm:$0xf]
  %v59 = vld [vmem:[%s0 + $0xa0] sm:$0xf]
  %v60 = vld [vmem:[%s0 + $0xa4] sm:$0xf]
  %v61 = vld [vmem:[%s0 + $0xa8] sm:$0xf]
  %v62 = vld [vmem:[%s0 + $0xac] sm:$0xf]
  %v63 = vld [vmem:[%s0 + $0xb0] sm:$0xf]
  %v64 = vld [vmem:[%s0 + $0xb4] sm:$0xf]
  %v65 = vld [vmem:[%s0 + $0xb8] sm:$0xf]
  %v66 = vld [vmem:[%s0 + $0xbc] sm:$0xf]
  %v67 = vld [vmem:[%s0 + $0xc0] sm:$0xf]
  %v68 = vld [vmem:[%s0 + $0xc4] sm:$0xf]
  %v69 = vld [vmem:[%s0 + $0xc8] sm:$0xf]
  %v70 = vld [vmem:[%s0 + $0xcc] sm:$0xf]
  %v71 = vld [vmem:[%s0 + $0xd0] sm:$0xf]
  %v72 = vld [vmem:[%s0 + $0xd4] sm:$0xf]
  %v73 = vld [vmem:[%s0 + $0xd8] sm:$0xf]
  %v74 = vld [vmem:[%s0 + $0xdc] sm:$0xf]
  %v75 = vld [vmem:[%s0 + $0xe0] sm:$0xf]
  %v76 = vld [vmem:[%s0 + $0xe4] sm:$0xf]
  %v77 = vld [vmem:[%s0 + $0xe8] sm:$0xf]
  %v78 = vld [vmem:[%s0 + $0xec] sm:$0xf]
  %v79 = vld [vmem:[%s0 + $0xf0] sm:$0xf]
  %v80 = vld [vmem:[%s0 + $0xf4] sm:$0xf]
  %v81 = vld [vmem:[%s0 + $0xf8] sm:$0xf]
  %v82 = vld [vmem:[%s0 + $0xfc] sm:$0xf]
  %v147 = vunpack.c.l.b16 %v19
  %v148 = vunpack.c.l.b16 %v20
  %v149 = vunpack.c.l.b16 %v21
  %v150 = vunpack.c.l.b16 %v22
  %v151 = vunpack.c.l.b16 %v23
  %v152 = vunpack.c.l.b16 %v24
  %v153 = vunpack.c.l.b16 %v25
  %v154 = vunpack.c.l.b16 %v26
  %v155 = vunpack.c.l.b16 %v27
  %v156 = vunpack.c.l.b16 %v28
  %v157 = vunpack.c.l.b16 %v29
  %v158 = vunpack.c.l.b16 %v30
  %v159 = vunpack.c.l.b16 %v31
  %v160 = vunpack.c.l.b16 %v32
  %v161 = vunpack.c.l.b16 %v33
  %v162 = vunpack.c.l.b16 %v34
  %v163 = vunpack.c.l.b16 %v35
  %v164 = vunpack.c.l.b16 %v36
  %v165 = vunpack.c.l.b16 %v37
  %v166 = vunpack.c.l.b16 %v38
  %v167 = vunpack.c.l.b16 %v39
  %v168 = vunpack.c.l.b16 %v40
  %v169 = vunpack.c.l.b16 %v41
  %v170 = vunpack.c.l.b16 %v42
  %v171 = vunpack.c.l.b16 %v43
  %v172 = vunpack.c.l.b16 %v44
  %v173 = vunpack.c.l.b16 %v45
  %v174 = vunpack.c.l.b16 %v46
  %v175 = vunpack.c.l.b16 %v47
  %v176 = vunpack.c.l.b16 %v48
  %v177 = vunpack.c.l.b16 %v49
  %v178 = vunpack.c.l.b16 %v50
  %v179 = vunpack.c.l.b16 %v51
  %v180 = vunpack.c.l.b16 %v52
  %v181 = vunpack.c.l.b16 %v53
  %v182 = vunpack.c.l.b16 %v54
  %v183 = vunpack.c.l.b16 %v55
  %v184 = vunpack.c.l.b16 %v56
  %v185 = vunpack.c.l.b16 %v57
  %v186 = vunpack.c.l.b16 %v58
  %v187 = vunpack.c.l.b16 %v59
  %v188 = vunpack.c.l.b16 %v60
  %v189 = vunpack.c.l.b16 %v61
  %v190 = vunpack.c.l.b16 %v62
  %v191 = vunpack.c.l.b16 %v63
  %v192 = vunpack.c.l.b16 %v64
  %v193 = vunpack.c.l.b16 %v65
  %v194 = vunpack.c.l.b16 %v66
  %v195 = vunpack.c.l.b16 %v67
  %v196 = vunpack.c.l.b16 %v68
  %v197 = vunpack.c.l.b16 %v69
  %v198 = vunpack.c.l.b16 %v70
  %v199 = vunpack.c.l.b16 %v71
  %v200 = vunpack.c.l.b16 %v72
  %v201 = vunpack.c.l.b16 %v73
  %v202 = vunpack.c.l.b16 %v74
  %v203 = vunpack.c.l.b16 %v75
  %v204 = vunpack.c.l.b16 %v76
  %v205 = vunpack.c.l.b16 %v77
  %v206 = vunpack.c.l.b16 %v78
  %v207 = vunpack.c.l.b16 %v79
  %v208 = vunpack.c.l.b16 %v80
  %v209 = vunpack.c.l.b16 %v81
  %v210 = vunpack.c.l.b16 %v82
  %v211 = vpack.c.b16 %v148, %v147
  %v212 = vpack.c.b16 %v150, %v149
  %v213 = vpack.c.b16 %v152, %v151
  %v214 = vpack.c.b16 %v154, %v153
  %v215 = vpack.c.b16 %v156, %v155
  %v216 = vpack.c.b16 %v158, %v157
  %v217 = vpack.c.b16 %v160, %v159
  %v218 = vpack.c.b16 %v162, %v161
  %v219 = vpack.c.b16 %v164, %v163
  %v220 = vpack.c.b16 %v166, %v165
  %v221 = vpack.c.b16 %v168, %v167
  %v222 = vpack.c.b16 %v170, %v169
  %v223 = vpack.c.b16 %v172, %v171
  %v224 = vpack.c.b16 %v174, %v173
  %v225 = vpack.c.b16 %v176, %v175
  %v226 = vpack.c.b16 %v178, %v177
  %v227 = vpack.c.b16 %v180, %v179
  %v228 = vpack.c.b16 %v182, %v181
  %v229 = vpack.c.b16 %v184, %v183
  %v230 = vpack.c.b16 %v186, %v185
  %v231 = vpack.c.b16 %v188, %v187
  %v232 = vpack.c.b16 %v190, %v189
  %v233 = vpack.c.b16 %v192, %v191
  %v234 = vpack.c.b16 %v194, %v193
  %v235 = vpack.c.b16 %v196, %v195
  %v236 = vpack.c.b16 %v198, %v197
  %v237 = vpack.c.b16 %v200, %v199
  %v238 = vpack.c.b16 %v202, %v201
  %v239 = vpack.c.b16 %v204, %v203
  %v240 = vpack.c.b16 %v206, %v205
  %v241 = vpack.c.b16 %v208, %v207
  %v242 = vpack.c.b16 %v210, %v209
  %v247 = vunpack.c.l.b16 %v15
  %v248 = vunpack.c.l.b16 %v16
  %v249 = vunpack.c.l.b16 %v17
  %v250 = vunpack.c.l.b16 %v18
  %v251 = vpack.c.b16 %v248, %v247
  %v252 = vpack.c.b16 %v250, %v249
  %vm254 = vcmask 220160
  %v256 = vsel %vm254, %v211, 0
  %v259 = vsel %vm254, %v212, 0
  %v262 = vsel %vm254, %v213, 0
  %v265 = vsel %vm254, %v214, 0
  %v268 = vsel %vm254, %v215, 0
  %v271 = vsel %vm254, %v216, 0
  %v274 = vsel %vm254, %v217, 0
  %v277 = vsel %vm254, %v218, 0
  %v280 = vsel %vm254, %v219, 0
  %v283 = vsel %vm254, %v220, 0
  %v286 = vsel %vm254, %v221, 0
  %v289 = vsel %vm254, %v222, 0
  %v292 = vsel %vm254, %v223, 0
  %v295 = vsel %vm254, %v224, 0
  %v298 = vsel %vm254, %v225, 0
  %v301 = vsel %vm254, %v226, 0
  %v304 = vsel %vm254, %v227, 0
  %v307 = vsel %vm254, %v228, 0
  %v310 = vsel %vm254, %v229, 0
  %v313 = vsel %vm254, %v230, 0
  %v316 = vsel %vm254, %v231, 0
  %v319 = vsel %vm254, %v232, 0
  %v322 = vsel %vm254, %v233, 0
  %v325 = vsel %vm254, %v234, 0
  %v328 = vsel %vm254, %v235, 0
  %v331 = vsel %vm254, %v236, 0
  %v334 = vsel %vm254, %v237, 0
  %v337 = vsel %vm254, %v238, 0
  %v340 = vsel %vm254, %v239, 0
  %v343 = vsel %vm254, %v240, 0
  %v346 = vsel %vm254, %v241, 0
  %v349 = vsel %vm254, %v242, 0
  %vm351 = vcmask 1044480
  %vm352 = vcmask 1045504
  %v353 = vsel %vm351, 4294967295, 65535
  %v354 = vsel %vm352, %v353, 0
  %v356 = vand.u32 %v252, %v354
  %358 = vmatprep.subr.bf16.mxu0 0
  %359 = vmatpush1.bf16.msra.mxu0 0
  %360 = vmatprep.subr.bf16.mxu0 0
  %361 = vmatpush1.bf16.msra.mxu0 0
  %362 = vmatprep.subr.bf16.mxu0 0
  %363 = vmatpush1.bf16.msra.mxu0 0
  %364 = vmatprep.subr.bf16.mxu0 0
  %365 = vmatpush1.bf16.msra.mxu0 0
  %366 = vmatprep.subr.bf16.mxu0 0
  %367 = vmatpush1.bf16.msra.mxu0 0
  %368 = vmatprep.subr.bf16.mxu0 0
  %369 = vmatpush1.bf16.msra.mxu0 0
  %370 = vmatprep.subr.bf16.mxu0 0
  %371 = vmatpush1.bf16.msra.mxu0 %v356
  %372 = vmatprep.subr.bf16.mxu0 0
  %373 = vmatpush1.bf16.msra.mxu0 %v251
  %374 = vmatprep.subr.bf16.mxu0 0
  %375 = vmatpush2.bf16.msra.mxu0 0
  %376 = vmatprep.subr.bf16.mxu0 0
  %377 = vmatpush2.bf16.msra.mxu0 0
  %378 = vmatprep.subr.bf16.mxu0 0
  %379 = vmatpush2.bf16.msra.mxu0 0
  %380 = vmatprep.subr.bf16.mxu0 0
  %381 = vmatpush2.bf16.msra.mxu0 0
  %382 = vmatprep.subr.bf16.mxu0 0
  %383 = vmatpush2.bf16.msra.mxu0 0
  %384 = vmatprep.subr.bf16.mxu0 0
  %385 = vmatpush2.bf16.msra.mxu0 0
  %386 = vmatprep.subr.bf16.mxu0 0
  %387 = vmatpush2.bf16.msra.mxu0 0
  %388 = vmatprep.subr.bf16.mxu0 0
  %389 = vmatpush2.bf16.msra.mxu0 0
  %390 = vmatprep.mubr.bf16.mxu0 0
  %391 = vmatmul.mubr.bf16.gmra.mxu0 %v256
  %v392 = vpop.f32.mrf.mxu0
  %v393 = vadd.f32 0.0, %v392
  %v394 = vpop.f32.mrf.mxu0
  %v395 = vpop.f32.mrf.mxu0
  %v396 = vadd.f32 0.0, %v395
  %v397 = vpop.f32.mrf.mxu0
  %398 = vmatprep.mubr.bf16.mxu0 0
  %399 = vmatmul.mubr.bf16.gmra.mxu0 %v259
  %v400 = vpop.f32.mrf.mxu0
  %v401 = vadd.f32 0.0, %v400
  %v402 = vpop.f32.mrf.mxu0
  %v403 = vpop.f32.mrf.mxu0
  %v404 = vadd.f32 0.0, %v403
  %v405 = vpop.f32.mrf.mxu0
  %406 = vmatprep.mubr.bf16.mxu0 0
  %407 = vmatmul.mubr.bf16.gmra.mxu0 %v262
  %v408 = vpop.f32.mrf.mxu0
  %v409 = vadd.f32 0.0, %v408
  %v410 = vpop.f32.mrf.mxu0
  %v411 = vpop.f32.mrf.mxu0
  %v412 = vadd.f32 0.0, %v411
  %v413 = vpop.f32.mrf.mxu0
  %414 = vmatprep.mubr.bf16.mxu0 0
  %415 = vmatmul.mubr.bf16.gmra.mxu0 %v265
  %v416 = vpop.f32.mrf.mxu0
  %v417 = vadd.f32 0.0, %v416
  %v418 = vpop.f32.mrf.mxu0
  %v419 = vpop.f32.mrf.mxu0
  %v420 = vadd.f32 0.0, %v419
  %v421 = vpop.f32.mrf.mxu0
  %422 = vmatprep.mubr.bf16.mxu0 0
  %423 = vmatmul.mubr.bf16.gmra.mxu0 %v268
  %v424 = vpop.f32.mrf.mxu0
  %v425 = vadd.f32 0.0, %v424
  %v426 = vpop.f32.mrf.mxu0
  %v427 = vpop.f32.mrf.mxu0
  %v428 = vadd.f32 0.0, %v427
  %v429 = vpop.f32.mrf.mxu0
  %430 = vmatprep.mubr.bf16.mxu0 0
  %431 = vmatmul.mubr.bf16.gmra.mxu0 %v271
  %v432 = vpop.f32.mrf.mxu0
  %v433 = vadd.f32 0.0, %v432
  %v434 = vpop.f32.mrf.mxu0
  %v435 = vpop.f32.mrf.mxu0
  %v436 = vadd.f32 0.0, %v435
  %v437 = vpop.f32.mrf.mxu0
  %438 = vmatprep.mubr.bf16.mxu0 0
  %439 = vmatmul.mubr.bf16.gmra.mxu0 %v274
  %v440 = vpop.f32.mrf.mxu0
  %v441 = vadd.f32 0.0, %v440
  %v442 = vpop.f32.mrf.mxu0
  %v443 = vpop.f32.mrf.mxu0
  %v444 = vadd.f32 0.0, %v443
  %v445 = vpop.f32.mrf.mxu0
  %446 = vmatprep.mubr.bf16.mxu0 0
  %447 = vmatmul.mubr.bf16.gmra.mxu0 %v277
  %v448 = vpop.f32.mrf.mxu0
  %v449 = vadd.f32 0.0, %v448
  %v450 = vpop.f32.mrf.mxu0
  %v451 = vpop.f32.mrf.mxu0
  %v452 = vadd.f32 0.0, %v451
  %v453 = vpop.f32.mrf.mxu0
  %454 = vmatprep.mubr.bf16.mxu0 0
  %455 = vmatmul.mubr.bf16.gmra.mxu0 %v280
  %v456 = vpop.f32.mrf.mxu0
  %v457 = vadd.f32 0.0, %v456
  %v458 = vpop.f32.mrf.mxu0
  %v459 = vpop.f32.mrf.mxu0
  %v460 = vadd.f32 0.0, %v459
  %v461 = vpop.f32.mrf.mxu0
  %462 = vmatprep.mubr.bf16.mxu0 0
  %463 = vmatmul.mubr.bf16.gmra.mxu0 %v283
  %v464 = vpop.f32.mrf.mxu0
  %v465 = vadd.f32 0.0, %v464
  %v466 = vpop.f32.mrf.mxu0
  %v467 = vpop.f32.mrf.mxu0
  %v468 = vadd.f32 0.0, %v467
  %v469 = vpop.f32.mrf.mxu0
  %470 = vmatprep.mubr.bf16.mxu0 0
  %471 = vmatmul.mubr.bf16.gmra.mxu0 %v286
  %v472 = vpop.f32.mrf.mxu0
  %v473 = vadd.f32 0.0, %v472
  %v474 = vpop.f32.mrf.mxu0
  %v475 = vpop.f32.mrf.mxu0
  %v476 = vadd.f32 0.0, %v475
  %v477 = vpop.f32.mrf.mxu0
  %478 = vmatprep.mubr.bf16.mxu0 0
  %479 = vmatmul.mubr.bf16.gmra.mxu0 %v289
  %v480 = vpop.f32.mrf.mxu0
  %v481 = vadd.f32 0.0, %v480
  %v482 = vpop.f32.mrf.mxu0
  %v483 = vpop.f32.mrf.mxu0
  %v484 = vadd.f32 0.0, %v483
  %v485 = vpop.f32.mrf.mxu0
  %486 = vmatprep.mubr.bf16.mxu0 0
  %487 = vmatmul.mubr.bf16.gmra.mxu0 %v292
  %v488 = vpop.f32.mrf.mxu0
  %v489 = vadd.f32 0.0, %v488
  %v490 = vpop.f32.mrf.mxu0
  %v491 = vpop.f32.mrf.mxu0
  %v492 = vadd.f32 0.0, %v491
  %v493 = vpop.f32.mrf.mxu0
  %494 = vmatprep.mubr.bf16.mxu0 0
  %495 = vmatmul.mubr.bf16.gmra.mxu0 %v295
  %v496 = vpop.f32.mrf.mxu0
  %v497 = vadd.f32 0.0, %v496
  %v498 = vpop.f32.mrf.mxu0
  %v499 = vpop.f32.mrf.mxu0
  %v500 = vadd.f32 0.0, %v499
  %v501 = vpop.f32.mrf.mxu0
  %502 = vmatprep.mubr.bf16.mxu0 0
  %503 = vmatmul.mubr.bf16.gmra.mxu0 %v298
  %v504 = vpop.f32.mrf.mxu0
  %v505 = vadd.f32 0.0, %v504
  %v506 = vpop.f32.mrf.mxu0
  %v507 = vpop.f32.mrf.mxu0
  %v508 = vadd.f32 0.0, %v507
  %v509 = vpop.f32.mrf.mxu0
  %510 = vmatprep.mubr.bf16.mxu0 0
  %511 = vmatmul.mubr.bf16.gmra.mxu0 %v301
  %v512 = vpop.f32.mrf.mxu0
  %v513 = vadd.f32 0.0, %v512
  %v514 = vpop.f32.mrf.mxu0
  %v515 = vpop.f32.mrf.mxu0
  %v516 = vadd.f32 0.0, %v515
  %v517 = vpop.f32.mrf.mxu0
  %518 = vmatprep.mubr.bf16.mxu0 0
  %519 = vmatmul.mubr.bf16.gmra.mxu0 %v304
  %v520 = vpop.f32.mrf.mxu0
  %v521 = vadd.f32 0.0, %v520
  %v522 = vpop.f32.mrf.mxu0
  %v523 = vpop.f32.mrf.mxu0
  %v524 = vadd.f32 0.0, %v523
  %v525 = vpop.f32.mrf.mxu0
  %526 = vmatprep.mubr.bf16.mxu0 0
  %527 = vmatmul.mubr.bf16.gmra.mxu0 %v307
  %v528 = vpop.f32.mrf.mxu0
  %v529 = vadd.f32 0.0, %v528
  %v530 = vpop.f32.mrf.mxu0
  %v531 = vpop.f32.mrf.mxu0
  %v532 = vadd.f32 0.0, %v531
  %v533 = vpop.f32.mrf.mxu0
  %534 = vmatprep.mubr.bf16.mxu0 0
  %535 = vmatmul.mubr.bf16.gmra.mxu0 %v310
  %v536 = vpop.f32.mrf.mxu0
  %v537 = vadd.f32 0.0, %v536
  %v538 = vpop.f32.mrf.mxu0
  %v539 = vpop.f32.mrf.mxu0
  %v540 = vadd.f32 0.0, %v539
  %v541 = vpop.f32.mrf.mxu0
  %542 = vmatprep.mubr.bf16.mxu0 0
  %543 = vmatmul.mubr.bf16.gmra.mxu0 %v313
  %v544 = vpop.f32.mrf.mxu0
  %v545 = vadd.f32 0.0, %v544
  %v546 = vpop.f32.mrf.mxu0
  %v547 = vpop.f32.mrf.mxu0
  %v548 = vadd.f32 0.0, %v547
  %v549 = vpop.f32.mrf.mxu0
  %550 = vmatprep.mubr.bf16.mxu0 0
  %551 = vmatmul.mubr.bf16.gmra.mxu0 %v316
  %v552 = vpop.f32.mrf.mxu0
  %v553 = vadd.f32 0.0, %v552
  %v554 = vpop.f32.mrf.mxu0
  %v555 = vpop.f32.mrf.mxu0
  %v556 = vadd.f32 0.0, %v555
  %v557 = vpop.f32.mrf.mxu0
  %558 = vmatprep.mubr.bf16.mxu0 0
  %559 = vmatmul.mubr.bf16.gmra.mxu0 %v319
  %v560 = vpop.f32.mrf.mxu0
  %v561 = vadd.f32 0.0, %v560
  %v562 = vpop.f32.mrf.mxu0
  %v563 = vpop.f32.mrf.mxu0
  %v564 = vadd.f32 0.0, %v563
  %v565 = vpop.f32.mrf.mxu0
  %566 = vmatprep.mubr.bf16.mxu0 0
  %567 = vmatmul.mubr.bf16.gmra.mxu0 %v322
  %v568 = vpop.f32.mrf.mxu0
  %v569 = vadd.f32 0.0, %v568
  %v570 = vpop.f32.mrf.mxu0
  %v571 = vpop.f32.mrf.mxu0
  %v572 = vadd.f32 0.0, %v571
  %v573 = vpop.f32.mrf.mxu0
  %574 = vmatprep.mubr.bf16.mxu0 0
  %575 = vmatmul.mubr.bf16.gmra.mxu0 %v325
  %v576 = vpop.f32.mrf.mxu0
  %v577 = vadd.f32 0.0, %v576
  %v578 = vpop.f32.mrf.mxu0
  %v579 = vpop.f32.mrf.mxu0
  %v580 = vadd.f32 0.0, %v579
  %v581 = vpop.f32.mrf.mxu0
  %582 = vmatprep.mubr.bf16.mxu0 0
  %583 = vmatmul.mubr.bf16.gmra.mxu0 %v328
  %v584 = vpop.f32.mrf.mxu0
  %v585 = vadd.f32 0.0, %v584
  %v586 = vpop.f32.mrf.mxu0
  %v587 = vpop.f32.mrf.mxu0
  %v588 = vadd.f32 0.0, %v587
  %v589 = vpop.f32.mrf.mxu0
  %590 = vmatprep.mubr.bf16.mxu0 0
  %591 = vmatmul.mubr.bf16.gmra.mxu0 %v331
  %v592 = vpop.f32.mrf.mxu0
  %v593 = vadd.f32 0.0, %v592
  %v594 = vpop.f32.mrf.mxu0
  %v595 = vpop.f32.mrf.mxu0
  %v596 = vadd.f32 0.0, %v595
  %v597 = vpop.f32.mrf.mxu0
  %598 = vmatprep.mubr.bf16.mxu0 0
  %599 = vmatmul.mubr.bf16.gmra.mxu0 %v334
  %v600 = vpop.f32.mrf.mxu0
  %v601 = vadd.f32 0.0, %v600
  %v602 = vpop.f32.mrf.mxu0
  %v603 = vpop.f32.mrf.mxu0
  %v604 = vadd.f32 0.0, %v603
  %v605 = vpop.f32.mrf.mxu0
  %606 = vmatprep.mubr.bf16.mxu0 0
  %607 = vmatmul.mubr.bf16.gmra.mxu0 %v337
  %v608 = vpop.f32.mrf.mxu0
  %v609 = vadd.f32 0.0, %v608
  %v610 = vpop.f32.mrf.mxu0
  %v611 = vpop.f32.mrf.mxu0
  %v612 = vadd.f32 0.0, %v611
  %v613 = vpop.f32.mrf.mxu0
  %614 = vmatprep.mubr.bf16.mxu0 0
  %615 = vmatmul.mubr.bf16.gmra.mxu0 %v340
  %v616 = vpop.f32.mrf.mxu0
  %v617 = vadd.f32 0.0, %v616
  %v618 = vpop.f32.mrf.mxu0
  %v619 = vpop.f32.mrf.mxu0
  %v620 = vadd.f32 0.0, %v619
  %v621 = vpop.f32.mrf.mxu0
  %622 = vmatprep.mubr.bf16.mxu0 0
  %623 = vmatmul.mubr.bf16.gmra.mxu0 %v343
  %v624 = vpop.f32.mrf.mxu0
  %v625 = vadd.f32 0.0, %v624
  %v626 = vpop.f32.mrf.mxu0
  %v627 = vpop.f32.mrf.mxu0
  %v628 = vadd.f32 0.0, %v627
  %v629 = vpop.f32.mrf.mxu0
  %630 = vmatprep.mubr.bf16.mxu0 0
  %631 = vmatmul.mubr.bf16.gmra.mxu0 %v346
  %v632 = vpop.f32.mrf.mxu0
  %v633 = vadd.f32 0.0, %v632
  %v634 = vpop.f32.mrf.mxu0
  %v635 = vpop.f32.mrf.mxu0
  %v636 = vadd.f32 0.0, %v635
  %v637 = vpop.f32.mrf.mxu0
  %638 = vmatprep.mubr.bf16.mxu0 0
  %639 = vmatmul.mubr.bf16.gmra.mxu0 %v349
  %v640 = vpop.f32.mrf.mxu0
  %v641 = vadd.f32 0.0, %v640
  %v642 = vpop.f32.mrf.mxu0
  %v643 = vpop.f32.mrf.mxu0
  %v644 = vadd.f32 0.0, %v643
  %v645 = vpop.f32.mrf.mxu0
  %646 = vdwg.mxu0
  %s647 = scalar_lea.vmem %s0, 256
  %v648 = vld [vmem:[%s647] sm:$0xf]
  %v649 = vld [vmem:[%s647 + $0x4] sm:$0xf]
  %v650 = vld [vmem:[%s647 + $0x8] sm:$0xf]
  %v651 = vld [vmem:[%s647 + $0xc] sm:$0xf]
  %v652 = vld [vmem:[%s647 + $0x10] sm:$0xf]
  %v653 = vld [vmem:[%s647 + $0x14] sm:$0xf]
  %v654 = vld [vmem:[%s647 + $0x18] sm:$0xf]
  %v655 = vld [vmem:[%s647 + $0x1c] sm:$0xf]
  %v656 = vld [vmem:[%s647 + $0x20] sm:$0xf]
  %v657 = vld [vmem:[%s647 + $0x24] sm:$0xf]
  %v658 = vld [vmem:[%s647 + $0x28] sm:$0xf]
  %v659 = vld [vmem:[%s647 + $0x2c] sm:$0xf]
  %v660 = vld [vmem:[%s647 + $0x30] sm:$0xf]
  %v661 = vld [vmem:[%s647 + $0x34] sm:$0xf]
  %v662 = vld [vmem:[%s647 + $0x38] sm:$0xf]
  %v663 = vld [vmem:[%s647 + $0x3c] sm:$0xf]
  %v664 = vld [vmem:[%s647 + $0x40] sm:$0xf]
  %v665 = vld [vmem:[%s647 + $0x44] sm:$0xf]
  %v666 = vld [vmem:[%s647 + $0x48] sm:$0xf]
  %v667 = vld [vmem:[%s647 + $0x4c] sm:$0xf]
  %v668 = vld [vmem:[%s647 + $0x50] sm:$0xf]
  %v669 = vld [vmem:[%s647 + $0x54] sm:$0xf]
  %v670 = vld [vmem:[%s647 + $0x58] sm:$0xf]
  %v671 = vld [vmem:[%s647 + $0x5c] sm:$0xf]
  %v672 = vld [vmem:[%s647 + $0x60] sm:$0xf]
  %v673 = vld [vmem:[%s647 + $0x64] sm:$0xf]
  %v674 = vld [vmem:[%s647 + $0x68] sm:$0xf]
  %v675 = vld [vmem:[%s647 + $0x6c] sm:$0xf]
  %v676 = vld [vmem:[%s647 + $0x70] sm:$0xf]
  %v677 = vld [vmem:[%s647 + $0x74] sm:$0xf]
  %v678 = vld [vmem:[%s647 + $0x78] sm:$0xf]
  %v679 = vld [vmem:[%s647 + $0x7c] sm:$0xf]
  %v680 = vld [vmem:[%s647 + $0x80] sm:$0xf]
  %v681 = vld [vmem:[%s647 + $0x84] sm:$0xf]
  %v682 = vld [vmem:[%s647 + $0x88] sm:$0xf]
  %v683 = vld [vmem:[%s647 + $0x8c] sm:$0xf]
  %v684 = vld [vmem:[%s647 + $0x90] sm:$0xf]
  %v685 = vld [vmem:[%s647 + $0x94] sm:$0xf]
  %v686 = vld [vmem:[%s647 + $0x98] sm:$0xf]
  %v687 = vld [vmem:[%s647 + $0x9c] sm:$0xf]
  %v688 = vld [vmem:[%s647 + $0xa0] sm:$0xf]
  %v689 = vld [vmem:[%s647 + $0xa4] sm:$0xf]
  %v690 = vld [vmem:[%s647 + $0xa8] sm:$0xf]
  %v691 = vld [vmem:[%s647 + $0xac] sm:$0xf]
  %v692 = vld [vmem:[%s647 + $0xb0] sm:$0xf]
  %v693 = vld [vmem:[%s647 + $0xb4] sm:$0xf]
  %v694 = vld [vmem:[%s647 + $0xb8] sm:$0xf]
  %v695 = vld [vmem:[%s647 + $0xbc] sm:$0xf]
  %v696 = vld [vmem:[%s647 + $0xc0] sm:$0xf]
  %v697 = vld [vmem:[%s647 + $0xc4] sm:$0xf]
  %v698 = vld [vmem:[%s647 + $0xc8] sm:$0xf]
  %v699 = vld [vmem:[%s647 + $0xcc] sm:$0xf]
  %v700 = vld [vmem:[%s647 + $0xd0] sm:$0xf]
  %v701 = vld [vmem:[%s647 + $0xd4] sm:$0xf]
  %v702 = vld [vmem:[%s647 + $0xd8] sm:$0xf]
  %v703 = vld [vmem:[%s647 + $0xdc] sm:$0xf]
  %v704 = vld [vmem:[%s647 + $0xe0] sm:$0xf]
  %v705 = vld [vmem:[%s647 + $0xe4] sm:$0xf]
  %v706 = vld [vmem:[%s647 + $0xe8] sm:$0xf]
  %v707 = vld [vmem:[%s647 + $0xec] sm:$0xf]
  %v708 = vld [vmem:[%s647 + $0xf0] sm:$0xf]
  %v709 = vld [vmem:[%s647 + $0xf4] sm:$0xf]
  %v710 = vld [vmem:[%s647 + $0xf8] sm:$0xf]
  %v711 = vld [vmem:[%s647 + $0xfc] sm:$0xf]
  %v776 = vunpack.c.l.b16 %v648
  %v777 = vunpack.c.l.b16 %v649
  %v778 = vunpack.c.l.b16 %v650
  %v779 = vunpack.c.l.b16 %v651
  %v780 = vunpack.c.l.b16 %v652
  %v781 = vunpack.c.l.b16 %v653
  %v782 = vunpack.c.l.b16 %v654
  %v783 = vunpack.c.l.b16 %v655
  %v784 = vunpack.c.l.b16 %v656
  %v785 = vunpack.c.l.b16 %v657
  %v786 = vunpack.c.l.b16 %v658
  %v787 = vunpack.c.l.b16 %v659
  %v788 = vunpack.c.l.b16 %v660
  %v789 = vunpack.c.l.b16 %v661
  %v790 = vunpack.c.l.b16 %v662
  %v791 = vunpack.c.l.b16 %v663
  %v792 = vunpack.c.l.b16 %v664
  %v793 = vunpack.c.l.b16 %v665
  %v794 = vunpack.c.l.b16 %v666
  %v795 = vunpack.c.l.b16 %v667
  %v796 = vunpack.c.l.b16 %v668
  %v797 = vunpack.c.l.b16 %v669
  %v798 = vunpack.c.l.b16 %v670
  %v799 = vunpack.c.l.b16 %v671
  %v800 = vunpack.c.l.b16 %v672
  %v801 = vunpack.c.l.b16 %v673
  %v802 = vunpack.c.l.b16 %v674
  %v803 = vunpack.c.l.b16 %v675
  %v804 = vunpack.c.l.b16 %v676
  %v805 = vunpack.c.l.b16 %v677
  %v806 = vunpack.c.l.b16 %v678
  %v807 = vunpack.c.l.b16 %v679
  %v808 = vunpack.c.l.b16 %v680
  %v809 = vunpack.c.l.b16 %v681
  %v810 = vunpack.c.l.b16 %v682
  %v811 = vunpack.c.l.b16 %v683
  %v812 = vunpack.c.l.b16 %v684
  %v813 = vunpack.c.l.b16 %v685
  %v814 = vunpack.c.l.b16 %v686
  %v815 = vunpack.c.l.b16 %v687
  %v816 = vunpack.c.l.b16 %v688
  %v817 = vunpack.c.l.b16 %v689
  %v818 = vunpack.c.l.b16 %v690
  %v819 = vunpack.c.l.b16 %v691
  %v820 = vunpack.c.l.b16 %v692
  %v821 = vunpack.c.l.b16 %v693
  %v822 = vunpack.c.l.b16 %v694
  %v823 = vunpack.c.l.b16 %v695
  %v824 = vunpack.c.l.b16 %v696
  %v825 = vunpack.c.l.b16 %v697
  %v826 = vunpack.c.l.b16 %v698
  %v827 = vunpack.c.l.b16 %v699
  %v828 = vunpack.c.l.b16 %v700
  %v829 = vunpack.c.l.b16 %v701
  %v830 = vunpack.c.l.b16 %v702
  %v831 = vunpack.c.l.b16 %v703
  %v832 = vunpack.c.l.b16 %v704
  %v833 = vunpack.c.l.b16 %v705
  %v834 = vunpack.c.l.b16 %v706
  %v835 = vunpack.c.l.b16 %v707
  %v836 = vunpack.c.l.b16 %v708
  %v837 = vunpack.c.l.b16 %v709
  %v838 = vunpack.c.l.b16 %v710
  %v839 = vunpack.c.l.b16 %v711
  %v840 = vpack.c.b16 %v777, %v776
  %v841 = vpack.c.b16 %v779, %v778
  %v842 = vpack.c.b16 %v781, %v780
  %v843 = vpack.c.b16 %v783, %v782
  %v844 = vpack.c.b16 %v785, %v784
  %v845 = vpack.c.b16 %v787, %v786
  %v846 = vpack.c.b16 %v789, %v788
  %v847 = vpack.c.b16 %v791, %v790
  %v848 = vpack.c.b16 %v793, %v792
  %v849 = vpack.c.b16 %v795, %v794
  %v850 = vpack.c.b16 %v797, %v796
  %v851 = vpack.c.b16 %v799, %v798
  %v852 = vpack.c.b16 %v801, %v800
  %v853 = vpack.c.b16 %v803, %v802
  %v854 = vpack.c.b16 %v805, %v804
  %v855 = vpack.c.b16 %v807, %v806
  %v856 = vpack.c.b16 %v809, %v808
  %v857 = vpack.c.b16 %v811, %v810
  %v858 = vpack.c.b16 %v813, %v812
  %v859 = vpack.c.b16 %v815, %v814
  %v860 = vpack.c.b16 %v817, %v816
  %v861 = vpack.c.b16 %v819, %v818
  %v862 = vpack.c.b16 %v821, %v820
  %v863 = vpack.c.b16 %v823, %v822
  %v864 = vpack.c.b16 %v825, %v824
  %v865 = vpack.c.b16 %v827, %v826
  %v866 = vpack.c.b16 %v829, %v828
  %v867 = vpack.c.b16 %v831, %v830
  %v868 = vpack.c.b16 %v833, %v832
  %v869 = vpack.c.b16 %v835, %v834
  %v870 = vpack.c.b16 %v837, %v836
  %v871 = vpack.c.b16 %v839, %v838
  %v873 = vsel %vm254, %v840, 0
  %v876 = vsel %vm254, %v841, 0
  %v879 = vsel %vm254, %v842, 0
  %v882 = vsel %vm254, %v843, 0
  %v885 = vsel %vm254, %v844, 0
  %v888 = vsel %vm254, %v845, 0
  %v891 = vsel %vm254, %v846, 0
  %v894 = vsel %vm254, %v847, 0
  %v897 = vsel %vm254, %v848, 0
  %v900 = vsel %vm254, %v849, 0
  %v903 = vsel %vm254, %v850, 0
  %v906 = vsel %vm254, %v851, 0
  %v909 = vsel %vm254, %v852, 0
  %v912 = vsel %vm254, %v853, 0
  %v915 = vsel %vm254, %v854, 0
  %v918 = vsel %vm254, %v855, 0
  %v921 = vsel %vm254, %v856, 0
  %v924 = vsel %vm254, %v857, 0
  %v927 = vsel %vm254, %v858, 0
  %v930 = vsel %vm254, %v859, 0
  %v933 = vsel %vm254, %v860, 0
  %v936 = vsel %vm254, %v861, 0
  %v939 = vsel %vm254, %v862, 0
  %v942 = vsel %vm254, %v863, 0
  %v945 = vsel %vm254, %v864, 0
  %v948 = vsel %vm254, %v865, 0
  %v951 = vsel %vm254, %v866, 0
  %v954 = vsel %vm254, %v867, 0
  %v957 = vsel %vm254, %v868, 0
  %v960 = vsel %vm254, %v869, 0
  %v963 = vsel %vm254, %v870, 0
  %v966 = vsel %vm254, %v871, 0
  %968 = vmatprep.subr.bf16.mxu0 0
  %969 = vmatpush1.bf16.msra.mxu0 0
  %970 = vmatprep.subr.bf16.mxu0 0
  %971 = vmatpush1.bf16.msra.mxu0 0
  %972 = vmatprep.subr.bf16.mxu0 0
  %973 = vmatpush1.bf16.msra.mxu0 0
  %974 = vmatprep.subr.bf16.mxu0 0
  %975 = vmatpush1.bf16.msra.mxu0 0
  %976 = vmatprep.subr.bf16.mxu0 0
  %977 = vmatpush1.bf16.msra.mxu0 0
  %978 = vmatprep.subr.bf16.mxu0 0
  %979 = vmatpush1.bf16.msra.mxu0 0
  %980 = vmatprep.subr.bf16.mxu0 0
  %981 = vmatpush1.bf16.msra.mxu0 %v356
  %982 = vmatprep.subr.bf16.mxu0 0
  %983 = vmatpush1.bf16.msra.mxu0 %v251
  %984 = vmatprep.subr.bf16.mxu0 0
  %985 = vmatpush2.bf16.msra.mxu0 0
  %986 = vmatprep.subr.bf16.mxu0 0
  %987 = vmatpush2.bf16.msra.mxu0 0
  %988 = vmatprep.subr.bf16.mxu0 0
  %989 = vmatpush2.bf16.msra.mxu0 0
  %990 = vmatprep.subr.bf16.mxu0 0
  %991 = vmatpush2.bf16.msra.mxu0 0
  %992 = vmatprep.subr.bf16.mxu0 0
  %993 = vmatpush2.bf16.msra.mxu0 0
  %994 = vmatprep.subr.bf16.mxu0 0
  %995 = vmatpush2.bf16.msra.mxu0 0
  %996 = vmatprep.subr.bf16.mxu0 0
  %997 = vmatpush2.bf16.msra.mxu0 0
  %998 = vmatprep.subr.bf16.mxu0 0
  %999 = vmatpush2.bf16.msra.mxu0 0
  %1000 = vmatprep.mubr.bf16.mxu0 0
  %1001 = vmatmul.mubr.bf16.gmra.mxu0 %v873
  %v1002 = vpop.f32.mrf.mxu0
  %v1003 = vadd.f32 0.0, %v1002
  %v1004 = vpop.f32.mrf.mxu0
  %v1005 = vpop.f32.mrf.mxu0
  %v1006 = vadd.f32 0.0, %v1005
  %v1007 = vpop.f32.mrf.mxu0
  %1008 = vmatprep.mubr.bf16.mxu0 0
  %1009 = vmatmul.mubr.bf16.gmra.mxu0 %v876
  %v1010 = vpop.f32.mrf.mxu0
  %v1011 = vadd.f32 0.0, %v1010
  %v1012 = vpop.f32.mrf.mxu0
  %v1013 = vpop.f32.mrf.mxu0
  %v1014 = vadd.f32 0.0, %v1013
  %v1015 = vpop.f32.mrf.mxu0
  %1016 = vmatprep.mubr.bf16.mxu0 0
  %1017 = vmatmul.mubr.bf16.gmra.mxu0 %v879
  %v1018 = vpop.f32.mrf.mxu0
  %v1019 = vadd.f32 0.0, %v1018
  %v1020 = vpop.f32.mrf.mxu0
  %v1021 = vpop.f32.mrf.mxu0
  %v1022 = vadd.f32 0.0, %v1021
  %v1023 = vpop.f32.mrf.mxu0
  %1024 = vmatprep.mubr.bf16.mxu0 0
  %1025 = vmatmul.mubr.bf16.gmra.mxu0 %v882
  %v1026 = vpop.f32.mrf.mxu0
  %v1027 = vadd.f32 0.0, %v1026
  %v1028 = vpop.f32.mrf.mxu0
  %v1029 = vpop.f32.mrf.mxu0
  %v1030 = vadd.f32 0.0, %v1029
  %v1031 = vpop.f32.mrf.mxu0
  %1032 = vmatprep.mubr.bf16.mxu0 0
  %1033 = vmatmul.mubr.bf16.gmra.mxu0 %v885
  %v1034 = vpop.f32.mrf.mxu0
  %v1035 = vadd.f32 0.0, %v1034
  %v1036 = vpop.f32.mrf.mxu0
  %v1037 = vpop.f32.mrf.mxu0
  %v1038 = vadd.f32 0.0, %v1037
  %v1039 = vpop.f32.mrf.mxu0
  %1040 = vmatprep.mubr.bf16.mxu0 0
  %1041 = vmatmul.mubr.bf16.gmra.mxu0 %v888
  %v1042 = vpop.f32.mrf.mxu0
  %v1043 = vadd.f32 0.0, %v1042
  %v1044 = vpop.f32.mrf.mxu0
  %v1045 = vpop.f32.mrf.mxu0
  %v1046 = vadd.f32 0.0, %v1045
  %v1047 = vpop.f32.mrf.mxu0
  %1048 = vmatprep.mubr.bf16.mxu0 0
  %1049 = vmatmul.mubr.bf16.gmra.mxu0 %v891
  %v1050 = vpop.f32.mrf.mxu0
  %v1051 = vadd.f32 0.0, %v1050
  %v1052 = vpop.f32.mrf.mxu0
  %v1053 = vpop.f32.mrf.mxu0
  %v1054 = vadd.f32 0.0, %v1053
  %v1055 = vpop.f32.mrf.mxu0
  %1056 = vmatprep.mubr.bf16.mxu0 0
  %1057 = vmatmul.mubr.bf16.gmra.mxu0 %v894
  %v1058 = vpop.f32.mrf.mxu0
  %v1059 = vadd.f32 0.0, %v1058
  %v1060 = vpop.f32.mrf.mxu0
  %v1061 = vpop.f32.mrf.mxu0
  %v1062 = vadd.f32 0.0, %v1061
  %v1063 = vpop.f32.mrf.mxu0
  %1064 = vmatprep.mubr.bf16.mxu0 0
  %1065 = vmatmul.mubr.bf16.gmra.mxu0 %v897
  %v1066 = vpop.f32.mrf.mxu0
  %v1067 = vadd.f32 0.0, %v1066
  %v1068 = vpop.f32.mrf.mxu0
  %v1069 = vpop.f32.mrf.mxu0
  %v1070 = vadd.f32 0.0, %v1069
  %v1071 = vpop.f32.mrf.mxu0
  %1072 = vmatprep.mubr.bf16.mxu0 0
  %1073 = vmatmul.mubr.bf16.gmra.mxu0 %v900
  %v1074 = vpop.f32.mrf.mxu0
  %v1075 = vadd.f32 0.0, %v1074
  %v1076 = vpop.f32.mrf.mxu0
  %v1077 = vpop.f32.mrf.mxu0
  %v1078 = vadd.f32 0.0, %v1077
  %v1079 = vpop.f32.mrf.mxu0
  %1080 = vmatprep.mubr.bf16.mxu0 0
  %1081 = vmatmul.mubr.bf16.gmra.mxu0 %v903
  %v1082 = vpop.f32.mrf.mxu0
  %v1083 = vadd.f32 0.0, %v1082
  %v1084 = vpop.f32.mrf.mxu0
  %v1085 = vpop.f32.mrf.mxu0
  %v1086 = vadd.f32 0.0, %v1085
  %v1087 = vpop.f32.mrf.mxu0
  %1088 = vmatprep.mubr.bf16.mxu0 0
  %1089 = vmatmul.mubr.bf16.gmra.mxu0 %v906
  %v1090 = vpop.f32.mrf.mxu0
  %v1091 = vadd.f32 0.0, %v1090
  %v1092 = vpop.f32.mrf.mxu0
  %v1093 = vpop.f32.mrf.mxu0
  %v1094 = vadd.f32 0.0, %v1093
  %v1095 = vpop.f32.mrf.mxu0
  %1096 = vmatprep.mubr.bf16.mxu0 0
  %1097 = vmatmul.mubr.bf16.gmra.mxu0 %v909
  %v1098 = vpop.f32.mrf.mxu0
  %v1099 = vadd.f32 0.0, %v1098
  %v1100 = vpop.f32.mrf.mxu0
  %v1101 = vpop.f32.mrf.mxu0
  %v1102 = vadd.f32 0.0, %v1101
  %v1103 = vpop.f32.mrf.mxu0
  %1104 = vmatprep.mubr.bf16.mxu0 0
  %1105 = vmatmul.mubr.bf16.gmra.mxu0 %v912
  %v1106 = vpop.f32.mrf.mxu0
  %v1107 = vadd.f32 0.0, %v1106
  %v1108 = vpop.f32.mrf.mxu0
  %v1109 = vpop.f32.mrf.mxu0
  %v1110 = vadd.f32 0.0, %v1109
  %v1111 = vpop.f32.mrf.mxu0
  %1112 = vmatprep.mubr.bf16.mxu0 0
  %1113 = vmatmul.mubr.bf16.gmra.mxu0 %v915
  %v1114 = vpop.f32.mrf.mxu0
  %v1115 = vadd.f32 0.0, %v1114
  %v1116 = vpop.f32.mrf.mxu0
  %v1117 = vpop.f32.mrf.mxu0
  %v1118 = vadd.f32 0.0, %v1117
  %v1119 = vpop.f32.mrf.mxu0
  %1120 = vmatprep.mubr.bf16.mxu0 0
  %1121 = vmatmul.mubr.bf16.gmra.mxu0 %v918
  %v1122 = vpop.f32.mrf.mxu0
  %v1123 = vadd.f32 0.0, %v1122
  %v1124 = vpop.f32.mrf.mxu0
  %v1125 = vpop.f32.mrf.mxu0
  %v1126 = vadd.f32 0.0, %v1125
  %v1127 = vpop.f32.mrf.mxu0
  %1128 = vmatprep.mubr.bf16.mxu0 0
  %1129 = vmatmul.mubr.bf16.gmra.mxu0 %v921
  %v1130 = vpop.f32.mrf.mxu0
  %v1131 = vadd.f32 0.0, %v1130
  %v1132 = vpop.f32.mrf.mxu0
  %v1133 = vpop.f32.mrf.mxu0
  %v1134 = vadd.f32 0.0, %v1133
  %v1135 = vpop.f32.mrf.mxu0
  %1136 = vmatprep.mubr.bf16.mxu0 0
  %1137 = vmatmul.mubr.bf16.gmra.mxu0 %v924
  %v1138 = vpop.f32.mrf.mxu0
  %v1139 = vadd.f32 0.0, %v1138
  %v1140 = vpop.f32.mrf.mxu0
  %v1141 = vpop.f32.mrf.mxu0
  %v1142 = vadd.f32 0.0, %v1141
  %v1143 = vpop.f32.mrf.mxu0
  %1144 = vmatprep.mubr.bf16.mxu0 0
  %1145 = vmatmul.mubr.bf16.gmra.mxu0 %v927
  %v1146 = vpop.f32.mrf.mxu0
  %v1147 = vadd.f32 0.0, %v1146
  %v1148 = vpop.f32.mrf.mxu0
  %v1149 = vpop.f32.mrf.mxu0
  %v1150 = vadd.f32 0.0, %v1149
  %v1151 = vpop.f32.mrf.mxu0
  %1152 = vmatprep.mubr.bf16.mxu0 0
  %1153 = vmatmul.mubr.bf16.gmra.mxu0 %v930
  %v1154 = vpop.f32.mrf.mxu0
  %v1155 = vadd.f32 0.0, %v1154
  %v1156 = vpop.f32.mrf.mxu0
  %v1157 = vpop.f32.mrf.mxu0
  %v1158 = vadd.f32 0.0, %v1157
  %v1159 = vpop.f32.mrf.mxu0
  %1160 = vmatprep.mubr.bf16.mxu0 0
  %1161 = vmatmul.mubr.bf16.gmra.mxu0 %v933
  %v1162 = vpop.f32.mrf.mxu0
  %v1163 = vadd.f32 0.0, %v1162
  %v1164 = vpop.f32.mrf.mxu0
  %v1165 = vpop.f32.mrf.mxu0
  %v1166 = vadd.f32 0.0, %v1165
  %v1167 = vpop.f32.mrf.mxu0
  %1168 = vmatprep.mubr.bf16.mxu0 0
  %1169 = vmatmul.mubr.bf16.gmra.mxu0 %v936
  %v1170 = vpop.f32.mrf.mxu0
  %v1171 = vadd.f32 0.0, %v1170
  %v1172 = vpop.f32.mrf.mxu0
  %v1173 = vpop.f32.mrf.mxu0
  %v1174 = vadd.f32 0.0, %v1173
  %v1175 = vpop.f32.mrf.mxu0
  %1176 = vmatprep.mubr.bf16.mxu0 0
  %1177 = vmatmul.mubr.bf16.gmra.mxu0 %v939
  %v1178 = vpop.f32.mrf.mxu0
  %v1179 = vadd.f32 0.0, %v1178
  %v1180 = vpop.f32.mrf.mxu0
  %v1181 = vpop.f32.mrf.mxu0
  %v1182 = vadd.f32 0.0, %v1181
  %v1183 = vpop.f32.mrf.mxu0
  %1184 = vmatprep.mubr.bf16.mxu0 0
  %1185 = vmatmul.mubr.bf16.gmra.mxu0 %v942
  %v1186 = vpop.f32.mrf.mxu0
  %v1187 = vadd.f32 0.0, %v1186
  %v1188 = vpop.f32.mrf.mxu0
  %v1189 = vpop.f32.mrf.mxu0
  %v1190 = vadd.f32 0.0, %v1189
  %v1191 = vpop.f32.mrf.mxu0
  %1192 = vmatprep.mubr.bf16.mxu0 0
  %1193 = vmatmul.mubr.bf16.gmra.mxu0 %v945
  %v1194 = vpop.f32.mrf.mxu0
  %v1195 = vadd.f32 0.0, %v1194
  %v1196 = vpop.f32.mrf.mxu0
  %v1197 = vpop.f32.mrf.mxu0
  %v1198 = vadd.f32 0.0, %v1197
  %v1199 = vpop.f32.mrf.mxu0
  %1200 = vmatprep.mubr.bf16.mxu0 0
  %1201 = vmatmul.mubr.bf16.gmra.mxu0 %v948
  %v1202 = vpop.f32.mrf.mxu0
  %v1203 = vadd.f32 0.0, %v1202
  %v1204 = vpop.f32.mrf.mxu0
  %v1205 = vpop.f32.mrf.mxu0
  %v1206 = vadd.f32 0.0, %v1205
  %v1207 = vpop.f32.mrf.mxu0
  %1208 = vmatprep.mubr.bf16.mxu0 0
  %1209 = vmatmul.mubr.bf16.gmra.mxu0 %v951
  %v1210 = vpop.f32.mrf.mxu0
  %v1211 = vadd.f32 0.0, %v1210
  %v1212 = vpop.f32.mrf.mxu0
  %v1213 = vpop.f32.mrf.mxu0
  %v1214 = vadd.f32 0.0, %v1213
  %v1215 = vpop.f32.mrf.mxu0
  %1216 = vmatprep.mubr.bf16.mxu0 0
  %1217 = vmatmul.mubr.bf16.gmra.mxu0 %v954
  %v1218 = vpop.f32.mrf.mxu0
  %v1219 = vadd.f32 0.0, %v1218
  %v1220 = vpop.f32.mrf.mxu0
  %v1221 = vpop.f32.mrf.mxu0
  %v1222 = vadd.f32 0.0, %v1221
  %v1223 = vpop.f32.mrf.mxu0
  %1224 = vmatprep.mubr.bf16.mxu0 0
  %1225 = vmatmul.mubr.bf16.gmra.mxu0 %v957
  %v1226 = vpop.f32.mrf.mxu0
  %v1227 = vadd.f32 0.0, %v1226
  %v1228 = vpop.f32.mrf.mxu0
  %v1229 = vpop.f32.mrf.mxu0
  %v1230 = vadd.f32 0.0, %v1229
  %v1231 = vpop.f32.mrf.mxu0
  %1232 = vmatprep.mubr.bf16.mxu0 0
  %1233 = vmatmul.mubr.bf16.gmra.mxu0 %v960
  %v1234 = vpop.f32.mrf.mxu0
  %v1235 = vadd.f32 0.0, %v1234
  %v1236 = vpop.f32.mrf.mxu0
  %v1237 = vpop.f32.mrf.mxu0
  %v1238 = vadd.f32 0.0, %v1237
  %v1239 = vpop.f32.mrf.mxu0
  %1240 = vmatprep.mubr.bf16.mxu0 0
  %1241 = vmatmul.mubr.bf16.gmra.mxu0 %v963
  %v1242 = vpop.f32.mrf.mxu0
  %v1243 = vadd.f32 0.0, %v1242
  %v1244 = vpop.f32.mrf.mxu0
  %v1245 = vpop.f32.mrf.mxu0
  %v1246 = vadd.f32 0.0, %v1245
  %v1247 = vpop.f32.mrf.mxu0
  %1248 = vmatprep.mubr.bf16.mxu0 0
  %1249 = vmatmul.mubr.bf16.gmra.mxu0 %v966
  %v1250 = vpop.f32.mrf.mxu0
  %v1251 = vadd.f32 0.0, %v1250
  %v1252 = vpop.f32.mrf.mxu0
  %v1253 = vpop.f32.mrf.mxu0
  %v1254 = vadd.f32 0.0, %v1253
  %v1255 = vpop.f32.mrf.mxu0
  %1256 = vdwg.mxu0
  %v1257 = vmax.f32 %v393, %v1003
  %v1258 = vmax.f32 %v396, %v1006
  %v1259 = vmax.f32 %v401, %v1011
  %v1260 = vmax.f32 %v404, %v1014
  %v1261 = vmax.f32 %v409, %v1019
  %v1262 = vmax.f32 %v412, %v1022
  %v1263 = vmax.f32 %v417, %v1027
  %v1264 = vmax.f32 %v420, %v1030
  %v1265 = vmax.f32 %v425, %v1035
  %v1266 = vmax.f32 %v428, %v1038
  %v1267 = vmax.f32 %v433, %v1043
  %v1268 = vmax.f32 %v436, %v1046
  %v1269 = vmax.f32 %v441, %v1051
  %v1270 = vmax.f32 %v444, %v1054
  %v1271 = vmax.f32 %v449, %v1059
  %v1272 = vmax.f32 %v452, %v1062
  %v1273 = vmax.f32 %v457, %v1067
  %v1274 = vmax.f32 %v460, %v1070
  %v1275 = vmax.f32 %v465, %v1075
  %v1276 = vmax.f32 %v468, %v1078
  %v1277 = vmax.f32 %v473, %v1083
  %v1278 = vmax.f32 %v476, %v1086
  %v1279 = vmax.f32 %v481, %v1091
  %v1280 = vmax.f32 %v484, %v1094
  %v1281 = vmax.f32 %v489, %v1099
  %v1282 = vmax.f32 %v492, %v1102
  %v1283 = vmax.f32 %v497, %v1107
  %v1284 = vmax.f32 %v500, %v1110
  %v1285 = vmax.f32 %v505, %v1115
  %v1286 = vmax.f32 %v508, %v1118
  %v1287 = vmax.f32 %v513, %v1123
  %v1288 = vmax.f32 %v516, %v1126
  %v1289 = vmax.f32 %v521, %v1131
  %v1290 = vmax.f32 %v524, %v1134
  %v1291 = vmax.f32 %v529, %v1139
  %v1292 = vmax.f32 %v532, %v1142
  %v1293 = vmax.f32 %v537, %v1147
  %v1294 = vmax.f32 %v540, %v1150
  %v1295 = vmax.f32 %v545, %v1155
  %v1296 = vmax.f32 %v548, %v1158
  %v1297 = vmax.f32 %v553, %v1163
  %v1298 = vmax.f32 %v556, %v1166
  %v1299 = vmax.f32 %v561, %v1171
  %v1300 = vmax.f32 %v564, %v1174
  %v1301 = vmax.f32 %v569, %v1179
  %v1302 = vmax.f32 %v572, %v1182
  %v1303 = vmax.f32 %v577, %v1187
  %v1304 = vmax.f32 %v580, %v1190
  %v1305 = vmax.f32 %v585, %v1195
  %v1306 = vmax.f32 %v588, %v1198
  %v1307 = vmax.f32 %v593, %v1203
  %v1308 = vmax.f32 %v596, %v1206
  %v1309 = vmax.f32 %v601, %v1211
  %v1310 = vmax.f32 %v604, %v1214
  %v1311 = vmax.f32 %v609, %v1219
  %v1312 = vmax.f32 %v612, %v1222
  %v1313 = vmax.f32 %v617, %v1227
  %v1314 = vmax.f32 %v620, %v1230
  %v1315 = vmax.f32 %v625, %v1235
  %v1316 = vmax.f32 %v628, %v1238
  %v1317 = vmax.f32 %v633, %v1243
  %v1318 = vmax.f32 %v636, %v1246
  %v1319 = vmax.f32 %v641, %v1251
  %v1320 = vmax.f32 %v644, %v1254
  %s1321 = scalar_lea.vmem %s0, 512
  %v1322 = vld [vmem:[%s1321] sm:$0xf]
  %v1323 = vld [vmem:[%s1321 + $0x4] sm:$0xf]
  %v1324 = vld [vmem:[%s1321 + $0x8] sm:$0xf]
  %v1325 = vld [vmem:[%s1321 + $0xc] sm:$0xf]
  %v1326 = vld [vmem:[%s1321 + $0x10] sm:$0xf]
  %v1327 = vld [vmem:[%s1321 + $0x14] sm:$0xf]
  %v1328 = vld [vmem:[%s1321 + $0x18] sm:$0xf]
  %v1329 = vld [vmem:[%s1321 + $0x1c] sm:$0xf]
  %v1330 = vld [vmem:[%s1321 + $0x20] sm:$0xf]
  %v1331 = vld [vmem:[%s1321 + $0x24] sm:$0xf]
  %v1332 = vld [vmem:[%s1321 + $0x28] sm:$0xf]
  %v1333 = vld [vmem:[%s1321 + $0x2c] sm:$0xf]
  %v1334 = vld [vmem:[%s1321 + $0x30] sm:$0xf]
  %v1335 = vld [vmem:[%s1321 + $0x34] sm:$0xf]
  %v1336 = vld [vmem:[%s1321 + $0x38] sm:$0xf]
  %v1337 = vld [vmem:[%s1321 + $0x3c] sm:$0xf]
  %v1338 = vld [vmem:[%s1321 + $0x40] sm:$0xf]
  %v1339 = vld [vmem:[%s1321 + $0x44] sm:$0xf]
  %v1340 = vld [vmem:[%s1321 + $0x48] sm:$0xf]
  %v1341 = vld [vmem:[%s1321 + $0x4c] sm:$0xf]
  %v1342 = vld [vmem:[%s1321 + $0x50] sm:$0xf]
  %v1343 = vld [vmem:[%s1321 + $0x54] sm:$0xf]
  %v1344 = vld [vmem:[%s1321 + $0x58] sm:$0xf]
  %v1345 = vld [vmem:[%s1321 + $0x5c] sm:$0xf]
  %v1346 = vld [vmem:[%s1321 + $0x60] sm:$0xf]
  %v1347 = vld [vmem:[%s1321 + $0x64] sm:$0xf]
  %v1348 = vld [vmem:[%s1321 + $0x68] sm:$0xf]
  %v1349 = vld [vmem:[%s1321 + $0x6c] sm:$0xf]
  %v1350 = vld [vmem:[%s1321 + $0x70] sm:$0xf]
  %v1351 = vld [vmem:[%s1321 + $0x74] sm:$0xf]
  %v1352 = vld [vmem:[%s1321 + $0x78] sm:$0xf]
  %v1353 = vld [vmem:[%s1321 + $0x7c] sm:$0xf]
  %v1354 = vld [vmem:[%s1321 + $0x80] sm:$0xf]
  %v1355 = vld [vmem:[%s1321 + $0x84] sm:$0xf]
  %v1356 = vld [vmem:[%s1321 + $0x88] sm:$0xf]
  %v1357 = vld [vmem:[%s1321 + $0x8c] sm:$0xf]
  %v1358 = vld [vmem:[%s1321 + $0x90] sm:$0xf]
  %v1359 = vld [vmem:[%s1321 + $0x94] sm:$0xf]
  %v1360 = vld [vmem:[%s1321 + $0x98] sm:$0xf]
  %v1361 = vld [vmem:[%s1321 + $0x9c] sm:$0xf]
  %v1362 = vld [vmem:[%s1321 + $0xa0] sm:$0xf]
  %v1363 = vld [vmem:[%s1321 + $0xa4] sm:$0xf]
  %v1364 = vld [vmem:[%s1321 + $0xa8] sm:$0xf]
  %v1365 = vld [vmem:[%s1321 + $0xac] sm:$0xf]
  %v1366 = vld [vmem:[%s1321 + $0xb0] sm:$0xf]
  %v1367 = vld [vmem:[%s1321 + $0xb4] sm:$0xf]
  %v1368 = vld [vmem:[%s1321 + $0xb8] sm:$0xf]
  %v1369 = vld [vmem:[%s1321 + $0xbc] sm:$0xf]
  %v1370 = vld [vmem:[%s1321 + $0xc0] sm:$0xf]
  %v1371 = vld [vmem:[%s1321 + $0xc4] sm:$0xf]
  %v1372 = vld [vmem:[%s1321 + $0xc8] sm:$0xf]
  %v1373 = vld [vmem:[%s1321 + $0xcc] sm:$0xf]
  %v1374 = vld [vmem:[%s1321 + $0xd0] sm:$0xf]
  %v1375 = vld [vmem:[%s1321 + $0xd4] sm:$0xf]
  %v1376 = vld [vmem:[%s1321 + $0xd8] sm:$0xf]
  %v1377 = vld [vmem:[%s1321 + $0xdc] sm:$0xf]
  %v1378 = vld [vmem:[%s1321 + $0xe0] sm:$0xf]
  %v1379 = vld [vmem:[%s1321 + $0xe4] sm:$0xf]
  %v1380 = vld [vmem:[%s1321 + $0xe8] sm:$0xf]
  %v1381 = vld [vmem:[%s1321 + $0xec] sm:$0xf]
  %v1382 = vld [vmem:[%s1321 + $0xf0] sm:$0xf]
  %v1383 = vld [vmem:[%s1321 + $0xf4] sm:$0xf]
  %v1384 = vld [vmem:[%s1321 + $0xf8] sm:$0xf]
  %v1385 = vld [vmem:[%s1321 + $0xfc] sm:$0xf]
  %v1450 = vunpack.c.l.b16 %v1322
  %v1451 = vunpack.c.l.b16 %v1323
  %v1452 = vunpack.c.l.b16 %v1324
  %v1453 = vunpack.c.l.b16 %v1325
  %v1454 = vunpack.c.l.b16 %v1326
  %v1455 = vunpack.c.l.b16 %v1327
  %v1456 = vunpack.c.l.b16 %v1328
  %v1457 = vunpack.c.l.b16 %v1329
  %v1458 = vunpack.c.l.b16 %v1330
  %v1459 = vunpack.c.l.b16 %v1331
  %v1460 = vunpack.c.l.b16 %v1332
  %v1461 = vunpack.c.l.b16 %v1333
  %v1462 = vunpack.c.l.b16 %v1334
  %v1463 = vunpack.c.l.b16 %v1335
  %v1464 = vunpack.c.l.b16 %v1336
  %v1465 = vunpack.c.l.b16 %v1337
  %v1466 = vunpack.c.l.b16 %v1338
  %v1467 = vunpack.c.l.b16 %v1339
  %v1468 = vunpack.c.l.b16 %v1340
  %v1469 = vunpack.c.l.b16 %v1341
  %v1470 = vunpack.c.l.b16 %v1342
  %v1471 = vunpack.c.l.b16 %v1343
  %v1472 = vunpack.c.l.b16 %v1344
  %v1473 = vunpack.c.l.b16 %v1345
  %v1474 = vunpack.c.l.b16 %v1346
  %v1475 = vunpack.c.l.b16 %v1347
  %v1476 = vunpack.c.l.b16 %v1348
  %v1477 = vunpack.c.l.b16 %v1349
  %v1478 = vunpack.c.l.b16 %v1350
  %v1479 = vunpack.c.l.b16 %v1351
  %v1480 = vunpack.c.l.b16 %v1352
  %v1481 = vunpack.c.l.b16 %v1353
  %v1482 = vunpack.c.l.b16 %v1354
  %v1483 = vunpack.c.l.b16 %v1355
  %v1484 = vunpack.c.l.b16 %v1356
  %v1485 = vunpack.c.l.b16 %v1357
  %v1486 = vunpack.c.l.b16 %v1358
  %v1487 = vunpack.c.l.b16 %v1359
  %v1488 = vunpack.c.l.b16 %v1360
  %v1489 = vunpack.c.l.b16 %v1361
  %v1490 = vunpack.c.l.b16 %v1362
  %v1491 = vunpack.c.l.b16 %v1363
  %v1492 = vunpack.c.l.b16 %v1364
  %v1493 = vunpack.c.l.b16 %v1365
  %v1494 = vunpack.c.l.b16 %v1366
  %v1495 = vunpack.c.l.b16 %v1367
  %v1496 = vunpack.c.l.b16 %v1368
  %v1497 = vunpack.c.l.b16 %v1369
  %v1498 = vunpack.c.l.b16 %v1370
  %v1499 = vunpack.c.l.b16 %v1371
  %v1500 = vunpack.c.l.b16 %v1372
  %v1501 = vunpack.c.l.b16 %v1373
  %v1502 = vunpack.c.l.b16 %v1374
  %v1503 = vunpack.c.l.b16 %v1375
  %v1504 = vunpack.c.l.b16 %v1376
  %v1505 = vunpack.c.l.b16 %v1377
  %v1506 = vunpack.c.l.b16 %v1378
  %v1507 = vunpack.c.l.b16 %v1379
  %v1508 = vunpack.c.l.b16 %v1380
  %v1509 = vunpack.c.l.b16 %v1381
  %v1510 = vunpack.c.l.b16 %v1382
  %v1511 = vunpack.c.l.b16 %v1383
  %v1512 = vunpack.c.l.b16 %v1384
  %v1513 = vunpack.c.l.b16 %v1385
  %v1514 = vpack.c.b16 %v1451, %v1450
  %v1515 = vpack.c.b16 %v1453, %v1452
  %v1516 = vpack.c.b16 %v1455, %v1454
  %v1517 = vpack.c.b16 %v1457, %v1456
  %v1518 = vpack.c.b16 %v1459, %v1458
  %v1519 = vpack.c.b16 %v1461, %v1460
  %v1520 = vpack.c.b16 %v1463, %v1462
  %v1521 = vpack.c.b16 %v1465, %v1464
  %v1522 = vpack.c.b16 %v1467, %v1466
  %v1523 = vpack.c.b16 %v1469, %v1468
  %v1524 = vpack.c.b16 %v1471, %v1470
  %v1525 = vpack.c.b16 %v1473, %v1472
  %v1526 = vpack.c.b16 %v1475, %v1474
  %v1527 = vpack.c.b16 %v1477, %v1476
  %v1528 = vpack.c.b16 %v1479, %v1478
  %v1529 = vpack.c.b16 %v1481, %v1480
  %v1530 = vpack.c.b16 %v1483, %v1482
  %v1531 = vpack.c.b16 %v1485, %v1484
  %v1532 = vpack.c.b16 %v1487, %v1486
  %v1533 = vpack.c.b16 %v1489, %v1488
  %v1534 = vpack.c.b16 %v1491, %v1490
  %v1535 = vpack.c.b16 %v1493, %v1492
  %v1536 = vpack.c.b16 %v1495, %v1494
  %v1537 = vpack.c.b16 %v1497, %v1496
  %v1538 = vpack.c.b16 %v1499, %v1498
  %v1539 = vpack.c.b16 %v1501, %v1500
  %v1540 = vpack.c.b16 %v1503, %v1502
  %v1541 = vpack.c.b16 %v1505, %v1504
  %v1542 = vpack.c.b16 %v1507, %v1506
  %v1543 = vpack.c.b16 %v1509, %v1508
  %v1544 = vpack.c.b16 %v1511, %v1510
  %v1545 = vpack.c.b16 %v1513, %v1512
  %v1547 = vsel %vm254, %v1514, 0
  %v1550 = vsel %vm254, %v1515, 0
  %v1553 = vsel %vm254, %v1516, 0
  %v1556 = vsel %vm254, %v1517, 0
  %v1559 = vsel %vm254, %v1518, 0
  %v1562 = vsel %vm254, %v1519, 0
  %v1565 = vsel %vm254, %v1520, 0
  %v1568 = vsel %vm254, %v1521, 0
  %v1571 = vsel %vm254, %v1522, 0
  %v1574 = vsel %vm254, %v1523, 0
  %v1577 = vsel %vm254, %v1524, 0
  %v1580 = vsel %vm254, %v1525, 0
  %v1583 = vsel %vm254, %v1526, 0
  %v1586 = vsel %vm254, %v1527, 0
  %v1589 = vsel %vm254, %v1528, 0
  %v1592 = vsel %vm254, %v1529, 0
  %v1595 = vsel %vm254, %v1530, 0
  %v1598 = vsel %vm254, %v1531, 0
  %v1601 = vsel %vm254, %v1532, 0
  %v1604 = vsel %vm254, %v1533, 0
  %v1607 = vsel %vm254, %v1534, 0
  %v1610 = vsel %vm254, %v1535, 0
  %v1613 = vsel %vm254, %v1536, 0
  %v1616 = vsel %vm254, %v1537, 0
  %v1619 = vsel %vm254, %v1538, 0
  %v1622 = vsel %vm254, %v1539, 0
  %v1625 = vsel %vm254, %v1540, 0
  %v1628 = vsel %vm254, %v1541, 0
  %v1631 = vsel %vm254, %v1542, 0
  %v1634 = vsel %vm254, %v1543, 0
  %v1637 = vsel %vm254, %v1544, 0
  %v1640 = vsel %vm254, %v1545, 0
  %1642 = vmatprep.subr.bf16.mxu0 0
  %1643 = vmatpush1.bf16.msra.mxu0 0
  %1644 = vmatprep.subr.bf16.mxu0 0
  %1645 = vmatpush1.bf16.msra.mxu0 0
  %1646 = vmatprep.subr.bf16.mxu0 0
  %1647 = vmatpush1.bf16.msra.mxu0 0
  %1648 = vmatprep.subr.bf16.mxu0 0
  %1649 = vmatpush1.bf16.msra.mxu0 0
  %1650 = vmatprep.subr.bf16.mxu0 0
  %1651 = vmatpush1.bf16.msra.mxu0 0
  %1652 = vmatprep.subr.bf16.mxu0 0
  %1653 = vmatpush1.bf16.msra.mxu0 0
  %1654 = vmatprep.subr.bf16.mxu0 0
  %1655 = vmatpush1.bf16.msra.mxu0 %v356
  %1656 = vmatprep.subr.bf16.mxu0 0
  %1657 = vmatpush1.bf16.msra.mxu0 %v251
  %1658 = vmatprep.subr.bf16.mxu0 0
  %1659 = vmatpush2.bf16.msra.mxu0 0
  %1660 = vmatprep.subr.bf16.mxu0 0
  %1661 = vmatpush2.bf16.msra.mxu0 0
  %1662 = vmatprep.subr.bf16.mxu0 0
  %1663 = vmatpush2.bf16.msra.mxu0 0
  %1664 = vmatprep.subr.bf16.mxu0 0
  %1665 = vmatpush2.bf16.msra.mxu0 0
  %1666 = vmatprep.subr.bf16.mxu0 0
  %1667 = vmatpush2.bf16.msra.mxu0 0
  %1668 = vmatprep.subr.bf16.mxu0 0
  %1669 = vmatpush2.bf16.msra.mxu0 0
  %1670 = vmatprep.subr.bf16.mxu0 0
  %1671 = vmatpush2.bf16.msra.mxu0 0
  %1672 = vmatprep.subr.bf16.mxu0 0
  %1673 = vmatpush2.bf16.msra.mxu0 0
  %1674 = vmatprep.mubr.bf16.mxu0 0
  %1675 = vmatmul.mubr.bf16.gmra.mxu0 %v1547
  %v1676 = vpop.f32.mrf.mxu0
  %v1677 = vadd.f32 0.0, %v1676
  %v1678 = vpop.f32.mrf.mxu0
  %v1679 = vpop.f32.mrf.mxu0
  %v1680 = vadd.f32 0.0, %v1679
  %v1681 = vpop.f32.mrf.mxu0
  %1682 = vmatprep.mubr.bf16.mxu0 0
  %1683 = vmatmul.mubr.bf16.gmra.mxu0 %v1550
  %v1684 = vpop.f32.mrf.mxu0
  %v1685 = vadd.f32 0.0, %v1684
  %v1686 = vpop.f32.mrf.mxu0
  %v1687 = vpop.f32.mrf.mxu0
  %v1688 = vadd.f32 0.0, %v1687
  %v1689 = vpop.f32.mrf.mxu0
  %1690 = vmatprep.mubr.bf16.mxu0 0
  %1691 = vmatmul.mubr.bf16.gmra.mxu0 %v1553
  %v1692 = vpop.f32.mrf.mxu0
  %v1693 = vadd.f32 0.0, %v1692
  %v1694 = vpop.f32.mrf.mxu0
  %v1695 = vpop.f32.mrf.mxu0
  %v1696 = vadd.f32 0.0, %v1695
  %v1697 = vpop.f32.mrf.mxu0
  %1698 = vmatprep.mubr.bf16.mxu0 0
  %1699 = vmatmul.mubr.bf16.gmra.mxu0 %v1556
  %v1700 = vpop.f32.mrf.mxu0
  %v1701 = vadd.f32 0.0, %v1700
  %v1702 = vpop.f32.mrf.mxu0
  %v1703 = vpop.f32.mrf.mxu0
  %v1704 = vadd.f32 0.0, %v1703
  %v1705 = vpop.f32.mrf.mxu0
  %1706 = vmatprep.mubr.bf16.mxu0 0
  %1707 = vmatmul.mubr.bf16.gmra.mxu0 %v1559
  %v1708 = vpop.f32.mrf.mxu0
  %v1709 = vadd.f32 0.0, %v1708
  %v1710 = vpop.f32.mrf.mxu0
  %v1711 = vpop.f32.mrf.mxu0
  %v1712 = vadd.f32 0.0, %v1711
  %v1713 = vpop.f32.mrf.mxu0
  %1714 = vmatprep.mubr.bf16.mxu0 0
  %1715 = vmatmul.mubr.bf16.gmra.mxu0 %v1562
  %v1716 = vpop.f32.mrf.mxu0
  %v1717 = vadd.f32 0.0, %v1716
  %v1718 = vpop.f32.mrf.mxu0
  %v1719 = vpop.f32.mrf.mxu0
  %v1720 = vadd.f32 0.0, %v1719
  %v1721 = vpop.f32.mrf.mxu0
  %1722 = vmatprep.mubr.bf16.mxu0 0
  %1723 = vmatmul.mubr.bf16.gmra.mxu0 %v1565
  %v1724 = vpop.f32.mrf.mxu0
  %v1725 = vadd.f32 0.0, %v1724
  %v1726 = vpop.f32.mrf.mxu0
  %v1727 = vpop.f32.mrf.mxu0
  %v1728 = vadd.f32 0.0, %v1727
  %v1729 = vpop.f32.mrf.mxu0
  %1730 = vmatprep.mubr.bf16.mxu0 0
  %1731 = vmatmul.mubr.bf16.gmra.mxu0 %v1568
  %v1732 = vpop.f32.mrf.mxu0
  %v1733 = vadd.f32 0.0, %v1732
  %v1734 = vpop.f32.mrf.mxu0
  %v1735 = vpop.f32.mrf.mxu0
  %v1736 = vadd.f32 0.0, %v1735
  %v1737 = vpop.f32.mrf.mxu0
  %1738 = vmatprep.mubr.bf16.mxu0 0
  %1739 = vmatmul.mubr.bf16.gmra.mxu0 %v1571
  %v1740 = vpop.f32.mrf.mxu0
  %v1741 = vadd.f32 0.0, %v1740
  %v1742 = vpop.f32.mrf.mxu0
  %v1743 = vpop.f32.mrf.mxu0
  %v1744 = vadd.f32 0.0, %v1743
  %v1745 = vpop.f32.mrf.mxu0
  %1746 = vmatprep.mubr.bf16.mxu0 0
  %1747 = vmatmul.mubr.bf16.gmra.mxu0 %v1574
  %v1748 = vpop.f32.mrf.mxu0
  %v1749 = vadd.f32 0.0, %v1748
  %v1750 = vpop.f32.mrf.mxu0
  %v1751 = vpop.f32.mrf.mxu0
  %v1752 = vadd.f32 0.0, %v1751
  %v1753 = vpop.f32.mrf.mxu0
  %1754 = vmatprep.mubr.bf16.mxu0 0
  %1755 = vmatmul.mubr.bf16.gmra.mxu0 %v1577
  %v1756 = vpop.f32.mrf.mxu0
  %v1757 = vadd.f32 0.0, %v1756
  %v1758 = vpop.f32.mrf.mxu0
  %v1759 = vpop.f32.mrf.mxu0
  %v1760 = vadd.f32 0.0, %v1759
  %v1761 = vpop.f32.mrf.mxu0
  %1762 = vmatprep.mubr.bf16.mxu0 0
  %1763 = vmatmul.mubr.bf16.gmra.mxu0 %v1580
  %v1764 = vpop.f32.mrf.mxu0
  %v1765 = vadd.f32 0.0, %v1764
  %v1766 = vpop.f32.mrf.mxu0
  %v1767 = vpop.f32.mrf.mxu0
  %v1768 = vadd.f32 0.0, %v1767
  %v1769 = vpop.f32.mrf.mxu0
  %1770 = vmatprep.mubr.bf16.mxu0 0
  %1771 = vmatmul.mubr.bf16.gmra.mxu0 %v1583
  %v1772 = vpop.f32.mrf.mxu0
  %v1773 = vadd.f32 0.0, %v1772
  %v1774 = vpop.f32.mrf.mxu0
  %v1775 = vpop.f32.mrf.mxu0
  %v1776 = vadd.f32 0.0, %v1775
  %v1777 = vpop.f32.mrf.mxu0
  %1778 = vmatprep.mubr.bf16.mxu0 0
  %1779 = vmatmul.mubr.bf16.gmra.mxu0 %v1586
  %v1780 = vpop.f32.mrf.mxu0
  %v1781 = vadd.f32 0.0, %v1780
  %v1782 = vpop.f32.mrf.mxu0
  %v1783 = vpop.f32.mrf.mxu0
  %v1784 = vadd.f32 0.0, %v1783
  %v1785 = vpop.f32.mrf.mxu0
  %1786 = vmatprep.mubr.bf16.mxu0 0
  %1787 = vmatmul.mubr.bf16.gmra.mxu0 %v1589
  %v1788 = vpop.f32.mrf.mxu0
  %v1789 = vadd.f32 0.0, %v1788
  %v1790 = vpop.f32.mrf.mxu0
  %v1791 = vpop.f32.mrf.mxu0
  %v1792 = vadd.f32 0.0, %v1791
  %v1793 = vpop.f32.mrf.mxu0
  %1794 = vmatprep.mubr.bf16.mxu0 0
  %1795 = vmatmul.mubr.bf16.gmra.mxu0 %v1592
  %v1796 = vpop.f32.mrf.mxu0
  %v1797 = vadd.f32 0.0, %v1796
  %v1798 = vpop.f32.mrf.mxu0
  %v1799 = vpop.f32.mrf.mxu0
  %v1800 = vadd.f32 0.0, %v1799
  %v1801 = vpop.f32.mrf.mxu0
  %1802 = vmatprep.mubr.bf16.mxu0 0
  %1803 = vmatmul.mubr.bf16.gmra.mxu0 %v1595
  %v1804 = vpop.f32.mrf.mxu0
  %v1805 = vadd.f32 0.0, %v1804
  %v1806 = vpop.f32.mrf.mxu0
  %v1807 = vpop.f32.mrf.mxu0
  %v1808 = vadd.f32 0.0, %v1807
  %v1809 = vpop.f32.mrf.mxu0
  %1810 = vmatprep.mubr.bf16.mxu0 0
  %1811 = vmatmul.mubr.bf16.gmra.mxu0 %v1598
  %v1812 = vpop.f32.mrf.mxu0
  %v1813 = vadd.f32 0.0, %v1812
  %v1814 = vpop.f32.mrf.mxu0
  %v1815 = vpop.f32.mrf.mxu0
  %v1816 = vadd.f32 0.0, %v1815
  %v1817 = vpop.f32.mrf.mxu0
  %1818 = vmatprep.mubr.bf16.mxu0 0
  %1819 = vmatmul.mubr.bf16.gmra.mxu0 %v1601
  %v1820 = vpop.f32.mrf.mxu0
  %v1821 = vadd.f32 0.0, %v1820
  %v1822 = vpop.f32.mrf.mxu0
  %v1823 = vpop.f32.mrf.mxu0
  %v1824 = vadd.f32 0.0, %v1823
  %v1825 = vpop.f32.mrf.mxu0
  %1826 = vmatprep.mubr.bf16.mxu0 0
  %1827 = vmatmul.mubr.bf16.gmra.mxu0 %v1604
  %v1828 = vpop.f32.mrf.mxu0
  %v1829 = vadd.f32 0.0, %v1828
  %v1830 = vpop.f32.mrf.mxu0
  %v1831 = vpop.f32.mrf.mxu0
  %v1832 = vadd.f32 0.0, %v1831
  %v1833 = vpop.f32.mrf.mxu0
  %1834 = vmatprep.mubr.bf16.mxu0 0
  %1835 = vmatmul.mubr.bf16.gmra.mxu0 %v1607
  %v1836 = vpop.f32.mrf.mxu0
  %v1837 = vadd.f32 0.0, %v1836
  %v1838 = vpop.f32.mrf.mxu0
  %v1839 = vpop.f32.mrf.mxu0
  %v1840 = vadd.f32 0.0, %v1839
  %v1841 = vpop.f32.mrf.mxu0
  %1842 = vmatprep.mubr.bf16.mxu0 0
  %1843 = vmatmul.mubr.bf16.gmra.mxu0 %v1610
  %v1844 = vpop.f32.mrf.mxu0
  %v1845 = vadd.f32 0.0, %v1844
  %v1846 = vpop.f32.mrf.mxu0
  %v1847 = vpop.f32.mrf.mxu0
  %v1848 = vadd.f32 0.0, %v1847
  %v1849 = vpop.f32.mrf.mxu0
  %1850 = vmatprep.mubr.bf16.mxu0 0
  %1851 = vmatmul.mubr.bf16.gmra.mxu0 %v1613
  %v1852 = vpop.f32.mrf.mxu0
  %v1853 = vadd.f32 0.0, %v1852
  %v1854 = vpop.f32.mrf.mxu0
  %v1855 = vpop.f32.mrf.mxu0
  %v1856 = vadd.f32 0.0, %v1855
  %v1857 = vpop.f32.mrf.mxu0
  %1858 = vmatprep.mubr.bf16.mxu0 0
  %1859 = vmatmul.mubr.bf16.gmra.mxu0 %v1616
  %v1860 = vpop.f32.mrf.mxu0
  %v1861 = vadd.f32 0.0, %v1860
  %v1862 = vpop.f32.mrf.mxu0
  %v1863 = vpop.f32.mrf.mxu0
  %v1864 = vadd.f32 0.0, %v1863
  %v1865 = vpop.f32.mrf.mxu0
  %1866 = vmatprep.mubr.bf16.mxu0 0
  %1867 = vmatmul.mubr.bf16.gmra.mxu0 %v1619
  %v1868 = vpop.f32.mrf.mxu0
  %v1869 = vadd.f32 0.0, %v1868
  %v1870 = vpop.f32.mrf.mxu0
  %v1871 = vpop.f32.mrf.mxu0
  %v1872 = vadd.f32 0.0, %v1871
  %v1873 = vpop.f32.mrf.mxu0
  %1874 = vmatprep.mubr.bf16.mxu0 0
  %1875 = vmatmul.mubr.bf16.gmra.mxu0 %v1622
  %v1876 = vpop.f32.mrf.mxu0
  %v1877 = vadd.f32 0.0, %v1876
  %v1878 = vpop.f32.mrf.mxu0
  %v1879 = vpop.f32.mrf.mxu0
  %v1880 = vadd.f32 0.0, %v1879
  %v1881 = vpop.f32.mrf.mxu0
  %1882 = vmatprep.mubr.bf16.mxu0 0
  %1883 = vmatmul.mubr.bf16.gmra.mxu0 %v1625
  %v1884 = vpop.f32.mrf.mxu0
  %v1885 = vadd.f32 0.0, %v1884
  %v1886 = vpop.f32.mrf.mxu0
  %v1887 = vpop.f32.mrf.mxu0
  %v1888 = vadd.f32 0.0, %v1887
  %v1889 = vpop.f32.mrf.mxu0
  %1890 = vmatprep.mubr.bf16.mxu0 0
  %1891 = vmatmul.mubr.bf16.gmra.mxu0 %v1628
  %v1892 = vpop.f32.mrf.mxu0
  %v1893 = vadd.f32 0.0, %v1892
  %v1894 = vpop.f32.mrf.mxu0
  %v1895 = vpop.f32.mrf.mxu0
  %v1896 = vadd.f32 0.0, %v1895
  %v1897 = vpop.f32.mrf.mxu0
  %1898 = vmatprep.mubr.bf16.mxu0 0
  %1899 = vmatmul.mubr.bf16.gmra.mxu0 %v1631
  %v1900 = vpop.f32.mrf.mxu0
  %v1901 = vadd.f32 0.0, %v1900
  %v1902 = vpop.f32.mrf.mxu0
  %v1903 = vpop.f32.mrf.mxu0
  %v1904 = vadd.f32 0.0, %v1903
  %v1905 = vpop.f32.mrf.mxu0
  %1906 = vmatprep.mubr.bf16.mxu0 0
  %1907 = vmatmul.mubr.bf16.gmra.mxu0 %v1634
  %v1908 = vpop.f32.mrf.mxu0
  %v1909 = vadd.f32 0.0, %v1908
  %v1910 = vpop.f32.mrf.mxu0
  %v1911 = vpop.f32.mrf.mxu0
  %v1912 = vadd.f32 0.0, %v1911
  %v1913 = vpop.f32.mrf.mxu0
  %1914 = vmatprep.mubr.bf16.mxu0 0
  %1915 = vmatmul.mubr.bf16.gmra.mxu0 %v1637
  %v1916 = vpop.f32.mrf.mxu0
  %v1917 = vadd.f32 0.0, %v1916
  %v1918 = vpop.f32.mrf.mxu0
  %v1919 = vpop.f32.mrf.mxu0
  %v1920 = vadd.f32 0.0, %v1919
  %v1921 = vpop.f32.mrf.mxu0
  %1922 = vmatprep.mubr.bf16.mxu0 0
  %1923 = vmatmul.mubr.bf16.gmra.mxu0 %v1640
  %v1924 = vpop.f32.mrf.mxu0
  %v1925 = vadd.f32 0.0, %v1924
  %v1926 = vpop.f32.mrf.mxu0
  %v1927 = vpop.f32.mrf.mxu0
  %v1928 = vadd.f32 0.0, %v1927
  %v1929 = vpop.f32.mrf.mxu0
  %1930 = vdwg.mxu0
  %s1931 = scalar_lea.vmem %s0, 768
  %v1932 = vld [vmem:[%s1931] sm:$0xf]
  %v1933 = vld [vmem:[%s1931 + $0x4] sm:$0xf]
  %v1934 = vld [vmem:[%s1931 + $0x8] sm:$0xf]
  %v1935 = vld [vmem:[%s1931 + $0xc] sm:$0xf]
  %v1936 = vld [vmem:[%s1931 + $0x10] sm:$0xf]
  %v1937 = vld [vmem:[%s1931 + $0x14] sm:$0xf]
  %v1938 = vld [vmem:[%s1931 + $0x18] sm:$0xf]
  %v1939 = vld [vmem:[%s1931 + $0x1c] sm:$0xf]
  %v1940 = vld [vmem:[%s1931 + $0x20] sm:$0xf]
  %v1941 = vld [vmem:[%s1931 + $0x24] sm:$0xf]
  %v1942 = vld [vmem:[%s1931 + $0x28] sm:$0xf]
  %v1943 = vld [vmem:[%s1931 + $0x2c] sm:$0xf]
  %v1944 = vld [vmem:[%s1931 + $0x30] sm:$0xf]
  %v1945 = vld [vmem:[%s1931 + $0x34] sm:$0xf]
  %v1946 = vld [vmem:[%s1931 + $0x38] sm:$0xf]
  %v1947 = vld [vmem:[%s1931 + $0x3c] sm:$0xf]
  %v1948 = vld [vmem:[%s1931 + $0x40] sm:$0xf]
  %v1949 = vld [vmem:[%s1931 + $0x44] sm:$0xf]
  %v1950 = vld [vmem:[%s1931 + $0x48] sm:$0xf]
  %v1951 = vld [vmem:[%s1931 + $0x4c] sm:$0xf]
  %v1952 = vld [vmem:[%s1931 + $0x50] sm:$0xf]
  %v1953 = vld [vmem:[%s1931 + $0x54] sm:$0xf]
  %v1954 = vld [vmem:[%s1931 + $0x58] sm:$0xf]
  %v1955 = vld [vmem:[%s1931 + $0x5c] sm:$0xf]
  %v1956 = vld [vmem:[%s1931 + $0x60] sm:$0xf]
  %v1957 = vld [vmem:[%s1931 + $0x64] sm:$0xf]
  %v1958 = vld [vmem:[%s1931 + $0x68] sm:$0xf]
  %v1959 = vld [vmem:[%s1931 + $0x6c] sm:$0xf]
  %v1960 = vld [vmem:[%s1931 + $0x70] sm:$0xf]
  %v1961 = vld [vmem:[%s1931 + $0x74] sm:$0xf]
  %v1962 = vld [vmem:[%s1931 + $0x78] sm:$0xf]
  %v1963 = vld [vmem:[%s1931 + $0x7c] sm:$0xf]
  %v1964 = vld [vmem:[%s1931 + $0x80] sm:$0xf]
  %v1965 = vld [vmem:[%s1931 + $0x84] sm:$0xf]
  %v1966 = vld [vmem:[%s1931 + $0x88] sm:$0xf]
  %v1967 = vld [vmem:[%s1931 + $0x8c] sm:$0xf]
  %v1968 = vld [vmem:[%s1931 + $0x90] sm:$0xf]
  %v1969 = vld [vmem:[%s1931 + $0x94] sm:$0xf]
  %v1970 = vld [vmem:[%s1931 + $0x98] sm:$0xf]
  %v1971 = vld [vmem:[%s1931 + $0x9c] sm:$0xf]
  %v1972 = vld [vmem:[%s1931 + $0xa0] sm:$0xf]
  %v1973 = vld [vmem:[%s1931 + $0xa4] sm:$0xf]
  %v1974 = vld [vmem:[%s1931 + $0xa8] sm:$0xf]
  %v1975 = vld [vmem:[%s1931 + $0xac] sm:$0xf]
  %v1976 = vld [vmem:[%s1931 + $0xb0] sm:$0xf]
  %v1977 = vld [vmem:[%s1931 + $0xb4] sm:$0xf]
  %v1978 = vld [vmem:[%s1931 + $0xb8] sm:$0xf]
  %v1979 = vld [vmem:[%s1931 + $0xbc] sm:$0xf]
  %v1980 = vld [vmem:[%s1931 + $0xc0] sm:$0xf]
  %v1981 = vld [vmem:[%s1931 + $0xc4] sm:$0xf]
  %v1982 = vld [vmem:[%s1931 + $0xc8] sm:$0xf]
  %v1983 = vld [vmem:[%s1931 + $0xcc] sm:$0xf]
  %v1984 = vld [vmem:[%s1931 + $0xd0] sm:$0xf]
  %v1985 = vld [vmem:[%s1931 + $0xd4] sm:$0xf]
  %v1986 = vld [vmem:[%s1931 + $0xd8] sm:$0xf]
  %v1987 = vld [vmem:[%s1931 + $0xdc] sm:$0xf]
  %v1988 = vld [vmem:[%s1931 + $0xe0] sm:$0xf]
  %v1989 = vld [vmem:[%s1931 + $0xe4] sm:$0xf]
  %v1990 = vld [vmem:[%s1931 + $0xe8] sm:$0xf]
  %v1991 = vld [vmem:[%s1931 + $0xec] sm:$0xf]
  %v1992 = vld [vmem:[%s1931 + $0xf0] sm:$0xf]
  %v1993 = vld [vmem:[%s1931 + $0xf4] sm:$0xf]
  %v1994 = vld [vmem:[%s1931 + $0xf8] sm:$0xf]
  %v1995 = vld [vmem:[%s1931 + $0xfc] sm:$0xf]
  %v2060 = vunpack.c.l.b16 %v1932
  %v2061 = vunpack.c.l.b16 %v1933
  %v2062 = vunpack.c.l.b16 %v1934
  %v2063 = vunpack.c.l.b16 %v1935
  %v2064 = vunpack.c.l.b16 %v1936
  %v2065 = vunpack.c.l.b16 %v1937
  %v2066 = vunpack.c.l.b16 %v1938
  %v2067 = vunpack.c.l.b16 %v1939
  %v2068 = vunpack.c.l.b16 %v1940
  %v2069 = vunpack.c.l.b16 %v1941
  %v2070 = vunpack.c.l.b16 %v1942
  %v2071 = vunpack.c.l.b16 %v1943
  %v2072 = vunpack.c.l.b16 %v1944
  %v2073 = vunpack.c.l.b16 %v1945
  %v2074 = vunpack.c.l.b16 %v1946
  %v2075 = vunpack.c.l.b16 %v1947
  %v2076 = vunpack.c.l.b16 %v1948
  %v2077 = vunpack.c.l.b16 %v1949
  %v2078 = vunpack.c.l.b16 %v1950
  %v2079 = vunpack.c.l.b16 %v1951
  %v2080 = vunpack.c.l.b16 %v1952
  %v2081 = vunpack.c.l.b16 %v1953
  %v2082 = vunpack.c.l.b16 %v1954
  %v2083 = vunpack.c.l.b16 %v1955
  %v2084 = vunpack.c.l.b16 %v1956
  %v2085 = vunpack.c.l.b16 %v1957
  %v2086 = vunpack.c.l.b16 %v1958
  %v2087 = vunpack.c.l.b16 %v1959
  %v2088 = vunpack.c.l.b16 %v1960
  %v2089 = vunpack.c.l.b16 %v1961
  %v2090 = vunpack.c.l.b16 %v1962
  %v2091 = vunpack.c.l.b16 %v1963
  %v2092 = vunpack.c.l.b16 %v1964
  %v2093 = vunpack.c.l.b16 %v1965
  %v2094 = vunpack.c.l.b16 %v1966
  %v2095 = vunpack.c.l.b16 %v1967
  %v2096 = vunpack.c.l.b16 %v1968
  %v2097 = vunpack.c.l.b16 %v1969
  %v2098 = vunpack.c.l.b16 %v1970
  %v2099 = vunpack.c.l.b16 %v1971
  %v2100 = vunpack.c.l.b16 %v1972
  %v2101 = vunpack.c.l.b16 %v1973
  %v2102 = vunpack.c.l.b16 %v1974
  %v2103 = vunpack.c.l.b16 %v1975
  %v2104 = vunpack.c.l.b16 %v1976
  %v2105 = vunpack.c.l.b16 %v1977
  %v2106 = vunpack.c.l.b16 %v1978
  %v2107 = vunpack.c.l.b16 %v1979
  %v2108 = vunpack.c.l.b16 %v1980
  %v2109 = vunpack.c.l.b16 %v1981
  %v2110 = vunpack.c.l.b16 %v1982
  %v2111 = vunpack.c.l.b16 %v1983
  %v2112 = vunpack.c.l.b16 %v1984
  %v2113 = vunpack.c.l.b16 %v1985
  %v2114 = vunpack.c.l.b16 %v1986
  %v2115 = vunpack.c.l.b16 %v1987
  %v2116 = vunpack.c.l.b16 %v1988
  %v2117 = vunpack.c.l.b16 %v1989
  %v2118 = vunpack.c.l.b16 %v1990
  %v2119 = vunpack.c.l.b16 %v1991
  %v2120 = vunpack.c.l.b16 %v1992
  %v2121 = vunpack.c.l.b16 %v1993
  %v2122 = vunpack.c.l.b16 %v1994
  %v2123 = vunpack.c.l.b16 %v1995
  %v2124 = vpack.c.b16 %v2061, %v2060
  %v2125 = vpack.c.b16 %v2063, %v2062
  %v2126 = vpack.c.b16 %v2065, %v2064
  %v2127 = vpack.c.b16 %v2067, %v2066
  %v2128 = vpack.c.b16 %v2069, %v2068
  %v2129 = vpack.c.b16 %v2071, %v2070
  %v2130 = vpack.c.b16 %v2073, %v2072
  %v2131 = vpack.c.b16 %v2075, %v2074
  %v2132 = vpack.c.b16 %v2077, %v2076
  %v2133 = vpack.c.b16 %v2079, %v2078
  %v2134 = vpack.c.b16 %v2081, %v2080
  %v2135 = vpack.c.b16 %v2083, %v2082
  %v2136 = vpack.c.b16 %v2085, %v2084
  %v2137 = vpack.c.b16 %v2087, %v2086
  %v2138 = vpack.c.b16 %v2089, %v2088
  %v2139 = vpack.c.b16 %v2091, %v2090
  %v2140 = vpack.c.b16 %v2093, %v2092
  %v2141 = vpack.c.b16 %v2095, %v2094
  %v2142 = vpack.c.b16 %v2097, %v2096
  %v2143 = vpack.c.b16 %v2099, %v2098
  %v2144 = vpack.c.b16 %v2101, %v2100
  %v2145 = vpack.c.b16 %v2103, %v2102
  %v2146 = vpack.c.b16 %v2105, %v2104
  %v2147 = vpack.c.b16 %v2107, %v2106
  %v2148 = vpack.c.b16 %v2109, %v2108
  %v2149 = vpack.c.b16 %v2111, %v2110
  %v2150 = vpack.c.b16 %v2113, %v2112
  %v2151 = vpack.c.b16 %v2115, %v2114
  %v2152 = vpack.c.b16 %v2117, %v2116
  %v2153 = vpack.c.b16 %v2119, %v2118
  %v2154 = vpack.c.b16 %v2121, %v2120
  %v2155 = vpack.c.b16 %v2123, %v2122
  %v2157 = vsel %vm254, %v2124, 0
  %v2160 = vsel %vm254, %v2125, 0
  %v2163 = vsel %vm254, %v2126, 0
  %v2166 = vsel %vm254, %v2127, 0
  %v2169 = vsel %vm254, %v2128, 0
  %v2172 = vsel %vm254, %v2129, 0
  %v2175 = vsel %vm254, %v2130, 0
  %v2178 = vsel %vm254, %v2131, 0
  %v2181 = vsel %vm254, %v2132, 0
  %v2184 = vsel %vm254, %v2133, 0
  %v2187 = vsel %vm254, %v2134, 0
  %v2190 = vsel %vm254, %v2135, 0
  %v2193 = vsel %vm254, %v2136, 0
  %v2196 = vsel %vm254, %v2137, 0
  %v2199 = vsel %vm254, %v2138, 0
  %v2202 = vsel %vm254, %v2139, 0
  %v2205 = vsel %vm254, %v2140, 0
  %v2208 = vsel %vm254, %v2141, 0
  %v2211 = vsel %vm254, %v2142, 0
  %v2214 = vsel %vm254, %v2143, 0
  %v2217 = vsel %vm254, %v2144, 0
  %v2220 = vsel %vm254, %v2145, 0
  %v2223 = vsel %vm254, %v2146, 0
  %v2226 = vsel %vm254, %v2147, 0
  %v2229 = vsel %vm254, %v2148, 0
  %v2232 = vsel %vm254, %v2149, 0
  %v2235 = vsel %vm254, %v2150, 0
  %v2238 = vsel %vm254, %v2151, 0
  %v2241 = vsel %vm254, %v2152, 0
  %v2244 = vsel %vm254, %v2153, 0
  %v2247 = vsel %vm254, %v2154, 0
  %v2250 = vsel %vm254, %v2155, 0
  %2252 = vmatprep.subr.bf16.mxu0 0
  %2253 = vmatpush1.bf16.msra.mxu0 0
  %2254 = vmatprep.subr.bf16.mxu0 0
  %2255 = vmatpush1.bf16.msra.mxu0 0
  %2256 = vmatprep.subr.bf16.mxu0 0
  %2257 = vmatpush1.bf16.msra.mxu0 0
  %2258 = vmatprep.subr.bf16.mxu0 0
  %2259 = vmatpush1.bf16.msra.mxu0 0
  %2260 = vmatprep.subr.bf16.mxu0 0
  %2261 = vmatpush1.bf16.msra.mxu0 0
  %2262 = vmatprep.subr.bf16.mxu0 0
  %2263 = vmatpush1.bf16.msra.mxu0 0
  %2264 = vmatprep.subr.bf16.mxu0 0
  %2265 = vmatpush1.bf16.msra.mxu0 %v356
  %2266 = vmatprep.subr.bf16.mxu0 0
  %2267 = vmatpush1.bf16.msra.mxu0 %v251
  %2268 = vmatprep.subr.bf16.mxu0 0
  %2269 = vmatpush2.bf16.msra.mxu0 0
  %2270 = vmatprep.subr.bf16.mxu0 0
  %2271 = vmatpush2.bf16.msra.mxu0 0
  %2272 = vmatprep.subr.bf16.mxu0 0
  %2273 = vmatpush2.bf16.msra.mxu0 0
  %2274 = vmatprep.subr.bf16.mxu0 0
  %2275 = vmatpush2.bf16.msra.mxu0 0
  %2276 = vmatprep.subr.bf16.mxu0 0
  %2277 = vmatpush2.bf16.msra.mxu0 0
  %2278 = vmatprep.subr.bf16.mxu0 0
  %2279 = vmatpush2.bf16.msra.mxu0 0
  %2280 = vmatprep.subr.bf16.mxu0 0
  %2281 = vmatpush2.bf16.msra.mxu0 0
  %2282 = vmatprep.subr.bf16.mxu0 0
  %2283 = vmatpush2.bf16.msra.mxu0 0
  %2284 = vmatprep.mubr.bf16.mxu0 0
  %2285 = vmatmul.mubr.bf16.gmra.mxu0 %v2157
  %v2286 = vpop.f32.mrf.mxu0
  %v2287 = vadd.f32 0.0, %v2286
  %v2288 = vpop.f32.mrf.mxu0
  %v2289 = vpop.f32.mrf.mxu0
  %v2290 = vadd.f32 0.0, %v2289
  %v2291 = vpop.f32.mrf.mxu0
  %2292 = vmatprep.mubr.bf16.mxu0 0
  %2293 = vmatmul.mubr.bf16.gmra.mxu0 %v2160
  %v2294 = vpop.f32.mrf.mxu0
  %v2295 = vadd.f32 0.0, %v2294
  %v2296 = vpop.f32.mrf.mxu0
  %v2297 = vpop.f32.mrf.mxu0
  %v2298 = vadd.f32 0.0, %v2297
  %v2299 = vpop.f32.mrf.mxu0
  %2300 = vmatprep.mubr.bf16.mxu0 0
  %2301 = vmatmul.mubr.bf16.gmra.mxu0 %v2163
  %v2302 = vpop.f32.mrf.mxu0
  %v2303 = vadd.f32 0.0, %v2302
  %v2304 = vpop.f32.mrf.mxu0
  %v2305 = vpop.f32.mrf.mxu0
  %v2306 = vadd.f32 0.0, %v2305
  %v2307 = vpop.f32.mrf.mxu0
  %2308 = vmatprep.mubr.bf16.mxu0 0
  %2309 = vmatmul.mubr.bf16.gmra.mxu0 %v2166
  %v2310 = vpop.f32.mrf.mxu0
  %v2311 = vadd.f32 0.0, %v2310
  %v2312 = vpop.f32.mrf.mxu0
  %v2313 = vpop.f32.mrf.mxu0
  %v2314 = vadd.f32 0.0, %v2313
  %v2315 = vpop.f32.mrf.mxu0
  %2316 = vmatprep.mubr.bf16.mxu0 0
  %2317 = vmatmul.mubr.bf16.gmra.mxu0 %v2169
  %v2318 = vpop.f32.mrf.mxu0
  %v2319 = vadd.f32 0.0, %v2318
  %v2320 = vpop.f32.mrf.mxu0
  %v2321 = vpop.f32.mrf.mxu0
  %v2322 = vadd.f32 0.0, %v2321
  %v2323 = vpop.f32.mrf.mxu0
  %2324 = vmatprep.mubr.bf16.mxu0 0
  %2325 = vmatmul.mubr.bf16.gmra.mxu0 %v2172
  %v2326 = vpop.f32.mrf.mxu0
  %v2327 = vadd.f32 0.0, %v2326
  %v2328 = vpop.f32.mrf.mxu0
  %v2329 = vpop.f32.mrf.mxu0
  %v2330 = vadd.f32 0.0, %v2329
  %v2331 = vpop.f32.mrf.mxu0
  %2332 = vmatprep.mubr.bf16.mxu0 0
  %2333 = vmatmul.mubr.bf16.gmra.mxu0 %v2175
  %v2334 = vpop.f32.mrf.mxu0
  %v2335 = vadd.f32 0.0, %v2334
  %v2336 = vpop.f32.mrf.mxu0
  %v2337 = vpop.f32.mrf.mxu0
  %v2338 = vadd.f32 0.0, %v2337
  %v2339 = vpop.f32.mrf.mxu0
  %2340 = vmatprep.mubr.bf16.mxu0 0
  %2341 = vmatmul.mubr.bf16.gmra.mxu0 %v2178
  %v2342 = vpop.f32.mrf.mxu0
  %v2343 = vadd.f32 0.0, %v2342
  %v2344 = vpop.f32.mrf.mxu0
  %v2345 = vpop.f32.mrf.mxu0
  %v2346 = vadd.f32 0.0, %v2345
  %v2347 = vpop.f32.mrf.mxu0
  %2348 = vmatprep.mubr.bf16.mxu0 0
  %2349 = vmatmul.mubr.bf16.gmra.mxu0 %v2181
  %v2350 = vpop.f32.mrf.mxu0
  %v2351 = vadd.f32 0.0, %v2350
  %v2352 = vpop.f32.mrf.mxu0
  %v2353 = vpop.f32.mrf.mxu0
  %v2354 = vadd.f32 0.0, %v2353
  %v2355 = vpop.f32.mrf.mxu0
  %2356 = vmatprep.mubr.bf16.mxu0 0
  %2357 = vmatmul.mubr.bf16.gmra.mxu0 %v2184
  %v2358 = vpop.f32.mrf.mxu0
  %v2359 = vadd.f32 0.0, %v2358
  %v2360 = vpop.f32.mrf.mxu0
  %v2361 = vpop.f32.mrf.mxu0
  %v2362 = vadd.f32 0.0, %v2361
  %v2363 = vpop.f32.mrf.mxu0
  %2364 = vmatprep.mubr.bf16.mxu0 0
  %2365 = vmatmul.mubr.bf16.gmra.mxu0 %v2187
  %v2366 = vpop.f32.mrf.mxu0
  %v2367 = vadd.f32 0.0, %v2366
  %v2368 = vpop.f32.mrf.mxu0
  %v2369 = vpop.f32.mrf.mxu0
  %v2370 = vadd.f32 0.0, %v2369
  %v2371 = vpop.f32.mrf.mxu0
  %2372 = vmatprep.mubr.bf16.mxu0 0
  %2373 = vmatmul.mubr.bf16.gmra.mxu0 %v2190
  %v2374 = vpop.f32.mrf.mxu0
  %v2375 = vadd.f32 0.0, %v2374
  %v2376 = vpop.f32.mrf.mxu0
  %v2377 = vpop.f32.mrf.mxu0
  %v2378 = vadd.f32 0.0, %v2377
  %v2379 = vpop.f32.mrf.mxu0
  %2380 = vmatprep.mubr.bf16.mxu0 0
  %2381 = vmatmul.mubr.bf16.gmra.mxu0 %v2193
  %v2382 = vpop.f32.mrf.mxu0
  %v2383 = vadd.f32 0.0, %v2382
  %v2384 = vpop.f32.mrf.mxu0
  %v2385 = vpop.f32.mrf.mxu0
  %v2386 = vadd.f32 0.0, %v2385
  %v2387 = vpop.f32.mrf.mxu0
  %2388 = vmatprep.mubr.bf16.mxu0 0
  %2389 = vmatmul.mubr.bf16.gmra.mxu0 %v2196
  %v2390 = vpop.f32.mrf.mxu0
  %v2391 = vadd.f32 0.0, %v2390
  %v2392 = vpop.f32.mrf.mxu0
  %v2393 = vpop.f32.mrf.mxu0
  %v2394 = vadd.f32 0.0, %v2393
  %v2395 = vpop.f32.mrf.mxu0
  %2396 = vmatprep.mubr.bf16.mxu0 0
  %2397 = vmatmul.mubr.bf16.gmra.mxu0 %v2199
  %v2398 = vpop.f32.mrf.mxu0
  %v2399 = vadd.f32 0.0, %v2398
  %v2400 = vpop.f32.mrf.mxu0
  %v2401 = vpop.f32.mrf.mxu0
  %v2402 = vadd.f32 0.0, %v2401
  %v2403 = vpop.f32.mrf.mxu0
  %2404 = vmatprep.mubr.bf16.mxu0 0
  %2405 = vmatmul.mubr.bf16.gmra.mxu0 %v2202
  %v2406 = vpop.f32.mrf.mxu0
  %v2407 = vadd.f32 0.0, %v2406
  %v2408 = vpop.f32.mrf.mxu0
  %v2409 = vpop.f32.mrf.mxu0
  %v2410 = vadd.f32 0.0, %v2409
  %v2411 = vpop.f32.mrf.mxu0
  %2412 = vmatprep.mubr.bf16.mxu0 0
  %2413 = vmatmul.mubr.bf16.gmra.mxu0 %v2205
  %v2414 = vpop.f32.mrf.mxu0
  %v2415 = vadd.f32 0.0, %v2414
  %v2416 = vpop.f32.mrf.mxu0
  %v2417 = vpop.f32.mrf.mxu0
  %v2418 = vadd.f32 0.0, %v2417
  %v2419 = vpop.f32.mrf.mxu0
  %2420 = vmatprep.mubr.bf16.mxu0 0
  %2421 = vmatmul.mubr.bf16.gmra.mxu0 %v2208
  %v2422 = vpop.f32.mrf.mxu0
  %v2423 = vadd.f32 0.0, %v2422
  %v2424 = vpop.f32.mrf.mxu0
  %v2425 = vpop.f32.mrf.mxu0
  %v2426 = vadd.f32 0.0, %v2425
  %v2427 = vpop.f32.mrf.mxu0
  %2428 = vmatprep.mubr.bf16.mxu0 0
  %2429 = vmatmul.mubr.bf16.gmra.mxu0 %v2211
  %v2430 = vpop.f32.mrf.mxu0
  %v2431 = vadd.f32 0.0, %v2430
  %v2432 = vpop.f32.mrf.mxu0
  %v2433 = vpop.f32.mrf.mxu0
  %v2434 = vadd.f32 0.0, %v2433
  %v2435 = vpop.f32.mrf.mxu0
  %2436 = vmatprep.mubr.bf16.mxu0 0
  %2437 = vmatmul.mubr.bf16.gmra.mxu0 %v2214
  %v2438 = vpop.f32.mrf.mxu0
  %v2439 = vadd.f32 0.0, %v2438
  %v2440 = vpop.f32.mrf.mxu0
  %v2441 = vpop.f32.mrf.mxu0
  %v2442 = vadd.f32 0.0, %v2441
  %v2443 = vpop.f32.mrf.mxu0
  %2444 = vmatprep.mubr.bf16.mxu0 0
  %2445 = vmatmul.mubr.bf16.gmra.mxu0 %v2217
  %v2446 = vpop.f32.mrf.mxu0
  %v2447 = vadd.f32 0.0, %v2446
  %v2448 = vpop.f32.mrf.mxu0
  %v2449 = vpop.f32.mrf.mxu0
  %v2450 = vadd.f32 0.0, %v2449
  %v2451 = vpop.f32.mrf.mxu0
  %2452 = vmatprep.mubr.bf16.mxu0 0
  %2453 = vmatmul.mubr.bf16.gmra.mxu0 %v2220
  %v2454 = vpop.f32.mrf.mxu0
  %v2455 = vadd.f32 0.0, %v2454
  %v2456 = vpop.f32.mrf.mxu0
  %v2457 = vpop.f32.mrf.mxu0
  %v2458 = vadd.f32 0.0, %v2457
  %v2459 = vpop.f32.mrf.mxu0
  %2460 = vmatprep.mubr.bf16.mxu0 0
  %2461 = vmatmul.mubr.bf16.gmra.mxu0 %v2223
  %v2462 = vpop.f32.mrf.mxu0
  %v2463 = vadd.f32 0.0, %v2462
  %v2464 = vpop.f32.mrf.mxu0
  %v2465 = vpop.f32.mrf.mxu0
  %v2466 = vadd.f32 0.0, %v2465
  %v2467 = vpop.f32.mrf.mxu0
  %2468 = vmatprep.mubr.bf16.mxu0 0
  %2469 = vmatmul.mubr.bf16.gmra.mxu0 %v2226
  %v2470 = vpop.f32.mrf.mxu0
  %v2471 = vadd.f32 0.0, %v2470
  %v2472 = vpop.f32.mrf.mxu0
  %v2473 = vpop.f32.mrf.mxu0
  %v2474 = vadd.f32 0.0, %v2473
  %v2475 = vpop.f32.mrf.mxu0
  %2476 = vmatprep.mubr.bf16.mxu0 0
  %2477 = vmatmul.mubr.bf16.gmra.mxu0 %v2229
  %v2478 = vpop.f32.mrf.mxu0
  %v2479 = vadd.f32 0.0, %v2478
  %v2480 = vpop.f32.mrf.mxu0
  %v2481 = vpop.f32.mrf.mxu0
  %v2482 = vadd.f32 0.0, %v2481
  %v2483 = vpop.f32.mrf.mxu0
  %2484 = vmatprep.mubr.bf16.mxu0 0
  %2485 = vmatmul.mubr.bf16.gmra.mxu0 %v2232
  %v2486 = vpop.f32.mrf.mxu0
  %v2487 = vadd.f32 0.0, %v2486
  %v2488 = vpop.f32.mrf.mxu0
  %v2489 = vpop.f32.mrf.mxu0
  %v2490 = vadd.f32 0.0, %v2489
  %v2491 = vpop.f32.mrf.mxu0
  %2492 = vmatprep.mubr.bf16.mxu0 0
  %2493 = vmatmul.mubr.bf16.gmra.mxu0 %v2235
  %v2494 = vpop.f32.mrf.mxu0
  %v2495 = vadd.f32 0.0, %v2494
  %v2496 = vpop.f32.mrf.mxu0
  %v2497 = vpop.f32.mrf.mxu0
  %v2498 = vadd.f32 0.0, %v2497
  %v2499 = vpop.f32.mrf.mxu0
  %2500 = vmatprep.mubr.bf16.mxu0 0
  %2501 = vmatmul.mubr.bf16.gmra.mxu0 %v2238
  %v2502 = vpop.f32.mrf.mxu0
  %v2503 = vadd.f32 0.0, %v2502
  %v2504 = vpop.f32.mrf.mxu0
  %v2505 = vpop.f32.mrf.mxu0
  %v2506 = vadd.f32 0.0, %v2505
  %v2507 = vpop.f32.mrf.mxu0
  %2508 = vmatprep.mubr.bf16.mxu0 0
  %2509 = vmatmul.mubr.bf16.gmra.mxu0 %v2241
  %v2510 = vpop.f32.mrf.mxu0
  %v2511 = vadd.f32 0.0, %v2510
  %v2512 = vpop.f32.mrf.mxu0
  %v2513 = vpop.f32.mrf.mxu0
  %v2514 = vadd.f32 0.0, %v2513
  %v2515 = vpop.f32.mrf.mxu0
  %2516 = vmatprep.mubr.bf16.mxu0 0
  %2517 = vmatmul.mubr.bf16.gmra.mxu0 %v2244
  %v2518 = vpop.f32.mrf.mxu0
  %v2519 = vadd.f32 0.0, %v2518
  %v2520 = vpop.f32.mrf.mxu0
  %v2521 = vpop.f32.mrf.mxu0
  %v2522 = vadd.f32 0.0, %v2521
  %v2523 = vpop.f32.mrf.mxu0
  %2524 = vmatprep.mubr.bf16.mxu0 0
  %2525 = vmatmul.mubr.bf16.gmra.mxu0 %v2247
  %v2526 = vpop.f32.mrf.mxu0
  %v2527 = vadd.f32 0.0, %v2526
  %v2528 = vpop.f32.mrf.mxu0
  %v2529 = vpop.f32.mrf.mxu0
  %v2530 = vadd.f32 0.0, %v2529
  %v2531 = vpop.f32.mrf.mxu0
  %2532 = vmatprep.mubr.bf16.mxu0 0
  %2533 = vmatmul.mubr.bf16.gmra.mxu0 %v2250
  %v2534 = vpop.f32.mrf.mxu0
  %v2535 = vadd.f32 0.0, %v2534
  %v2536 = vpop.f32.mrf.mxu0
  %v2537 = vpop.f32.mrf.mxu0
  %v2538 = vadd.f32 0.0, %v2537
  %v2539 = vpop.f32.mrf.mxu0
  %2540 = vdwg.mxu0
  %v2541 = vmax.f32 %v1677, %v2287
  %v2542 = vmax.f32 %v1680, %v2290
  %v2543 = vmax.f32 %v1685, %v2295
  %v2544 = vmax.f32 %v1688, %v2298
  %v2545 = vmax.f32 %v1693, %v2303
  %v2546 = vmax.f32 %v1696, %v2306
  %v2547 = vmax.f32 %v1701, %v2311
  %v2548 = vmax.f32 %v1704, %v2314
  %v2549 = vmax.f32 %v1709, %v2319
  %v2550 = vmax.f32 %v1712, %v2322
  %v2551 = vmax.f32 %v1717, %v2327
  %v2552 = vmax.f32 %v1720, %v2330
  %v2553 = vmax.f32 %v1725, %v2335
  %v2554 = vmax.f32 %v1728, %v2338
  %v2555 = vmax.f32 %v1733, %v2343
  %v2556 = vmax.f32 %v1736, %v2346
  %v2557 = vmax.f32 %v1741, %v2351
  %v2558 = vmax.f32 %v1744, %v2354
  %v2559 = vmax.f32 %v1749, %v2359
  %v2560 = vmax.f32 %v1752, %v2362
  %v2561 = vmax.f32 %v1757, %v2367
  %v2562 = vmax.f32 %v1760, %v2370
  %v2563 = vmax.f32 %v1765, %v2375
  %v2564 = vmax.f32 %v1768, %v2378
  %v2565 = vmax.f32 %v1773, %v2383
  %v2566 = vmax.f32 %v1776, %v2386
  %v2567 = vmax.f32 %v1781, %v2391
  %v2568 = vmax.f32 %v1784, %v2394
  %v2569 = vmax.f32 %v1789, %v2399
  %v2570 = vmax.f32 %v1792, %v2402
  %v2571 = vmax.f32 %v1797, %v2407
  %v2572 = vmax.f32 %v1800, %v2410
  %v2573 = vmax.f32 %v1805, %v2415
  %v2574 = vmax.f32 %v1808, %v2418
  %v2575 = vmax.f32 %v1813, %v2423
  %v2576 = vmax.f32 %v1816, %v2426
  %v2577 = vmax.f32 %v1821, %v2431
  %v2578 = vmax.f32 %v1824, %v2434
  %v2579 = vmax.f32 %v1829, %v2439
  %v2580 = vmax.f32 %v1832, %v2442
  %v2581 = vmax.f32 %v1837, %v2447
  %v2582 = vmax.f32 %v1840, %v2450
  %v2583 = vmax.f32 %v1845, %v2455
  %v2584 = vmax.f32 %v1848, %v2458
  %v2585 = vmax.f32 %v1853, %v2463
  %v2586 = vmax.f32 %v1856, %v2466
  %v2587 = vmax.f32 %v1861, %v2471
  %v2588 = vmax.f32 %v1864, %v2474
  %v2589 = vmax.f32 %v1869, %v2479
  %v2590 = vmax.f32 %v1872, %v2482
  %v2591 = vmax.f32 %v1877, %v2487
  %v2592 = vmax.f32 %v1880, %v2490
  %v2593 = vmax.f32 %v1885, %v2495
  %v2594 = vmax.f32 %v1888, %v2498
  %v2595 = vmax.f32 %v1893, %v2503
  %v2596 = vmax.f32 %v1896, %v2506
  %v2597 = vmax.f32 %v1901, %v2511
  %v2598 = vmax.f32 %v1904, %v2514
  %v2599 = vmax.f32 %v1909, %v2519
  %v2600 = vmax.f32 %v1912, %v2522
  %v2601 = vmax.f32 %v1917, %v2527
  %v2602 = vmax.f32 %v1920, %v2530
  %v2603 = vmax.f32 %v1925, %v2535
  %v2604 = vmax.f32 %v1928, %v2538
  %v2605 = vmax.f32 %v1257, %v2541
  %v2606 = vmax.f32 %v1258, %v2542
  %v2607 = vmax.f32 %v1259, %v2543
  %v2608 = vmax.f32 %v1260, %v2544
  %v2609 = vmax.f32 %v1261, %v2545
  %v2610 = vmax.f32 %v1262, %v2546
  %v2611 = vmax.f32 %v1263, %v2547
  %v2612 = vmax.f32 %v1264, %v2548
  %v2613 = vmax.f32 %v1265, %v2549
  %v2614 = vmax.f32 %v1266, %v2550
  %v2615 = vmax.f32 %v1267, %v2551
  %v2616 = vmax.f32 %v1268, %v2552
  %v2617 = vmax.f32 %v1269, %v2553
  %v2618 = vmax.f32 %v1270, %v2554
  %v2619 = vmax.f32 %v1271, %v2555
  %v2620 = vmax.f32 %v1272, %v2556
  %v2621 = vmax.f32 %v1273, %v2557
  %v2622 = vmax.f32 %v1274, %v2558
  %v2623 = vmax.f32 %v1275, %v2559
  %v2624 = vmax.f32 %v1276, %v2560
  %v2625 = vmax.f32 %v1277, %v2561
  %v2626 = vmax.f32 %v1278, %v2562
  %v2627 = vmax.f32 %v1279, %v2563
  %v2628 = vmax.f32 %v1280, %v2564
  %v2629 = vmax.f32 %v1281, %v2565
  %v2630 = vmax.f32 %v1282, %v2566
  %v2631 = vmax.f32 %v1283, %v2567
  %v2632 = vmax.f32 %v1284, %v2568
  %v2633 = vmax.f32 %v1285, %v2569
  %v2634 = vmax.f32 %v1286, %v2570
  %v2635 = vmax.f32 %v1287, %v2571
  %v2636 = vmax.f32 %v1288, %v2572
  %v2637 = vmax.f32 %v1289, %v2573
  %v2638 = vmax.f32 %v1290, %v2574
  %v2639 = vmax.f32 %v1291, %v2575
  %v2640 = vmax.f32 %v1292, %v2576
  %v2641 = vmax.f32 %v1293, %v2577
  %v2642 = vmax.f32 %v1294, %v2578
  %v2643 = vmax.f32 %v1295, %v2579
  %v2644 = vmax.f32 %v1296, %v2580
  %v2645 = vmax.f32 %v1297, %v2581
  %v2646 = vmax.f32 %v1298, %v2582
  %v2647 = vmax.f32 %v1299, %v2583
  %v2648 = vmax.f32 %v1300, %v2584
  %v2649 = vmax.f32 %v1301, %v2585
  %v2650 = vmax.f32 %v1302, %v2586
  %v2651 = vmax.f32 %v1303, %v2587
  %v2652 = vmax.f32 %v1304, %v2588
  %v2653 = vmax.f32 %v1305, %v2589
  %v2654 = vmax.f32 %v1306, %v2590
  %v2655 = vmax.f32 %v1307, %v2591
  %v2656 = vmax.f32 %v1308, %v2592
  %v2657 = vmax.f32 %v1309, %v2593
  %v2658 = vmax.f32 %v1310, %v2594
  %v2659 = vmax.f32 %v1311, %v2595
  %v2660 = vmax.f32 %v1312, %v2596
  %v2661 = vmax.f32 %v1313, %v2597
  %v2662 = vmax.f32 %v1314, %v2598
  %v2663 = vmax.f32 %v1315, %v2599
  %v2664 = vmax.f32 %v1316, %v2600
  %v2665 = vmax.f32 %v1317, %v2601
  %v2666 = vmax.f32 %v1318, %v2602
  %v2667 = vmax.f32 %v1319, %v2603
  %v2668 = vmax.f32 %v1320, %v2604
  %v2669 = vld [vmem:[%s2] sm:$0x1]
  %v2671 = vlaneseq
  %v2672 = vshrl.u32 %v2671, 7
  %v2673 = vsub.s32 0, %v2672
  %v2674 = vrot.slane %v2669, %v2673
  %v2676 = vadd.f32 %v2605, %v2674
  %v2677 = vadd.f32 %v2606, %v2674
  %v2678 = vadd.f32 %v2607, %v2674
  %v2679 = vadd.f32 %v2608, %v2674
  %v2680 = vadd.f32 %v2609, %v2674
  %v2681 = vadd.f32 %v2610, %v2674
  %v2682 = vadd.f32 %v2611, %v2674
  %v2683 = vadd.f32 %v2612, %v2674
  %v2684 = vadd.f32 %v2613, %v2674
  %v2685 = vadd.f32 %v2614, %v2674
  %v2686 = vadd.f32 %v2615, %v2674
  %v2687 = vadd.f32 %v2616, %v2674
  %v2688 = vadd.f32 %v2617, %v2674
  %v2689 = vadd.f32 %v2618, %v2674
  %v2690 = vadd.f32 %v2619, %v2674
  %v2691 = vadd.f32 %v2620, %v2674
  %v2692 = vadd.f32 %v2621, %v2674
  %v2693 = vadd.f32 %v2622, %v2674
  %v2694 = vadd.f32 %v2623, %v2674
  %v2695 = vadd.f32 %v2624, %v2674
  %v2696 = vadd.f32 %v2625, %v2674
  %v2697 = vadd.f32 %v2626, %v2674
  %v2698 = vadd.f32 %v2627, %v2674
  %v2699 = vadd.f32 %v2628, %v2674
  %v2700 = vadd.f32 %v2629, %v2674
  %v2701 = vadd.f32 %v2630, %v2674
  %v2702 = vadd.f32 %v2631, %v2674
  %v2703 = vadd.f32 %v2632, %v2674
  %v2704 = vadd.f32 %v2633, %v2674
  %v2705 = vadd.f32 %v2634, %v2674
  %v2706 = vadd.f32 %v2635, %v2674
  %v2707 = vadd.f32 %v2636, %v2674
  %v2708 = vadd.f32 %v2637, %v2674
  %v2709 = vadd.f32 %v2638, %v2674
  %v2710 = vadd.f32 %v2639, %v2674
  %v2711 = vadd.f32 %v2640, %v2674
  %v2712 = vadd.f32 %v2641, %v2674
  %v2713 = vadd.f32 %v2642, %v2674
  %v2714 = vadd.f32 %v2643, %v2674
  %v2715 = vadd.f32 %v2644, %v2674
  %v2716 = vadd.f32 %v2645, %v2674
  %v2717 = vadd.f32 %v2646, %v2674
  %v2718 = vadd.f32 %v2647, %v2674
  %v2719 = vadd.f32 %v2648, %v2674
  %v2720 = vadd.f32 %v2649, %v2674
  %v2721 = vadd.f32 %v2650, %v2674
  %v2722 = vadd.f32 %v2651, %v2674
  %v2723 = vadd.f32 %v2652, %v2674
  %v2724 = vadd.f32 %v2653, %v2674
  %v2725 = vadd.f32 %v2654, %v2674
  %v2726 = vadd.f32 %v2655, %v2674
  %v2727 = vadd.f32 %v2656, %v2674
  %v2728 = vadd.f32 %v2657, %v2674
  %v2729 = vadd.f32 %v2658, %v2674
  %v2730 = vadd.f32 %v2659, %v2674
  %v2731 = vadd.f32 %v2660, %v2674
  %v2732 = vadd.f32 %v2661, %v2674
  %v2733 = vadd.f32 %v2662, %v2674
  %v2734 = vadd.f32 %v2663, %v2674
  %v2735 = vadd.f32 %v2664, %v2674
  %v2736 = vadd.f32 %v2665, %v2674
  %v2737 = vadd.f32 %v2666, %v2674
  %v2738 = vadd.f32 %v2667, %v2674
  %v2739 = vadd.f32 %v2668, %v2674
  %v2740 = vmax.f32 %v2676, 0.0
  %v2741 = vmax.f32 %v2677, 0.0
  %v2742 = vmax.f32 %v2678, 0.0
  %v2743 = vmax.f32 %v2679, 0.0
  %v2744 = vmax.f32 %v2680, 0.0
  %v2745 = vmax.f32 %v2681, 0.0
  %v2746 = vmax.f32 %v2682, 0.0
  %v2747 = vmax.f32 %v2683, 0.0
  %v2748 = vmax.f32 %v2684, 0.0
  %v2749 = vmax.f32 %v2685, 0.0
  %v2750 = vmax.f32 %v2686, 0.0
  %v2751 = vmax.f32 %v2687, 0.0
  %v2752 = vmax.f32 %v2688, 0.0
  %v2753 = vmax.f32 %v2689, 0.0
  %v2754 = vmax.f32 %v2690, 0.0
  %v2755 = vmax.f32 %v2691, 0.0
  %v2756 = vmax.f32 %v2692, 0.0
  %v2757 = vmax.f32 %v2693, 0.0
  %v2758 = vmax.f32 %v2694, 0.0
  %v2759 = vmax.f32 %v2695, 0.0
  %v2760 = vmax.f32 %v2696, 0.0
  %v2761 = vmax.f32 %v2697, 0.0
  %v2762 = vmax.f32 %v2698, 0.0
  %v2763 = vmax.f32 %v2699, 0.0
  %v2764 = vmax.f32 %v2700, 0.0
  %v2765 = vmax.f32 %v2701, 0.0
  %v2766 = vmax.f32 %v2702, 0.0
  %v2767 = vmax.f32 %v2703, 0.0
  %v2768 = vmax.f32 %v2704, 0.0
  %v2769 = vmax.f32 %v2705, 0.0
  %v2770 = vmax.f32 %v2706, 0.0
  %v2771 = vmax.f32 %v2707, 0.0
  %v2772 = vmax.f32 %v2708, 0.0
  %v2773 = vmax.f32 %v2709, 0.0
  %v2774 = vmax.f32 %v2710, 0.0
  %v2775 = vmax.f32 %v2711, 0.0
  %v2776 = vmax.f32 %v2712, 0.0
  %v2777 = vmax.f32 %v2713, 0.0
  %v2778 = vmax.f32 %v2714, 0.0
  %v2779 = vmax.f32 %v2715, 0.0
  %v2780 = vmax.f32 %v2716, 0.0
  %v2781 = vmax.f32 %v2717, 0.0
  %v2782 = vmax.f32 %v2718, 0.0
  %v2783 = vmax.f32 %v2719, 0.0
  %v2784 = vmax.f32 %v2720, 0.0
  %v2785 = vmax.f32 %v2721, 0.0
  %v2786 = vmax.f32 %v2722, 0.0
  %v2787 = vmax.f32 %v2723, 0.0
  %v2788 = vmax.f32 %v2724, 0.0
  %v2789 = vmax.f32 %v2725, 0.0
  %v2790 = vmax.f32 %v2726, 0.0
  %v2791 = vmax.f32 %v2727, 0.0
  %v2792 = vmax.f32 %v2728, 0.0
  %v2793 = vmax.f32 %v2729, 0.0
  %v2794 = vmax.f32 %v2730, 0.0
  %v2795 = vmax.f32 %v2731, 0.0
  %v2796 = vmax.f32 %v2732, 0.0
  %v2797 = vmax.f32 %v2733, 0.0
  %v2798 = vmax.f32 %v2734, 0.0
  %v2799 = vmax.f32 %v2735, 0.0
  %v2800 = vmax.f32 %v2736, 0.0
  %v2801 = vmax.f32 %v2737, 0.0
  %v2802 = vmax.f32 %v2738, 0.0
  %v2803 = vmax.f32 %v2739, 0.0
  %v2804 = vpack.c.bf16 %v2741, %v2740
  %v2805 = vpack.c.bf16 %v2743, %v2742
  %v2806 = vpack.c.bf16 %v2745, %v2744
  %v2807 = vpack.c.bf16 %v2747, %v2746
  %v2808 = vpack.c.bf16 %v2749, %v2748
  %v2809 = vpack.c.bf16 %v2751, %v2750
  %v2810 = vpack.c.bf16 %v2753, %v2752
  %v2811 = vpack.c.bf16 %v2755, %v2754
  %v2812 = vpack.c.bf16 %v2757, %v2756
  %v2813 = vpack.c.bf16 %v2759, %v2758
  %v2814 = vpack.c.bf16 %v2761, %v2760
  %v2815 = vpack.c.bf16 %v2763, %v2762
  %v2816 = vpack.c.bf16 %v2765, %v2764
  %v2817 = vpack.c.bf16 %v2767, %v2766
  %v2818 = vpack.c.bf16 %v2769, %v2768
  %v2819 = vpack.c.bf16 %v2771, %v2770
  %v2820 = vpack.c.bf16 %v2773, %v2772
  %v2821 = vpack.c.bf16 %v2775, %v2774
  %v2822 = vpack.c.bf16 %v2777, %v2776
  %v2823 = vpack.c.bf16 %v2779, %v2778
  %v2824 = vpack.c.bf16 %v2781, %v2780
  %v2825 = vpack.c.bf16 %v2783, %v2782
  %v2826 = vpack.c.bf16 %v2785, %v2784
  %v2827 = vpack.c.bf16 %v2787, %v2786
  %v2828 = vpack.c.bf16 %v2789, %v2788
  %v2829 = vpack.c.bf16 %v2791, %v2790
  %v2830 = vpack.c.bf16 %v2793, %v2792
  %v2831 = vpack.c.bf16 %v2795, %v2794
  %v2832 = vpack.c.bf16 %v2797, %v2796
  %v2833 = vpack.c.bf16 %v2799, %v2798
  %v2834 = vpack.c.bf16 %v2801, %v2800
  %v2835 = vpack.c.bf16 %v2803, %v2802
  %v2868 = vunpack.c.l.b16 %v2804
  %v2869 = vunpack.c.h.b16 %v2804
  %v2870 = vunpack.c.l.b16 %v2805
  %v2871 = vunpack.c.h.b16 %v2805
  %v2872 = vunpack.c.l.b16 %v2806
  %v2873 = vunpack.c.h.b16 %v2806
  %v2874 = vunpack.c.l.b16 %v2807
  %v2875 = vunpack.c.h.b16 %v2807
  %v2876 = vunpack.c.l.b16 %v2808
  %v2877 = vunpack.c.h.b16 %v2808
  %v2878 = vunpack.c.l.b16 %v2809
  %v2879 = vunpack.c.h.b16 %v2809
  %v2880 = vunpack.c.l.b16 %v2810
  %v2881 = vunpack.c.h.b16 %v2810
  %v2882 = vunpack.c.l.b16 %v2811
  %v2883 = vunpack.c.h.b16 %v2811
  %v2884 = vunpack.c.l.b16 %v2812
  %v2885 = vunpack.c.h.b16 %v2812
  %v2886 = vunpack.c.l.b16 %v2813
  %v2887 = vunpack.c.h.b16 %v2813
  %v2888 = vunpack.c.l.b16 %v2814
  %v2889 = vunpack.c.h.b16 %v2814
  %v2890 = vunpack.c.l.b16 %v2815
  %v2891 = vunpack.c.h.b16 %v2815
  %v2892 = vunpack.c.l.b16 %v2816
  %v2893 = vunpack.c.h.b16 %v2816
  %v2894 = vunpack.c.l.b16 %v2817
  %v2895 = vunpack.c.h.b16 %v2817
  %v2896 = vunpack.c.l.b16 %v2818
  %v2897 = vunpack.c.h.b16 %v2818
  %v2898 = vunpack.c.l.b16 %v2819
  %v2899 = vunpack.c.h.b16 %v2819
  %v2900 = vunpack.c.l.b16 %v2820
  %v2901 = vunpack.c.h.b16 %v2820
  %v2902 = vunpack.c.l.b16 %v2821
  %v2903 = vunpack.c.h.b16 %v2821
  %v2904 = vunpack.c.l.b16 %v2822
  %v2905 = vunpack.c.h.b16 %v2822
  %v2906 = vunpack.c.l.b16 %v2823
  %v2907 = vunpack.c.h.b16 %v2823
  %v2908 = vunpack.c.l.b16 %v2824
  %v2909 = vunpack.c.h.b16 %v2824
  %v2910 = vunpack.c.l.b16 %v2825
  %v2911 = vunpack.c.h.b16 %v2825
  %v2912 = vunpack.c.l.b16 %v2826
  %v2913 = vunpack.c.h.b16 %v2826
  %v2914 = vunpack.c.l.b16 %v2827
  %v2915 = vunpack.c.h.b16 %v2827
  %v2916 = vunpack.c.l.b16 %v2828
  %v2917 = vunpack.c.h.b16 %v2828
  %v2918 = vunpack.c.l.b16 %v2829
  %v2919 = vunpack.c.h.b16 %v2829
  %v2920 = vunpack.c.l.b16 %v2830
  %v2921 = vunpack.c.h.b16 %v2830
  %v2922 = vunpack.c.l.b16 %v2831
  %v2923 = vunpack.c.h.b16 %v2831
  %v2924 = vunpack.c.l.b16 %v2832
  %v2925 = vunpack.c.h.b16 %v2832
  %v2926 = vunpack.c.l.b16 %v2833
  %v2927 = vunpack.c.h.b16 %v2833
  %v2928 = vunpack.c.l.b16 %v2834
  %v2929 = vunpack.c.h.b16 %v2834
  %v2930 = vunpack.c.l.b16 %v2835
  %v2931 = vunpack.c.h.b16 %v2835
  %v2932 = vpack.c.b16 %v2868, %v2868
  %v2933 = vpack.c.b16 %v2869, %v2869
  %v2934 = vpack.c.b16 %v2870, %v2870
  %v2935 = vpack.c.b16 %v2871, %v2871
  %v2936 = vpack.c.b16 %v2872, %v2872
  %v2937 = vpack.c.b16 %v2873, %v2873
  %v2938 = vpack.c.b16 %v2874, %v2874
  %v2939 = vpack.c.b16 %v2875, %v2875
  %v2940 = vpack.c.b16 %v2876, %v2876
  %v2941 = vpack.c.b16 %v2877, %v2877
  %v2942 = vpack.c.b16 %v2878, %v2878
  %v2943 = vpack.c.b16 %v2879, %v2879
  %v2944 = vpack.c.b16 %v2880, %v2880
  %v2945 = vpack.c.b16 %v2881, %v2881
  %v2946 = vpack.c.b16 %v2882, %v2882
  %v2947 = vpack.c.b16 %v2883, %v2883
  %v2948 = vpack.c.b16 %v2884, %v2884
  %v2949 = vpack.c.b16 %v2885, %v2885
  %v2950 = vpack.c.b16 %v2886, %v2886
  %v2951 = vpack.c.b16 %v2887, %v2887
  %v2952 = vpack.c.b16 %v2888, %v2888
  %v2953 = vpack.c.b16 %v2889, %v2889
  %v2954 = vpack.c.b16 %v2890, %v2890
  %v2955 = vpack.c.b16 %v2891, %v2891
  %v2956 = vpack.c.b16 %v2892, %v2892
  %v2957 = vpack.c.b16 %v2893, %v2893
  %v2958 = vpack.c.b16 %v2894, %v2894
  %v2959 = vpack.c.b16 %v2895, %v2895
  %v2960 = vpack.c.b16 %v2896, %v2896
  %v2961 = vpack.c.b16 %v2897, %v2897
  %v2962 = vpack.c.b16 %v2898, %v2898
  %v2963 = vpack.c.b16 %v2899, %v2899
  %v2964 = vpack.c.b16 %v2900, %v2900
  %v2965 = vpack.c.b16 %v2901, %v2901
  %v2966 = vpack.c.b16 %v2902, %v2902
  %v2967 = vpack.c.b16 %v2903, %v2903
  %v2968 = vpack.c.b16 %v2904, %v2904
  %v2969 = vpack.c.b16 %v2905, %v2905
  %v2970 = vpack.c.b16 %v2906, %v2906
  %v2971 = vpack.c.b16 %v2907, %v2907
  %v2972 = vpack.c.b16 %v2908, %v2908
  %v2973 = vpack.c.b16 %v2909, %v2909
  %v2974 = vpack.c.b16 %v2910, %v2910
  %v2975 = vpack.c.b16 %v2911, %v2911
  %v2976 = vpack.c.b16 %v2912, %v2912
  %v2977 = vpack.c.b16 %v2913, %v2913
  %v2978 = vpack.c.b16 %v2914, %v2914
  %v2979 = vpack.c.b16 %v2915, %v2915
  %v2980 = vpack.c.b16 %v2916, %v2916
  %v2981 = vpack.c.b16 %v2917, %v2917
  %v2982 = vpack.c.b16 %v2918, %v2918
  %v2983 = vpack.c.b16 %v2919, %v2919
  %v2984 = vpack.c.b16 %v2920, %v2920
  %v2985 = vpack.c.b16 %v2921, %v2921
  %v2986 = vpack.c.b16 %v2922, %v2922
  %v2987 = vpack.c.b16 %v2923, %v2923
  %v2988 = vpack.c.b16 %v2924, %v2924
  %v2989 = vpack.c.b16 %v2925, %v2925
  %v2990 = vpack.c.b16 %v2926, %v2926
  %v2991 = vpack.c.b16 %v2927, %v2927
  %v2992 = vpack.c.b16 %v2928, %v2928
  %v2993 = vpack.c.b16 %v2929, %v2929
  %v2994 = vpack.c.b16 %v2930, %v2930
  %v2995 = vpack.c.b16 %v2931, %v2931
  %3060 = vst [vmem:[%s3] sm:$0xf] %v2932
  %3061 = vst [vmem:[%s3 + $0x4] sm:$0xf] %v2933
  %3062 = vst [vmem:[%s3 + $0x8] sm:$0xf] %v2934
  %3063 = vst [vmem:[%s3 + $0xc] sm:$0xf] %v2935
  %3064 = vst [vmem:[%s3 + $0x10] sm:$0xf] %v2936
  %3065 = vst [vmem:[%s3 + $0x14] sm:$0xf] %v2937
  %3066 = vst [vmem:[%s3 + $0x18] sm:$0xf] %v2938
  %3067 = vst [vmem:[%s3 + $0x1c] sm:$0xf] %v2939
  %3068 = vst [vmem:[%s3 + $0x20] sm:$0xf] %v2940
  %3069 = vst [vmem:[%s3 + $0x24] sm:$0xf] %v2941
  %3070 = vst [vmem:[%s3 + $0x28] sm:$0xf] %v2942
  %3071 = vst [vmem:[%s3 + $0x2c] sm:$0xf] %v2943
  %3072 = vst [vmem:[%s3 + $0x30] sm:$0xf] %v2944
  %3073 = vst [vmem:[%s3 + $0x34] sm:$0xf] %v2945
  %3074 = vst [vmem:[%s3 + $0x38] sm:$0xf] %v2946
  %3075 = vst [vmem:[%s3 + $0x3c] sm:$0xf] %v2947
  %3076 = vst [vmem:[%s3 + $0x40] sm:$0xf] %v2948
  %3077 = vst [vmem:[%s3 + $0x44] sm:$0xf] %v2949
  %3078 = vst [vmem:[%s3 + $0x48] sm:$0xf] %v2950
  %3079 = vst [vmem:[%s3 + $0x4c] sm:$0xf] %v2951
  %3080 = vst [vmem:[%s3 + $0x50] sm:$0xf] %v2952
  %3081 = vst [vmem:[%s3 + $0x54] sm:$0xf] %v2953
  %3082 = vst [vmem:[%s3 + $0x58] sm:$0xf] %v2954
  %3083 = vst [vmem:[%s3 + $0x5c] sm:$0xf] %v2955
  %3084 = vst [vmem:[%s3 + $0x60] sm:$0xf] %v2956
  %3085 = vst [vmem:[%s3 + $0x64] sm:$0xf] %v2957
  %3086 = vst [vmem:[%s3 + $0x68] sm:$0xf] %v2958
  %3087 = vst [vmem:[%s3 + $0x6c] sm:$0xf] %v2959
  %3088 = vst [vmem:[%s3 + $0x70] sm:$0xf] %v2960
  %3089 = vst [vmem:[%s3 + $0x74] sm:$0xf] %v2961
  %3090 = vst [vmem:[%s3 + $0x78] sm:$0xf] %v2962
  %3091 = vst [vmem:[%s3 + $0x7c] sm:$0xf] %v2963
  %3092 = vst [vmem:[%s3 + $0x80] sm:$0xf] %v2964
  %3093 = vst [vmem:[%s3 + $0x84] sm:$0xf] %v2965
  %3094 = vst [vmem:[%s3 + $0x88] sm:$0xf] %v2966
  %3095 = vst [vmem:[%s3 + $0x8c] sm:$0xf] %v2967
  %3096 = vst [vmem:[%s3 + $0x90] sm:$0xf] %v2968
  %3097 = vst [vmem:[%s3 + $0x94] sm:$0xf] %v2969
  %3098 = vst [vmem:[%s3 + $0x98] sm:$0xf] %v2970
  %3099 = vst [vmem:[%s3 + $0x9c] sm:$0xf] %v2971
  %3100 = vst [vmem:[%s3 + $0xa0] sm:$0xf] %v2972
  %3101 = vst [vmem:[%s3 + $0xa4] sm:$0xf] %v2973
  %3102 = vst [vmem:[%s3 + $0xa8] sm:$0xf] %v2974
  %3103 = vst [vmem:[%s3 + $0xac] sm:$0xf] %v2975
  %3104 = vst [vmem:[%s3 + $0xb0] sm:$0xf] %v2976
  %3105 = vst [vmem:[%s3 + $0xb4] sm:$0xf] %v2977
  %3106 = vst [vmem:[%s3 + $0xb8] sm:$0xf] %v2978
  %3107 = vst [vmem:[%s3 + $0xbc] sm:$0xf] %v2979
  %3108 = vst [vmem:[%s3 + $0xc0] sm:$0xf] %v2980
  %3109 = vst [vmem:[%s3 + $0xc4] sm:$0xf] %v2981
  %3110 = vst [vmem:[%s3 + $0xc8] sm:$0xf] %v2982
  %3111 = vst [vmem:[%s3 + $0xcc] sm:$0xf] %v2983
  %3112 = vst [vmem:[%s3 + $0xd0] sm:$0xf] %v2984
  %3113 = vst [vmem:[%s3 + $0xd4] sm:$0xf] %v2985
  %3114 = vst [vmem:[%s3 + $0xd8] sm:$0xf] %v2986
  %3115 = vst [vmem:[%s3 + $0xdc] sm:$0xf] %v2987
  %3116 = vst [vmem:[%s3 + $0xe0] sm:$0xf] %v2988
  %3117 = vst [vmem:[%s3 + $0xe4] sm:$0xf] %v2989
  %3118 = vst [vmem:[%s3 + $0xe8] sm:$0xf] %v2990
  %3119 = vst [vmem:[%s3 + $0xec] sm:$0xf] %v2991
  %3120 = vst [vmem:[%s3 + $0xf0] sm:$0xf] %v2992
  %3121 = vst [vmem:[%s3 + $0xf4] sm:$0xf] %v2993
  %3122 = vst [vmem:[%s3 + $0xf8] sm:$0xf] %v2994
  %3123 = vst [vmem:[%s3 + $0xfc] sm:$0xf] %v2995
  // Predicated region
  $region14: #{cnn_forward.3} parent=0 // pred_check
    _
  $region15: #{cnn_forward.3} parent=0 // pred_check_branch
    %3125 = sbr.rel (0) target = $region17
  $region16: #{cnn_forward.3} parent=0 // pred_region
    _
  $region17: #{cnn_forward.3} parent=0 // pred_fallthru
    _
  // Predicated region
  $region18: #{cnn_forward.3} parent=0 // pred_check
    _
  $region19: #{cnn_forward.3} parent=0 // pred_check_branch
    %3127 = sbr.rel (0) target = $region21
  $region20: #{cnn_forward.3} parent=0 // pred_region
    _
  $region21: #{cnn_forward.3} parent=0 // pred_fallthru
    _

// kernel: cnn_forward.4
$region0: #{cnn_forward.4}
  #allocation0 [shape = 'u32[]', space=smem, size = 0x4, offset = 0x4, fixed_abs, tag = 'smem constant byte address 0x4 - core index']
  #allocation1 [shape = 'u32[144,128]{1,0:T(1,128)}', space=vmem, size = 0x12000, scoped, tag = 'internal scratch']
  %s0 = inlined_call_operand.vmem [shape: bf16[4,128,144], index: 0, kind: input, shape index: {}]
  %s1 = inlined_call_operand.vmem [shape: bf16[144,128], index: 1, kind: input, shape index: {}]
  %s2 = inlined_call_operand.vmem [shape: f32[1,128], index: 2, kind: input, shape index: {}]
  %s3 = inlined_call_operand.vmem [shape: bf16[128,128], index: 3, kind: output, shape index: {}]
  %s4 = sld [smem:[#allocation0]]
  $region22: #{cnn_forward.4} parent=0
    _
  %s6 = ssub.s32 1, %s4
  %s7 = scalar_select 0, %s6, %s4
  // Predicated region
  $region2: #{cnn_forward.4} parent=0 // pred_check
    _
  $region3: #{cnn_forward.4} parent=0 // pred_check_branch
    %9 = sbr.rel (0) target = $region5
  $region4: #{cnn_forward.4} parent=0 // pred_region
    _
  $region5: #{cnn_forward.4} parent=0 // pred_fallthru
    _
  // Predicated region
  $region6: #{cnn_forward.4} parent=0 // pred_check
    _
  $region7: #{cnn_forward.4} parent=0 // pred_check_branch
    %11 = sbr.rel (0) target = $region9
  $region8: #{cnn_forward.4} parent=0 // pred_region
    _
  $region9: #{cnn_forward.4} parent=0 // pred_fallthru
    _
  // Predicated region
  $region10: #{cnn_forward.4} parent=0 // pred_check
    _
  $region11: #{cnn_forward.4} parent=0 // pred_check_branch
    %13 = sbr.rel (0) target = $region13
  $region12: #{cnn_forward.4} parent=0 // pred_region
    _
  $region13: #{cnn_forward.4} parent=0 // pred_fallthru
    _
  %v15 = vld [vmem:[%s1] sm:$0xf]
  %v16 = vld [vmem:[%s1 + $0x4] sm:$0xf]
  %v17 = vld [vmem:[%s1 + $0x8] sm:$0xf]
  %v18 = vld [vmem:[%s1 + $0xc] sm:$0xf]
  %v19 = vld [vmem:[%s1 + $0x10] sm:$0xf]
  %v20 = vld [vmem:[%s1 + $0x14] sm:$0xf]
  %v21 = vld [vmem:[%s1 + $0x18] sm:$0xf]
  %v22 = vld [vmem:[%s1 + $0x1c] sm:$0xf]
  %v23 = vld [vmem:[%s1 + $0x20] sm:$0xf]
  %v24 = vld [vmem:[%s1 + $0x24] sm:$0xf]
  %v25 = vld [vmem:[%s1 + $0x28] sm:$0xf]
  %v26 = vld [vmem:[%s1 + $0x2c] sm:$0xf]
  %v27 = vld [vmem:[%s1 + $0x30] sm:$0xf]
  %v28 = vld [vmem:[%s1 + $0x34] sm:$0xf]
  %v29 = vld [vmem:[%s1 + $0x38] sm:$0xf]
  %v30 = vld [vmem:[%s1 + $0x3c] sm:$0xf]
  %v31 = vld [vmem:[%s1 + $0x40] sm:$0xf]
  %v32 = vld [vmem:[%s1 + $0x44] sm:$0xf]
  %v33 = vld [vmem:[%s0] sm:$0xff]
  %v34 = vld [vmem:[%s0 + $0x8] sm:$0xff]
  %v35 = vld [vmem:[%s0 + $0x10] sm:$0xff]
  %v36 = vld [vmem:[%s0 + $0x18] sm:$0xff]
  %v37 = vld [vmem:[%s0 + $0x20] sm:$0xff]
  %v38 = vld [vmem:[%s0 + $0x28] sm:$0xff]
  %v39 = vld [vmem:[%s0 + $0x30] sm:$0xff]
  %v40 = vld [vmem:[%s0 + $0x38] sm:$0xff]
  %v41 = vld [vmem:[%s0 + $0x40] sm:$0xff]
  %v42 = vld [vmem:[%s0 + $0x48] sm:$0xff]
  %v43 = vld [vmem:[%s0 + $0x50] sm:$0xff]
  %v44 = vld [vmem:[%s0 + $0x58] sm:$0xff]
  %v45 = vld [vmem:[%s0 + $0x60] sm:$0xff]
  %v46 = vld [vmem:[%s0 + $0x68] sm:$0xff]
  %v47 = vld [vmem:[%s0 + $0x70] sm:$0xff]
  %v48 = vld [vmem:[%s0 + $0x78] sm:$0xff]
  %v65 = vunpack.c.l.b16 %v33
  %v66 = vunpack.c.h.b16 %v33
  %v67 = vunpack.c.l.b16 %v34
  %v68 = vunpack.c.h.b16 %v34
  %v69 = vunpack.c.l.b16 %v35
  %v70 = vunpack.c.h.b16 %v35
  %v71 = vunpack.c.l.b16 %v36
  %v72 = vunpack.c.h.b16 %v36
  %v73 = vunpack.c.l.b16 %v37
  %v74 = vunpack.c.h.b16 %v37
  %v75 = vunpack.c.l.b16 %v38
  %v76 = vunpack.c.h.b16 %v38
  %v77 = vunpack.c.l.b16 %v39
  %v78 = vunpack.c.h.b16 %v39
  %v79 = vunpack.c.l.b16 %v40
  %v80 = vunpack.c.h.b16 %v40
  %v81 = vunpack.c.l.b16 %v41
  %v82 = vunpack.c.h.b16 %v41
  %v83 = vunpack.c.l.b16 %v42
  %v84 = vunpack.c.h.b16 %v42
  %v85 = vunpack.c.l.b16 %v43
  %v86 = vunpack.c.h.b16 %v43
  %v87 = vunpack.c.l.b16 %v44
  %v88 = vunpack.c.h.b16 %v44
  %v89 = vunpack.c.l.b16 %v45
  %v90 = vunpack.c.h.b16 %v45
  %v91 = vunpack.c.l.b16 %v46
  %v92 = vunpack.c.h.b16 %v46
  %v93 = vunpack.c.l.b16 %v47
  %v94 = vunpack.c.h.b16 %v47
  %v95 = vunpack.c.l.b16 %v48
  %v96 = vunpack.c.h.b16 %v48
  %v97 = vpack.c.b16 %v67, %v65
  %v98 = vpack.c.b16 %v68, %v66
  %v99 = vpack.c.b16 %v71, %v69
  %v100 = vpack.c.b16 %v72, %v70
  %v101 = vpack.c.b16 %v75, %v73
  %v102 = vpack.c.b16 %v76, %v74
  %v103 = vpack.c.b16 %v79, %v77
  %v104 = vpack.c.b16 %v80, %v78
  %v105 = vpack.c.b16 %v83, %v81
  %v106 = vpack.c.b16 %v84, %v82
  %v107 = vpack.c.b16 %v87, %v85
  %v108 = vpack.c.b16 %v88, %v86
  %v109 = vpack.c.b16 %v91, %v89
  %v110 = vpack.c.b16 %v92, %v90
  %v111 = vpack.c.b16 %v95, %v93
  %v112 = vpack.c.b16 %v96, %v94
  %v139 = vunpack.c.l.b16 %v15
  %v140 = vunpack.c.l.b16 %v16
  %v141 = vunpack.c.l.b16 %v17
  %v142 = vunpack.c.l.b16 %v18
  %v143 = vunpack.c.l.b16 %v19
  %v144 = vunpack.c.l.b16 %v20
  %v145 = vunpack.c.l.b16 %v21
  %v146 = vunpack.c.l.b16 %v22
  %v147 = vunpack.c.l.b16 %v23
  %v148 = vunpack.c.l.b16 %v24
  %v149 = vunpack.c.l.b16 %v25
  %v150 = vunpack.c.l.b16 %v26
  %v151 = vunpack.c.l.b16 %v27
  %v152 = vunpack.c.l.b16 %v28
  %v153 = vunpack.c.l.b16 %v29
  %v154 = vunpack.c.l.b16 %v30
  %v155 = vunpack.c.l.b16 %v31
  %v156 = vunpack.c.l.b16 %v32
  %v157 = vpack.c.b16 %v140, %v139
  %v158 = vpack.c.b16 %v142, %v141
  %v159 = vpack.c.b16 %v144, %v143
  %v160 = vpack.c.b16 %v146, %v145
  %v161 = vpack.c.b16 %v148, %v147
  %v162 = vpack.c.b16 %v150, %v149
  %v163 = vpack.c.b16 %v152, %v151
  %v164 = vpack.c.b16 %v154, %v153
  %v165 = vpack.c.b16 %v156, %v155
  %vm175 = vcmask 130048
  %v177 = vsel %vm175, %v98, 0
  %v180 = vsel %vm175, %v100, 0
  %v183 = vsel %vm175, %v102, 0
  %v186 = vsel %vm175, %v104, 0
  %v189 = vsel %vm175, %v106, 0
  %v192 = vsel %vm175, %v108, 0
  %v195 = vsel %vm175, %v110, 0
  %v198 = vsel %vm175, %v112, 0
  %200 = vmatprep.subr.bf16.mxu0 0
  %201 = vmatpush1.bf16.msra.mxu0 %v164
  %202 = vmatprep.subr.bf16.mxu0 0
  %203 = vmatpush1.bf16.msra.mxu0 %v163
  %204 = vmatprep.subr.bf16.mxu0 0
  %205 = vmatpush1.bf16.msra.mxu0 %v162
  %206 = vmatprep.subr.bf16.mxu0 0
  %207 = vmatpush1.bf16.msra.mxu0 %v161
  %208 = vmatprep.subr.bf16.mxu0 0
  %209 = vmatpush1.bf16.msra.mxu0 %v160
  %210 = vmatprep.subr.bf16.mxu0 0
  %211 = vmatpush1.bf16.msra.mxu0 %v159
  %212 = vmatprep.subr.bf16.mxu0 0
  %213 = vmatpush1.bf16.msra.mxu0 %v158
  %214 = vmatprep.subr.bf16.mxu0 0
  %215 = vmatpush1.bf16.msra.mxu0 %v157
  %216 = vmatprep.subr.bf16.mxu0 0
  %217 = vmatpush2.bf16.msra.mxu0 0
  %218 = vmatprep.subr.bf16.mxu0 0
  %219 = vmatpush2.bf16.msra.mxu0 0
  %220 = vmatprep.subr.bf16.mxu0 0
  %221 = vmatpush2.bf16.msra.mxu0 0
  %222 = vmatprep.subr.bf16.mxu0 0
  %223 = vmatpush2.bf16.msra.mxu0 0
  %224 = vmatprep.subr.bf16.mxu0 0
  %225 = vmatpush2.bf16.msra.mxu0 0
  %226 = vmatprep.subr.bf16.mxu0 0
  %227 = vmatpush2.bf16.msra.mxu0 0
  %228 = vmatprep.subr.bf16.mxu0 0
  %229 = vmatpush2.bf16.msra.mxu0 0
  %230 = vmatprep.subr.bf16.mxu0 0
  %231 = vmatpush2.bf16.msra.mxu0 %v165
  %232 = vmatprep.mubr.bf16.mxu0 %v177
  %233 = vmatmul.mubr.bf16.gmra.mxu0 %v97
  %v234 = vpop.f32.mrf.mxu0
  %v235 = vadd.f32 0.0, %v234
  %v236 = vpop.f32.mrf.mxu0
  %v237 = vpop.f32.mrf.mxu0
  %v238 = vadd.f32 0.0, %v237
  %v239 = vpop.f32.mrf.mxu0
  %240 = vmatprep.mubr.bf16.mxu0 %v180
  %241 = vmatmul.mubr.bf16.gmra.mxu0 %v99
  %v242 = vpop.f32.mrf.mxu0
  %v243 = vadd.f32 0.0, %v242
  %v244 = vpop.f32.mrf.mxu0
  %v245 = vpop.f32.mrf.mxu0
  %v246 = vadd.f32 0.0, %v245
  %v247 = vpop.f32.mrf.mxu0
  %248 = vmatprep.mubr.bf16.mxu0 %v183
  %249 = vmatmul.mubr.bf16.gmra.mxu0 %v101
  %v250 = vpop.f32.mrf.mxu0
  %v251 = vadd.f32 0.0, %v250
  %v252 = vpop.f32.mrf.mxu0
  %v253 = vpop.f32.mrf.mxu0
  %v254 = vadd.f32 0.0, %v253
  %v255 = vpop.f32.mrf.mxu0
  %256 = vmatprep.mubr.bf16.mxu0 %v186
  %257 = vmatmul.mubr.bf16.gmra.mxu0 %v103
  %v258 = vpop.f32.mrf.mxu0
  %v259 = vadd.f32 0.0, %v258
  %v260 = vpop.f32.mrf.mxu0
  %v261 = vpop.f32.mrf.mxu0
  %v262 = vadd.f32 0.0, %v261
  %v263 = vpop.f32.mrf.mxu0
  %264 = vmatprep.mubr.bf16.mxu0 %v189
  %265 = vmatmul.mubr.bf16.gmra.mxu0 %v105
  %v266 = vpop.f32.mrf.mxu0
  %v267 = vadd.f32 0.0, %v266
  %v268 = vpop.f32.mrf.mxu0
  %v269 = vpop.f32.mrf.mxu0
  %v270 = vadd.f32 0.0, %v269
  %v271 = vpop.f32.mrf.mxu0
  %272 = vmatprep.mubr.bf16.mxu0 %v192
  %273 = vmatmul.mubr.bf16.gmra.mxu0 %v107
  %v274 = vpop.f32.mrf.mxu0
  %v275 = vadd.f32 0.0, %v274
  %v276 = vpop.f32.mrf.mxu0
  %v277 = vpop.f32.mrf.mxu0
  %v278 = vadd.f32 0.0, %v277
  %v279 = vpop.f32.mrf.mxu0
  %280 = vmatprep.mubr.bf16.mxu0 %v195
  %281 = vmatmul.mubr.bf16.gmra.mxu0 %v109
  %v282 = vpop.f32.mrf.mxu0
  %v283 = vadd.f32 0.0, %v282
  %v284 = vpop.f32.mrf.mxu0
  %v285 = vpop.f32.mrf.mxu0
  %v286 = vadd.f32 0.0, %v285
  %v287 = vpop.f32.mrf.mxu0
  %288 = vmatprep.mubr.bf16.mxu0 %v198
  %289 = vmatmul.mubr.bf16.gmra.mxu0 %v111
  %v290 = vpop.f32.mrf.mxu0
  %v291 = vadd.f32 0.0, %v290
  %v292 = vpop.f32.mrf.mxu0
  %v293 = vpop.f32.mrf.mxu0
  %v294 = vadd.f32 0.0, %v293
  %v295 = vpop.f32.mrf.mxu0
  %296 = vdwg.mxu0
  %s297 = scalar_lea.vmem %s0, 128
  %v298 = vld [vmem:[%s297] sm:$0xff]
  %v299 = vld [vmem:[%s297 + $0x8] sm:$0xff]
  %v300 = vld [vmem:[%s297 + $0x10] sm:$0xff]
  %v301 = vld [vmem:[%s297 + $0x18] sm:$0xff]
  %v302 = vld [vmem:[%s297 + $0x20] sm:$0xff]
  %v303 = vld [vmem:[%s297 + $0x28] sm:$0xff]
  %v304 = vld [vmem:[%s297 + $0x30] sm:$0xff]
  %v305 = vld [vmem:[%s297 + $0x38] sm:$0xff]
  %v306 = vld [vmem:[%s297 + $0x40] sm:$0xff]
  %v307 = vld [vmem:[%s297 + $0x48] sm:$0xff]
  %v308 = vld [vmem:[%s297 + $0x50] sm:$0xff]
  %v309 = vld [vmem:[%s297 + $0x58] sm:$0xff]
  %v310 = vld [vmem:[%s297 + $0x60] sm:$0xff]
  %v311 = vld [vmem:[%s297 + $0x68] sm:$0xff]
  %v312 = vld [vmem:[%s297 + $0x70] sm:$0xff]
  %v313 = vld [vmem:[%s297 + $0x78] sm:$0xff]
  %v330 = vunpack.c.l.b16 %v298
  %v331 = vunpack.c.h.b16 %v298
  %v332 = vunpack.c.l.b16 %v299
  %v333 = vunpack.c.h.b16 %v299
  %v334 = vunpack.c.l.b16 %v300
  %v335 = vunpack.c.h.b16 %v300
  %v336 = vunpack.c.l.b16 %v301
  %v337 = vunpack.c.h.b16 %v301
  %v338 = vunpack.c.l.b16 %v302
  %v339 = vunpack.c.h.b16 %v302
  %v340 = vunpack.c.l.b16 %v303
  %v341 = vunpack.c.h.b16 %v303
  %v342 = vunpack.c.l.b16 %v304
  %v343 = vunpack.c.h.b16 %v304
  %v344 = vunpack.c.l.b16 %v305
  %v345 = vunpack.c.h.b16 %v305
  %v346 = vunpack.c.l.b16 %v306
  %v347 = vunpack.c.h.b16 %v306
  %v348 = vunpack.c.l.b16 %v307
  %v349 = vunpack.c.h.b16 %v307
  %v350 = vunpack.c.l.b16 %v308
  %v351 = vunpack.c.h.b16 %v308
  %v352 = vunpack.c.l.b16 %v309
  %v353 = vunpack.c.h.b16 %v309
  %v354 = vunpack.c.l.b16 %v310
  %v355 = vunpack.c.h.b16 %v310
  %v356 = vunpack.c.l.b16 %v311
  %v357 = vunpack.c.h.b16 %v311
  %v358 = vunpack.c.l.b16 %v312
  %v359 = vunpack.c.h.b16 %v312
  %v360 = vunpack.c.l.b16 %v313
  %v361 = vunpack.c.h.b16 %v313
  %v362 = vpack.c.b16 %v332, %v330
  %v363 = vpack.c.b16 %v333, %v331
  %v364 = vpack.c.b16 %v336, %v334
  %v365 = vpack.c.b16 %v337, %v335
  %v366 = vpack.c.b16 %v340, %v338
  %v367 = vpack.c.b16 %v341, %v339
  %v368 = vpack.c.b16 %v344, %v342
  %v369 = vpack.c.b16 %v345, %v343
  %v370 = vpack.c.b16 %v348, %v346
  %v371 = vpack.c.b16 %v349, %v347
  %v372 = vpack.c.b16 %v352, %v350
  %v373 = vpack.c.b16 %v353, %v351
  %v374 = vpack.c.b16 %v356, %v354
  %v375 = vpack.c.b16 %v357, %v355
  %v376 = vpack.c.b16 %v360, %v358
  %v377 = vpack.c.b16 %v361, %v359
  %v387 = vsel %vm175, %v363, 0
  %v390 = vsel %vm175, %v365, 0
  %v393 = vsel %vm175, %v367, 0
  %v396 = vsel %vm175, %v369, 0
  %v399 = vsel %vm175, %v371, 0
  %v402 = vsel %vm175, %v373, 0
  %v405 = vsel %vm175, %v375, 0
  %v408 = vsel %vm175, %v377, 0
  %410 = vmatprep.subr.bf16.mxu0 0
  %411 = vmatpush1.bf16.msra.mxu0 %v164
  %412 = vmatprep.subr.bf16.mxu0 0
  %413 = vmatpush1.bf16.msra.mxu0 %v163
  %414 = vmatprep.subr.bf16.mxu0 0
  %415 = vmatpush1.bf16.msra.mxu0 %v162
  %416 = vmatprep.subr.bf16.mxu0 0
  %417 = vmatpush1.bf16.msra.mxu0 %v161
  %418 = vmatprep.subr.bf16.mxu0 0
  %419 = vmatpush1.bf16.msra.mxu0 %v160
  %420 = vmatprep.subr.bf16.mxu0 0
  %421 = vmatpush1.bf16.msra.mxu0 %v159
  %422 = vmatprep.subr.bf16.mxu0 0
  %423 = vmatpush1.bf16.msra.mxu0 %v158
  %424 = vmatprep.subr.bf16.mxu0 0
  %425 = vmatpush1.bf16.msra.mxu0 %v157
  %426 = vmatprep.subr.bf16.mxu0 0
  %427 = vmatpush2.bf16.msra.mxu0 0
  %428 = vmatprep.subr.bf16.mxu0 0
  %429 = vmatpush2.bf16.msra.mxu0 0
  %430 = vmatprep.subr.bf16.mxu0 0
  %431 = vmatpush2.bf16.msra.mxu0 0
  %432 = vmatprep.subr.bf16.mxu0 0
  %433 = vmatpush2.bf16.msra.mxu0 0
  %434 = vmatprep.subr.bf16.mxu0 0
  %435 = vmatpush2.bf16.msra.mxu0 0
  %436 = vmatprep.subr.bf16.mxu0 0
  %437 = vmatpush2.bf16.msra.mxu0 0
  %438 = vmatprep.subr.bf16.mxu0 0
  %439 = vmatpush2.bf16.msra.mxu0 0
  %440 = vmatprep.subr.bf16.mxu0 0
  %441 = vmatpush2.bf16.msra.mxu0 %v165
  %442 = vmatprep.mubr.bf16.mxu0 %v387
  %443 = vmatmul.mubr.bf16.gmra.mxu0 %v362
  %v444 = vpop.f32.mrf.mxu0
  %v445 = vadd.f32 0.0, %v444
  %v446 = vpop.f32.mrf.mxu0
  %v447 = vpop.f32.mrf.mxu0
  %v448 = vadd.f32 0.0, %v447
  %v449 = vpop.f32.mrf.mxu0
  %450 = vmatprep.mubr.bf16.mxu0 %v390
  %451 = vmatmul.mubr.bf16.gmra.mxu0 %v364
  %v452 = vpop.f32.mrf.mxu0
  %v453 = vadd.f32 0.0, %v452
  %v454 = vpop.f32.mrf.mxu0
  %v455 = vpop.f32.mrf.mxu0
  %v456 = vadd.f32 0.0, %v455
  %v457 = vpop.f32.mrf.mxu0
  %458 = vmatprep.mubr.bf16.mxu0 %v393
  %459 = vmatmul.mubr.bf16.gmra.mxu0 %v366
  %v460 = vpop.f32.mrf.mxu0
  %v461 = vadd.f32 0.0, %v460
  %v462 = vpop.f32.mrf.mxu0
  %v463 = vpop.f32.mrf.mxu0
  %v464 = vadd.f32 0.0, %v463
  %v465 = vpop.f32.mrf.mxu0
  %466 = vmatprep.mubr.bf16.mxu0 %v396
  %467 = vmatmul.mubr.bf16.gmra.mxu0 %v368
  %v468 = vpop.f32.mrf.mxu0
  %v469 = vadd.f32 0.0, %v468
  %v470 = vpop.f32.mrf.mxu0
  %v471 = vpop.f32.mrf.mxu0
  %v472 = vadd.f32 0.0, %v471
  %v473 = vpop.f32.mrf.mxu0
  %474 = vmatprep.mubr.bf16.mxu0 %v399
  %475 = vmatmul.mubr.bf16.gmra.mxu0 %v370
  %v476 = vpop.f32.mrf.mxu0
  %v477 = vadd.f32 0.0, %v476
  %v478 = vpop.f32.mrf.mxu0
  %v479 = vpop.f32.mrf.mxu0
  %v480 = vadd.f32 0.0, %v479
  %v481 = vpop.f32.mrf.mxu0
  %482 = vmatprep.mubr.bf16.mxu0 %v402
  %483 = vmatmul.mubr.bf16.gmra.mxu0 %v372
  %v484 = vpop.f32.mrf.mxu0
  %v485 = vadd.f32 0.0, %v484
  %v486 = vpop.f32.mrf.mxu0
  %v487 = vpop.f32.mrf.mxu0
  %v488 = vadd.f32 0.0, %v487
  %v489 = vpop.f32.mrf.mxu0
  %490 = vmatprep.mubr.bf16.mxu0 %v405
  %491 = vmatmul.mubr.bf16.gmra.mxu0 %v374
  %v492 = vpop.f32.mrf.mxu0
  %v493 = vadd.f32 0.0, %v492
  %v494 = vpop.f32.mrf.mxu0
  %v495 = vpop.f32.mrf.mxu0
  %v496 = vadd.f32 0.0, %v495
  %v497 = vpop.f32.mrf.mxu0
  %498 = vmatprep.mubr.bf16.mxu0 %v408
  %499 = vmatmul.mubr.bf16.gmra.mxu0 %v376
  %v500 = vpop.f32.mrf.mxu0
  %v501 = vadd.f32 0.0, %v500
  %v502 = vpop.f32.mrf.mxu0
  %v503 = vpop.f32.mrf.mxu0
  %v504 = vadd.f32 0.0, %v503
  %v505 = vpop.f32.mrf.mxu0
  %506 = vdwg.mxu0
  %v507 = vmax.f32 %v235, %v445
  %v508 = vmax.f32 %v238, %v448
  %v509 = vmax.f32 %v243, %v453
  %v510 = vmax.f32 %v246, %v456
  %v511 = vmax.f32 %v251, %v461
  %v512 = vmax.f32 %v254, %v464
  %v513 = vmax.f32 %v259, %v469
  %v514 = vmax.f32 %v262, %v472
  %v515 = vmax.f32 %v267, %v477
  %v516 = vmax.f32 %v270, %v480
  %v517 = vmax.f32 %v275, %v485
  %v518 = vmax.f32 %v278, %v488
  %v519 = vmax.f32 %v283, %v493
  %v520 = vmax.f32 %v286, %v496
  %v521 = vmax.f32 %v291, %v501
  %v522 = vmax.f32 %v294, %v504
  %s523 = scalar_lea.vmem %s0, 256
  %v524 = vld [vmem:[%s523] sm:$0xff]
  %v525 = vld [vmem:[%s523 + $0x8] sm:$0xff]
  %v526 = vld [vmem:[%s523 + $0x10] sm:$0xff]
  %v527 = vld [vmem:[%s523 + $0x18] sm:$0xff]
  %v528 = vld [vmem:[%s523 + $0x20] sm:$0xff]
  %v529 = vld [vmem:[%s523 + $0x28] sm:$0xff]
  %v530 = vld [vmem:[%s523 + $0x30] sm:$0xff]
  %v531 = vld [vmem:[%s523 + $0x38] sm:$0xff]
  %v532 = vld [vmem:[%s523 + $0x40] sm:$0xff]
  %v533 = vld [vmem:[%s523 + $0x48] sm:$0xff]
  %v534 = vld [vmem:[%s523 + $0x50] sm:$0xff]
  %v535 = vld [vmem:[%s523 + $0x58] sm:$0xff]
  %v536 = vld [vmem:[%s523 + $0x60] sm:$0xff]
  %v537 = vld [vmem:[%s523 + $0x68] sm:$0xff]
  %v538 = vld [vmem:[%s523 + $0x70] sm:$0xff]
  %v539 = vld [vmem:[%s523 + $0x78] sm:$0xff]
  %v556 = vunpack.c.l.b16 %v524
  %v557 = vunpack.c.h.b16 %v524
  %v558 = vunpack.c.l.b16 %v525
  %v559 = vunpack.c.h.b16 %v525
  %v560 = vunpack.c.l.b16 %v526
  %v561 = vunpack.c.h.b16 %v526
  %v562 = vunpack.c.l.b16 %v527
  %v563 = vunpack.c.h.b16 %v527
  %v564 = vunpack.c.l.b16 %v528
  %v565 = vunpack.c.h.b16 %v528
  %v566 = vunpack.c.l.b16 %v529
  %v567 = vunpack.c.h.b16 %v529
  %v568 = vunpack.c.l.b16 %v530
  %v569 = vunpack.c.h.b16 %v530
  %v570 = vunpack.c.l.b16 %v531
  %v571 = vunpack.c.h.b16 %v531
  %v572 = vunpack.c.l.b16 %v532
  %v573 = vunpack.c.h.b16 %v532
  %v574 = vunpack.c.l.b16 %v533
  %v575 = vunpack.c.h.b16 %v533
  %v576 = vunpack.c.l.b16 %v534
  %v577 = vunpack.c.h.b16 %v534
  %v578 = vunpack.c.l.b16 %v535
  %v579 = vunpack.c.h.b16 %v535
  %v580 = vunpack.c.l.b16 %v536
  %v581 = vunpack.c.h.b16 %v536
  %v582 = vunpack.c.l.b16 %v537
  %v583 = vunpack.c.h.b16 %v537
  %v584 = vunpack.c.l.b16 %v538
  %v585 = vunpack.c.h.b16 %v538
  %v586 = vunpack.c.l.b16 %v539
  %v587 = vunpack.c.h.b16 %v539
  %v588 = vpack.c.b16 %v558, %v556
  %v589 = vpack.c.b16 %v559, %v557
  %v590 = vpack.c.b16 %v562, %v560
  %v591 = vpack.c.b16 %v563, %v561
  %v592 = vpack.c.b16 %v566, %v564
  %v593 = vpack.c.b16 %v567, %v565
  %v594 = vpack.c.b16 %v570, %v568
  %v595 = vpack.c.b16 %v571, %v569
  %v596 = vpack.c.b16 %v574, %v572
  %v597 = vpack.c.b16 %v575, %v573
  %v598 = vpack.c.b16 %v578, %v576
  %v599 = vpack.c.b16 %v579, %v577
  %v600 = vpack.c.b16 %v582, %v580
  %v601 = vpack.c.b16 %v583, %v581
  %v602 = vpack.c.b16 %v586, %v584
  %v603 = vpack.c.b16 %v587, %v585
  %v613 = vsel %vm175, %v589, 0
  %v616 = vsel %vm175, %v591, 0
  %v619 = vsel %vm175, %v593, 0
  %v622 = vsel %vm175, %v595, 0
  %v625 = vsel %vm175, %v597, 0
  %v628 = vsel %vm175, %v599, 0
  %v631 = vsel %vm175, %v601, 0
  %v634 = vsel %vm175, %v603, 0
  %636 = vmatprep.subr.bf16.mxu0 0
  %637 = vmatpush1.bf16.msra.mxu0 %v164
  %638 = vmatprep.subr.bf16.mxu0 0
  %639 = vmatpush1.bf16.msra.mxu0 %v163
  %640 = vmatprep.subr.bf16.mxu0 0
  %641 = vmatpush1.bf16.msra.mxu0 %v162
  %642 = vmatprep.subr.bf16.mxu0 0
  %643 = vmatpush1.bf16.msra.mxu0 %v161
  %644 = vmatprep.subr.bf16.mxu0 0
  %645 = vmatpush1.bf16.msra.mxu0 %v160
  %646 = vmatprep.subr.bf16.mxu0 0
  %647 = vmatpush1.bf16.msra.mxu0 %v159
  %648 = vmatprep.subr.bf16.mxu0 0
  %649 = vmatpush1.bf16.msra.mxu0 %v158
  %650 = vmatprep.subr.bf16.mxu0 0
  %651 = vmatpush1.bf16.msra.mxu0 %v157
  %652 = vmatprep.subr.bf16.mxu0 0
  %653 = vmatpush2.bf16.msra.mxu0 0
  %654 = vmatprep.subr.bf16.mxu0 0
  %655 = vmatpush2.bf16.msra.mxu0 0
  %656 = vmatprep.subr.bf16.mxu0 0
  %657 = vmatpush2.bf16.msra.mxu0 0
  %658 = vmatprep.subr.bf16.mxu0 0
  %659 = vmatpush2.bf16.msra.mxu0 0
  %660 = vmatprep.subr.bf16.mxu0 0
  %661 = vmatpush2.bf16.msra.mxu0 0
  %662 = vmatprep.subr.bf16.mxu0 0
  %663 = vmatpush2.bf16.msra.mxu0 0
  %664 = vmatprep.subr.bf16.mxu0 0
  %665 = vmatpush2.bf16.msra.mxu0 0
  %666 = vmatprep.subr.bf16.mxu0 0
  %667 = vmatpush2.bf16.msra.mxu0 %v165
  %668 = vmatprep.mubr.bf16.mxu0 %v613
  %669 = vmatmul.mubr.bf16.gmra.mxu0 %v588
  %v670 = vpop.f32.mrf.mxu0
  %v671 = vadd.f32 0.0, %v670
  %v672 = vpop.f32.mrf.mxu0
  %v673 = vpop.f32.mrf.mxu0
  %v674 = vadd.f32 0.0, %v673
  %v675 = vpop.f32.mrf.mxu0
  %676 = vmatprep.mubr.bf16.mxu0 %v616
  %677 = vmatmul.mubr.bf16.gmra.mxu0 %v590
  %v678 = vpop.f32.mrf.mxu0
  %v679 = vadd.f32 0.0, %v678
  %v680 = vpop.f32.mrf.mxu0
  %v681 = vpop.f32.mrf.mxu0
  %v682 = vadd.f32 0.0, %v681
  %v683 = vpop.f32.mrf.mxu0
  %684 = vmatprep.mubr.bf16.mxu0 %v619
  %685 = vmatmul.mubr.bf16.gmra.mxu0 %v592
  %v686 = vpop.f32.mrf.mxu0
  %v687 = vadd.f32 0.0, %v686
  %v688 = vpop.f32.mrf.mxu0
  %v689 = vpop.f32.mrf.mxu0
  %v690 = vadd.f32 0.0, %v689
  %v691 = vpop.f32.mrf.mxu0
  %692 = vmatprep.mubr.bf16.mxu0 %v622
  %693 = vmatmul.mubr.bf16.gmra.mxu0 %v594
  %v694 = vpop.f32.mrf.mxu0
  %v695 = vadd.f32 0.0, %v694
  %v696 = vpop.f32.mrf.mxu0
  %v697 = vpop.f32.mrf.mxu0
  %v698 = vadd.f32 0.0, %v697
  %v699 = vpop.f32.mrf.mxu0
  %700 = vmatprep.mubr.bf16.mxu0 %v625
  %701 = vmatmul.mubr.bf16.gmra.mxu0 %v596
  %v702 = vpop.f32.mrf.mxu0
  %v703 = vadd.f32 0.0, %v702
  %v704 = vpop.f32.mrf.mxu0
  %v705 = vpop.f32.mrf.mxu0
  %v706 = vadd.f32 0.0, %v705
  %v707 = vpop.f32.mrf.mxu0
  %708 = vmatprep.mubr.bf16.mxu0 %v628
  %709 = vmatmul.mubr.bf16.gmra.mxu0 %v598
  %v710 = vpop.f32.mrf.mxu0
  %v711 = vadd.f32 0.0, %v710
  %v712 = vpop.f32.mrf.mxu0
  %v713 = vpop.f32.mrf.mxu0
  %v714 = vadd.f32 0.0, %v713
  %v715 = vpop.f32.mrf.mxu0
  %716 = vmatprep.mubr.bf16.mxu0 %v631
  %717 = vmatmul.mubr.bf16.gmra.mxu0 %v600
  %v718 = vpop.f32.mrf.mxu0
  %v719 = vadd.f32 0.0, %v718
  %v720 = vpop.f32.mrf.mxu0
  %v721 = vpop.f32.mrf.mxu0
  %v722 = vadd.f32 0.0, %v721
  %v723 = vpop.f32.mrf.mxu0
  %724 = vmatprep.mubr.bf16.mxu0 %v634
  %725 = vmatmul.mubr.bf16.gmra.mxu0 %v602
  %v726 = vpop.f32.mrf.mxu0
  %v727 = vadd.f32 0.0, %v726
  %v728 = vpop.f32.mrf.mxu0
  %v729 = vpop.f32.mrf.mxu0
  %v730 = vadd.f32 0.0, %v729
  %v731 = vpop.f32.mrf.mxu0
  %732 = vdwg.mxu0
  %s733 = scalar_lea.vmem %s0, 384
  %v734 = vld [vmem:[%s733] sm:$0xff]
  %v735 = vld [vmem:[%s733 + $0x8] sm:$0xff]
  %v736 = vld [vmem:[%s733 + $0x10] sm:$0xff]
  %v737 = vld [vmem:[%s733 + $0x18] sm:$0xff]
  %v738 = vld [vmem:[%s733 + $0x20] sm:$0xff]
  %v739 = vld [vmem:[%s733 + $0x28] sm:$0xff]
  %v740 = vld [vmem:[%s733 + $0x30] sm:$0xff]
  %v741 = vld [vmem:[%s733 + $0x38] sm:$0xff]
  %v742 = vld [vmem:[%s733 + $0x40] sm:$0xff]
  %v743 = vld [vmem:[%s733 + $0x48] sm:$0xff]
  %v744 = vld [vmem:[%s733 + $0x50] sm:$0xff]
  %v745 = vld [vmem:[%s733 + $0x58] sm:$0xff]
  %v746 = vld [vmem:[%s733 + $0x60] sm:$0xff]
  %v747 = vld [vmem:[%s733 + $0x68] sm:$0xff]
  %v748 = vld [vmem:[%s733 + $0x70] sm:$0xff]
  %v749 = vld [vmem:[%s733 + $0x78] sm:$0xff]
  %v766 = vunpack.c.l.b16 %v734
  %v767 = vunpack.c.h.b16 %v734
  %v768 = vunpack.c.l.b16 %v735
  %v769 = vunpack.c.h.b16 %v735
  %v770 = vunpack.c.l.b16 %v736
  %v771 = vunpack.c.h.b16 %v736
  %v772 = vunpack.c.l.b16 %v737
  %v773 = vunpack.c.h.b16 %v737
  %v774 = vunpack.c.l.b16 %v738
  %v775 = vunpack.c.h.b16 %v738
  %v776 = vunpack.c.l.b16 %v739
  %v777 = vunpack.c.h.b16 %v739
  %v778 = vunpack.c.l.b16 %v740
  %v779 = vunpack.c.h.b16 %v740
  %v780 = vunpack.c.l.b16 %v741
  %v781 = vunpack.c.h.b16 %v741
  %v782 = vunpack.c.l.b16 %v742
  %v783 = vunpack.c.h.b16 %v742
  %v784 = vunpack.c.l.b16 %v743
  %v785 = vunpack.c.h.b16 %v743
  %v786 = vunpack.c.l.b16 %v744
  %v787 = vunpack.c.h.b16 %v744
  %v788 = vunpack.c.l.b16 %v745
  %v789 = vunpack.c.h.b16 %v745
  %v790 = vunpack.c.l.b16 %v746
  %v791 = vunpack.c.h.b16 %v746
  %v792 = vunpack.c.l.b16 %v747
  %v793 = vunpack.c.h.b16 %v747
  %v794 = vunpack.c.l.b16 %v748
  %v795 = vunpack.c.h.b16 %v748
  %v796 = vunpack.c.l.b16 %v749
  %v797 = vunpack.c.h.b16 %v749
  %v798 = vpack.c.b16 %v768, %v766
  %v799 = vpack.c.b16 %v769, %v767
  %v800 = vpack.c.b16 %v772, %v770
  %v801 = vpack.c.b16 %v773, %v771
  %v802 = vpack.c.b16 %v776, %v774
  %v803 = vpack.c.b16 %v777, %v775
  %v804 = vpack.c.b16 %v780, %v778
  %v805 = vpack.c.b16 %v781, %v779
  %v806 = vpack.c.b16 %v784, %v782
  %v807 = vpack.c.b16 %v785, %v783
  %v808 = vpack.c.b16 %v788, %v786
  %v809 = vpack.c.b16 %v789, %v787
  %v810 = vpack.c.b16 %v792, %v790
  %v811 = vpack.c.b16 %v793, %v791
  %v812 = vpack.c.b16 %v796, %v794
  %v813 = vpack.c.b16 %v797, %v795
  %v823 = vsel %vm175, %v799, 0
  %v826 = vsel %vm175, %v801, 0
  %v829 = vsel %vm175, %v803, 0
  %v832 = vsel %vm175, %v805, 0
  %v835 = vsel %vm175, %v807, 0
  %v838 = vsel %vm175, %v809, 0
  %v841 = vsel %vm175, %v811, 0
  %v844 = vsel %vm175, %v813, 0
  %846 = vmatprep.subr.bf16.mxu0 0
  %847 = vmatpush1.bf16.msra.mxu0 %v164
  %848 = vmatprep.subr.bf16.mxu0 0
  %849 = vmatpush1.bf16.msra.mxu0 %v163
  %850 = vmatprep.subr.bf16.mxu0 0
  %851 = vmatpush1.bf16.msra.mxu0 %v162
  %852 = vmatprep.subr.bf16.mxu0 0
  %853 = vmatpush1.bf16.msra.mxu0 %v161
  %854 = vmatprep.subr.bf16.mxu0 0
  %855 = vmatpush1.bf16.msra.mxu0 %v160
  %856 = vmatprep.subr.bf16.mxu0 0
  %857 = vmatpush1.bf16.msra.mxu0 %v159
  %858 = vmatprep.subr.bf16.mxu0 0
  %859 = vmatpush1.bf16.msra.mxu0 %v158
  %860 = vmatprep.subr.bf16.mxu0 0
  %861 = vmatpush1.bf16.msra.mxu0 %v157
  %862 = vmatprep.subr.bf16.mxu0 0
  %863 = vmatpush2.bf16.msra.mxu0 0
  %864 = vmatprep.subr.bf16.mxu0 0
  %865 = vmatpush2.bf16.msra.mxu0 0
  %866 = vmatprep.subr.bf16.mxu0 0
  %867 = vmatpush2.bf16.msra.mxu0 0
  %868 = vmatprep.subr.bf16.mxu0 0
  %869 = vmatpush2.bf16.msra.mxu0 0
  %870 = vmatprep.subr.bf16.mxu0 0
  %871 = vmatpush2.bf16.msra.mxu0 0
  %872 = vmatprep.subr.bf16.mxu0 0
  %873 = vmatpush2.bf16.msra.mxu0 0
  %874 = vmatprep.subr.bf16.mxu0 0
  %875 = vmatpush2.bf16.msra.mxu0 0
  %876 = vmatprep.subr.bf16.mxu0 0
  %877 = vmatpush2.bf16.msra.mxu0 %v165
  %878 = vmatprep.mubr.bf16.mxu0 %v823
  %879 = vmatmul.mubr.bf16.gmra.mxu0 %v798
  %v880 = vpop.f32.mrf.mxu0
  %v881 = vadd.f32 0.0, %v880
  %v882 = vpop.f32.mrf.mxu0
  %v883 = vpop.f32.mrf.mxu0
  %v884 = vadd.f32 0.0, %v883
  %v885 = vpop.f32.mrf.mxu0
  %886 = vmatprep.mubr.bf16.mxu0 %v826
  %887 = vmatmul.mubr.bf16.gmra.mxu0 %v800
  %v888 = vpop.f32.mrf.mxu0
  %v889 = vadd.f32 0.0, %v888
  %v890 = vpop.f32.mrf.mxu0
  %v891 = vpop.f32.mrf.mxu0
  %v892 = vadd.f32 0.0, %v891
  %v893 = vpop.f32.mrf.mxu0
  %894 = vmatprep.mubr.bf16.mxu0 %v829
  %895 = vmatmul.mubr.bf16.gmra.mxu0 %v802
  %v896 = vpop.f32.mrf.mxu0
  %v897 = vadd.f32 0.0, %v896
  %v898 = vpop.f32.mrf.mxu0
  %v899 = vpop.f32.mrf.mxu0
  %v900 = vadd.f32 0.0, %v899
  %v901 = vpop.f32.mrf.mxu0
  %902 = vmatprep.mubr.bf16.mxu0 %v832
  %903 = vmatmul.mubr.bf16.gmra.mxu0 %v804
  %v904 = vpop.f32.mrf.mxu0
  %v905 = vadd.f32 0.0, %v904
  %v906 = vpop.f32.mrf.mxu0
  %v907 = vpop.f32.mrf.mxu0
  %v908 = vadd.f32 0.0, %v907
  %v909 = vpop.f32.mrf.mxu0
  %910 = vmatprep.mubr.bf16.mxu0 %v835
  %911 = vmatmul.mubr.bf16.gmra.mxu0 %v806
  %v912 = vpop.f32.mrf.mxu0
  %v913 = vadd.f32 0.0, %v912
  %v914 = vpop.f32.mrf.mxu0
  %v915 = vpop.f32.mrf.mxu0
  %v916 = vadd.f32 0.0, %v915
  %v917 = vpop.f32.mrf.mxu0
  %918 = vmatprep.mubr.bf16.mxu0 %v838
  %919 = vmatmul.mubr.bf16.gmra.mxu0 %v808
  %v920 = vpop.f32.mrf.mxu0
  %v921 = vadd.f32 0.0, %v920
  %v922 = vpop.f32.mrf.mxu0
  %v923 = vpop.f32.mrf.mxu0
  %v924 = vadd.f32 0.0, %v923
  %v925 = vpop.f32.mrf.mxu0
  %926 = vmatprep.mubr.bf16.mxu0 %v841
  %927 = vmatmul.mubr.bf16.gmra.mxu0 %v810
  %v928 = vpop.f32.mrf.mxu0
  %v929 = vadd.f32 0.0, %v928
  %v930 = vpop.f32.mrf.mxu0
  %v931 = vpop.f32.mrf.mxu0
  %v932 = vadd.f32 0.0, %v931
  %v933 = vpop.f32.mrf.mxu0
  %934 = vmatprep.mubr.bf16.mxu0 %v844
  %935 = vmatmul.mubr.bf16.gmra.mxu0 %v812
  %v936 = vpop.f32.mrf.mxu0
  %v937 = vadd.f32 0.0, %v936
  %v938 = vpop.f32.mrf.mxu0
  %v939 = vpop.f32.mrf.mxu0
  %v940 = vadd.f32 0.0, %v939
  %v941 = vpop.f32.mrf.mxu0
  %942 = vdwg.mxu0
  %v943 = vmax.f32 %v671, %v881
  %v944 = vmax.f32 %v674, %v884
  %v945 = vmax.f32 %v679, %v889
  %v946 = vmax.f32 %v682, %v892
  %v947 = vmax.f32 %v687, %v897
  %v948 = vmax.f32 %v690, %v900
  %v949 = vmax.f32 %v695, %v905
  %v950 = vmax.f32 %v698, %v908
  %v951 = vmax.f32 %v703, %v913
  %v952 = vmax.f32 %v706, %v916
  %v953 = vmax.f32 %v711, %v921
  %v954 = vmax.f32 %v714, %v924
  %v955 = vmax.f32 %v719, %v929
  %v956 = vmax.f32 %v722, %v932
  %v957 = vmax.f32 %v727, %v937
  %v958 = vmax.f32 %v730, %v940
  %v959 = vmax.f32 %v507, %v943
  %v960 = vmax.f32 %v508, %v944
  %v961 = vmax.f32 %v509, %v945
  %v962 = vmax.f32 %v510, %v946
  %v963 = vmax.f32 %v511, %v947
  %v964 = vmax.f32 %v512, %v948
  %v965 = vmax.f32 %v513, %v949
  %v966 = vmax.f32 %v514, %v950
  %v967 = vmax.f32 %v515, %v951
  %v968 = vmax.f32 %v516, %v952
  %v969 = vmax.f32 %v517, %v953
  %v970 = vmax.f32 %v518, %v954
  %v971 = vmax.f32 %v519, %v955
  %v972 = vmax.f32 %v520, %v956
  %v973 = vmax.f32 %v521, %v957
  %v974 = vmax.f32 %v522, %v958
  %v975 = vld [vmem:[%s2] sm:$0x1]
  %v977 = vlaneseq
  %v978 = vshrl.u32 %v977, 7
  %v979 = vsub.s32 0, %v978
  %v980 = vrot.slane %v975, %v979
  %v982 = vadd.f32 %v959, %v980
  %v983 = vadd.f32 %v960, %v980
  %v984 = vadd.f32 %v961, %v980
  %v985 = vadd.f32 %v962, %v980
  %v986 = vadd.f32 %v963, %v980
  %v987 = vadd.f32 %v964, %v980
  %v988 = vadd.f32 %v965, %v980
  %v989 = vadd.f32 %v966, %v980
  %v990 = vadd.f32 %v967, %v980
  %v991 = vadd.f32 %v968, %v980
  %v992 = vadd.f32 %v969, %v980
  %v993 = vadd.f32 %v970, %v980
  %v994 = vadd.f32 %v971, %v980
  %v995 = vadd.f32 %v972, %v980
  %v996 = vadd.f32 %v973, %v980
  %v997 = vadd.f32 %v974, %v980
  %v998 = vmax.f32 %v982, 0.0
  %v999 = vmax.f32 %v983, 0.0
  %v1000 = vmax.f32 %v984, 0.0
  %v1001 = vmax.f32 %v985, 0.0
  %v1002 = vmax.f32 %v986, 0.0
  %v1003 = vmax.f32 %v987, 0.0
  %v1004 = vmax.f32 %v988, 0.0
  %v1005 = vmax.f32 %v989, 0.0
  %v1006 = vmax.f32 %v990, 0.0
  %v1007 = vmax.f32 %v991, 0.0
  %v1008 = vmax.f32 %v992, 0.0
  %v1009 = vmax.f32 %v993, 0.0
  %v1010 = vmax.f32 %v994, 0.0
  %v1011 = vmax.f32 %v995, 0.0
  %v1012 = vmax.f32 %v996, 0.0
  %v1013 = vmax.f32 %v997, 0.0
  %v1014 = vpack.c.bf16 %v999, %v998
  %v1015 = vpack.c.bf16 %v1001, %v1000
  %v1016 = vpack.c.bf16 %v1003, %v1002
  %v1017 = vpack.c.bf16 %v1005, %v1004
  %v1018 = vpack.c.bf16 %v1007, %v1006
  %v1019 = vpack.c.bf16 %v1009, %v1008
  %v1020 = vpack.c.bf16 %v1011, %v1010
  %v1021 = vpack.c.bf16 %v1013, %v1012
  %v1030 = vunpack.c.l.b16 %v1014
  %v1031 = vunpack.c.h.b16 %v1014
  %v1032 = vunpack.c.l.b16 %v1015
  %v1033 = vunpack.c.h.b16 %v1015
  %v1034 = vunpack.c.l.b16 %v1016
  %v1035 = vunpack.c.h.b16 %v1016
  %v1036 = vunpack.c.l.b16 %v1017
  %v1037 = vunpack.c.h.b16 %v1017
  %v1038 = vunpack.c.l.b16 %v1018
  %v1039 = vunpack.c.h.b16 %v1018
  %v1040 = vunpack.c.l.b16 %v1019
  %v1041 = vunpack.c.h.b16 %v1019
  %v1042 = vunpack.c.l.b16 %v1020
  %v1043 = vunpack.c.h.b16 %v1020
  %v1044 = vunpack.c.l.b16 %v1021
  %v1045 = vunpack.c.h.b16 %v1021
  %v1046 = vpack.c.b16 %v1030, %v1030
  %v1047 = vpack.c.b16 %v1031, %v1031
  %v1048 = vpack.c.b16 %v1032, %v1032
  %v1049 = vpack.c.b16 %v1033, %v1033
  %v1050 = vpack.c.b16 %v1034, %v1034
  %v1051 = vpack.c.b16 %v1035, %v1035
  %v1052 = vpack.c.b16 %v1036, %v1036
  %v1053 = vpack.c.b16 %v1037, %v1037
  %v1054 = vpack.c.b16 %v1038, %v1038
  %v1055 = vpack.c.b16 %v1039, %v1039
  %v1056 = vpack.c.b16 %v1040, %v1040
  %v1057 = vpack.c.b16 %v1041, %v1041
  %v1058 = vpack.c.b16 %v1042, %v1042
  %v1059 = vpack.c.b16 %v1043, %v1043
  %v1060 = vpack.c.b16 %v1044, %v1044
  %v1061 = vpack.c.b16 %v1045, %v1045
  %1078 = vst [vmem:[%s3] sm:$0xf] %v1046
  %1079 = vst [vmem:[%s3 + $0x4] sm:$0xf] %v1047
  %1080 = vst [vmem:[%s3 + $0x8] sm:$0xf] %v1048
  %1081 = vst [vmem:[%s3 + $0xc] sm:$0xf] %v1049
  %1082 = vst [vmem:[%s3 + $0x10] sm:$0xf] %v1050
  %1083 = vst [vmem:[%s3 + $0x14] sm:$0xf] %v1051
  %1084 = vst [vmem:[%s3 + $0x18] sm:$0xf] %v1052
  %1085 = vst [vmem:[%s3 + $0x1c] sm:$0xf] %v1053
  %1086 = vst [vmem:[%s3 + $0x20] sm:$0xf] %v1054
  %1087 = vst [vmem:[%s3 + $0x24] sm:$0xf] %v1055
  %1088 = vst [vmem:[%s3 + $0x28] sm:$0xf] %v1056
  %1089 = vst [vmem:[%s3 + $0x2c] sm:$0xf] %v1057
  %1090 = vst [vmem:[%s3 + $0x30] sm:$0xf] %v1058
  %1091 = vst [vmem:[%s3 + $0x34] sm:$0xf] %v1059
  %1092 = vst [vmem:[%s3 + $0x38] sm:$0xf] %v1060
  %1093 = vst [vmem:[%s3 + $0x3c] sm:$0xf] %v1061
  // Predicated region
  $region14: #{cnn_forward.4} parent=0 // pred_check
    _
  $region15: #{cnn_forward.4} parent=0 // pred_check_branch
    %1095 = sbr.rel (0) target = $region17
  $region16: #{cnn_forward.4} parent=0 // pred_region
    _
  $region17: #{cnn_forward.4} parent=0 // pred_fallthru
    _
  // Predicated region
  $region18: #{cnn_forward.4} parent=0 // pred_check
    _
  $region19: #{cnn_forward.4} parent=0 // pred_check_branch
    %1097 = sbr.rel (0) target = $region21
  $region20: #{cnn_forward.4} parent=0 // pred_region
    _
  $region21: #{cnn_forward.4} parent=0 // pred_fallthru
    _

// kernel: cnn_forward.5
$region0: #{cnn_forward.5}
  #allocation0 [shape = 'u32[]', space=smem, size = 0x4, offset = 0x4, fixed_abs, tag = 'smem constant byte address 0x4 - core index']
  #allocation1 [shape = 'u32[144,128]{1,0:T(1,128)}', space=vmem, size = 0x12000, scoped, tag = 'internal scratch']
  #allocation2 [shape = 'f32[8,1024]{1,0:T(8,128)}', space=vmem, size = 0x8000, scoped, tag = 'scratch operand']
  %s0 = inlined_call_operand.vmem [shape: bf16[8,2048], index: 0, kind: input, shape index: {}]
  %s1 = inlined_call_operand.vmem [shape: bf16[2048,1024], index: 1, kind: input, shape index: {}]
  %s2 = inlined_call_operand.vmem [shape: f32[1,1024], index: 2, kind: input, shape index: {}]
  %s3 = inlined_call_operand.vmem [shape: bf16[1024,1024], index: 3, kind: input, shape index: {}]
  %s4 = inlined_call_operand.vmem [shape: f32[1,1024], index: 4, kind: input, shape index: {}]
  %s5 = inlined_call_operand.vmem [shape: bf16[1024,128], index: 5, kind: input, shape index: {}]
  %s6 = inlined_call_operand.vmem [shape: f32[1,128], index: 6, kind: input, shape index: {}]
  %s7 = inlined_call_operand.vmem [shape: f32[8,128], index: 7, kind: output, shape index: {}]
  %s8 = sld [smem:[#allocation0]]
  $region69: #{cnn_forward.5} parent=0
    _
  %s10 = ssub.s32 1, %s8
  %s11 = scalar_select 0, %s10, %s8
  loop: start=0, step=1, limit=6
  $region2: #{cnn_forward.5} parent=0 // loop_pre_header
    _
  $region3: #{cnn_forward.5} parent=0 // loop_header
    %s13 = sphi 0, %s17
    %p14 = scmp.ge.s32.totalorder %s13, 6
    %s23 = sphi 0, %s25
    %s26 = sphi 0, %s23
    %s27 = sphi 0, %s26
    %s43 = sphi 0, %s27
    %s49 = sphi 0, %s51
    %s52 = sphi 0, %s49
    %s53 = sphi 0, %s52
    %s69 = sphi 0, %s53
    %s73 = sphi 0, %s73
    %s75 = sphi 0, %s73
    %s76 = sphi 0, %s75
    %s90 = sphi 0, %s76
    %s94 = sphi 0, %s94
    %s96 = sphi 0, %s94
    %s97 = sphi 0, %s96
    %s111 = sphi 0, %s97
    %s115 = sphi 0, %s115
    %s117 = sphi 0, %s115
    %s118 = sphi 0, %s117
    %s132 = sphi 0, %s118
    %s136 = sphi 0, %s136
    %s138 = sphi 0, %s136
    %s139 = sphi 0, %s138
    %s153 = sphi 0, %s139
    %s157 = sphi 0, %s157
    %s159 = sphi 0, %s157
    %s160 = sphi 0, %s159
    %s174 = sphi 0, %s160
    %s178 = sphi 0, %s178
    %s180 = sphi 0, %s178
    %s181 = sphi 0, %s180
    %s195 = sphi 0, %s181
  $region4: #{cnn_forward.5} parent=0 // loop_header_branch
    %16 = sbr.rel (%p14) target = $region8
  $region5: #{cnn_forward.5} parent=0 // loop_body
    %s18 = ssub.s32 %s13, 1
    %s19 = ssub.s32 %s13, 2
    %s20 = sadd.s32 %s13, 1
    %s21 = ssub.s32 %s13, %s20
    %p22 = scmp.eq.s32.totalorder %s21, 0
    %s24 = sadd.s32 %s23, 1
    %s25 = scalar_select %p22, %s23, %s24
    %p28 = pneg %p22
    %p29 = scmp.eq.s32.totalorder %s13, 3
    %p30 = por %p28, %p29
    %p31 = scmp.ne.s32.totalorder %s23, %s26
    %p32 = scmp.eq.s32.totalorder %s13, 0
    %p33 = por %p31, %p32
    %p34 = scmp.ne.s32.totalorder %s23, %s26
    %p35 = scmp.eq.s32.totalorder %s18, 3
    %p36 = por %p34, %p35
    %p37 = scmp.ne.s32.totalorder %s26, %s27
    %p38 = scmp.eq.s32.totalorder %s18, 0
    %p39 = por %p37, %p38
    %p40 = scmp.ne.s32.totalorder %s26, %s27
    %p41 = scmp.eq.s32.totalorder %s19, 3
    %p42 = por %p40, %p41
    %p44 = scmp.ne.s32.totalorder %s27, %s43
    %p45 = scmp.eq.s32.totalorder %s19, 0
    %p46 = por %p44, %p45
    %s47 = ssub.s32 %s13, %s20
    %p48 = scmp.eq.s32.totalorder %s47, 0
    %s50 = sadd.s32 %s49, 1
    %s51 = scalar_select %p48, %s49, %s50
    %p54 = pneg %p48
    %p55 = scmp.eq.s32.totalorder %s13, 3
    %p56 = por %p54, %p55
    %p57 = scmp.ne.s32.totalorder %s49, %s52
    %p58 = scmp.eq.s32.totalorder %s13, 0
    %p59 = por %p57, %p58
    %p60 = scmp.ne.s32.totalorder %s49, %s52
    %p61 = scmp.eq.s32.totalorder %s18, 3
    %p62 = por %p60, %p61
    %p63 = scmp.ne.s32.totalorder %s52, %s53
    %p64 = scmp.eq.s32.totalorder %s18, 0
    %p65 = por %p63, %p64
    %p66 = scmp.ne.s32.totalorder %s52, %s53
    %p67 = scmp.eq.s32.totalorder %s19, 3
    %p68 = por %p66, %p67
    %p70 = scmp.ne.s32.totalorder %s53, %s69
    %p71 = scmp.eq.s32.totalorder %s19, 0
    %p72 = por %p70, %p71
    %s74 = sadd.s32 %s73, 1
    %p77 = scmp.eq.s32.totalorder %s13, 3
    %p78 = scmp.ne.s32.totalorder %s73, %s75
    %p79 = scmp.eq.s32.totalorder %s13, 0
    %p80 = por %p78, %p79
    %p81 = scmp.ne.s32.totalorder %s73, %s75
    %p82 = scmp.eq.s32.totalorder %s18, 3
    %p83 = por %p81, %p82
    %p84 = scmp.ne.s32.totalorder %s75, %s76
    %p85 = scmp.eq.s32.totalorder %s18, 0
    %p86 = por %p84, %p85
    %p87 = scmp.ne.s32.totalorder %s75, %s76
    %p88 = scmp.eq.s32.totalorder %s19, 3
    %p89 = por %p87, %p88
    %p91 = scmp.ne.s32.totalorder %s76, %s90
    %p92 = scmp.eq.s32.totalorder %s19, 0
    %p93 = por %p91, %p92
    %s95 = sadd.s32 %s94, 1
    %p98 = scmp.eq.s32.totalorder %s13, 3
    %p99 = scmp.ne.s32.totalorder %s94, %s96
    %p100 = scmp.eq.s32.totalorder %s13, 0
    %p101 = por %p99, %p100
    %p102 = scmp.ne.s32.totalorder %s94, %s96
    %p103 = scmp.eq.s32.totalorder %s18, 3
    %p104 = por %p102, %p103
    %p105 = scmp.ne.s32.totalorder %s96, %s97
    %p106 = scmp.eq.s32.totalorder %s18, 0
    %p107 = por %p105, %p106
    %p108 = scmp.ne.s32.totalorder %s96, %s97
    %p109 = scmp.eq.s32.totalorder %s19, 3
    %p110 = por %p108, %p109
    %p112 = scmp.ne.s32.totalorder %s97, %s111
    %p113 = scmp.eq.s32.totalorder %s19, 0
    %p114 = por %p112, %p113
    %s116 = sadd.s32 %s115, 1
    %p119 = scmp.eq.s32.totalorder %s13, 3
    %p120 = scmp.ne.s32.totalorder %s115, %s117
    %p121 = scmp.eq.s32.totalorder %s13, 0
    %p122 = por %p120, %p121
    %p123 = scmp.ne.s32.totalorder %s115, %s117
    %p124 = scmp.eq.s32.totalorder %s18, 3
    %p125 = por %p123, %p124
    %p126 = scmp.ne.s32.totalorder %s117, %s118
    %p127 = scmp.eq.s32.totalorder %s18, 0
    %p128 = por %p126, %p127
    %p129 = scmp.ne.s32.totalorder %s117, %s118
    %p130 = scmp.eq.s32.totalorder %s19, 3
    %p131 = por %p129, %p130
    %p133 = scmp.ne.s32.totalorder %s118, %s132
    %p134 = scmp.eq.s32.totalorder %s19, 0
    %p135 = por %p133, %p134
    %s137 = sadd.s32 %s136, 1
    %p140 = scmp.eq.s32.totalorder %s13, 3
    %p141 = scmp.ne.s32.totalorder %s136, %s138
    %p142 = scmp.eq.s32.totalorder %s13, 0
    %p143 = por %p141, %p142
    %p144 = scmp.ne.s32.totalorder %s136, %s138
    %p145 = scmp.eq.s32.totalorder %s18, 3
    %p146 = por %p144, %p145
    %p147 = scmp.ne.s32.totalorder %s138, %s139
    %p148 = scmp.eq.s32.totalorder %s18, 0
    %p149 = por %p147, %p148
    %p150 = scmp.ne.s32.totalorder %s138, %s139
    %p151 = scmp.eq.s32.totalorder %s19, 3
    %p152 = por %p150, %p151
    %p154 = scmp.ne.s32.totalorder %s139, %s153
    %p155 = scmp.eq.s32.totalorder %s19, 0
    %p156 = por %p154, %p155
    %s158 = sadd.s32 %s157, 1
    %p161 = scmp.eq.s32.totalorder %s13, 3
    %p162 = scmp.ne.s32.totalorder %s157, %s159
    %p163 = scmp.eq.s32.totalorder %s13, 0
    %p164 = por %p162, %p163
    %p165 = scmp.ne.s32.totalorder %s157, %s159
    %p166 = scmp.eq.s32.totalorder %s18, 3
    %p167 = por %p165, %p166
    %p168 = scmp.ne.s32.totalorder %s159, %s160
    %p169 = scmp.eq.s32.totalorder %s18, 0
    %p170 = por %p168, %p169
    %p171 = scmp.ne.s32.totalorder %s159, %s160
    %p172 = scmp.eq.s32.totalorder %s19, 3
    %p173 = por %p171, %p172
    %p175 = scmp.ne.s32.totalorder %s160, %s174
    %p176 = scmp.eq.s32.totalorder %s19, 0
    %p177 = por %p175, %p176
    %s179 = sadd.s32 %s178, 1
    %p182 = scmp.eq.s32.totalorder %s13, 3
    %p183 = scmp.ne.s32.totalorder %s178, %s180
    %p184 = scmp.eq.s32.totalorder %s13, 0
    %p185 = por %p183, %p184
    %p186 = scmp.ne.s32.totalorder %s178, %s180
    %p187 = scmp.eq.s32.totalorder %s18, 3
    %p188 = por %p186, %p187
    %p189 = scmp.ne.s32.totalorder %s180, %s181
    %p190 = scmp.eq.s32.totalorder %s18, 0
    %p191 = por %p189, %p190
    %p192 = scmp.ne.s32.totalorder %s180, %s181
    %p193 = scmp.eq.s32.totalorder %s19, 3
    %p194 = por %p192, %p193
    %p196 = scmp.ne.s32.totalorder %s181, %s195
    %p197 = scmp.eq.s32.totalorder %s19, 0
    %p198 = por %p196, %p197
    %p199 = scmp.le.s32.totalorder 1, %s13
    %p200 = scmp.lt.s32.totalorder %s13, 5
    %p201 = pnand %p199, %p200
    %p202 = pneg %p201
    // Predicated region
    $region9: #{cnn_forward.5} parent=5 // pred_check
      _
    $region10: #{cnn_forward.5} parent=5 // pred_check_branch
      %204 = sbr.rel (%p201) target = $region12
    $region11: #{cnn_forward.5} parent=5 // pred_region
      %s205 = ssub.s32 %s13, 1
      // Predicated region
      $region13: #{cnn_forward.5} parent=11 // pred_check
        %p206 = pneg %p86
      $region14: #{cnn_forward.5} parent=11 // pred_check_branch
        %208 = sbr.rel (%p206) target = $region16
      $region15: #{cnn_forward.5} parent=11 // pred_region
        _
      $region16: #{cnn_forward.5} parent=11 // pred_fallthru
        _
      // Predicated region
      $region17: #{cnn_forward.5} parent=11 // pred_check
        %p209 = pneg %p107
      $region18: #{cnn_forward.5} parent=11 // pred_check_branch
        %211 = sbr.rel (%p209) target = $region20
      $region19: #{cnn_forward.5} parent=11 // pred_region
        _
      $region20: #{cnn_forward.5} parent=11 // pred_fallthru
        _
      // Predicated region
      $region21: #{cnn_forward.5} parent=11 // pred_check
        %p212 = pneg %p128
      $region22: #{cnn_forward.5} parent=11 // pred_check_branch
        %214 = sbr.rel (%p212) target = $region24
      $region23: #{cnn_forward.5} parent=11 // pred_region
        _
      $region24: #{cnn_forward.5} parent=11 // pred_fallthru
        _
      // Predicated region
      $region25: #{cnn_forward.5} parent=11 // pred_check
        %p215 = pneg %p149
      $region26: #{cnn_forward.5} parent=11 // pred_check_branch
        %217 = sbr.rel (%p215) target = $region28
      $region27: #{cnn_forward.5} parent=11 // pred_region
        _
      $region28: #{cnn_forward.5} parent=11 // pred_fallthru
        _
      // Predicated region
      $region29: #{cnn_forward.5} parent=11 // pred_check
        %p218 = pneg %p170
      $region30: #{cnn_forward.5} parent=11 // pred_check_branch
        %220 = sbr.rel (%p218) target = $region32
      $region31: #{cnn_forward.5} parent=11 // pred_region
        _
      $region32: #{cnn_forward.5} parent=11 // pred_fallthru
        _
    $region12: #{cnn_forward.5} parent=5 // pred_fallthru
      _
    %p221 = scmp.lt.s32.totalorder %s13, 4
    // Predicated region
    $region33: #{cnn_forward.5} parent=5 // pred_check
      %p222 = pneg %p221
    $region34: #{cnn_forward.5} parent=5 // pred_check_branch
      %224 = sbr.rel (%p222) target = $region36
    $region35: #{cnn_forward.5} parent=5 // pred_region
      // Predicated region
      $region37: #{cnn_forward.5} parent=35 // pred_check
        %p225 = pneg %p33
      $region38: #{cnn_forward.5} parent=35 // pred_check_branch
        %227 = sbr.rel (%p225) target = $region40
      $region39: #{cnn_forward.5} parent=35 // pred_region
        %s228 = smul.u32 4, %s13
        %p229 = scmp.lt.s32.totalorder %s228, 15
        %s230 = scalar_select %p229, %s228, 15
        %s231 = smul.addr %s230, 4
        %s232 = scalar_lea.vmem %s0, %s231
        %s233 = smul.u32 4, %s13
      $region40: #{cnn_forward.5} parent=35 // pred_fallthru
        _
      // Predicated region
      $region41: #{cnn_forward.5} parent=35 // pred_check
        %p234 = pneg %p59
      $region42: #{cnn_forward.5} parent=35 // pred_check_branch
        %236 = sbr.rel (%p234) target = $region44
      $region43: #{cnn_forward.5} parent=35 // pred_region
        %s237 = smul.u32 64, %s13
        %p238 = scmp.lt.s32.totalorder %s237, 255
        %s239 = scalar_select %p238, %s237, 255
        %s240 = smul.addr %s239, 8
        %s241 = smul.addr %s240, 4
        %s242 = scalar_lea.vmem %s1, %s241
        %s243 = smul.u32 64, %s13
      $region44: #{cnn_forward.5} parent=35 // pred_fallthru
        _
    $region36: #{cnn_forward.5} parent=5 // pred_fallthru
      _
    %p244 = scmp.le.s32.totalorder 1, %s13
    %p245 = scmp.lt.s32.totalorder %s13, 5
    %p246 = pnand %p244, %p245
    %p247 = pneg %p246
    // Predicated region
    $region45: #{cnn_forward.5} parent=5 // pred_check
      _
    $region46: #{cnn_forward.5} parent=5 // pred_check_branch
      %249 = sbr.rel (%p246) target = $region48
    $region47: #{cnn_forward.5} parent=5 // pred_region
      %s250 = ssub.s32 %s13, 1
      %s251 = smul.u32 4, %s18
      %p252 = scmp.lt.s32.totalorder %s251, 15
      %s253 = scalar_select %p252, %s251, 15
      %s254 = smul.addr %s253, 4
      %s255 = scalar_lea.vmem %s0, %s254
      %p256 = pneg %p39
      %p257 = pneg %p36
      %s258 = smul.u32 64, %s18
      %p259 = scmp.lt.s32.totalorder %s258, 255
      %s260 = scalar_select %p259, %s258, 255
      %s261 = smul.addr %s260, 8
      %s262 = smul.addr %s261, 4
      %s263 = scalar_lea.vmem %s1, %s262
      %p264 = pneg %p65
      %p265 = pneg %p62
      %p266 = pneg %p86
      %p267 = pneg %p83
      %p268 = pneg %p107
      %p269 = pneg %p104
      %p270 = pneg %p128
      %p271 = pneg %p125
      %p272 = pneg %p149
      %p273 = pneg %p146
      %p274 = pneg %p170
      %p275 = pneg %p167
      %p276 = pneg %p191
      %p277 = pneg %p188
      %s278 = smul.u32 4, %s18
      %p279 = scmp.lt.s32.totalorder %s278, 15
      %s280 = scalar_select %p279, %s278, 15
      %s281 = smul.addr %s280, 4
      %s282 = scalar_lea.vmem %s0, %s281
      %s283 = smul.u32 4, %s18
      %s284 = smul.u32 64, %s18
      %p285 = scmp.lt.s32.totalorder %s284, 255
      %s286 = scalar_select %p285, %s284, 255
      %s287 = smul.addr %s286, 8
      %s288 = smul.addr %s287, 4
      %s289 = scalar_lea.vmem %s1, %s288
      %s290 = smul.u32 64, %s18
      %p292 = scmp.eq.s32.totalorder %s18, 0
      // Predicated region
      $region49: #{cnn_forward.5} parent=47 // pred_check
        %p293 = pneg %p292
      $region50: #{cnn_forward.5} parent=47 // pred_check_branch
        %295 = sbr.rel (%p293) target = $region52
      $region51: #{cnn_forward.5} parent=47 // pred_region
        %296 = vst [vmem:[#allocation2] sm:$0xff] 0.0
        %297 = vst [vmem:[#allocation2 + $0x8] sm:$0xff] 0.0
        %298 = vst [vmem:[#allocation2 + $0x10] sm:$0xff] 0.0
        %299 = vst [vmem:[#allocation2 + $0x18] sm:$0xff] 0.0
        %300 = vst [vmem:[#allocation2 + $0x20] sm:$0xff] 0.0
        %301 = vst [vmem:[#allocation2 + $0x28] sm:$0xff] 0.0
        %302 = vst [vmem:[#allocation2 + $0x30] sm:$0xff] 0.0
        %303 = vst [vmem:[#allocation2 + $0x38] sm:$0xff] 0.0
      $region52: #{cnn_forward.5} parent=47 // pred_fallthru
        _
      %v304 = vld [vmem:[#allocation2] sm:$0xff]
      %v305 = vld [vmem:[#allocation2 + $0x8] sm:$0xff]
      %v306 = vld [vmem:[#allocation2 + $0x10] sm:$0xff]
      %v307 = vld [vmem:[#allocation2 + $0x18] sm:$0xff]
      %v308 = vld [vmem:[#allocation2 + $0x20] sm:$0xff]
      %v309 = vld [vmem:[#allocation2 + $0x28] sm:$0xff]
      %v310 = vld [vmem:[#allocation2 + $0x30] sm:$0xff]
      %v311 = vld [vmem:[#allocation2 + $0x38] sm:$0xff]
      %v312 = vld [vmem:[%s282] sm:$0xff]
      %v313 = vld [vmem:[%s282 + $0x8] sm:$0xff]
      %v314 = vld [vmem:[%s289] sm:$0xff]
      %v315 = vld [vmem:[%s289 + $0x8] sm:$0xff]
      %v316 = vld [vmem:[%s289 + $0x10] sm:$0xff]
      %v317 = vld [vmem:[%s289 + $0x18] sm:$0xff]
      %v318 = vld [vmem:[%s289 + $0x20] sm:$0xff]
      %v319 = vld [vmem:[%s289 + $0x28] sm:$0xff]
      %v320 = vld [vmem:[%s289 + $0x30] sm:$0xff]
      %v321 = vld [vmem:[%s289 + $0x38] sm:$0xff]
      %v322 = vld [vmem:[%s289 + $0x40] sm:$0xff]
      %v323 = vld [vmem:[%s289 + $0x48] sm:$0xff]
      %v324 = vld [vmem:[%s289 + $0x50] sm:$0xff]
      %v325 = vld [vmem:[%s289 + $0x58] sm:$0xff]
      %v326 = vld [vmem:[%s289 + $0x60] sm:$0xff]
      %v327 = vld [vmem:[%s289 + $0x68] sm:$0xff]
      %v328 = vld [vmem:[%s289 + $0x70] sm:$0xff]
      %v329 = vld [vmem:[%s289 + $0x78] sm:$0xff]
      %v330 = vld [vmem:[%s289 + $0x80] sm:$0xff]
      %v331 = vld [vmem:[%s289 + $0x88] sm:$0xff]
      %v332 = vld [vmem:[%s289 + $0x90] sm:$0xff]
      %v333 = vld [vmem:[%s289 + $0x98] sm:$0xff]
      %v334 = vld [vmem:[%s289 + $0xa0] sm:$0xff]
      %v335 = vld [vmem:[%s289 + $0xa8] sm:$0xff]
      %v336 = vld [vmem:[%s289 + $0xb0] sm:$0xff]
      %v337 = vld [vmem:[%s289 + $0xb8] sm:$0xff]
      %v338 = vld [vmem:[%s289 + $0xc0] sm:$0xff]
      %v339 = vld [vmem:[%s289 + $0xc8] sm:$0xff]
      %v340 = vld [vmem:[%s289 + $0xd0] sm:$0xff]
      %v341 = vld [vmem:[%s289 + $0xd8] sm:$0xff]
      %v342 = vld [vmem:[%s289 + $0xe0] sm:$0xff]
      %v343 = vld [vmem:[%s289 + $0xe8] sm:$0xff]
      %v344 = vld [vmem:[%s289 + $0xf0] sm:$0xff]
      %v345 = vld [vmem:[%s289 + $0xf8] sm:$0xff]
      %v346 = vld [vmem:[%s289 + $0x100] sm:$0xff]
      %v347 = vld [vmem:[%s289 + $0x108] sm:$0xff]
      %v348 = vld [vmem:[%s289 + $0x110] sm:$0xff]
      %v349 = vld [vmem:[%s289 + $0x118] sm:$0xff]
      %v350 = vld [vmem:[%s289 + $0x120] sm:$0xff]
      %v351 = vld [vmem:[%s289 + $0x128] sm:$0xff]
      %v352 = vld [vmem:[%s289 + $0x130] sm:$0xff]
      %v353 = vld [vmem:[%s289 + $0x138] sm:$0xff]
      %v354 = vld [vmem:[%s289 + $0x140] sm:$0xff]
      %v355 = vld [vmem:[%s289 + $0x148] sm:$0xff]
      %v356 = vld [vmem:[%s289 + $0x150] sm:$0xff]
      %v357 = vld [vmem:[%s289 + $0x158] sm:$0xff]
      %v358 = vld [vmem:[%s289 + $0x160] sm:$0xff]
      %v359 = vld [vmem:[%s289 + $0x168] sm:$0xff]
      %v360 = vld [vmem:[%s289 + $0x170] sm:$0xff]
      %v361 = vld [vmem:[%s289 + $0x178] sm:$0xff]
      %v362 = vld [vmem:[%s289 + $0x180] sm:$0xff]
      %v363 = vld [vmem:[%s289 + $0x188] sm:$0xff]
      %v364 = vld [vmem:[%s289 + $0x190] sm:$0xff]
      %v365 = vld [vmem:[%s289 + $0x198] sm:$0xff]
      %v366 = vld [vmem:[%s289 + $0x1a0] sm:$0xff]
      %v367 = vld [vmem:[%s289 + $0x1a8] sm:$0xff]
      %v368 = vld [vmem:[%s289 + $0x1b0] sm:$0xff]
      %v369 = vld [vmem:[%s289 + $0x1b8] sm:$0xff]
      %v370 = vld [vmem:[%s289 + $0x1c0] sm:$0xff]
      %v371 = vld [vmem:[%s289 + $0x1c8] sm:$0xff]
      %v372 = vld [vmem:[%s289 + $0x1d0] sm:$0xff]
      %v373 = vld [vmem:[%s289 + $0x1d8] sm:$0xff]
      %v374 = vld [vmem:[%s289 + $0x1e0] sm:$0xff]
      %v375 = vld [vmem:[%s289 + $0x1e8] sm:$0xff]
      %v376 = vld [vmem:[%s289 + $0x1f0] sm:$0xff]
      %v377 = vld [vmem:[%s289 + $0x1f8] sm:$0xff]
      %v378 = vld [vmem:[%s289 + $0x200] sm:$0xff]
      %v379 = vld [vmem:[%s289 + $0x208] sm:$0xff]
      %v380 = vld [vmem:[%s289 + $0x210] sm:$0xff]
      %v381 = vld [vmem:[%s289 + $0x218] sm:$0xff]
      %v382 = vld [vmem:[%s289 + $0x220] sm:$0xff]
      %v383 = vld [vmem:[%s289 + $0x228] sm:$0xff]
      %v384 = vld [vmem:[%s289 + $0x230] sm:$0xff]
      %v385 = vld [vmem:[%s289 + $0x238] sm:$0xff]
      %v386 = vld [vmem:[%s289 + $0x240] sm:$0xff]
      %v387 = vld [vmem:[%s289 + $0x248] sm:$0xff]
      %v388 = vld [vmem:[%s289 + $0x250] sm:$0xff]
      %v389 = vld [vmem:[%s289 + $0x258] sm:$0xff]
      %v390 = vld [vmem:[%s289 + $0x260] sm:$0xff]
      %v391 = vld [vmem:[%s289 + $0x268] sm:$0xff]
      %v392 = vld [vmem:[%s289 + $0x270] sm:$0xff]
      %v393 = vld [vmem:[%s289 + $0x278] sm:$0xff]
      %v394 = vld [vmem:[%s289 + $0x280] sm:$0xff]
      %v395 = vld [vmem:[%s289 + $0x288] sm:$0xff]
      %v396 = vld [vmem:[%s289 + $0x290] sm:$0xff]
      %v397 = vld [vmem:[%s289 + $0x298] sm:$0xff]
      %v398 = vld [vmem:[%s289 + $0x2a0] sm:$0xff]
      %v399 = vld [vmem:[%s289 + $0x2a8] sm:$0xff]
      %v400 = vld [vmem:[%s289 + $0x2b0] sm:$0xff]
      %v401 = vld [vmem:[%s289 + $0x2b8] sm:$0xff]
      %v402 = vld [vmem:[%s289 + $0x2c0] sm:$0xff]
      %v403 = vld [vmem:[%s289 + $0x2c8] sm:$0xff]
      %v404 = vld [vmem:[%s289 + $0x2d0] sm:$0xff]
      %v405 = vld [vmem:[%s289 + $0x2d8] sm:$0xff]
      %v406 = vld [vmem:[%s289 + $0x2e0] sm:$0xff]
      %v407 = vld [vmem:[%s289 + $0x2e8] sm:$0xff]
      %v408 = vld [vmem:[%s289 + $0x2f0] sm:$0xff]
      %v409 = vld [vmem:[%s289 + $0x2f8] sm:$0xff]
      %v410 = vld [vmem:[%s289 + $0x300] sm:$0xff]
      %v411 = vld [vmem:[%s289 + $0x308] sm:$0xff]
      %v412 = vld [vmem:[%s289 + $0x310] sm:$0xff]
      %v413 = vld [vmem:[%s289 + $0x318] sm:$0xff]
      %v414 = vld [vmem:[%s289 + $0x320] sm:$0xff]
      %v415 = vld [vmem:[%s289 + $0x328] sm:$0xff]
      %v416 = vld [vmem:[%s289 + $0x330] sm:$0xff]
      %v417 = vld [vmem:[%s289 + $0x338] sm:$0xff]
      %v418 = vld [vmem:[%s289 + $0x340] sm:$0xff]
      %v419 = vld [vmem:[%s289 + $0x348] sm:$0xff]
      %v420 = vld [vmem:[%s289 + $0x350] sm:$0xff]
      %v421 = vld [vmem:[%s289 + $0x358] sm:$0xff]
      %v422 = vld [vmem:[%s289 + $0x360] sm:$0xff]
      %v423 = vld [vmem:[%s289 + $0x368] sm:$0xff]
      %v424 = vld [vmem:[%s289 + $0x370] sm:$0xff]
      %v425 = vld [vmem:[%s289 + $0x378] sm:$0xff]
      %v426 = vld [vmem:[%s289 + $0x380] sm:$0xff]
      %v427 = vld [vmem:[%s289 + $0x388] sm:$0xff]
      %v428 = vld [vmem:[%s289 + $0x390] sm:$0xff]
      %v429 = vld [vmem:[%s289 + $0x398] sm:$0xff]
      %v430 = vld [vmem:[%s289 + $0x3a0] sm:$0xff]
      %v431 = vld [vmem:[%s289 + $0x3a8] sm:$0xff]
      %v432 = vld [vmem:[%s289 + $0x3b0] sm:$0xff]
      %v433 = vld [vmem:[%s289 + $0x3b8] sm:$0xff]
      %v434 = vld [vmem:[%s289 + $0x3c0] sm:$0xff]
      %v435 = vld [vmem:[%s289 + $0x3c8] sm:$0xff]
      %v436 = vld [vmem:[%s289 + $0x3d0] sm:$0xff]
      %v437 = vld [vmem:[%s289 + $0x3d8] sm:$0xff]
      %v438 = vld [vmem:[%s289 + $0x3e0] sm:$0xff]
      %v439 = vld [vmem:[%s289 + $0x3e8] sm:$0xff]
      %v440 = vld [vmem:[%s289 + $0x3f0] sm:$0xff]
      %v441 = vld [vmem:[%s289 + $0x3f8] sm:$0xff]
      %v442 = vld [vmem:[%s289 + $0x400] sm:$0xff]
      %v443 = vld [vmem:[%s289 + $0x408] sm:$0xff]
      %v444 = vld [vmem:[%s289 + $0x410] sm:$0xff]
      %v445 = vld [vmem:[%s289 + $0x418] sm:$0xff]
      %v446 = vld [vmem:[%s289 + $0x420] sm:$0xff]
      %v447 = vld [vmem:[%s289 + $0x428] sm:$0xff]
      %v448 = vld [vmem:[%s289 + $0x430] sm:$0xff]
      %v449 = vld [vmem:[%s289 + $0x438] sm:$0xff]
      %v450 = vld [vmem:[%s289 + $0x440] sm:$0xff]
      %v451 = vld [vmem:[%s289 + $0x448] sm:$0xff]
      %v452 = vld [vmem:[%s289 + $0x450] sm:$0xff]
      %v453 = vld [vmem:[%s289 + $0x458] sm:$0xff]
      %v454 = vld [vmem:[%s289 + $0x460] sm:$0xff]
      %v455 = vld [vmem:[%s289 + $0x468] sm:$0xff]
      %v456 = vld [vmem:[%s289 + $0x470] sm:$0xff]
      %v457 = vld [vmem:[%s289 + $0x478] sm:$0xff]
      %v458 = vld [vmem:[%s289 + $0x480] sm:$0xff]
      %v459 = vld [vmem:[%s289 + $0x488] sm:$0xff]
      %v460 = vld [vmem:[%s289 + $0x490] sm:$0xff]
      %v461 = vld [vmem:[%s289 + $0x498] sm:$0xff]
      %v462 = vld [vmem:[%s289 + $0x4a0] sm:$0xff]
      %v463 = vld [vmem:[%s289 + $0x4a8] sm:$0xff]
      %v464 = vld [vmem:[%s289 + $0x4b0] sm:$0xff]
      %v465 = vld [vmem:[%s289 + $0x4b8] sm:$0xff]
      %v466 = vld [vmem:[%s289 + $0x4c0] sm:$0xff]
      %v467 = vld [vmem:[%s289 + $0x4c8] sm:$0xff]
      %v468 = vld [vmem:[%s289 + $0x4d0] sm:$0xff]
      %v469 = vld [vmem:[%s289 + $0x4d8] sm:$0xff]
      %v470 = vld [vmem:[%s289 + $0x4e0] sm:$0xff]
      %v471 = vld [vmem:[%s289 + $0x4e8] sm:$0xff]
      %v472 = vld [vmem:[%s289 + $0x4f0] sm:$0xff]
      %v473 = vld [vmem:[%s289 + $0x4f8] sm:$0xff]
      %v474 = vld [vmem:[%s289 + $0x500] sm:$0xff]
      %v475 = vld [vmem:[%s289 + $0x508] sm:$0xff]
      %v476 = vld [vmem:[%s289 + $0x510] sm:$0xff]
      %v477 = vld [vmem:[%s289 + $0x518] sm:$0xff]
      %v478 = vld [vmem:[%s289 + $0x520] sm:$0xff]
      %v479 = vld [vmem:[%s289 + $0x528] sm:$0xff]
      %v480 = vld [vmem:[%s289 + $0x530] sm:$0xff]
      %v481 = vld [vmem:[%s289 + $0x538] sm:$0xff]
      %v482 = vld [vmem:[%s289 + $0x540] sm:$0xff]
      %v483 = vld [vmem:[%s289 + $0x548] sm:$0xff]
      %v484 = vld [vmem:[%s289 + $0x550] sm:$0xff]
      %v485 = vld [vmem:[%s289 + $0x558] sm:$0xff]
      %v486 = vld [vmem:[%s289 + $0x560] sm:$0xff]
      %v487 = vld [vmem:[%s289 + $0x568] sm:$0xff]
      %v488 = vld [vmem:[%s289 + $0x570] sm:$0xff]
      %v489 = vld [vmem:[%s289 + $0x578] sm:$0xff]
      %v490 = vld [vmem:[%s289 + $0x580] sm:$0xff]
      %v491 = vld [vmem:[%s289 + $0x588] sm:$0xff]
      %v492 = vld [vmem:[%s289 + $0x590] sm:$0xff]
      %v493 = vld [vmem:[%s289 + $0x598] sm:$0xff]
      %v494 = vld [vmem:[%s289 + $0x5a0] sm:$0xff]
      %v495 = vld [vmem:[%s289 + $0x5a8] sm:$0xff]
      %v496 = vld [vmem:[%s289 + $0x5b0] sm:$0xff]
      %v497 = vld [vmem:[%s289 + $0x5b8] sm:$0xff]
      %v498 = vld [vmem:[%s289 + $0x5c0] sm:$0xff]
      %v499 = vld [vmem:[%s289 + $0x5c8] sm:$0xff]
      %v500 = vld [vmem:[%s289 + $0x5d0] sm:$0xff]
      %v501 = vld [vmem:[%s289 + $0x5d8] sm:$0xff]
      %v502 = vld [vmem:[%s289 + $0x5e0] sm:$0xff]
      %v503 = vld [vmem:[%s289 + $0x5e8] sm:$0xff]
      %v504 = vld [vmem:[%s289 + $0x5f0] sm:$0xff]
      %v505 = vld [vmem:[%s289 + $0x5f8] sm:$0xff]
      %v506 = vld [vmem:[%s289 + $0x600] sm:$0xff]
      %v507 = vld [vmem:[%s289 + $0x608] sm:$0xff]
      %v508 = vld [vmem:[%s289 + $0x610] sm:$0xff]
      %v509 = vld [vmem:[%s289 + $0x618] sm:$0xff]
      %v510 = vld [vmem:[%s289 + $0x620] sm:$0xff]
      %v511 = vld [vmem:[%s289 + $0x628] sm:$0xff]
      %v512 = vld [vmem:[%s289 + $0x630] sm:$0xff]
      %v513 = vld [vmem:[%s289 + $0x638] sm:$0xff]
      %v514 = vld [vmem:[%s289 + $0x640] sm:$0xff]
      %v515 = vld [vmem:[%s289 + $0x648] sm:$0xff]
      %v516 = vld [vmem:[%s289 + $0x650] sm:$0xff]
      %v517 = vld [vmem:[%s289 + $0x658] sm:$0xff]
      %v518 = vld [vmem:[%s289 + $0x660] sm:$0xff]
      %v519 = vld [vmem:[%s289 + $0x668] sm:$0xff]
      %v520 = vld [vmem:[%s289 + $0x670] sm:$0xff]
      %v521 = vld [vmem:[%s289 + $0x678] sm:$0xff]
      %v522 = vld [vmem:[%s289 + $0x680] sm:$0xff]
      %v523 = vld [vmem:[%s289 + $0x688] sm:$0xff]
      %v524 = vld [vmem:[%s289 + $0x690] sm:$0xff]
      %v525 = vld [vmem:[%s289 + $0x698] sm:$0xff]
      %v526 = vld [vmem:[%s289 + $0x6a0] sm:$0xff]
      %v527 = vld [vmem:[%s289 + $0x6a8] sm:$0xff]
      %v528 = vld [vmem:[%s289 + $0x6b0] sm:$0xff]
      %v529 = vld [vmem:[%s289 + $0x6b8] sm:$0xff]
      %v530 = vld [vmem:[%s289 + $0x6c0] sm:$0xff]
      %v531 = vld [vmem:[%s289 + $0x6c8] sm:$0xff]
      %v532 = vld [vmem:[%s289 + $0x6d0] sm:$0xff]
      %v533 = vld [vmem:[%s289 + $0x6d8] sm:$0xff]
      %v534 = vld [vmem:[%s289 + $0x6e0] sm:$0xff]
      %v535 = vld [vmem:[%s289 + $0x6e8] sm:$0xff]
      %v536 = vld [vmem:[%s289 + $0x6f0] sm:$0xff]
      %v537 = vld [vmem:[%s289 + $0x6f8] sm:$0xff]
      %v538 = vld [vmem:[%s289 + $0x700] sm:$0xff]
      %v539 = vld [vmem:[%s289 + $0x708] sm:$0xff]
      %v540 = vld [vmem:[%s289 + $0x710] sm:$0xff]
      %v541 = vld [vmem:[%s289 + $0x718] sm:$0xff]
      %v542 = vld [vmem:[%s289 + $0x720] sm:$0xff]
      %v543 = vld [vmem:[%s289 + $0x728] sm:$0xff]
      %v544 = vld [vmem:[%s289 + $0x730] sm:$0xff]
      %v545 = vld [vmem:[%s289 + $0x738] sm:$0xff]
      %v546 = vld [vmem:[%s289 + $0x740] sm:$0xff]
      %v547 = vld [vmem:[%s289 + $0x748] sm:$0xff]
      %v548 = vld [vmem:[%s289 + $0x750] sm:$0xff]
      %v549 = vld [vmem:[%s289 + $0x758] sm:$0xff]
      %v550 = vld [vmem:[%s289 + $0x760] sm:$0xff]
      %v551 = vld [vmem:[%s289 + $0x768] sm:$0xff]
      %v552 = vld [vmem:[%s289 + $0x770] sm:$0xff]
      %v553 = vld [vmem:[%s289 + $0x778] sm:$0xff]
      %v554 = vld [vmem:[%s289 + $0x780] sm:$0xff]
      %v555 = vld [vmem:[%s289 + $0x788] sm:$0xff]
      %v556 = vld [vmem:[%s289 + $0x790] sm:$0xff]
      %v557 = vld [vmem:[%s289 + $0x798] sm:$0xff]
      %v558 = vld [vmem:[%s289 + $0x7a0] sm:$0xff]
      %v559 = vld [vmem:[%s289 + $0x7a8] sm:$0xff]
      %v560 = vld [vmem:[%s289 + $0x7b0] sm:$0xff]
      %v561 = vld [vmem:[%s289 + $0x7b8] sm:$0xff]
      %v562 = vld [vmem:[%s289 + $0x7c0] sm:$0xff]
      %v563 = vld [vmem:[%s289 + $0x7c8] sm:$0xff]
      %v564 = vld [vmem:[%s289 + $0x7d0] sm:$0xff]
      %v565 = vld [vmem:[%s289 + $0x7d8] sm:$0xff]
      %v566 = vld [vmem:[%s289 + $0x7e0] sm:$0xff]
      %v567 = vld [vmem:[%s289 + $0x7e8] sm:$0xff]
      %v568 = vld [vmem:[%s289 + $0x7f0] sm:$0xff]
      %v569 = vld [vmem:[%s289 + $0x7f8] sm:$0xff]
      %v572 = vunpack.c.l.b16 %v312
      %v573 = vunpack.c.h.b16 %v312
      %v574 = vunpack.c.l.b16 %v313
      %v575 = vunpack.c.h.b16 %v313
      %v576 = vpack.c.b16 %v572, %v572
      %v577 = vpack.c.b16 %v573, %v573
      %v578 = vpack.c.b16 %v574, %v574
      %v579 = vpack.c.b16 %v575, %v575
      %v840 = vunpack.c.l.b16 %v314
      %v841 = vunpack.c.h.b16 %v314
      %v842 = vunpack.c.l.b16 %v315
      %v843 = vunpack.c.h.b16 %v315
      %v844 = vunpack.c.l.b16 %v316
      %v845 = vunpack.c.h.b16 %v316
      %v846 = vunpack.c.l.b16 %v317
      %v847 = vunpack.c.h.b16 %v317
      %v848 = vunpack.c.l.b16 %v318
      %v849 = vunpack.c.h.b16 %v318
      %v850 = vunpack.c.l.b16 %v319
      %v851 = vunpack.c.h.b16 %v319
      %v852 = vunpack.c.l.b16 %v320
      %v853 = vunpack.c.h.b16 %v320
      %v854 = vunpack.c.l.b16 %v321
      %v855 = vunpack.c.h.b16 %v321
      %v856 = vunpack.c.l.b16 %v322
      %v857 = vunpack.c.h.b16 %v322
      %v858 = vunpack.c.l.b16 %v323
      %v859 = vunpack.c.h.b16 %v323
      %v860 = vunpack.c.l.b16 %v324
      %v861 = vunpack.c.h.b16 %v324
      %v862 = vunpack.c.l.b16 %v325
      %v863 = vunpack.c.h.b16 %v325
      %v864 = vunpack.c.l.b16 %v326
      %v865 = vunpack.c.h.b16 %v326
      %v866 = vunpack.c.l.b16 %v327
      %v867 = vunpack.c.h.b16 %v327
      %v868 = vunpack.c.l.b16 %v328
      %v869 = vunpack.c.h.b16 %v328
      %v870 = vunpack.c.l.b16 %v329
      %v871 = vunpack.c.h.b16 %v329
      %v872 = vunpack.c.l.b16 %v330
      %v873 = vunpack.c.h.b16 %v330
      %v874 = vunpack.c.l.b16 %v331
      %v875 = vunpack.c.h.b16 %v331
      %v876 = vunpack.c.l.b16 %v332
      %v877 = vunpack.c.h.b16 %v332
      %v878 = vunpack.c.l.b16 %v333
      %v879 = vunpack.c.h.b16 %v333
      %v880 = vunpack.c.l.b16 %v334
      %v881 = vunpack.c.h.b16 %v334
      %v882 = vunpack.c.l.b16 %v335
      %v883 = vunpack.c.h.b16 %v335
      %v884 = vunpack.c.l.b16 %v336
      %v885 = vunpack.c.h.b16 %v336
      %v886 = vunpack.c.l.b16 %v337
      %v887 = vunpack.c.h.b16 %v337
      %v888 = vunpack.c.l.b16 %v338
      %v889 = vunpack.c.h.b16 %v338
      %v890 = vunpack.c.l.b16 %v339
      %v891 = vunpack.c.h.b16 %v339
      %v892 = vunpack.c.l.b16 %v340
      %v893 = vunpack.c.h.b16 %v340
      %v894 = vunpack.c.l.b16 %v341
      %v895 = vunpack.c.h.b16 %v341
      %v896 = vunpack.c.l.b16 %v342
      %v897 = vunpack.c.h.b16 %v342
      %v898 = vunpack.c.l.b16 %v343
      %v899 = vunpack.c.h.b16 %v343
      %v900 = vunpack.c.l.b16 %v344
      %v901 = vunpack.c.h.b16 %v344
      %v902 = vunpack.c.l.b16 %v345
      %v903 = vunpack.c.h.b16 %v345
      %v904 = vunpack.c.l.b16 %v346
      %v905 = vunpack.c.h.b16 %v346
      %v906 = vunpack.c.l.b16 %v347
      %v907 = vunpack.c.h.b16 %v347
      %v908 = vunpack.c.l.b16 %v348
      %v909 = vunpack.c.h.b16 %v348
      %v910 = vunpack.c.l.b16 %v349
      %v911 = vunpack.c.h.b16 %v349
      %v912 = vunpack.c.l.b16 %v350
      %v913 = vunpack.c.h.b16 %v350
      %v914 = vunpack.c.l.b16 %v351
      %v915 = vunpack.c.h.b16 %v351
      %v916 = vunpack.c.l.b16 %v352
      %v917 = vunpack.c.h.b16 %v352
      %v918 = vunpack.c.l.b16 %v353
      %v919 = vunpack.c.h.b16 %v353
      %v920 = vunpack.c.l.b16 %v354
      %v921 = vunpack.c.h.b16 %v354
      %v922 = vunpack.c.l.b16 %v355
      %v923 = vunpack.c.h.b16 %v355
      %v924 = vunpack.c.l.b16 %v356
      %v925 = vunpack.c.h.b16 %v356
      %v926 = vunpack.c.l.b16 %v357
      %v927 = vunpack.c.h.b16 %v357
      %v928 = vunpack.c.l.b16 %v358
      %v929 = vunpack.c.h.b16 %v358
      %v930 = vunpack.c.l.b16 %v359
      %v931 = vunpack.c.h.b16 %v359
      %v932 = vunpack.c.l.b16 %v360
      %v933 = vunpack.c.h.b16 %v360
      %v934 = vunpack.c.l.b16 %v361
      %v935 = vunpack.c.h.b16 %v361
      %v936 = vunpack.c.l.b16 %v362
      %v937 = vunpack.c.h.b16 %v362
      %v938 = vunpack.c.l.b16 %v363
      %v939 = vunpack.c.h.b16 %v363
      %v940 = vunpack.c.l.b16 %v364
      %v941 = vunpack.c.h.b16 %v364
      %v942 = vunpack.c.l.b16 %v365
      %v943 = vunpack.c.h.b16 %v365
      %v944 = vunpack.c.l.b16 %v366
      %v945 = vunpack.c.h.b16 %v366
      %v946 = vunpack.c.l.b16 %v367
      %v947 = vunpack.c.h.b16 %v367
      %v948 = vunpack.c.l.b16 %v368
      %v949 = vunpack.c.h.b16 %v368
      %v950 = vunpack.c.l.b16 %v369
      %v951 = vunpack.c.h.b16 %v369
      %v952 = vunpack.c.l.b16 %v370
      %v953 = vunpack.c.h.b16 %v370
      %v954 = vunpack.c.l.b16 %v371
      %v955 = vunpack.c.h.b16 %v371
      %v956 = vunpack.c.l.b16 %v372
      %v957 = vunpack.c.h.b16 %v372
      %v958 = vunpack.c.l.b16 %v373
      %v959 = vunpack.c.h.b16 %v373
      %v960 = vunpack.c.l.b16 %v374
      %v961 = vunpack.c.h.b16 %v374
      %v962 = vunpack.c.l.b16 %v375
      %v963 = vunpack.c.h.b16 %v375
      %v964 = vunpack.c.l.b16 %v376
      %v965 = vunpack.c.h.b16 %v376
      %v966 = vunpack.c.l.b16 %v377
      %v967 = vunpack.c.h.b16 %v377
      %v968 = vunpack.c.l.b16 %v378
      %v969 = vunpack.c.h.b16 %v378
      %v970 = vunpack.c.l.b16 %v379
      %v971 = vunpack.c.h.b16 %v379
      %v972 = vunpack.c.l.b16 %v380
      %v973 = vunpack.c.h.b16 %v380
      %v974 = vunpack.c.l.b16 %v381
      %v975 = vunpack.c.h.b16 %v381
      %v976 = vunpack.c.l.b16 %v382
      %v977 = vunpack.c.h.b16 %v382
      %v978 = vunpack.c.l.b16 %v383
      %v979 = vunpack.c.h.b16 %v383
      %v980 = vunpack.c.l.b16 %v384
      %v981 = vunpack.c.h.b16 %v384
      %v982 = vunpack.c.l.b16 %v385
      %v983 = vunpack.c.h.b16 %v385
      %v984 = vunpack.c.l.b16 %v386
      %v985 = vunpack.c.h.b16 %v386
      %v986 = vunpack.c.l.b16 %v387
      %v987 = vunpack.c.h.b16 %v387
      %v988 = vunpack.c.l.b16 %v388
      %v989 = vunpack.c.h.b16 %v388
      %v990 = vunpack.c.l.b16 %v389
      %v991 = vunpack.c.h.b16 %v389
      %v992 = vunpack.c.l.b16 %v390
      %v993 = vunpack.c.h.b16 %v390
      %v994 = vunpack.c.l.b16 %v391
      %v995 = vunpack.c.h.b16 %v391
      %v996 = vunpack.c.l.b16 %v392
      %v997 = vunpack.c.h.b16 %v392
      %v998 = vunpack.c.l.b16 %v393
      %v999 = vunpack.c.h.b16 %v393
      %v1000 = vunpack.c.l.b16 %v394
      %v1001 = vunpack.c.h.b16 %v394
      %v1002 = vunpack.c.l.b16 %v395
      %v1003 = vunpack.c.h.b16 %v395
      %v1004 = vunpack.c.l.b16 %v396
      %v1005 = vunpack.c.h.b16 %v396
      %v1006 = vunpack.c.l.b16 %v397
      %v1007 = vunpack.c.h.b16 %v397
      %v1008 = vunpack.c.l.b16 %v398
      %v1009 = vunpack.c.h.b16 %v398
      %v1010 = vunpack.c.l.b16 %v399
      %v1011 = vunpack.c.h.b16 %v399
      %v1012 = vunpack.c.l.b16 %v400
      %v1013 = vunpack.c.h.b16 %v400
      %v1014 = vunpack.c.l.b16 %v401
      %v1015 = vunpack.c.h.b16 %v401
      %v1016 = vunpack.c.l.b16 %v402
      %v1017 = vunpack.c.h.b16 %v402
      %v1018 = vunpack.c.l.b16 %v403
      %v1019 = vunpack.c.h.b16 %v403
      %v1020 = vunpack.c.l.b16 %v404
      %v1021 = vunpack.c.h.b16 %v404
      %v1022 = vunpack.c.l.b16 %v405
      %v1023 = vunpack.c.h.b16 %v405
      %v1024 = vunpack.c.l.b16 %v406
      %v1025 = vunpack.c.h.b16 %v406
      %v1026 = vunpack.c.l.b16 %v407
      %v1027 = vunpack.c.h.b16 %v407
      %v1028 = vunpack.c.l.b16 %v408
      %v1029 = vunpack.c.h.b16 %v408
      %v1030 = vunpack.c.l.b16 %v409
      %v1031 = vunpack.c.h.b16 %v409
      %v1032 = vunpack.c.l.b16 %v410
      %v1033 = vunpack.c.h.b16 %v410
      %v1034 = vunpack.c.l.b16 %v411
      %v1035 = vunpack.c.h.b16 %v411
      %v1036 = vunpack.c.l.b16 %v412
      %v1037 = vunpack.c.h.b16 %v412
      %v1038 = vunpack.c.l.b16 %v413
      %v1039 = vunpack.c.h.b16 %v413
      %v1040 = vunpack.c.l.b16 %v414
      %v1041 = vunpack.c.h.b16 %v414
      %v1042 = vunpack.c.l.b16 %v415
      %v1043 = vunpack.c.h.b16 %v415
      %v1044 = vunpack.c.l.b16 %v416
      %v1045 = vunpack.c.h.b16 %v416
      %v1046 = vunpack.c.l.b16 %v417
      %v1047 = vunpack.c.h.b16 %v417
      %v1048 = vunpack.c.l.b16 %v418
      %v1049 = vunpack.c.h.b16 %v418
      %v1050 = vunpack.c.l.b16 %v419
      %v1051 = vunpack.c.h.b16 %v419
      %v1052 = vunpack.c.l.b16 %v420
      %v1053 = vunpack.c.h.b16 %v420
      %v1054 = vunpack.c.l.b16 %v421
      %v1055 = vunpack.c.h.b16 %v421
      %v1056 = vunpack.c.l.b16 %v422
      %v1057 = vunpack.c.h.b16 %v422
      %v1058 = vunpack.c.l.b16 %v423
      %v1059 = vunpack.c.h.b16 %v423
      %v1060 = vunpack.c.l.b16 %v424
      %v1061 = vunpack.c.h.b16 %v424
      %v1062 = vunpack.c.l.b16 %v425
      %v1063 = vunpack.c.h.b16 %v425
      %v1064 = vunpack.c.l.b16 %v426
      %v1065 = vunpack.c.h.b16 %v426
      %v1066 = vunpack.c.l.b16 %v427
      %v1067 = vunpack.c.h.b16 %v427
      %v1068 = vunpack.c.l.b16 %v428
      %v1069 = vunpack.c.h.b16 %v428
      %v1070 = vunpack.c.l.b16 %v429
      %v1071 = vunpack.c.h.b16 %v429
      %v1072 = vunpack.c.l.b16 %v430
      %v1073 = vunpack.c.h.b16 %v430
      %v1074 = vunpack.c.l.b16 %v431
      %v1075 = vunpack.c.h.b16 %v431
      %v1076 = vunpack.c.l.b16 %v432
      %v1077 = vunpack.c.h.b16 %v432
      %v1078 = vunpack.c.l.b16 %v433
      %v1079 = vunpack.c.h.b16 %v433
      %v1080 = vunpack.c.l.b16 %v434
      %v1081 = vunpack.c.h.b16 %v434
      %v1082 = vunpack.c.l.b16 %v435
      %v1083 = vunpack.c.h.b16 %v435
      %v1084 = vunpack.c.l.b16 %v436
      %v1085 = vunpack.c.h.b16 %v436
      %v1086 = vunpack.c.l.b16 %v437
      %v1087 = vunpack.c.h.b16 %v437
      %v1088 = vunpack.c.l.b16 %v438
      %v1089 = vunpack.c.h.b16 %v438
      %v1090 = vunpack.c.l.b16 %v439
      %v1091 = vunpack.c.h.b16 %v439
      %v1092 = vunpack.c.l.b16 %v440
      %v1093 = vunpack.c.h.b16 %v440
      %v1094 = vunpack.c.l.b16 %v441
      %v1095 = vunpack.c.h.b16 %v441
      %v1096 = vunpack.c.l.b16 %v442
      %v1097 = vunpack.c.h.b16 %v442
      %v1098 = vunpack.c.l.b16 %v443
      %v1099 = vunpack.c.h.b16 %v443
      %v1100 = vunpack.c.l.b16 %v444
      %v1101 = vunpack.c.h.b16 %v444
      %v1102 = vunpack.c.l.b16 %v445
      %v1103 = vunpack.c.h.b16 %v445
      %v1104 = vunpack.c.l.b16 %v446
      %v1105 = vunpack.c.h.b16 %v446
      %v1106 = vunpack.c.l.b16 %v447
      %v1107 = vunpack.c.h.b16 %v447
      %v1108 = vunpack.c.l.b16 %v448
      %v1109 = vunpack.c.h.b16 %v448
      %v1110 = vunpack.c.l.b16 %v449
      %v1111 = vunpack.c.h.b16 %v449
      %v1112 = vunpack.c.l.b16 %v450
      %v1113 = vunpack.c.h.b16 %v450
      %v1114 = vunpack.c.l.b16 %v451
      %v1115 = vunpack.c.h.b16 %v451
      %v1116 = vunpack.c.l.b16 %v452
      %v1117 = vunpack.c.h.b16 %v452
      %v1118 = vunpack.c.l.b16 %v453
      %v1119 = vunpack.c.h.b16 %v453
      %v1120 = vunpack.c.l.b16 %v454
      %v1121 = vunpack.c.h.b16 %v454
      %v1122 = vunpack.c.l.b16 %v455
      %v1123 = vunpack.c.h.b16 %v455
      %v1124 = vunpack.c.l.b16 %v456
      %v1125 = vunpack.c.h.b16 %v456
      %v1126 = vunpack.c.l.b16 %v457
      %v1127 = vunpack.c.h.b16 %v457
      %v1128 = vunpack.c.l.b16 %v458
      %v1129 = vunpack.c.h.b16 %v458
      %v1130 = vunpack.c.l.b16 %v459
      %v1131 = vunpack.c.h.b16 %v459
      %v1132 = vunpack.c.l.b16 %v460
      %v1133 = vunpack.c.h.b16 %v460
      %v1134 = vunpack.c.l.b16 %v461
      %v1135 = vunpack.c.h.b16 %v461
      %v1136 = vunpack.c.l.b16 %v462
      %v1137 = vunpack.c.h.b16 %v462
      %v1138 = vunpack.c.l.b16 %v463
      %v1139 = vunpack.c.h.b16 %v463
      %v1140 = vunpack.c.l.b16 %v464
      %v1141 = vunpack.c.h.b16 %v464
      %v1142 = vunpack.c.l.b16 %v465
      %v1143 = vunpack.c.h.b16 %v465
      %v1144 = vunpack.c.l.b16 %v466
      %v1145 = vunpack.c.h.b16 %v466
      %v1146 = vunpack.c.l.b16 %v467
      %v1147 = vunpack.c.h.b16 %v467
      %v1148 = vunpack.c.l.b16 %v468
      %v1149 = vunpack.c.h.b16 %v468
      %v1150 = vunpack.c.l.b16 %v469
      %v1151 = vunpack.c.h.b16 %v469
      %v1152 = vunpack.c.l.b16 %v470
      %v1153 = vunpack.c.h.b16 %v470
      %v1154 = vunpack.c.l.b16 %v471
      %v1155 = vunpack.c.h.b16 %v471
      %v1156 = vunpack.c.l.b16 %v472
      %v1157 = vunpack.c.h.b16 %v472
      %v1158 = vunpack.c.l.b16 %v473
      %v1159 = vunpack.c.h.b16 %v473
      %v1160 = vunpack.c.l.b16 %v474
      %v1161 = vunpack.c.h.b16 %v474
      %v1162 = vunpack.c.l.b16 %v475
      %v1163 = vunpack.c.h.b16 %v475
      %v1164 = vunpack.c.l.b16 %v476
      %v1165 = vunpack.c.h.b16 %v476
      %v1166 = vunpack.c.l.b16 %v477
      %v1167 = vunpack.c.h.b16 %v477
      %v1168 = vunpack.c.l.b16 %v478
      %v1169 = vunpack.c.h.b16 %v478
      %v1170 = vunpack.c.l.b16 %v479
      %v1171 = vunpack.c.h.b16 %v479
      %v1172 = vunpack.c.l.b16 %v480
      %v1173 = vunpack.c.h.b16 %v480
      %v1174 = vunpack.c.l.b16 %v481
      %v1175 = vunpack.c.h.b16 %v481
      %v1176 = vunpack.c.l.b16 %v482
      %v1177 = vunpack.c.h.b16 %v482
      %v1178 = vunpack.c.l.b16 %v483
      %v1179 = vunpack.c.h.b16 %v483
      %v1180 = vunpack.c.l.b16 %v484
      %v1181 = vunpack.c.h.b16 %v484
      %v1182 = vunpack.c.l.b16 %v485
      %v1183 = vunpack.c.h.b16 %v485
      %v1184 = vunpack.c.l.b16 %v486
      %v1185 = vunpack.c.h.b16 %v486
      %v1186 = vunpack.c.l.b16 %v487
      %v1187 = vunpack.c.h.b16 %v487
      %v1188 = vunpack.c.l.b16 %v488
      %v1189 = vunpack.c.h.b16 %v488
      %v1190 = vunpack.c.l.b16 %v489
      %v1191 = vunpack.c.h.b16 %v489
      %v1192 = vunpack.c.l.b16 %v490
      %v1193 = vunpack.c.h.b16 %v490
      %v1194 = vunpack.c.l.b16 %v491
      %v1195 = vunpack.c.h.b16 %v491
      %v1196 = vunpack.c.l.b16 %v492
      %v1197 = vunpack.c.h.b16 %v492
      %v1198 = vunpack.c.l.b16 %v493
      %v1199 = vunpack.c.h.b16 %v493
      %v1200 = vunpack.c.l.b16 %v494
      %v1201 = vunpack.c.h.b16 %v494
      %v1202 = vunpack.c.l.b16 %v495
      %v1203 = vunpack.c.h.b16 %v495
      %v1204 = vunpack.c.l.b16 %v496
      %v1205 = vunpack.c.h.b16 %v496
      %v1206 = vunpack.c.l.b16 %v497
      %v1207 = vunpack.c.h.b16 %v497
      %v1208 = vunpack.c.l.b16 %v498
      %v1209 = vunpack.c.h.b16 %v498
      %v1210 = vunpack.c.l.b16 %v499
      %v1211 = vunpack.c.h.b16 %v499
      %v1212 = vunpack.c.l.b16 %v500
      %v1213 = vunpack.c.h.b16 %v500
      %v1214 = vunpack.c.l.b16 %v501
      %v1215 = vunpack.c.h.b16 %v501
      %v1216 = vunpack.c.l.b16 %v502
      %v1217 = vunpack.c.h.b16 %v502
      %v1218 = vunpack.c.l.b16 %v503
      %v1219 = vunpack.c.h.b16 %v503
      %v1220 = vunpack.c.l.b16 %v504
      %v1221 = vunpack.c.h.b16 %v504
      %v1222 = vunpack.c.l.b16 %v505
      %v1223 = vunpack.c.h.b16 %v505
      %v1224 = vunpack.c.l.b16 %v506
      %v1225 = vunpack.c.h.b16 %v506
      %v1226 = vunpack.c.l.b16 %v507
      %v1227 = vunpack.c.h.b16 %v507
      %v1228 = vunpack.c.l.b16 %v508
      %v1229 = vunpack.c.h.b16 %v508
      %v1230 = vunpack.c.l.b16 %v509
      %v1231 = vunpack.c.h.b16 %v509
      %v1232 = vunpack.c.l.b16 %v510
      %v1233 = vunpack.c.h.b16 %v510
      %v1234 = vunpack.c.l.b16 %v511
      %v1235 = vunpack.c.h.b16 %v511
      %v1236 = vunpack.c.l.b16 %v512
      %v1237 = vunpack.c.h.b16 %v512
      %v1238 = vunpack.c.l.b16 %v513
      %v1239 = vunpack.c.h.b16 %v513
      %v1240 = vunpack.c.l.b16 %v514
      %v1241 = vunpack.c.h.b16 %v514
      %v1242 = vunpack.c.l.b16 %v515
      %v1243 = vunpack.c.h.b16 %v515
      %v1244 = vunpack.c.l.b16 %v516
      %v1245 = vunpack.c.h.b16 %v516
      %v1246 = vunpack.c.l.b16 %v517
      %v1247 = vunpack.c.h.b16 %v517
      %v1248 = vunpack.c.l.b16 %v518
      %v1249 = vunpack.c.h.b16 %v518
      %v1250 = vunpack.c.l.b16 %v519
      %v1251 = vunpack.c.h.b16 %v519
      %v1252 = vunpack.c.l.b16 %v520
      %v1253 = vunpack.c.h.b16 %v520
      %v1254 = vunpack.c.l.b16 %v521
      %v1255 = vunpack.c.h.b16 %v521
      %v1256 = vunpack.c.l.b16 %v522
      %v1257 = vunpack.c.h.b16 %v522
      %v1258 = vunpack.c.l.b16 %v523
      %v1259 = vunpack.c.h.b16 %v523
      %v1260 = vunpack.c.l.b16 %v524
      %v1261 = vunpack.c.h.b16 %v524
      %v1262 = vunpack.c.l.b16 %v525
      %v1263 = vunpack.c.h.b16 %v525
      %v1264 = vunpack.c.l.b16 %v526
      %v1265 = vunpack.c.h.b16 %v526
      %v1266 = vunpack.c.l.b16 %v527
      %v1267 = vunpack.c.h.b16 %v527
      %v1268 = vunpack.c.l.b16 %v528
      %v1269 = vunpack.c.h.b16 %v528
      %v1270 = vunpack.c.l.b16 %v529
      %v1271 = vunpack.c.h.b16 %v529
      %v1272 = vunpack.c.l.b16 %v530
      %v1273 = vunpack.c.h.b16 %v530
      %v1274 = vunpack.c.l.b16 %v531
      %v1275 = vunpack.c.h.b16 %v531
      %v1276 = vunpack.c.l.b16 %v532
      %v1277 = vunpack.c.h.b16 %v532
      %v1278 = vunpack.c.l.b16 %v533
      %v1279 = vunpack.c.h.b16 %v533
      %v1280 = vunpack.c.l.b16 %v534
      %v1281 = vunpack.c.h.b16 %v534
      %v1282 = vunpack.c.l.b16 %v535
      %v1283 = vunpack.c.h.b16 %v535
      %v1284 = vunpack.c.l.b16 %v536
      %v1285 = vunpack.c.h.b16 %v536
      %v1286 = vunpack.c.l.b16 %v537
      %v1287 = vunpack.c.h.b16 %v537
      %v1288 = vunpack.c.l.b16 %v538
      %v1289 = vunpack.c.h.b16 %v538
      %v1290 = vunpack.c.l.b16 %v539
      %v1291 = vunpack.c.h.b16 %v539
      %v1292 = vunpack.c.l.b16 %v540
      %v1293 = vunpack.c.h.b16 %v540
      %v1294 = vunpack.c.l.b16 %v541
      %v1295 = vunpack.c.h.b16 %v541
      %v1296 = vunpack.c.l.b16 %v542
      %v1297 = vunpack.c.h.b16 %v542
      %v1298 = vunpack.c.l.b16 %v543
      %v1299 = vunpack.c.h.b16 %v543
      %v1300 = vunpack.c.l.b16 %v544
      %v1301 = vunpack.c.h.b16 %v544
      %v1302 = vunpack.c.l.b16 %v545
      %v1303 = vunpack.c.h.b16 %v545
      %v1304 = vunpack.c.l.b16 %v546
      %v1305 = vunpack.c.h.b16 %v546
      %v1306 = vunpack.c.l.b16 %v547
      %v1307 = vunpack.c.h.b16 %v547
      %v1308 = vunpack.c.l.b16 %v548
      %v1309 = vunpack.c.h.b16 %v548
      %v1310 = vunpack.c.l.b16 %v549
      %v1311 = vunpack.c.h.b16 %v549
      %v1312 = vunpack.c.l.b16 %v550
      %v1313 = vunpack.c.h.b16 %v550
      %v1314 = vunpack.c.l.b16 %v551
      %v1315 = vunpack.c.h.b16 %v551
      %v1316 = vunpack.c.l.b16 %v552
      %v1317 = vunpack.c.h.b16 %v552
      %v1318 = vunpack.c.l.b16 %v553
      %v1319 = vunpack.c.h.b16 %v553
      %v1320 = vunpack.c.l.b16 %v554
      %v1321 = vunpack.c.h.b16 %v554
      %v1322 = vunpack.c.l.b16 %v555
      %v1323 = vunpack.c.h.b16 %v555
      %v1324 = vunpack.c.l.b16 %v556
      %v1325 = vunpack.c.h.b16 %v556
      %v1326 = vunpack.c.l.b16 %v557
      %v1327 = vunpack.c.h.b16 %v557
      %v1328 = vunpack.c.l.b16 %v558
      %v1329 = vunpack.c.h.b16 %v558
      %v1330 = vunpack.c.l.b16 %v559
      %v1331 = vunpack.c.h.b16 %v559
      %v1332 = vunpack.c.l.b16 %v560
      %v1333 = vunpack.c.h.b16 %v560
      %v1334 = vunpack.c.l.b16 %v561
      %v1335 = vunpack.c.h.b16 %v561
      %v1336 = vunpack.c.l.b16 %v562
      %v1337 = vunpack.c.h.b16 %v562
      %v1338 = vunpack.c.l.b16 %v563
      %v1339 = vunpack.c.h.b16 %v563
      %v1340 = vunpack.c.l.b16 %v564
      %v1341 = vunpack.c.h.b16 %v564
      %v1342 = vunpack.c.l.b16 %v565
      %v1343 = vunpack.c.h.b16 %v565
      %v1344 = vunpack.c.l.b16 %v566
      %v1345 = vunpack.c.h.b16 %v566
      %v1346 = vunpack.c.l.b16 %v567
      %v1347 = vunpack.c.h.b16 %v567
      %v1348 = vunpack.c.l.b16 %v568
      %v1349 = vunpack.c.h.b16 %v568
      %v1350 = vunpack.c.l.b16 %v569
      %v1351 = vunpack.c.h.b16 %v569
      %v1352 = vpack.c.b16 %v848, %v840
      %v1353 = vpack.c.b16 %v849, %v841
      %v1354 = vpack.c.b16 %v850, %v842
      %v1355 = vpack.c.b16 %v851, %v843
      %v1356 = vpack.c.b16 %v852, %v844
      %v1357 = vpack.c.b16 %v853, %v845
      %v1358 = vpack.c.b16 %v854, %v846
      %v1359 = vpack.c.b16 %v855, %v847
      %v1360 = vpack.c.b16 %v864, %v856
      %v1361 = vpack.c.b16 %v865, %v857
      %v1362 = vpack.c.b16 %v866, %v858
      %v1363 = vpack.c.b16 %v867, %v859
      %v1364 = vpack.c.b16 %v868, %v860
      %v1365 = vpack.c.b16 %v869, %v861
      %v1366 = vpack.c.b16 %v870, %v862
      %v1367 = vpack.c.b16 %v871, %v863
      %v1368 = vpack.c.b16 %v880, %v872
      %v1369 = vpack.c.b16 %v881, %v873
      %v1370 = vpack.c.b16 %v882, %v874
      %v1371 = vpack.c.b16 %v883, %v875
      %v1372 = vpack.c.b16 %v884, %v876
      %v1373 = vpack.c.b16 %v885, %v877
      %v1374 = vpack.c.b16 %v886, %v878
      %v1375 = vpack.c.b16 %v887, %v879
      %v1376 = vpack.c.b16 %v896, %v888
      %v1377 = vpack.c.b16 %v897, %v889
      %v1378 = vpack.c.b16 %v898, %v890
      %v1379 = vpack.c.b16 %v899, %v891
      %v1380 = vpack.c.b16 %v900, %v892
      %v1381 = vpack.c.b16 %v901, %v893
      %v1382 = vpack.c.b16 %v902, %v894
      %v1383 = vpack.c.b16 %v903, %v895
      %v1384 = vpack.c.b16 %v912, %v904
      %v1385 = vpack.c.b16 %v913, %v905
      %v1386 = vpack.c.b16 %v914, %v906
      %v1387 = vpack.c.b16 %v915, %v907
      %v1388 = vpack.c.b16 %v916, %v908
      %v1389 = vpack.c.b16 %v917, %v909
      %v1390 = vpack.c.b16 %v918, %v910
      %v1391 = vpack.c.b16 %v919, %v911
      %v1392 = vpack.c.b16 %v928, %v920
      %v1393 = vpack.c.b16 %v929, %v921
      %v1394 = vpack.c.b16 %v930, %v922
      %v1395 = vpack.c.b16 %v931, %v923
      %v1396 = vpack.c.b16 %v932, %v924
      %v1397 = vpack.c.b16 %v933, %v925
      %v1398 = vpack.c.b16 %v934, %v926
      %v1399 = vpack.c.b16 %v935, %v927
      %v1400 = vpack.c.b16 %v944, %v936
      %v1401 = vpack.c.b16 %v945, %v937
      %v1402 = vpack.c.b16 %v946, %v938
      %v1403 = vpack.c.b16 %v947, %v939
      %v1404 = vpack.c.b16 %v948, %v940
      %v1405 = vpack.c.b16 %v949, %v941
      %v1406 = vpack.c.b16 %v950, %v942
      %v1407 = vpack.c.b16 %v951, %v943
      %v1408 = vpack.c.b16 %v960, %v952
      %v1409 = vpack.c.b16 %v961, %v953
      %v1410 = vpack.c.b16 %v962, %v954
      %v1411 = vpack.c.b16 %v963, %v955
      %v1412 = vpack.c.b16 %v964, %v956
      %v1413 = vpack.c.b16 %v965, %v957
      %v1414 = vpack.c.b16 %v966, %v958
      %v1415 = vpack.c.b16 %v967, %v959
      %v1416 = vpack.c.b16 %v976, %v968
      %v1417 = vpack.c.b16 %v977, %v969
      %v1418 = vpack.c.b16 %v978, %v970
      %v1419 = vpack.c.b16 %v979, %v971
      %v1420 = vpack.c.b16 %v980, %v972
      %v1421 = vpack.c.b16 %v981, %v973
      %v1422 = vpack.c.b16 %v982, %v974
      %v1423 = vpack.c.b16 %v983, %v975
      %v1424 = vpack.c.b16 %v992, %v984
      %v1425 = vpack.c.b16 %v993, %v985
      %v1426 = vpack.c.b16 %v994, %v986
      %v1427 = vpack.c.b16 %v995, %v987
      %v1428 = vpack.c.b16 %v996, %v988
      %v1429 = vpack.c.b16 %v997, %v989
      %v1430 = vpack.c.b16 %v998, %v990
      %v1431 = vpack.c.b16 %v999, %v991
      %v1432 = vpack.c.b16 %v1008, %v1000
      %v1433 = vpack.c.b16 %v1009, %v1001
      %v1434 = vpack.c.b16 %v1010, %v1002
      %v1435 = vpack.c.b16 %v1011, %v1003
      %v1436 = vpack.c.b16 %v1012, %v1004
      %v1437 = vpack.c.b16 %v1013, %v1005
      %v1438 = vpack.c.b16 %v1014, %v1006
      %v1439 = vpack.c.b16 %v1015, %v1007
      %v1440 = vpack.c.b16 %v1024, %v1016
      %v1441 = vpack.c.b16 %v1025, %v1017
      %v1442 = vpack.c.b16 %v1026, %v1018
      %v1443 = vpack.c.b16 %v1027, %v1019
      %v1444 = vpack.c.b16 %v1028, %v1020
      %v1445 = vpack.c.b16 %v1029, %v1021
      %v1446 = vpack.c.b16 %v1030, %v1022
      %v1447 = vpack.c.b16 %v1031, %v1023
      %v1448 = vpack.c.b16 %v1040, %v1032
      %v1449 = vpack.c.b16 %v1041, %v1033
      %v1450 = vpack.c.b16 %v1042, %v1034
      %v1451 = vpack.c.b16 %v1043, %v1035
      %v1452 = vpack.c.b16 %v1044, %v1036
      %v1453 = vpack.c.b16 %v1045, %v1037
      %v1454 = vpack.c.b16 %v1046, %v1038
      %v1455 = vpack.c.b16 %v1047, %v1039
      %v1456 = vpack.c.b16 %v1056, %v1048
      %v1457 = vpack.c.b16 %v1057, %v1049
      %v1458 = vpack.c.b16 %v1058, %v1050
      %v1459 = vpack.c.b16 %v1059, %v1051
      %v1460 = vpack.c.b16 %v1060, %v1052
      %v1461 = vpack.c.b16 %v1061, %v1053
      %v1462 = vpack.c.b16 %v1062, %v1054
      %v1463 = vpack.c.b16 %v1063, %v1055
      %v1464 = vpack.c.b16 %v1072, %v1064
      %v1465 = vpack.c.b16 %v1073, %v1065
      %v1466 = vpack.c.b16 %v1074, %v1066
      %v1467 = vpack.c.b16 %v1075, %v1067
      %v1468 = vpack.c.b16 %v1076, %v1068
      %v1469 = vpack.c.b16 %v1077, %v1069
      %v1470 = vpack.c.b16 %v1078, %v1070
      %v1471 = vpack.c.b16 %v1079, %v1071
      %v1472 = vpack.c.b16 %v1088, %v1080
      %v1473 = vpack.c.b16 %v1089, %v1081
      %v1474 = vpack.c.b16 %v1090, %v1082
      %v1475 = vpack.c.b16 %v1091, %v1083
      %v1476 = vpack.c.b16 %v1092, %v1084
      %v1477 = vpack.c.b16 %v1093, %v1085
      %v1478 = vpack.c.b16 %v1094, %v1086
      %v1479 = vpack.c.b16 %v1095, %v1087
      %v1480 = vpack.c.b16 %v1104, %v1096
      %v1481 = vpack.c.b16 %v1105, %v1097
      %v1482 = vpack.c.b16 %v1106, %v1098
      %v1483 = vpack.c.b16 %v1107, %v1099
      %v1484 = vpack.c.b16 %v1108, %v1100
      %v1485 = vpack.c.b16 %v1109, %v1101
      %v1486 = vpack.c.b16 %v1110, %v1102
      %v1487 = vpack.c.b16 %v1111, %v1103
      %v1488 = vpack.c.b16 %v1120, %v1112
      %v1489 = vpack.c.b16 %v1121, %v1113
      %v1490 = vpack.c.b16 %v1122, %v1114
      %v1491 = vpack.c.b16 %v1123, %v1115
      %v1492 = vpack.c.b16 %v1124, %v1116
      %v1493 = vpack.c.b16 %v1125, %v1117
      %v1494 = vpack.c.b16 %v1126, %v1118
      %v1495 = vpack.c.b16 %v1127, %v1119
      %v1496 = vpack.c.b16 %v1136, %v1128
      %v1497 = vpack.c.b16 %v1137, %v1129
      %v1498 = vpack.c.b16 %v1138, %v1130
      %v1499 = vpack.c.b16 %v1139, %v1131
      %v1500 = vpack.c.b16 %v1140, %v1132
      %v1501 = vpack.c.b16 %v1141, %v1133
      %v1502 = vpack.c.b16 %v1142, %v1134
      %v1503 = vpack.c.b16 %v1143, %v1135
      %v1504 = vpack.c.b16 %v1152, %v1144
      %v1505 = vpack.c.b16 %v1153, %v1145
      %v1506 = vpack.c.b16 %v1154, %v1146
      %v1507 = vpack.c.b16 %v1155, %v1147
      %v1508 = vpack.c.b16 %v1156, %v1148
      %v1509 = vpack.c.b16 %v1157, %v1149
      %v1510 = vpack.c.b16 %v1158, %v1150
      %v1511 = vpack.c.b16 %v1159, %v1151
      %v1512 = vpack.c.b16 %v1168, %v1160
      %v1513 = vpack.c.b16 %v1169, %v1161
      %v1514 = vpack.c.b16 %v1170, %v1162
      %v1515 = vpack.c.b16 %v1171, %v1163
      %v1516 = vpack.c.b16 %v1172, %v1164
      %v1517 = vpack.c.b16 %v1173, %v1165
      %v1518 = vpack.c.b16 %v1174, %v1166
      %v1519 = vpack.c.b16 %v1175, %v1167
      %v1520 = vpack.c.b16 %v1184, %v1176
      %v1521 = vpack.c.b16 %v1185, %v1177
      %v1522 = vpack.c.b16 %v1186, %v1178
      %v1523 = vpack.c.b16 %v1187, %v1179
      %v1524 = vpack.c.b16 %v1188, %v1180
      %v1525 = vpack.c.b16 %v1189, %v1181
      %v1526 = vpack.c.b16 %v1190, %v1182
      %v1527 = vpack.c.b16 %v1191, %v1183
      %v1528 = vpack.c.b16 %v1200, %v1192
      %v1529 = vpack.c.b16 %v1201, %v1193
      %v1530 = vpack.c.b16 %v1202, %v1194
      %v1531 = vpack.c.b16 %v1203, %v1195
      %v1532 = vpack.c.b16 %v1204, %v1196
      %v1533 = vpack.c.b16 %v1205, %v1197
      %v1534 = vpack.c.b16 %v1206, %v1198
      %v1535 = vpack.c.b16 %v1207, %v1199
      %v1536 = vpack.c.b16 %v1216, %v1208
      %v1537 = vpack.c.b16 %v1217, %v1209
      %v1538 = vpack.c.b16 %v1218, %v1210
      %v1539 = vpack.c.b16 %v1219, %v1211
      %v1540 = vpack.c.b16 %v1220, %v1212
      %v1541 = vpack.c.b16 %v1221, %v1213
      %v1542 = vpack.c.b16 %v1222, %v1214
      %v1543 = vpack.c.b16 %v1223, %v1215
      %v1544 = vpack.c.b16 %v1232, %v1224
      %v1545 = vpack.c.b16 %v1233, %v1225
      %v1546 = vpack.c.b16 %v1234, %v1226
      %v1547 = vpack.c.b16 %v1235, %v1227
      %v1548 = vpack.c.b16 %v1236, %v1228
      %v1549 = vpack.c.b16 %v1237, %v1229
      %v1550 = vpack.c.b16 %v1238, %v1230
      %v1551 = vpack.c.b16 %v1239, %v1231
      %v1552 = vpack.c.b16 %v1248, %v1240
      %v1553 = vpack.c.b16 %v1249, %v1241
      %v1554 = vpack.c.b16 %v1250, %v1242
      %v1555 = vpack.c.b16 %v1251, %v1243
      %v1556 = vpack.c.b16 %v1252, %v1244
      %v1557 = vpack.c.b16 %v1253, %v1245
      %v1558 = vpack.c.b16 %v1254, %v1246
      %v1559 = vpack.c.b16 %v1255, %v1247
      %v1560 = vpack.c.b16 %v1264, %v1256
      %v1561 = vpack.c.b16 %v1265, %v1257
      %v1562 = vpack.c.b16 %v1266, %v1258
      %v1563 = vpack.c.b16 %v1267, %v1259
      %v1564 = vpack.c.b16 %v1268, %v1260
      %v1565 = vpack.c.b16 %v1269, %v1261
      %v1566 = vpack.c.b16 %v1270, %v1262
      %v1567 = vpack.c.b16 %v1271, %v1263
      %v1568 = vpack.c.b16 %v1280, %v1272
      %v1569 = vpack.c.b16 %v1281, %v1273
      %v1570 = vpack.c.b16 %v1282, %v1274
      %v1571 = vpack.c.b16 %v1283, %v1275
      %v1572 = vpack.c.b16 %v1284, %v1276
      %v1573 = vpack.c.b16 %v1285, %v1277
      %v1574 = vpack.c.b16 %v1286, %v1278
      %v1575 = vpack.c.b16 %v1287, %v1279
      %v1576 = vpack.c.b16 %v1296, %v1288
      %v1577 = vpack.c.b16 %v1297, %v1289
      %v1578 = vpack.c.b16 %v1298, %v1290
      %v1579 = vpack.c.b16 %v1299, %v1291
      %v1580 = vpack.c.b16 %v1300, %v1292
      %v1581 = vpack.c.b16 %v1301, %v1293
      %v1582 = vpack.c.b16 %v1302, %v1294
      %v1583 = vpack.c.b16 %v1303, %v1295
      %v1584 = vpack.c.b16 %v1312, %v1304
      %v1585 = vpack.c.b16 %v1313, %v1305
      %v1586 = vpack.c.b16 %v1314, %v1306
      %v1587 = vpack.c.b16 %v1315, %v1307
      %v1588 = vpack.c.b16 %v1316, %v1308
      %v1589 = vpack.c.b16 %v1317, %v1309
      %v1590 = vpack.c.b16 %v1318, %v1310
      %v1591 = vpack.c.b16 %v1319, %v1311
      %v1592 = vpack.c.b16 %v1328, %v1320
      %v1593 = vpack.c.b16 %v1329, %v1321
      %v1594 = vpack.c.b16 %v1330, %v1322
      %v1595 = vpack.c.b16 %v1331, %v1323
      %v1596 = vpack.c.b16 %v1332, %v1324
      %v1597 = vpack.c.b16 %v1333, %v1325
      %v1598 = vpack.c.b16 %v1334, %v1326
      %v1599 = vpack.c.b16 %v1335, %v1327
      %v1600 = vpack.c.b16 %v1344, %v1336
      %v1601 = vpack.c.b16 %v1345, %v1337
      %v1602 = vpack.c.b16 %v1346, %v1338
      %v1603 = vpack.c.b16 %v1347, %v1339
      %v1604 = vpack.c.b16 %v1348, %v1340
      %v1605 = vpack.c.b16 %v1349, %v1341
      %v1606 = vpack.c.b16 %v1350, %v1342
      %v1607 = vpack.c.b16 %v1351, %v1343
      %1864 = vmatprep.subr.bf16.mxu0 %v1409
      %1865 = vmatpush1.bf16.msra.mxu0 %v1408
      %1866 = vmatprep.subr.bf16.mxu0 %v1401
      %1867 = vmatpush1.bf16.msra.mxu0 %v1400
      %1868 = vmatprep.subr.bf16.mxu0 %v1393
      %1869 = vmatpush1.bf16.msra.mxu0 %v1392
      %1870 = vmatprep.subr.bf16.mxu0 %v1385
      %1871 = vmatpush1.bf16.msra.mxu0 %v1384
      %1872 = vmatprep.subr.bf16.mxu0 %v1377
      %1873 = vmatpush1.bf16.msra.mxu0 %v1376
      %1874 = vmatprep.subr.bf16.mxu0 %v1369
      %1875 = vmatpush1.bf16.msra.mxu0 %v1368
      %1876 = vmatprep.subr.bf16.mxu0 %v1361
      %1877 = vmatpush1.bf16.msra.mxu0 %v1360
      %1878 = vmatprep.subr.bf16.mxu0 %v1353
      %1879 = vmatpush1.bf16.msra.mxu0 %v1352
      %1880 = vmatprep.subr.bf16.mxu0 %v1473
      %1881 = vmatpush2.bf16.msra.mxu0 %v1472
      %1882 = vmatprep.subr.bf16.mxu0 %v1465
      %1883 = vmatpush2.bf16.msra.mxu0 %v1464
      %1884 = vmatprep.subr.bf16.mxu0 %v1457
      %1885 = vmatpush2.bf16.msra.mxu0 %v1456
      %1886 = vmatprep.subr.bf16.mxu0 %v1449
      %1887 = vmatpush2.bf16.msra.mxu0 %v1448
      %1888 = vmatprep.subr.bf16.mxu0 %v1441
      %1889 = vmatpush2.bf16.msra.mxu0 %v1440
      %1890 = vmatprep.subr.bf16.mxu0 %v1433
      %1891 = vmatpush2.bf16.msra.mxu0 %v1432
      %1892 = vmatprep.subr.bf16.mxu0 %v1425
      %1893 = vmatpush2.bf16.msra.mxu0 %v1424
      %1894 = vmatprep.subr.bf16.mxu0 %v1417
      %1895 = vmatpush2.bf16.msra.mxu0 %v1416
      %1896 = vmatprep.mubr.bf16.mxu0 %v577
      %1897 = vmatmul.mubr.bf16.gmra.mxu0 %v576
      %v1898 = vpop.f32.mrf.mxu0
      %v1899 = vadd.f32 0.0, %v1898
      %v1900 = vpop.f32.mrf.mxu0
      %v1901 = vadd.f32 0.0, %v1900
      %v1902 = vpop.f32.mrf.mxu0
      %v1903 = vpop.f32.mrf.mxu0
      %1904 = vdwg.mxu0
      %1905 = vmatprep.subr.bf16.mxu0 %v1537
      %1906 = vmatpush1.bf16.msra.mxu0 %v1536
      %1907 = vmatprep.subr.bf16.mxu0 %v1529
      %1908 = vmatpush1.bf16.msra.mxu0 %v1528
      %1909 = vmatprep.subr.bf16.mxu0 %v1521
      %1910 = vmatpush1.bf16.msra.mxu0 %v1520
      %1911 = vmatprep.subr.bf16.mxu0 %v1513
      %1912 = vmatpush1.bf16.msra.mxu0 %v1512
      %1913 = vmatprep.subr.bf16.mxu0 %v1505
      %1914 = vmatpush1.bf16.msra.mxu0 %v1504
      %1915 = vmatprep.subr.bf16.mxu0 %v1497
      %1916 = vmatpush1.bf16.msra.mxu0 %v1496
      %1917 = vmatprep.subr.bf16.mxu0 %v1489
      %1918 = vmatpush1.bf16.msra.mxu0 %v1488
      %1919 = vmatprep.subr.bf16.mxu0 %v1481
      %1920 = vmatpush1.bf16.msra.mxu0 %v1480
      %1921 = vmatprep.subr.bf16.mxu0 %v1601
      %1922 = vmatpush2.bf16.msra.mxu0 %v1600
      %1923 = vmatprep.subr.bf16.mxu0 %v1593
      %1924 = vmatpush2.bf16.msra.mxu0 %v1592
      %1925 = vmatprep.subr.bf16.mxu0 %v1585
      %1926 = vmatpush2.bf16.msra.mxu0 %v1584
      %1927 = vmatprep.subr.bf16.mxu0 %v1577
      %1928 = vmatpush2.bf16.msra.mxu0 %v1576
      %1929 = vmatprep.subr.bf16.mxu0 %v1569
      %1930 = vmatpush2.bf16.msra.mxu0 %v1568
      %1931 = vmatprep.subr.bf16.mxu0 %v1561
      %1932 = vmatpush2.bf16.msra.mxu0 %v1560
      %1933 = vmatprep.subr.bf16.mxu0 %v1553
      %1934 = vmatpush2.bf16.msra.mxu0 %v1552
      %1935 = vmatprep.subr.bf16.mxu0 %v1545
      %1936 = vmatpush2.bf16.msra.mxu0 %v1544
      %1937 = vmatprep.mubr.bf16.mxu0 %v579
      %1938 = vmatmul.mubr.bf16.gmra.mxu0 %v578
      %v1939 = vpop.f32.mrf.mxu0
      %v1940 = vadd.f32 %v1899, %v1939
      %v1941 = vpop.f32.mrf.mxu0
      %v1942 = vadd.f32 %v1901, %v1941
      %v1943 = vpop.f32.mrf.mxu0
      %v1944 = vpop.f32.mrf.mxu0
      %1945 = vdwg.mxu0
      %1946 = vmatprep.subr.bf16.mxu0 %v1411
      %1947 = vmatpush1.bf16.msra.mxu0 %v1410
      %1948 = vmatprep.subr.bf16.mxu0 %v1403
      %1949 = vmatpush1.bf16.msra.mxu0 %v1402
      %1950 = vmatprep.subr.bf16.mxu0 %v1395
      %1951 = vmatpush1.bf16.msra.mxu0 %v1394
      %1952 = vmatprep.subr.bf16.mxu0 %v1387
      %1953 = vmatpush1.bf16.msra.mxu0 %v1386
      %1954 = vmatprep.subr.bf16.mxu0 %v1379
      %1955 = vmatpush1.bf16.msra.mxu0 %v1378
      %1956 = vmatprep.subr.bf16.mxu0 %v1371
      %1957 = vmatpush1.bf16.msra.mxu0 %v1370
      %1958 = vmatprep.subr.bf16.mxu0 %v1363
      %1959 = vmatpush1.bf16.msra.mxu0 %v1362
      %1960 = vmatprep.subr.bf16.mxu0 %v1355
      %1961 = vmatpush1.bf16.msra.mxu0 %v1354
      %1962 = vmatprep.subr.bf16.mxu0 %v1475
      %1963 = vmatpush2.bf16.msra.mxu0 %v1474
      %1964 = vmatprep.subr.bf16.mxu0 %v1467
      %1965 = vmatpush2.bf16.msra.mxu0 %v1466
      %1966 = vmatprep.subr.bf16.mxu0 %v1459
      %1967 = vmatpush2.bf16.msra.mxu0 %v1458
      %1968 = vmatprep.subr.bf16.mxu0 %v1451
      %1969 = vmatpush2.bf16.msra.mxu0 %v1450
      %1970 = vmatprep.subr.bf16.mxu0 %v1443
      %1971 = vmatpush2.bf16.msra.mxu0 %v1442
      %1972 = vmatprep.subr.bf16.mxu0 %v1435
      %1973 = vmatpush2.bf16.msra.mxu0 %v1434
      %1974 = vmatprep.subr.bf16.mxu0 %v1427
      %1975 = vmatpush2.bf16.msra.mxu0 %v1426
      %1976 = vmatprep.subr.bf16.mxu0 %v1419
      %1977 = vmatpush2.bf16.msra.mxu0 %v1418
      %1978 = vmatprep.mubr.bf16.mxu0 %v577
      %1979 = vmatmul.mubr.bf16.gmra.mxu0 %v576
      %v1980 = vpop.f32.mrf.mxu0
      %v1981 = vadd.f32 0.0, %v1980
      %v1982 = vpop.f32.mrf.mxu0
      %v1983 = vadd.f32 0.0, %v1982
      %v1984 = vpop.f32.mrf.mxu0
      %v1985 = vpop.f32.mrf.mxu0
      %1986 = vdwg.mxu0
      %1987 = vmatprep.subr.bf16.mxu0 %v1539
      %1988 = vmatpush1.bf16.msra.mxu0 %v1538
      %1989 = vmatprep.subr.bf16.mxu0 %v1531
      %1990 = vmatpush1.bf16.msra.mxu0 %v1530
      %1991 = vmatprep.subr.bf16.mxu0 %v1523
      %1992 = vmatpush1.bf16.msra.mxu0 %v1522
      %1993 = vmatprep.subr.bf16.mxu0 %v1515
      %1994 = vmatpush1.bf16.msra.mxu0 %v1514
      %1995 = vmatprep.subr.bf16.mxu0 %v1507
      %1996 = vmatpush1.bf16.msra.mxu0 %v1506
      %1997 = vmatprep.subr.bf16.mxu0 %v1499
      %1998 = vmatpush1.bf16.msra.mxu0 %v1498
      %1999 = vmatprep.subr.bf16.mxu0 %v1491
      %2000 = vmatpush1.bf16.msra.mxu0 %v1490
      %2001 = vmatprep.subr.bf16.mxu0 %v1483
      %2002 = vmatpush1.bf16.msra.mxu0 %v1482
      %2003 = vmatprep.subr.bf16.mxu0 %v1603
      %2004 = vmatpush2.bf16.msra.mxu0 %v1602
      %2005 = vmatprep.subr.bf16.mxu0 %v1595
      %2006 = vmatpush2.bf16.msra.mxu0 %v1594
      %2007 = vmatprep.subr.bf16.mxu0 %v1587
      %2008 = vmatpush2.bf16.msra.mxu0 %v1586
      %2009 = vmatprep.subr.bf16.mxu0 %v1579
      %2010 = vmatpush2.bf16.msra.mxu0 %v1578
      %2011 = vmatprep.subr.bf16.mxu0 %v1571
      %2012 = vmatpush2.bf16.msra.mxu0 %v1570
      %2013 = vmatprep.subr.bf16.mxu0 %v1563
      %2014 = vmatpush2.bf16.msra.mxu0 %v1562
      %2015 = vmatprep.subr.bf16.mxu0 %v1555
      %2016 = vmatpush2.bf16.msra.mxu0 %v1554
      %2017 = vmatprep.subr.bf16.mxu0 %v1547
      %2018 = vmatpush2.bf16.msra.mxu0 %v1546
      %2019 = vmatprep.mubr.bf16.mxu0 %v579
      %2020 = vmatmul.mubr.bf16.gmra.mxu0 %v578
      %v2021 = vpop.f32.mrf.mxu0
      %v2022 = vadd.f32 %v1981, %v2021
      %v2023 = vpop.f32.mrf.mxu0
      %v2024 = vadd.f32 %v1983, %v2023
      %v2025 = vpop.f32.mrf.mxu0
      %v2026 = vpop.f32.mrf.mxu0
      %2027 = vdwg.mxu0
      %2028 = vmatprep.subr.bf16.mxu0 %v1413
      %2029 = vmatpush1.bf16.msra.mxu0 %v1412
      %2030 = vmatprep.subr.bf16.mxu0 %v1405
      %2031 = vmatpush1.bf16.msra.mxu0 %v1404
      %2032 = vmatprep.subr.bf16.mxu0 %v1397
      %2033 = vmatpush1.bf16.msra.mxu0 %v1396
      %2034 = vmatprep.subr.bf16.mxu0 %v1389
      %2035 = vmatpush1.bf16.msra.mxu0 %v1388
      %2036 = vmatprep.subr.bf16.mxu0 %v1381
      %2037 = vmatpush1.bf16.msra.mxu0 %v1380
      %2038 = vmatprep.subr.bf16.mxu0 %v1373
      %2039 = vmatpush1.bf16.msra.mxu0 %v1372
      %2040 = vmatprep.subr.bf16.mxu0 %v1365
      %2041 = vmatpush1.bf16.msra.mxu0 %v1364
      %2042 = vmatprep.subr.bf16.mxu0 %v1357
      %2043 = vmatpush1.bf16.msra.mxu0 %v1356
      %2044 = vmatprep.subr.bf16.mxu0 %v1477
      %2045 = vmatpush2.bf16.msra.mxu0 %v1476
      %2046 = vmatprep.subr.bf16.mxu0 %v1469
      %2047 = vmatpush2.bf16.msra.mxu0 %v1468
      %2048 = vmatprep.subr.bf16.mxu0 %v1461
      %2049 = vmatpush2.bf16.msra.mxu0 %v1460
      %2050 = vmatprep.subr.bf16.mxu0 %v1453
      %2051 = vmatpush2.bf16.msra.mxu0 %v1452
      %2052 = vmatprep.subr.bf16.mxu0 %v1445
      %2053 = vmatpush2.bf16.msra.mxu0 %v1444
      %2054 = vmatprep.subr.bf16.mxu0 %v1437
      %2055 = vmatpush2.bf16.msra.mxu0 %v1436
      %2056 = vmatprep.subr.bf16.mxu0 %v1429
      %2057 = vmatpush2.bf16.msra.mxu0 %v1428
      %2058 = vmatprep.subr.bf16.mxu0 %v1421
      %2059 = vmatpush2.bf16.msra.mxu0 %v1420
      %2060 = vmatprep.mubr.bf16.mxu0 %v577
      %2061 = vmatmul.mubr.bf16.gmra.mxu0 %v576
      %v2062 = vpop.f32.mrf.mxu0
      %v2063 = vadd.f32 0.0, %v2062
      %v2064 = vpop.f32.mrf.mxu0
      %v2065 = vadd.f32 0.0, %v2064
      %v2066 = vpop.f32.mrf.mxu0
      %v2067 = vpop.f32.mrf.mxu0
      %2068 = vdwg.mxu0
      %2069 = vmatprep.subr.bf16.mxu0 %v1541
      %2070 = vmatpush1.bf16.msra.mxu0 %v1540
      %2071 = vmatprep.subr.bf16.mxu0 %v1533
      %2072 = vmatpush1.bf16.msra.mxu0 %v1532
      %2073 = vmatprep.subr.bf16.mxu0 %v1525
      %2074 = vmatpush1.bf16.msra.mxu0 %v1524
      %2075 = vmatprep.subr.bf16.mxu0 %v1517
      %2076 = vmatpush1.bf16.msra.mxu0 %v1516
      %2077 = vmatprep.subr.bf16.mxu0 %v1509
      %2078 = vmatpush1.bf16.msra.mxu0 %v1508
      %2079 = vmatprep.subr.bf16.mxu0 %v1501
      %2080 = vmatpush1.bf16.msra.mxu0 %v1500
      %2081 = vmatprep.subr.bf16.mxu0 %v1493
      %2082 = vmatpush1.bf16.msra.mxu0 %v1492
      %2083 = vmatprep.subr.bf16.mxu0 %v1485
      %2084 = vmatpush1.bf16.msra.mxu0 %v1484
      %2085 = vmatprep.subr.bf16.mxu0 %v1605
      %2086 = vmatpush2.bf16.msra.mxu0 %v1604
      %2087 = vmatprep.subr.bf16.mxu0 %v1597
      %2088 = vmatpush2.bf16.msra.mxu0 %v1596
      %2089 = vmatprep.subr.bf16.mxu0 %v1589
      %2090 = vmatpush2.bf16.msra.mxu0 %v1588
      %2091 = vmatprep.subr.bf16.mxu0 %v1581
      %2092 = vmatpush2.bf16.msra.mxu0 %v1580
      %2093 = vmatprep.subr.bf16.mxu0 %v1573
      %2094 = vmatpush2.bf16.msra.mxu0 %v1572
      %2095 = vmatprep.subr.bf16.mxu0 %v1565
      %2096 = vmatpush2.bf16.msra.mxu0 %v1564
      %2097 = vmatprep.subr.bf16.mxu0 %v1557
      %2098 = vmatpush2.bf16.msra.mxu0 %v1556
      %2099 = vmatprep.subr.bf16.mxu0 %v1549
      %2100 = vmatpush2.bf16.msra.mxu0 %v1548
      %2101 = vmatprep.mubr.bf16.mxu0 %v579
      %2102 = vmatmul.mubr.bf16.gmra.mxu0 %v578
      %v2103 = vpop.f32.mrf.mxu0
      %v2104 = vadd.f32 %v2063, %v2103
      %v2105 = vpop.f32.mrf.mxu0
      %v2106 = vadd.f32 %v2065, %v2105
      %v2107 = vpop.f32.mrf.mxu0
      %v2108 = vpop.f32.mrf.mxu0
      %2109 = vdwg.mxu0
      %2110 = vmatprep.subr.bf16.mxu0 %v1415
      %2111 = vmatpush1.bf16.msra.mxu0 %v1414
      %2112 = vmatprep.subr.bf16.mxu0 %v1407
      %2113 = vmatpush1.bf16.msra.mxu0 %v1406
      %2114 = vmatprep.subr.bf16.mxu0 %v1399
      %2115 = vmatpush1.bf16.msra.mxu0 %v1398
      %2116 = vmatprep.subr.bf16.mxu0 %v1391
      %2117 = vmatpush1.bf16.msra.mxu0 %v1390
      %2118 = vmatprep.subr.bf16.mxu0 %v1383
      %2119 = vmatpush1.bf16.msra.mxu0 %v1382
      %2120 = vmatprep.subr.bf16.mxu0 %v1375
      %2121 = vmatpush1.bf16.msra.mxu0 %v1374
      %2122 = vmatprep.subr.bf16.mxu0 %v1367
      %2123 = vmatpush1.bf16.msra.mxu0 %v1366
      %2124 = vmatprep.subr.bf16.mxu0 %v1359
      %2125 = vmatpush1.bf16.msra.mxu0 %v1358
      %2126 = vmatprep.subr.bf16.mxu0 %v1479
      %2127 = vmatpush2.bf16.msra.mxu0 %v1478
      %2128 = vmatprep.subr.bf16.mxu0 %v1471
      %2129 = vmatpush2.bf16.msra.mxu0 %v1470
      %2130 = vmatprep.subr.bf16.mxu0 %v1463
      %2131 = vmatpush2.bf16.msra.mxu0 %v1462
      %2132 = vmatprep.subr.bf16.mxu0 %v1455
      %2133 = vmatpush2.bf16.msra.mxu0 %v1454
      %2134 = vmatprep.subr.bf16.mxu0 %v1447
      %2135 = vmatpush2.bf16.msra.mxu0 %v1446
      %2136 = vmatprep.subr.bf16.mxu0 %v1439
      %2137 = vmatpush2.bf16.msra.mxu0 %v1438
      %2138 = vmatprep.subr.bf16.mxu0 %v1431
      %2139 = vmatpush2.bf16.msra.mxu0 %v1430
      %2140 = vmatprep.subr.bf16.mxu0 %v1423
      %2141 = vmatpush2.bf16.msra.mxu0 %v1422
      %2142 = vmatprep.mubr.bf16.mxu0 %v577
      %2143 = vmatmul.mubr.bf16.gmra.mxu0 %v576
      %v2144 = vpop.f32.mrf.mxu0
      %v2145 = vadd.f32 0.0, %v2144
      %v2146 = vpop.f32.mrf.mxu0
      %v2147 = vadd.f32 0.0, %v2146
      %v2148 = vpop.f32.mrf.mxu0
      %v2149 = vpop.f32.mrf.mxu0
      %2150 = vdwg.mxu0
      %2151 = vmatprep.subr.bf16.mxu0 %v1543
      %2152 = vmatpush1.bf16.msra.mxu0 %v1542
      %2153 = vmatprep.subr.bf16.mxu0 %v1535
      %2154 = vmatpush1.bf16.msra.mxu0 %v1534
      %2155 = vmatprep.subr.bf16.mxu0 %v1527
      %2156 = vmatpush1.bf16.msra.mxu0 %v1526
      %2157 = vmatprep.subr.bf16.mxu0 %v1519
      %2158 = vmatpush1.bf16.msra.mxu0 %v1518
      %2159 = vmatprep.subr.bf16.mxu0 %v1511
      %2160 = vmatpush1.bf16.msra.mxu0 %v1510
      %2161 = vmatprep.subr.bf16.mxu0 %v1503
      %2162 = vmatpush1.bf16.msra.mxu0 %v1502
      %2163 = vmatprep.subr.bf16.mxu0 %v1495
      %2164 = vmatpush1.bf16.msra.mxu0 %v1494
      %2165 = vmatprep.subr.bf16.mxu0 %v1487
      %2166 = vmatpush1.bf16.msra.mxu0 %v1486
      %2167 = vmatprep.subr.bf16.mxu0 %v1607
      %2168 = vmatpush2.bf16.msra.mxu0 %v1606
      %2169 = vmatprep.subr.bf16.mxu0 %v1599
      %2170 = vmatpush2.bf16.msra.mxu0 %v1598
      %2171 = vmatprep.subr.bf16.mxu0 %v1591
      %2172 = vmatpush2.bf16.msra.mxu0 %v1590
      %2173 = vmatprep.subr.bf16.mxu0 %v1583
      %2174 = vmatpush2.bf16.msra.mxu0 %v1582
      %2175 = vmatprep.subr.bf16.mxu0 %v1575
      %2176 = vmatpush2.bf16.msra.mxu0 %v1574
      %2177 = vmatprep.subr.bf16.mxu0 %v1567
      %2178 = vmatpush2.bf16.msra.mxu0 %v1566
      %2179 = vmatprep.subr.bf16.mxu0 %v1559
      %2180 = vmatpush2.bf16.msra.mxu0 %v1558
      %2181 = vmatprep.subr.bf16.mxu0 %v1551
      %2182 = vmatpush2.bf16.msra.mxu0 %v1550
      %2183 = vmatprep.mubr.bf16.mxu0 %v579
      %2184 = vmatmul.mubr.bf16.gmra.mxu0 %v578
      %v2185 = vpop.f32.mrf.mxu0
      %v2186 = vadd.f32 %v2145, %v2185
      %v2187 = vpop.f32.mrf.mxu0
      %v2188 = vadd.f32 %v2147, %v2187
      %v2189 = vpop.f32.mrf.mxu0
      %v2190 = vpop.f32.mrf.mxu0
      %2191 = vdwg.mxu0
      %v2192 = vadd.f32 %v304, %v1940
      %v2193 = vadd.f32 %v305, %v1942
      %v2194 = vadd.f32 %v306, %v2022
      %v2195 = vadd.f32 %v307, %v2024
      %v2196 = vadd.f32 %v308, %v2104
      %v2197 = vadd.f32 %v309, %v2106
      %v2198 = vadd.f32 %v310, %v2186
      %v2199 = vadd.f32 %v311, %v2188
      %2200 = vst [vmem:[#allocation2] sm:$0xff] %v2192
      %2201 = vst [vmem:[#allocation2 + $0x8] sm:$0xff] %v2193
      %2202 = vst [vmem:[#allocation2 + $0x10] sm:$0xff] %v2194
      %2203 = vst [vmem:[#allocation2 + $0x18] sm:$0xff] %v2195
      %2204 = vst [vmem:[#allocation2 + $0x20] sm:$0xff] %v2196
      %2205 = vst [vmem:[#allocation2 + $0x28] sm:$0xff] %v2197
      %2206 = vst [vmem:[#allocation2 + $0x30] sm:$0xff] %v2198
      %2207 = vst [vmem:[#allocation2 + $0x38] sm:$0xff] %v2199
      %p2208 = scmp.eq.s32.totalorder %s18, 3
      // Predicated region
      $region53: #{cnn_forward.5} parent=47 // pred_check
        %p2209 = pneg %p2208
      $region54: #{cnn_forward.5} parent=47 // pred_check_branch
        %2211 = sbr.rel (%p2209) target = $region56
      $region55: #{cnn_forward.5} parent=47 // pred_region
        %v2212 = vld [vmem:[#allocation2] sm:$0xff]
        %v2213 = vld [vmem:[#allocation2 + $0x8] sm:$0xff]
        %v2214 = vld [vmem:[#allocation2 + $0x10] sm:$0xff]
        %v2215 = vld [vmem:[#allocation2 + $0x18] sm:$0xff]
        %v2216 = vld [vmem:[#allocation2 + $0x20] sm:$0xff]
        %v2217 = vld [vmem:[#allocation2 + $0x28] sm:$0xff]
        %v2218 = vld [vmem:[#allocation2 + $0x30] sm:$0xff]
        %v2219 = vld [vmem:[#allocation2 + $0x38] sm:$0xff]
        %v2220 = vld [vmem:[%s2] sm:$0xff]
        %v2222 = vlaneseq
        %v2223 = vshrl.u32 %v2222, 7
        %v2224 = vsub.s32 0, %v2223
        %v2225 = vrot.slane %v2220, %v2224
        %v2226 = vlaneseq
        %v2227 = vshrl.u32 %v2226, 7
        %v2228 = vsub.s32 1, %v2227
        %v2229 = vrot.slane %v2220, %v2228
        %v2230 = vlaneseq
        %v2231 = vshrl.u32 %v2230, 7
        %v2232 = vsub.s32 2, %v2231
        %v2233 = vrot.slane %v2220, %v2232
        %v2234 = vlaneseq
        %v2235 = vshrl.u32 %v2234, 7
        %v2236 = vsub.s32 3, %v2235
        %v2237 = vrot.slane %v2220, %v2236
        %v2238 = vlaneseq
        %v2239 = vshrl.u32 %v2238, 7
        %v2240 = vsub.s32 4, %v2239
        %v2241 = vrot.slane %v2220, %v2240
        %v2242 = vlaneseq
        %v2243 = vshrl.u32 %v2242, 7
        %v2244 = vsub.s32 5, %v2243
        %v2245 = vrot.slane %v2220, %v2244
        %v2246 = vlaneseq
        %v2247 = vshrl.u32 %v2246, 7
        %v2248 = vsub.s32 6, %v2247
        %v2249 = vrot.slane %v2220, %v2248
        %v2250 = vlaneseq
        %v2251 = vshrl.u32 %v2250, 7
        %v2252 = vsub.s32 7, %v2251
        %v2253 = vrot.slane %v2220, %v2252
        %v2262 = vadd.f32 %v2212, %v2225
        %v2263 = vadd.f32 %v2213, %v2229
        %v2264 = vadd.f32 %v2214, %v2233
        %v2265 = vadd.f32 %v2215, %v2237
        %v2266 = vadd.f32 %v2216, %v2241
        %v2267 = vadd.f32 %v2217, %v2245
        %v2268 = vadd.f32 %v2218, %v2249
        %v2269 = vadd.f32 %v2219, %v2253
        %v2270 = vmax.f32 %v2262, 0.0
        %v2271 = vmax.f32 %v2263, 0.0
        %v2272 = vmax.f32 %v2264, 0.0
        %v2273 = vmax.f32 %v2265, 0.0
        %v2274 = vmax.f32 %v2266, 0.0
        %v2275 = vmax.f32 %v2267, 0.0
        %v2276 = vmax.f32 %v2268, 0.0
        %v2277 = vmax.f32 %v2269, 0.0
        %v2278 = vpack.c.bf16 %v2270, %v2270
        %v2279 = vpack.c.bf16 %v2271, %v2271
        %v2280 = vpack.c.bf16 %v2272, %v2272
        %v2281 = vpack.c.bf16 %v2273, %v2273
        %v2282 = vpack.c.bf16 %v2274, %v2274
        %v2283 = vpack.c.bf16 %v2275, %v2275
        %v2284 = vpack.c.bf16 %v2276, %v2276
        %v2285 = vpack.c.bf16 %v2277, %v2277
        %v2286 = vld [vmem:[%s3] sm:$0xff]
        %v2287 = vld [vmem:[%s3 + $0x8] sm:$0xff]
        %v2288 = vld [vmem:[%s3 + $0x10] sm:$0xff]
        %v2289 = vld [vmem:[%s3 + $0x18] sm:$0xff]
        %v2290 = vld [vmem:[%s3 + $0x20] sm:$0xff]
        %v2291 = vld [vmem:[%s3 + $0x28] sm:$0xff]
        %v2292 = vld [vmem:[%s3 + $0x30] sm:$0xff]
        %v2293 = vld [vmem:[%s3 + $0x38] sm:$0xff]
        %v2294 = vld [vmem:[%s3 + $0x40] sm:$0xff]
        %v2295 = vld [vmem:[%s3 + $0x48] sm:$0xff]
        %v2296 = vld [vmem:[%s3 + $0x50] sm:$0xff]
        %v2297 = vld [vmem:[%s3 + $0x58] sm:$0xff]
        %v2298 = vld [vmem:[%s3 + $0x60] sm:$0xff]
        %v2299 = vld [vmem:[%s3 + $0x68] sm:$0xff]
        %v2300 = vld [vmem:[%s3 + $0x70] sm:$0xff]
        %v2301 = vld [vmem:[%s3 + $0x78] sm:$0xff]
        %v2302 = vld [vmem:[%s3 + $0x80] sm:$0xff]
        %v2303 = vld [vmem:[%s3 + $0x88] sm:$0xff]
        %v2304 = vld [vmem:[%s3 + $0x90] sm:$0xff]
        %v2305 = vld [vmem:[%s3 + $0x98] sm:$0xff]
        %v2306 = vld [vmem:[%s3 + $0xa0] sm:$0xff]
        %v2307 = vld [vmem:[%s3 + $0xa8] sm:$0xff]
        %v2308 = vld [vmem:[%s3 + $0xb0] sm:$0xff]
        %v2309 = vld [vmem:[%s3 + $0xb8] sm:$0xff]
        %v2310 = vld [vmem:[%s3 + $0xc0] sm:$0xff]
        %v2311 = vld [vmem:[%s3 + $0xc8] sm:$0xff]
        %v2312 = vld [vmem:[%s3 + $0xd0] sm:$0xff]
        %v2313 = vld [vmem:[%s3 + $0xd8] sm:$0xff]
        %v2314 = vld [vmem:[%s3 + $0xe0] sm:$0xff]
        %v2315 = vld [vmem:[%s3 + $0xe8] sm:$0xff]
        %v2316 = vld [vmem:[%s3 + $0xf0] sm:$0xff]
        %v2317 = vld [vmem:[%s3 + $0xf8] sm:$0xff]
        %v2318 = vld [vmem:[%s3 + $0x100] sm:$0xff]
        %v2319 = vld [vmem:[%s3 + $0x108] sm:$0xff]
        %v2320 = vld [vmem:[%s3 + $0x110] sm:$0xff]
        %v2321 = vld [vmem:[%s3 + $0x118] sm:$0xff]
        %v2322 = vld [vmem:[%s3 + $0x120] sm:$0xff]
        %v2323 = vld [vmem:[%s3 + $0x128] sm:$0xff]
        %v2324 = vld [vmem:[%s3 + $0x130] sm:$0xff]
        %v2325 = vld [vmem:[%s3 + $0x138] sm:$0xff]
        %v2326 = vld [vmem:[%s3 + $0x140] sm:$0xff]
        %v2327 = vld [vmem:[%s3 + $0x148] sm:$0xff]
        %v2328 = vld [vmem:[%s3 + $0x150] sm:$0xff]
        %v2329 = vld [vmem:[%s3 + $0x158] sm:$0xff]
        %v2330 = vld [vmem:[%s3 + $0x160] sm:$0xff]
        %v2331 = vld [vmem:[%s3 + $0x168] sm:$0xff]
        %v2332 = vld [vmem:[%s3 + $0x170] sm:$0xff]
        %v2333 = vld [vmem:[%s3 + $0x178] sm:$0xff]
        %v2334 = vld [vmem:[%s3 + $0x180] sm:$0xff]
        %v2335 = vld [vmem:[%s3 + $0x188] sm:$0xff]
        %v2336 = vld [vmem:[%s3 + $0x190] sm:$0xff]
        %v2337 = vld [vmem:[%s3 + $0x198] sm:$0xff]
        %v2338 = vld [vmem:[%s3 + $0x1a0] sm:$0xff]
        %v2339 = vld [vmem:[%s3 + $0x1a8] sm:$0xff]
        %v2340 = vld [vmem:[%s3 + $0x1b0] sm:$0xff]
        %v2341 = vld [vmem:[%s3 + $0x1b8] sm:$0xff]
        %v2342 = vld [vmem:[%s3 + $0x1c0] sm:$0xff]
        %v2343 = vld [vmem:[%s3 + $0x1c8] sm:$0xff]
        %v2344 = vld [vmem:[%s3 + $0x1d0] sm:$0xff]
        %v2345 = vld [vmem:[%s3 + $0x1d8] sm:$0xff]
        %v2346 = vld [vmem:[%s3 + $0x1e0] sm:$0xff]
        %v2347 = vld [vmem:[%s3 + $0x1e8] sm:$0xff]
        %v2348 = vld [vmem:[%s3 + $0x1f0] sm:$0xff]
        %v2349 = vld [vmem:[%s3 + $0x1f8] sm:$0xff]
        %v2350 = vld [vmem:[%s3 + $0x200] sm:$0xff]
        %v2351 = vld [vmem:[%s3 + $0x208] sm:$0xff]
        %v2352 = vld [vmem:[%s3 + $0x210] sm:$0xff]
        %v2353 = vld [vmem:[%s3 + $0x218] sm:$0xff]
        %v2354 = vld [vmem:[%s3 + $0x220] sm:$0xff]
        %v2355 = vld [vmem:[%s3 + $0x228] sm:$0xff]
        %v2356 = vld [vmem:[%s3 + $0x230] sm:$0xff]
        %v2357 = vld [vmem:[%s3 + $0x238] sm:$0xff]
        %v2358 = vld [vmem:[%s3 + $0x240] sm:$0xff]
        %v2359 = vld [vmem:[%s3 + $0x248] sm:$0xff]
        %v2360 = vld [vmem:[%s3 + $0x250] sm:$0xff]
        %v2361 = vld [vmem:[%s3 + $0x258] sm:$0xff]
        %v2362 = vld [vmem:[%s3 + $0x260] sm:$0xff]
        %v2363 = vld [vmem:[%s3 + $0x268] sm:$0xff]
        %v2364 = vld [vmem:[%s3 + $0x270] sm:$0xff]
        %v2365 = vld [vmem:[%s3 + $0x278] sm:$0xff]
        %v2366 = vld [vmem:[%s3 + $0x280] sm:$0xff]
        %v2367 = vld [vmem:[%s3 + $0x288] sm:$0xff]
        %v2368 = vld [vmem:[%s3 + $0x290] sm:$0xff]
        %v2369 = vld [vmem:[%s3 + $0x298] sm:$0xff]
        %v2370 = vld [vmem:[%s3 + $0x2a0] sm:$0xff]
        %v2371 = vld [vmem:[%s3 + $0x2a8] sm:$0xff]
        %v2372 = vld [vmem:[%s3 + $0x2b0] sm:$0xff]
        %v2373 = vld [vmem:[%s3 + $0x2b8] sm:$0xff]
        %v2374 = vld [vmem:[%s3 + $0x2c0] sm:$0xff]
        %v2375 = vld [vmem:[%s3 + $0x2c8] sm:$0xff]
        %v2376 = vld [vmem:[%s3 + $0x2d0] sm:$0xff]
        %v2377 = vld [vmem:[%s3 + $0x2d8] sm:$0xff]
        %v2378 = vld [vmem:[%s3 + $0x2e0] sm:$0xff]
        %v2379 = vld [vmem:[%s3 + $0x2e8] sm:$0xff]
        %v2380 = vld [vmem:[%s3 + $0x2f0] sm:$0xff]
        %v2381 = vld [vmem:[%s3 + $0x2f8] sm:$0xff]
        %v2382 = vld [vmem:[%s3 + $0x300] sm:$0xff]
        %v2383 = vld [vmem:[%s3 + $0x308] sm:$0xff]
        %v2384 = vld [vmem:[%s3 + $0x310] sm:$0xff]
        %v2385 = vld [vmem:[%s3 + $0x318] sm:$0xff]
        %v2386 = vld [vmem:[%s3 + $0x320] sm:$0xff]
        %v2387 = vld [vmem:[%s3 + $0x328] sm:$0xff]
        %v2388 = vld [vmem:[%s3 + $0x330] sm:$0xff]
        %v2389 = vld [vmem:[%s3 + $0x338] sm:$0xff]
        %v2390 = vld [vmem:[%s3 + $0x340] sm:$0xff]
        %v2391 = vld [vmem:[%s3 + $0x348] sm:$0xff]
        %v2392 = vld [vmem:[%s3 + $0x350] sm:$0xff]
        %v2393 = vld [vmem:[%s3 + $0x358] sm:$0xff]
        %v2394 = vld [vmem:[%s3 + $0x360] sm:$0xff]
        %v2395 = vld [vmem:[%s3 + $0x368] sm:$0xff]
        %v2396 = vld [vmem:[%s3 + $0x370] sm:$0xff]
        %v2397 = vld [vmem:[%s3 + $0x378] sm:$0xff]
        %v2398 = vld [vmem:[%s3 + $0x380] sm:$0xff]
        %v2399 = vld [vmem:[%s3 + $0x388] sm:$0xff]
        %v2400 = vld [vmem:[%s3 + $0x390] sm:$0xff]
        %v2401 = vld [vmem:[%s3 + $0x398] sm:$0xff]
        %v2402 = vld [vmem:[%s3 + $0x3a0] sm:$0xff]
        %v2403 = vld [vmem:[%s3 + $0x3a8] sm:$0xff]
        %v2404 = vld [vmem:[%s3 + $0x3b0] sm:$0xff]
        %v2405 = vld [vmem:[%s3 + $0x3b8] sm:$0xff]
        %v2406 = vld [vmem:[%s3 + $0x3c0] sm:$0xff]
        %v2407 = vld [vmem:[%s3 + $0x3c8] sm:$0xff]
        %v2408 = vld [vmem:[%s3 + $0x3d0] sm:$0xff]
        %v2409 = vld [vmem:[%s3 + $0x3d8] sm:$0xff]
        %v2410 = vld [vmem:[%s3 + $0x3e0] sm:$0xff]
        %v2411 = vld [vmem:[%s3 + $0x3e8] sm:$0xff]
        %v2412 = vld [vmem:[%s3 + $0x3f0] sm:$0xff]
        %v2413 = vld [vmem:[%s3 + $0x3f8] sm:$0xff]
        %v2414 = vld [vmem:[%s3 + $0x400] sm:$0xff]
        %v2415 = vld [vmem:[%s3 + $0x408] sm:$0xff]
        %v2416 = vld [vmem:[%s3 + $0x410] sm:$0xff]
        %v2417 = vld [vmem:[%s3 + $0x418] sm:$0xff]
        %v2418 = vld [vmem:[%s3 + $0x420] sm:$0xff]
        %v2419 = vld [vmem:[%s3 + $0x428] sm:$0xff]
        %v2420 = vld [vmem:[%s3 + $0x430] sm:$0xff]
        %v2421 = vld [vmem:[%s3 + $0x438] sm:$0xff]
        %v2422 = vld [vmem:[%s3 + $0x440] sm:$0xff]
        %v2423 = vld [vmem:[%s3 + $0x448] sm:$0xff]
        %v2424 = vld [vmem:[%s3 + $0x450] sm:$0xff]
        %v2425 = vld [vmem:[%s3 + $0x458] sm:$0xff]
        %v2426 = vld [vmem:[%s3 + $0x460] sm:$0xff]
        %v2427 = vld [vmem:[%s3 + $0x468] sm:$0xff]
        %v2428 = vld [vmem:[%s3 + $0x470] sm:$0xff]
        %v2429 = vld [vmem:[%s3 + $0x478] sm:$0xff]
        %v2430 = vld [vmem:[%s3 + $0x480] sm:$0xff]
        %v2431 = vld [vmem:[%s3 + $0x488] sm:$0xff]
        %v2432 = vld [vmem:[%s3 + $0x490] sm:$0xff]
        %v2433 = vld [vmem:[%s3 + $0x498] sm:$0xff]
        %v2434 = vld [vmem:[%s3 + $0x4a0] sm:$0xff]
        %v2435 = vld [vmem:[%s3 + $0x4a8] sm:$0xff]
        %v2436 = vld [vmem:[%s3 + $0x4b0] sm:$0xff]
        %v2437 = vld [vmem:[%s3 + $0x4b8] sm:$0xff]
        %v2438 = vld [vmem:[%s3 + $0x4c0] sm:$0xff]
        %v2439 = vld [vmem:[%s3 + $0x4c8] sm:$0xff]
        %v2440 = vld [vmem:[%s3 + $0x4d0] sm:$0xff]
        %v2441 = vld [vmem:[%s3 + $0x4d8] sm:$0xff]
        %v2442 = vld [vmem:[%s3 + $0x4e0] sm:$0xff]
        %v2443 = vld [vmem:[%s3 + $0x4e8] sm:$0xff]
        %v2444 = vld [vmem:[%s3 + $0x4f0] sm:$0xff]
        %v2445 = vld [vmem:[%s3 + $0x4f8] sm:$0xff]
        %v2446 = vld [vmem:[%s3 + $0x500] sm:$0xff]
        %v2447 = vld [vmem:[%s3 + $0x508] sm:$0xff]
        %v2448 = vld [vmem:[%s3 + $0x510] sm:$0xff]
        %v2449 = vld [vmem:[%s3 + $0x518] sm:$0xff]
        %v2450 = vld [vmem:[%s3 + $0x520] sm:$0xff]
        %v2451 = vld [vmem:[%s3 + $0x528] sm:$0xff]
        %v2452 = vld [vmem:[%s3 + $0x530] sm:$0xff]
        %v2453 = vld [vmem:[%s3 + $0x538] sm:$0xff]
        %v2454 = vld [vmem:[%s3 + $0x540] sm:$0xff]
        %v2455 = vld [vmem:[%s3 + $0x548] sm:$0xff]
        %v2456 = vld [vmem:[%s3 + $0x550] sm:$0xff]
        %v2457 = vld [vmem:[%s3 + $0x558] sm:$0xff]
        %v2458 = vld [vmem:[%s3 + $0x560] sm:$0xff]
        %v2459 = vld [vmem:[%s3 + $0x568] sm:$0xff]
        %v2460 = vld [vmem:[%s3 + $0x570] sm:$0xff]
        %v2461 = vld [vmem:[%s3 + $0x578] sm:$0xff]
        %v2462 = vld [vmem:[%s3 + $0x580] sm:$0xff]
        %v2463 = vld [vmem:[%s3 + $0x588] sm:$0xff]
        %v2464 = vld [vmem:[%s3 + $0x590] sm:$0xff]
        %v2465 = vld [vmem:[%s3 + $0x598] sm:$0xff]
        %v2466 = vld [vmem:[%s3 + $0x5a0] sm:$0xff]
        %v2467 = vld [vmem:[%s3 + $0x5a8] sm:$0xff]
        %v2468 = vld [vmem:[%s3 + $0x5b0] sm:$0xff]
        %v2469 = vld [vmem:[%s3 + $0x5b8] sm:$0xff]
        %v2470 = vld [vmem:[%s3 + $0x5c0] sm:$0xff]
        %v2471 = vld [vmem:[%s3 + $0x5c8] sm:$0xff]
        %v2472 = vld [vmem:[%s3 + $0x5d0] sm:$0xff]
        %v2473 = vld [vmem:[%s3 + $0x5d8] sm:$0xff]
        %v2474 = vld [vmem:[%s3 + $0x5e0] sm:$0xff]
        %v2475 = vld [vmem:[%s3 + $0x5e8] sm:$0xff]
        %v2476 = vld [vmem:[%s3 + $0x5f0] sm:$0xff]
        %v2477 = vld [vmem:[%s3 + $0x5f8] sm:$0xff]
        %v2478 = vld [vmem:[%s3 + $0x600] sm:$0xff]
        %v2479 = vld [vmem:[%s3 + $0x608] sm:$0xff]
        %v2480 = vld [vmem:[%s3 + $0x610] sm:$0xff]
        %v2481 = vld [vmem:[%s3 + $0x618] sm:$0xff]
        %v2482 = vld [vmem:[%s3 + $0x620] sm:$0xff]
        %v2483 = vld [vmem:[%s3 + $0x628] sm:$0xff]
        %v2484 = vld [vmem:[%s3 + $0x630] sm:$0xff]
        %v2485 = vld [vmem:[%s3 + $0x638] sm:$0xff]
        %v2486 = vld [vmem:[%s3 + $0x640] sm:$0xff]
        %v2487 = vld [vmem:[%s3 + $0x648] sm:$0xff]
        %v2488 = vld [vmem:[%s3 + $0x650] sm:$0xff]
        %v2489 = vld [vmem:[%s3 + $0x658] sm:$0xff]
        %v2490 = vld [vmem:[%s3 + $0x660] sm:$0xff]
        %v2491 = vld [vmem:[%s3 + $0x668] sm:$0xff]
        %v2492 = vld [vmem:[%s3 + $0x670] sm:$0xff]
        %v2493 = vld [vmem:[%s3 + $0x678] sm:$0xff]
        %v2494 = vld [vmem:[%s3 + $0x680] sm:$0xff]
        %v2495 = vld [vmem:[%s3 + $0x688] sm:$0xff]
        %v2496 = vld [vmem:[%s3 + $0x690] sm:$0xff]
        %v2497 = vld [vmem:[%s3 + $0x698] sm:$0xff]
        %v2498 = vld [vmem:[%s3 + $0x6a0] sm:$0xff]
        %v2499 = vld [vmem:[%s3 + $0x6a8] sm:$0xff]
        %v2500 = vld [vmem:[%s3 + $0x6b0] sm:$0xff]
        %v2501 = vld [vmem:[%s3 + $0x6b8] sm:$0xff]
        %v2502 = vld [vmem:[%s3 + $0x6c0] sm:$0xff]
        %v2503 = vld [vmem:[%s3 + $0x6c8] sm:$0xff]
        %v2504 = vld [vmem:[%s3 + $0x6d0] sm:$0xff]
        %v2505 = vld [vmem:[%s3 + $0x6d8] sm:$0xff]
        %v2506 = vld [vmem:[%s3 + $0x6e0] sm:$0xff]
        %v2507 = vld [vmem:[%s3 + $0x6e8] sm:$0xff]
        %v2508 = vld [vmem:[%s3 + $0x6f0] sm:$0xff]
        %v2509 = vld [vmem:[%s3 + $0x6f8] sm:$0xff]
        %v2510 = vld [vmem:[%s3 + $0x700] sm:$0xff]
        %v2511 = vld [vmem:[%s3 + $0x708] sm:$0xff]
        %v2512 = vld [vmem:[%s3 + $0x710] sm:$0xff]
        %v2513 = vld [vmem:[%s3 + $0x718] sm:$0xff]
        %v2514 = vld [vmem:[%s3 + $0x720] sm:$0xff]
        %v2515 = vld [vmem:[%s3 + $0x728] sm:$0xff]
        %v2516 = vld [vmem:[%s3 + $0x730] sm:$0xff]
        %v2517 = vld [vmem:[%s3 + $0x738] sm:$0xff]
        %v2518 = vld [vmem:[%s3 + $0x740] sm:$0xff]
        %v2519 = vld [vmem:[%s3 + $0x748] sm:$0xff]
        %v2520 = vld [vmem:[%s3 + $0x750] sm:$0xff]
        %v2521 = vld [vmem:[%s3 + $0x758] sm:$0xff]
        %v2522 = vld [vmem:[%s3 + $0x760] sm:$0xff]
        %v2523 = vld [vmem:[%s3 + $0x768] sm:$0xff]
        %v2524 = vld [vmem:[%s3 + $0x770] sm:$0xff]
        %v2525 = vld [vmem:[%s3 + $0x778] sm:$0xff]
        %v2526 = vld [vmem:[%s3 + $0x780] sm:$0xff]
        %v2527 = vld [vmem:[%s3 + $0x788] sm:$0xff]
        %v2528 = vld [vmem:[%s3 + $0x790] sm:$0xff]
        %v2529 = vld [vmem:[%s3 + $0x798] sm:$0xff]
        %v2530 = vld [vmem:[%s3 + $0x7a0] sm:$0xff]
        %v2531 = vld [vmem:[%s3 + $0x7a8] sm:$0xff]
        %v2532 = vld [vmem:[%s3 + $0x7b0] sm:$0xff]
        %v2533 = vld [vmem:[%s3 + $0x7b8] sm:$0xff]
        %v2534 = vld [vmem:[%s3 + $0x7c0] sm:$0xff]
        %v2535 = vld [vmem:[%s3 + $0x7c8] sm:$0xff]
        %v2536 = vld [vmem:[%s3 + $0x7d0] sm:$0xff]
        %v2537 = vld [vmem:[%s3 + $0x7d8] sm:$0xff]
        %v2538 = vld [vmem:[%s3 + $0x7e0] sm:$0xff]
        %v2539 = vld [vmem:[%s3 + $0x7e8] sm:$0xff]
        %v2540 = vld [vmem:[%s3 + $0x7f0] sm:$0xff]
        %v2541 = vld [vmem:[%s3 + $0x7f8] sm:$0xff]
        %v2542 = vld [vmem:[%s3 + $0x800] sm:$0xff]
        %v2543 = vld [vmem:[%s3 + $0x808] sm:$0xff]
        %v2544 = vld [vmem:[%s3 + $0x810] sm:$0xff]
        %v2545 = vld [vmem:[%s3 + $0x818] sm:$0xff]
        %v2546 = vld [vmem:[%s3 + $0x820] sm:$0xff]
        %v2547 = vld [vmem:[%s3 + $0x828] sm:$0xff]
        %v2548 = vld [vmem:[%s3 + $0x830] sm:$0xff]
        %v2549 = vld [vmem:[%s3 + $0x838] sm:$0xff]
        %v2550 = vld [vmem:[%s3 + $0x840] sm:$0xff]
        %v2551 = vld [vmem:[%s3 + $0x848] sm:$0xff]
        %v2552 = vld [vmem:[%s3 + $0x850] sm:$0xff]
        %v2553 = vld [vmem:[%s3 + $0x858] sm:$0xff]
        %v2554 = vld [vmem:[%s3 + $0x860] sm:$0xff]
        %v2555 = vld [vmem:[%s3 + $0x868] sm:$0xff]
        %v2556 = vld [vmem:[%s3 + $0x870] sm:$0xff]
        %v2557 = vld [vmem:[%s3 + $0x878] sm:$0xff]
        %v2558 = vld [vmem:[%s3 + $0x880] sm:$0xff]
        %v2559 = vld [vmem:[%s3 + $0x888] sm:$0xff]
        %v2560 = vld [vmem:[%s3 + $0x890] sm:$0xff]
        %v2561 = vld [vmem:[%s3 + $0x898] sm:$0xff]
        %v2562 = vld [vmem:[%s3 + $0x8a0] sm:$0xff]
        %v2563 = vld [vmem:[%s3 + $0x8a8] sm:$0xff]
        %v2564 = vld [vmem:[%s3 + $0x8b0] sm:$0xff]
        %v2565 = vld [vmem:[%s3 + $0x8b8] sm:$0xff]
        %v2566 = vld [vmem:[%s3 + $0x8c0] sm:$0xff]
        %v2567 = vld [vmem:[%s3 + $0x8c8] sm:$0xff]
        %v2568 = vld [vmem:[%s3 + $0x8d0] sm:$0xff]
        %v2569 = vld [vmem:[%s3 + $0x8d8] sm:$0xff]
        %v2570 = vld [vmem:[%s3 + $0x8e0] sm:$0xff]
        %v2571 = vld [vmem:[%s3 + $0x8e8] sm:$0xff]
        %v2572 = vld [vmem:[%s3 + $0x8f0] sm:$0xff]
        %v2573 = vld [vmem:[%s3 + $0x8f8] sm:$0xff]
        %v2574 = vld [vmem:[%s3 + $0x900] sm:$0xff]
        %v2575 = vld [vmem:[%s3 + $0x908] sm:$0xff]
        %v2576 = vld [vmem:[%s3 + $0x910] sm:$0xff]
        %v2577 = vld [vmem:[%s3 + $0x918] sm:$0xff]
        %v2578 = vld [vmem:[%s3 + $0x920] sm:$0xff]
        %v2579 = vld [vmem:[%s3 + $0x928] sm:$0xff]
        %v2580 = vld [vmem:[%s3 + $0x930] sm:$0xff]
        %v2581 = vld [vmem:[%s3 + $0x938] sm:$0xff]
        %v2582 = vld [vmem:[%s3 + $0x940] sm:$0xff]
        %v2583 = vld [vmem:[%s3 + $0x948] sm:$0xff]
        %v2584 = vld [vmem:[%s3 + $0x950] sm:$0xff]
        %v2585 = vld [vmem:[%s3 + $0x958] sm:$0xff]
        %v2586 = vld [vmem:[%s3 + $0x960] sm:$0xff]
        %v2587 = vld [vmem:[%s3 + $0x968] sm:$0xff]
        %v2588 = vld [vmem:[%s3 + $0x970] sm:$0xff]
        %v2589 = vld [vmem:[%s3 + $0x978] sm:$0xff]
        %v2590 = vld [vmem:[%s3 + $0x980] sm:$0xff]
        %v2591 = vld [vmem:[%s3 + $0x988] sm:$0xff]
        %v2592 = vld [vmem:[%s3 + $0x990] sm:$0xff]
        %v2593 = vld [vmem:[%s3 + $0x998] sm:$0xff]
        %v2594 = vld [vmem:[%s3 + $0x9a0] sm:$0xff]
        %v2595 = vld [vmem:[%s3 + $0x9a8] sm:$0xff]
        %v2596 = vld [vmem:[%s3 + $0x9b0] sm:$0xff]
        %v2597 = vld [vmem:[%s3 + $0x9b8] sm:$0xff]
        %v2598 = vld [vmem:[%s3 + $0x9c0] sm:$0xff]
        %v2599 = vld [vmem:[%s3 + $0x9c8] sm:$0xff]
        %v2600 = vld [vmem:[%s3 + $0x9d0] sm:$0xff]
        %v2601 = vld [vmem:[%s3 + $0x9d8] sm:$0xff]
        %v2602 = vld [vmem:[%s3 + $0x9e0] sm:$0xff]
        %v2603 = vld [vmem:[%s3 + $0x9e8] sm:$0xff]
        %v2604 = vld [vmem:[%s3 + $0x9f0] sm:$0xff]
        %v2605 = vld [vmem:[%s3 + $0x9f8] sm:$0xff]
        %v2606 = vld [vmem:[%s3 + $0xa00] sm:$0xff]
        %v2607 = vld [vmem:[%s3 + $0xa08] sm:$0xff]
        %v2608 = vld [vmem:[%s3 + $0xa10] sm:$0xff]
        %v2609 = vld [vmem:[%s3 + $0xa18] sm:$0xff]
        %v2610 = vld [vmem:[%s3 + $0xa20] sm:$0xff]
        %v2611 = vld [vmem:[%s3 + $0xa28] sm:$0xff]
        %v2612 = vld [vmem:[%s3 + $0xa30] sm:$0xff]
        %v2613 = vld [vmem:[%s3 + $0xa38] sm:$0xff]
        %v2614 = vld [vmem:[%s3 + $0xa40] sm:$0xff]
        %v2615 = vld [vmem:[%s3 + $0xa48] sm:$0xff]
        %v2616 = vld [vmem:[%s3 + $0xa50] sm:$0xff]
        %v2617 = vld [vmem:[%s3 + $0xa58] sm:$0xff]
        %v2618 = vld [vmem:[%s3 + $0xa60] sm:$0xff]
        %v2619 = vld [vmem:[%s3 + $0xa68] sm:$0xff]
        %v2620 = vld [vmem:[%s3 + $0xa70] sm:$0xff]
        %v2621 = vld [vmem:[%s3 + $0xa78] sm:$0xff]
        %v2622 = vld [vmem:[%s3 + $0xa80] sm:$0xff]
        %v2623 = vld [vmem:[%s3 + $0xa88] sm:$0xff]
        %v2624 = vld [vmem:[%s3 + $0xa90] sm:$0xff]
        %v2625 = vld [vmem:[%s3 + $0xa98] sm:$0xff]
        %v2626 = vld [vmem:[%s3 + $0xaa0] sm:$0xff]
        %v2627 = vld [vmem:[%s3 + $0xaa8] sm:$0xff]
        %v2628 = vld [vmem:[%s3 + $0xab0] sm:$0xff]
        %v2629 = vld [vmem:[%s3 + $0xab8] sm:$0xff]
        %v2630 = vld [vmem:[%s3 + $0xac0] sm:$0xff]
        %v2631 = vld [vmem:[%s3 + $0xac8] sm:$0xff]
        %v2632 = vld [vmem:[%s3 + $0xad0] sm:$0xff]
        %v2633 = vld [vmem:[%s3 + $0xad8] sm:$0xff]
        %v2634 = vld [vmem:[%s3 + $0xae0] sm:$0xff]
        %v2635 = vld [vmem:[%s3 + $0xae8] sm:$0xff]
        %v2636 = vld [vmem:[%s3 + $0xaf0] sm:$0xff]
        %v2637 = vld [vmem:[%s3 + $0xaf8] sm:$0xff]
        %v2638 = vld [vmem:[%s3 + $0xb00] sm:$0xff]
        %v2639 = vld [vmem:[%s3 + $0xb08] sm:$0xff]
        %v2640 = vld [vmem:[%s3 + $0xb10] sm:$0xff]
        %v2641 = vld [vmem:[%s3 + $0xb18] sm:$0xff]
        %v2642 = vld [vmem:[%s3 + $0xb20] sm:$0xff]
        %v2643 = vld [vmem:[%s3 + $0xb28] sm:$0xff]
        %v2644 = vld [vmem:[%s3 + $0xb30] sm:$0xff]
        %v2645 = vld [vmem:[%s3 + $0xb38] sm:$0xff]
        %v2646 = vld [vmem:[%s3 + $0xb40] sm:$0xff]
        %v2647 = vld [vmem:[%s3 + $0xb48] sm:$0xff]
        %v2648 = vld [vmem:[%s3 + $0xb50] sm:$0xff]
        %v2649 = vld [vmem:[%s3 + $0xb58] sm:$0xff]
        %v2650 = vld [vmem:[%s3 + $0xb60] sm:$0xff]
        %v2651 = vld [vmem:[%s3 + $0xb68] sm:$0xff]
        %v2652 = vld [vmem:[%s3 + $0xb70] sm:$0xff]
        %v2653 = vld [vmem:[%s3 + $0xb78] sm:$0xff]
        %v2654 = vld [vmem:[%s3 + $0xb80] sm:$0xff]
        %v2655 = vld [vmem:[%s3 + $0xb88] sm:$0xff]
        %v2656 = vld [vmem:[%s3 + $0xb90] sm:$0xff]
        %v2657 = vld [vmem:[%s3 + $0xb98] sm:$0xff]
        %v2658 = vld [vmem:[%s3 + $0xba0] sm:$0xff]
        %v2659 = vld [vmem:[%s3 + $0xba8] sm:$0xff]
        %v2660 = vld [vmem:[%s3 + $0xbb0] sm:$0xff]
        %v2661 = vld [vmem:[%s3 + $0xbb8] sm:$0xff]
        %v2662 = vld [vmem:[%s3 + $0xbc0] sm:$0xff]
        %v2663 = vld [vmem:[%s3 + $0xbc8] sm:$0xff]
        %v2664 = vld [vmem:[%s3 + $0xbd0] sm:$0xff]
        %v2665 = vld [vmem:[%s3 + $0xbd8] sm:$0xff]
        %v2666 = vld [vmem:[%s3 + $0xbe0] sm:$0xff]
        %v2667 = vld [vmem:[%s3 + $0xbe8] sm:$0xff]
        %v2668 = vld [vmem:[%s3 + $0xbf0] sm:$0xff]
        %v2669 = vld [vmem:[%s3 + $0xbf8] sm:$0xff]
        %v2670 = vld [vmem:[%s3 + $0xc00] sm:$0xff]
        %v2671 = vld [vmem:[%s3 + $0xc08] sm:$0xff]
        %v2672 = vld [vmem:[%s3 + $0xc10] sm:$0xff]
        %v2673 = vld [vmem:[%s3 + $0xc18] sm:$0xff]
        %v2674 = vld [vmem:[%s3 + $0xc20] sm:$0xff]
        %v2675 = vld [vmem:[%s3 + $0xc28] sm:$0xff]
        %v2676 = vld [vmem:[%s3 + $0xc30] sm:$0xff]
        %v2677 = vld [vmem:[%s3 + $0xc38] sm:$0xff]
        %v2678 = vld [vmem:[%s3 + $0xc40] sm:$0xff]
        %v2679 = vld [vmem:[%s3 + $0xc48] sm:$0xff]
        %v2680 = vld [vmem:[%s3 + $0xc50] sm:$0xff]
        %v2681 = vld [vmem:[%s3 + $0xc58] sm:$0xff]
        %v2682 = vld [vmem:[%s3 + $0xc60] sm:$0xff]
        %v2683 = vld [vmem:[%s3 + $0xc68] sm:$0xff]
        %v2684 = vld [vmem:[%s3 + $0xc70] sm:$0xff]
        %v2685 = vld [vmem:[%s3 + $0xc78] sm:$0xff]
        %v2686 = vld [vmem:[%s3 + $0xc80] sm:$0xff]
        %v2687 = vld [vmem:[%s3 + $0xc88] sm:$0xff]
        %v2688 = vld [vmem:[%s3 + $0xc90] sm:$0xff]
        %v2689 = vld [vmem:[%s3 + $0xc98] sm:$0xff]
        %v2690 = vld [vmem:[%s3 + $0xca0] sm:$0xff]
        %v2691 = vld [vmem:[%s3 + $0xca8] sm:$0xff]
        %v2692 = vld [vmem:[%s3 + $0xcb0] sm:$0xff]
        %v2693 = vld [vmem:[%s3 + $0xcb8] sm:$0xff]
        %v2694 = vld [vmem:[%s3 + $0xcc0] sm:$0xff]
        %v2695 = vld [vmem:[%s3 + $0xcc8] sm:$0xff]
        %v2696 = vld [vmem:[%s3 + $0xcd0] sm:$0xff]
        %v2697 = vld [vmem:[%s3 + $0xcd8] sm:$0xff]
        %v2698 = vld [vmem:[%s3 + $0xce0] sm:$0xff]
        %v2699 = vld [vmem:[%s3 + $0xce8] sm:$0xff]
        %v2700 = vld [vmem:[%s3 + $0xcf0] sm:$0xff]
        %v2701 = vld [vmem:[%s3 + $0xcf8] sm:$0xff]
        %v2702 = vld [vmem:[%s3 + $0xd00] sm:$0xff]
        %v2703 = vld [vmem:[%s3 + $0xd08] sm:$0xff]
        %v2704 = vld [vmem:[%s3 + $0xd10] sm:$0xff]
        %v2705 = vld [vmem:[%s3 + $0xd18] sm:$0xff]
        %v2706 = vld [vmem:[%s3 + $0xd20] sm:$0xff]
        %v2707 = vld [vmem:[%s3 + $0xd28] sm:$0xff]
        %v2708 = vld [vmem:[%s3 + $0xd30] sm:$0xff]
        %v2709 = vld [vmem:[%s3 + $0xd38] sm:$0xff]
        %v2710 = vld [vmem:[%s3 + $0xd40] sm:$0xff]
        %v2711 = vld [vmem:[%s3 + $0xd48] sm:$0xff]
        %v2712 = vld [vmem:[%s3 + $0xd50] sm:$0xff]
        %v2713 = vld [vmem:[%s3 + $0xd58] sm:$0xff]
        %v2714 = vld [vmem:[%s3 + $0xd60] sm:$0xff]
        %v2715 = vld [vmem:[%s3 + $0xd68] sm:$0xff]
        %v2716 = vld [vmem:[%s3 + $0xd70] sm:$0xff]
        %v2717 = vld [vmem:[%s3 + $0xd78] sm:$0xff]
        %v2718 = vld [vmem:[%s3 + $0xd80] sm:$0xff]
        %v2719 = vld [vmem:[%s3 + $0xd88] sm:$0xff]
        %v2720 = vld [vmem:[%s3 + $0xd90] sm:$0xff]
        %v2721 = vld [vmem:[%s3 + $0xd98] sm:$0xff]
        %v2722 = vld [vmem:[%s3 + $0xda0] sm:$0xff]
        %v2723 = vld [vmem:[%s3 + $0xda8] sm:$0xff]
        %v2724 = vld [vmem:[%s3 + $0xdb0] sm:$0xff]
        %v2725 = vld [vmem:[%s3 + $0xdb8] sm:$0xff]
        %v2726 = vld [vmem:[%s3 + $0xdc0] sm:$0xff]
        %v2727 = vld [vmem:[%s3 + $0xdc8] sm:$0xff]
        %v2728 = vld [vmem:[%s3 + $0xdd0] sm:$0xff]
        %v2729 = vld [vmem:[%s3 + $0xdd8] sm:$0xff]
        %v2730 = vld [vmem:[%s3 + $0xde0] sm:$0xff]
        %v2731 = vld [vmem:[%s3 + $0xde8] sm:$0xff]
        %v2732 = vld [vmem:[%s3 + $0xdf0] sm:$0xff]
        %v2733 = vld [vmem:[%s3 + $0xdf8] sm:$0xff]
        %v2734 = vld [vmem:[%s3 + $0xe00] sm:$0xff]
        %v2735 = vld [vmem:[%s3 + $0xe08] sm:$0xff]
        %v2736 = vld [vmem:[%s3 + $0xe10] sm:$0xff]
        %v2737 = vld [vmem:[%s3 + $0xe18] sm:$0xff]
        %v2738 = vld [vmem:[%s3 + $0xe20] sm:$0xff]
        %v2739 = vld [vmem:[%s3 + $0xe28] sm:$0xff]
        %v2740 = vld [vmem:[%s3 + $0xe30] sm:$0xff]
        %v2741 = vld [vmem:[%s3 + $0xe38] sm:$0xff]
        %v2742 = vld [vmem:[%s3 + $0xe40] sm:$0xff]
        %v2743 = vld [vmem:[%s3 + $0xe48] sm:$0xff]
        %v2744 = vld [vmem:[%s3 + $0xe50] sm:$0xff]
        %v2745 = vld [vmem:[%s3 + $0xe58] sm:$0xff]
        %v2746 = vld [vmem:[%s3 + $0xe60] sm:$0xff]
        %v2747 = vld [vmem:[%s3 + $0xe68] sm:$0xff]
        %v2748 = vld [vmem:[%s3 + $0xe70] sm:$0xff]
        %v2749 = vld [vmem:[%s3 + $0xe78] sm:$0xff]
        %v2750 = vld [vmem:[%s3 + $0xe80] sm:$0xff]
        %v2751 = vld [vmem:[%s3 + $0xe88] sm:$0xff]
        %v2752 = vld [vmem:[%s3 + $0xe90] sm:$0xff]
        %v2753 = vld [vmem:[%s3 + $0xe98] sm:$0xff]
        %v2754 = vld [vmem:[%s3 + $0xea0] sm:$0xff]
        %v2755 = vld [vmem:[%s3 + $0xea8] sm:$0xff]
        %v2756 = vld [vmem:[%s3 + $0xeb0] sm:$0xff]
        %v2757 = vld [vmem:[%s3 + $0xeb8] sm:$0xff]
        %v2758 = vld [vmem:[%s3 + $0xec0] sm:$0xff]
        %v2759 = vld [vmem:[%s3 + $0xec8] sm:$0xff]
        %v2760 = vld [vmem:[%s3 + $0xed0] sm:$0xff]
        %v2761 = vld [vmem:[%s3 + $0xed8] sm:$0xff]
        %v2762 = vld [vmem:[%s3 + $0xee0] sm:$0xff]
        %v2763 = vld [vmem:[%s3 + $0xee8] sm:$0xff]
        %v2764 = vld [vmem:[%s3 + $0xef0] sm:$0xff]
        %v2765 = vld [vmem:[%s3 + $0xef8] sm:$0xff]
        %v2766 = vld [vmem:[%s3 + $0xf00] sm:$0xff]
        %v2767 = vld [vmem:[%s3 + $0xf08] sm:$0xff]
        %v2768 = vld [vmem:[%s3 + $0xf10] sm:$0xff]
        %v2769 = vld [vmem:[%s3 + $0xf18] sm:$0xff]
        %v2770 = vld [vmem:[%s3 + $0xf20] sm:$0xff]
        %v2771 = vld [vmem:[%s3 + $0xf28] sm:$0xff]
        %v2772 = vld [vmem:[%s3 + $0xf30] sm:$0xff]
        %v2773 = vld [vmem:[%s3 + $0xf38] sm:$0xff]
        %v2774 = vld [vmem:[%s3 + $0xf40] sm:$0xff]
        %v2775 = vld [vmem:[%s3 + $0xf48] sm:$0xff]
        %v2776 = vld [vmem:[%s3 + $0xf50] sm:$0xff]
        %v2777 = vld [vmem:[%s3 + $0xf58] sm:$0xff]
        %v2778 = vld [vmem:[%s3 + $0xf60] sm:$0xff]
        %v2779 = vld [vmem:[%s3 + $0xf68] sm:$0xff]
        %v2780 = vld [vmem:[%s3 + $0xf70] sm:$0xff]
        %v2781 = vld [vmem:[%s3 + $0xf78] sm:$0xff]
        %v2782 = vld [vmem:[%s3 + $0xf80] sm:$0xff]
        %v2783 = vld [vmem:[%s3 + $0xf88] sm:$0xff]
        %v2784 = vld [vmem:[%s3 + $0xf90] sm:$0xff]
        %v2785 = vld [vmem:[%s3 + $0xf98] sm:$0xff]
        %v2786 = vld [vmem:[%s3 + $0xfa0] sm:$0xff]
        %v2787 = vld [vmem:[%s3 + $0xfa8] sm:$0xff]
        %v2788 = vld [vmem:[%s3 + $0xfb0] sm:$0xff]
        %v2789 = vld [vmem:[%s3 + $0xfb8] sm:$0xff]
        %v2790 = vld [vmem:[%s3 + $0xfc0] sm:$0xff]
        %v2791 = vld [vmem:[%s3 + $0xfc8] sm:$0xff]
        %v2792 = vld [vmem:[%s3 + $0xfd0] sm:$0xff]
        %v2793 = vld [vmem:[%s3 + $0xfd8] sm:$0xff]
        %v2794 = vld [vmem:[%s3 + $0xfe0] sm:$0xff]
        %v2795 = vld [vmem:[%s3 + $0xfe8] sm:$0xff]
        %v2796 = vld [vmem:[%s3 + $0xff0] sm:$0xff]
        %v2797 = vld [vmem:[%s3 + $0xff8] sm:$0xff]
        %v2798 = vld [vmem:[%s4] sm:$0xff]
        %v2800 = vlaneseq
        %v2801 = vshrl.u32 %v2800, 7
        %v2802 = vsub.s32 0, %v2801
        %v2803 = vrot.slane %v2798, %v2802
        %v2804 = vlaneseq
        %v2805 = vshrl.u32 %v2804, 7
        %v2806 = vsub.s32 1, %v2805
        %v2807 = vrot.slane %v2798, %v2806
        %v2808 = vlaneseq
        %v2809 = vshrl.u32 %v2808, 7
        %v2810 = vsub.s32 2, %v2809
        %v2811 = vrot.slane %v2798, %v2810
        %v2812 = vlaneseq
        %v2813 = vshrl.u32 %v2812, 7
        %v2814 = vsub.s32 3, %v2813
        %v2815 = vrot.slane %v2798, %v2814
        %v2816 = vlaneseq
        %v2817 = vshrl.u32 %v2816, 7
        %v2818 = vsub.s32 4, %v2817
        %v2819 = vrot.slane %v2798, %v2818
        %v2820 = vlaneseq
        %v2821 = vshrl.u32 %v2820, 7
        %v2822 = vsub.s32 5, %v2821
        %v2823 = vrot.slane %v2798, %v2822
        %v2824 = vlaneseq
        %v2825 = vshrl.u32 %v2824, 7
        %v2826 = vsub.s32 6, %v2825
        %v2827 = vrot.slane %v2798, %v2826
        %v2828 = vlaneseq
        %v2829 = vshrl.u32 %v2828, 7
        %v2830 = vsub.s32 7, %v2829
        %v2831 = vrot.slane %v2798, %v2830
        %v3352 = vunpack.c.l.b16 %v2286
        %v3353 = vunpack.c.h.b16 %v2286
        %v3354 = vunpack.c.l.b16 %v2287
        %v3355 = vunpack.c.h.b16 %v2287
        %v3356 = vunpack.c.l.b16 %v2288
        %v3357 = vunpack.c.h.b16 %v2288
        %v3358 = vunpack.c.l.b16 %v2289
        %v3359 = vunpack.c.h.b16 %v2289
        %v3360 = vunpack.c.l.b16 %v2290
        %v3361 = vunpack.c.h.b16 %v2290
        %v3362 = vunpack.c.l.b16 %v2291
        %v3363 = vunpack.c.h.b16 %v2291
        %v3364 = vunpack.c.l.b16 %v2292
        %v3365 = vunpack.c.h.b16 %v2292
        %v3366 = vunpack.c.l.b16 %v2293
        %v3367 = vunpack.c.h.b16 %v2293
        %v3368 = vunpack.c.l.b16 %v2294
        %v3369 = vunpack.c.h.b16 %v2294
        %v3370 = vunpack.c.l.b16 %v2295
        %v3371 = vunpack.c.h.b16 %v2295
        %v3372 = vunpack.c.l.b16 %v2296
        %v3373 = vunpack.c.h.b16 %v2296
        %v3374 = vunpack.c.l.b16 %v2297
        %v3375 = vunpack.c.h.b16 %v2297
        %v3376 = vunpack.c.l.b16 %v2298
        %v3377 = vunpack.c.h.b16 %v2298
        %v3378 = vunpack.c.l.b16 %v2299
        %v3379 = vunpack.c.h.b16 %v2299
        %v3380 = vunpack.c.l.b16 %v2300
        %v3381 = vunpack.c.h.b16 %v2300
        %v3382 = vunpack.c.l.b16 %v2301
        %v3383 = vunpack.c.h.b16 %v2301
        %v3384 = vunpack.c.l.b16 %v2302
        %v3385 = vunpack.c.h.b16 %v2302
        %v3386 = vunpack.c.l.b16 %v2303
        %v3387 = vunpack.c.h.b16 %v2303
        %v3388 = vunpack.c.l.b16 %v2304
        %v3389 = vunpack.c.h.b16 %v2304
        %v3390 = vunpack.c.l.b16 %v2305
        %v3391 = vunpack.c.h.b16 %v2305
        %v3392 = vunpack.c.l.b16 %v2306
        %v3393 = vunpack.c.h.b16 %v2306
        %v3394 = vunpack.c.l.b16 %v2307
        %v3395 = vunpack.c.h.b16 %v2307
        %v3396 = vunpack.c.l.b16 %v2308
        %v3397 = vunpack.c.h.b16 %v2308
        %v3398 = vunpack.c.l.b16 %v2309
        %v3399 = vunpack.c.h.b16 %v2309
        %v3400 = vunpack.c.l.b16 %v2310
        %v3401 = vunpack.c.h.b16 %v2310
        %v3402 = vunpack.c.l.b16 %v2311
        %v3403 = vunpack.c.h.b16 %v2311
        %v3404 = vunpack.c.l.b16 %v2312
        %v3405 = vunpack.c.h.b16 %v2312
        %v3406 = vunpack.c.l.b16 %v2313
        %v3407 = vunpack.c.h.b16 %v2313
        %v3408 = vunpack.c.l.b16 %v2314
        %v3409 = vunpack.c.h.b16 %v2314
        %v3410 = vunpack.c.l.b16 %v2315
        %v3411 = vunpack.c.h.b16 %v2315
        %v3412 = vunpack.c.l.b16 %v2316
        %v3413 = vunpack.c.h.b16 %v2316
        %v3414 = vunpack.c.l.b16 %v2317
        %v3415 = vunpack.c.h.b16 %v2317
        %v3416 = vunpack.c.l.b16 %v2318
        %v3417 = vunpack.c.h.b16 %v2318
        %v3418 = vunpack.c.l.b16 %v2319
        %v3419 = vunpack.c.h.b16 %v2319
        %v3420 = vunpack.c.l.b16 %v2320
        %v3421 = vunpack.c.h.b16 %v2320
        %v3422 = vunpack.c.l.b16 %v2321
        %v3423 = vunpack.c.h.b16 %v2321
        %v3424 = vunpack.c.l.b16 %v2322
        %v3425 = vunpack.c.h.b16 %v2322
        %v3426 = vunpack.c.l.b16 %v2323
        %v3427 = vunpack.c.h.b16 %v2323
        %v3428 = vunpack.c.l.b16 %v2324
        %v3429 = vunpack.c.h.b16 %v2324
        %v3430 = vunpack.c.l.b16 %v2325
        %v3431 = vunpack.c.h.b16 %v2325
        %v3432 = vunpack.c.l.b16 %v2326
        %v3433 = vunpack.c.h.b16 %v2326
        %v3434 = vunpack.c.l.b16 %v2327
        %v3435 = vunpack.c.h.b16 %v2327
        %v3436 = vunpack.c.l.b16 %v2328
        %v3437 = vunpack.c.h.b16 %v2328
        %v3438 = vunpack.c.l.b16 %v2329
        %v3439 = vunpack.c.h.b16 %v2329
        %v3440 = vunpack.c.l.b16 %v2330
        %v3441 = vunpack.c.h.b16 %v2330
        %v3442 = vunpack.c.l.b16 %v2331
        %v3443 = vunpack.c.h.b16 %v2331
        %v3444 = vunpack.c.l.b16 %v2332
        %v3445 = vunpack.c.h.b16 %v2332
        %v3446 = vunpack.c.l.b16 %v2333
        %v3447 = vunpack.c.h.b16 %v2333
        %v3448 = vunpack.c.l.b16 %v2334
        %v3449 = vunpack.c.h.b16 %v2334
        %v3450 = vunpack.c.l.b16 %v2335
        %v3451 = vunpack.c.h.b16 %v2335
        %v3452 = vunpack.c.l.b16 %v2336
        %v3453 = vunpack.c.h.b16 %v2336
        %v3454 = vunpack.c.l.b16 %v2337
        %v3455 = vunpack.c.h.b16 %v2337
        %v3456 = vunpack.c.l.b16 %v2338
        %v3457 = vunpack.c.h.b16 %v2338
        %v3458 = vunpack.c.l.b16 %v2339
        %v3459 = vunpack.c.h.b16 %v2339
        %v3460 = vunpack.c.l.b16 %v2340
        %v3461 = vunpack.c.h.b16 %v2340
        %v3462 = vunpack.c.l.b16 %v2341
        %v3463 = vunpack.c.h.b16 %v2341
        %v3464 = vunpack.c.l.b16 %v2342
        %v3465 = vunpack.c.h.b16 %v2342
        %v3466 = vunpack.c.l.b16 %v2343
        %v3467 = vunpack.c.h.b16 %v2343
        %v3468 = vunpack.c.l.b16 %v2344
        %v3469 = vunpack.c.h.b16 %v2344
        %v3470 = vunpack.c.l.b16 %v2345
        %v3471 = vunpack.c.h.b16 %v2345
        %v3472 = vunpack.c.l.b16 %v2346
        %v3473 = vunpack.c.h.b16 %v2346
        %v3474 = vunpack.c.l.b16 %v2347
        %v3475 = vunpack.c.h.b16 %v2347
        %v3476 = vunpack.c.l.b16 %v2348
        %v3477 = vunpack.c.h.b16 %v2348
        %v3478 = vunpack.c.l.b16 %v2349
        %v3479 = vunpack.c.h.b16 %v2349
        %v3480 = vunpack.c.l.b16 %v2350
        %v3481 = vunpack.c.h.b16 %v2350
        %v3482 = vunpack.c.l.b16 %v2351
        %v3483 = vunpack.c.h.b16 %v2351
        %v3484 = vunpack.c.l.b16 %v2352
        %v3485 = vunpack.c.h.b16 %v2352
        %v3486 = vunpack.c.l.b16 %v2353
        %v3487 = vunpack.c.h.b16 %v2353
        %v3488 = vunpack.c.l.b16 %v2354
        %v3489 = vunpack.c.h.b16 %v2354
        %v3490 = vunpack.c.l.b16 %v2355
        %v3491 = vunpack.c.h.b16 %v2355
        %v3492 = vunpack.c.l.b16 %v2356
        %v3493 = vunpack.c.h.b16 %v2356
        %v3494 = vunpack.c.l.b16 %v2357
        %v3495 = vunpack.c.h.b16 %v2357
        %v3496 = vunpack.c.l.b16 %v2358
        %v3497 = vunpack.c.h.b16 %v2358
        %v3498 = vunpack.c.l.b16 %v2359
        %v3499 = vunpack.c.h.b16 %v2359
        %v3500 = vunpack.c.l.b16 %v2360
        %v3501 = vunpack.c.h.b16 %v2360
        %v3502 = vunpack.c.l.b16 %v2361
        %v3503 = vunpack.c.h.b16 %v2361
        %v3504 = vunpack.c.l.b16 %v2362
        %v3505 = vunpack.c.h.b16 %v2362
        %v3506 = vunpack.c.l.b16 %v2363
        %v3507 = vunpack.c.h.b16 %v2363
        %v3508 = vunpack.c.l.b16 %v2364
        %v3509 = vunpack.c.h.b16 %v2364
        %v3510 = vunpack.c.l.b16 %v2365
        %v3511 = vunpack.c.h.b16 %v2365
        %v3512 = vunpack.c.l.b16 %v2366
        %v3513 = vunpack.c.h.b16 %v2366
        %v3514 = vunpack.c.l.b16 %v2367
        %v3515 = vunpack.c.h.b16 %v2367
        %v3516 = vunpack.c.l.b16 %v2368
        %v3517 = vunpack.c.h.b16 %v2368
        %v3518 = vunpack.c.l.b16 %v2369
        %v3519 = vunpack.c.h.b16 %v2369
        %v3520 = vunpack.c.l.b16 %v2370
        %v3521 = vunpack.c.h.b16 %v2370
        %v3522 = vunpack.c.l.b16 %v2371
        %v3523 = vunpack.c.h.b16 %v2371
        %v3524 = vunpack.c.l.b16 %v2372
        %v3525 = vunpack.c.h.b16 %v2372
        %v3526 = vunpack.c.l.b16 %v2373
        %v3527 = vunpack.c.h.b16 %v2373
        %v3528 = vunpack.c.l.b16 %v2374
        %v3529 = vunpack.c.h.b16 %v2374
        %v3530 = vunpack.c.l.b16 %v2375
        %v3531 = vunpack.c.h.b16 %v2375
        %v3532 = vunpack.c.l.b16 %v2376
        %v3533 = vunpack.c.h.b16 %v2376
        %v3534 = vunpack.c.l.b16 %v2377
        %v3535 = vunpack.c.h.b16 %v2377
        %v3536 = vunpack.c.l.b16 %v2378
        %v3537 = vunpack.c.h.b16 %v2378
        %v3538 = vunpack.c.l.b16 %v2379
        %v3539 = vunpack.c.h.b16 %v2379
        %v3540 = vunpack.c.l.b16 %v2380
        %v3541 = vunpack.c.h.b16 %v2380
        %v3542 = vunpack.c.l.b16 %v2381
        %v3543 = vunpack.c.h.b16 %v2381
        %v3544 = vunpack.c.l.b16 %v2382
        %v3545 = vunpack.c.h.b16 %v2382
        %v3546 = vunpack.c.l.b16 %v2383
        %v3547 = vunpack.c.h.b16 %v2383
        %v3548 = vunpack.c.l.b16 %v2384
        %v3549 = vunpack.c.h.b16 %v2384
        %v3550 = vunpack.c.l.b16 %v2385
        %v3551 = vunpack.c.h.b16 %v2385
        %v3552 = vunpack.c.l.b16 %v2386
        %v3553 = vunpack.c.h.b16 %v2386
        %v3554 = vunpack.c.l.b16 %v2387
        %v3555 = vunpack.c.h.b16 %v2387
        %v3556 = vunpack.c.l.b16 %v2388
        %v3557 = vunpack.c.h.b16 %v2388
        %v3558 = vunpack.c.l.b16 %v2389
        %v3559 = vunpack.c.h.b16 %v2389
        %v3560 = vunpack.c.l.b16 %v2390
        %v3561 = vunpack.c.h.b16 %v2390
        %v3562 = vunpack.c.l.b16 %v2391
        %v3563 = vunpack.c.h.b16 %v2391
        %v3564 = vunpack.c.l.b16 %v2392
        %v3565 = vunpack.c.h.b16 %v2392
        %v3566 = vunpack.c.l.b16 %v2393
        %v3567 = vunpack.c.h.b16 %v2393
        %v3568 = vunpack.c.l.b16 %v2394
        %v3569 = vunpack.c.h.b16 %v2394
        %v3570 = vunpack.c.l.b16 %v2395
        %v3571 = vunpack.c.h.b16 %v2395
        %v3572 = vunpack.c.l.b16 %v2396
        %v3573 = vunpack.c.h.b16 %v2396
        %v3574 = vunpack.c.l.b16 %v2397
        %v3575 = vunpack.c.h.b16 %v2397
        %v3576 = vunpack.c.l.b16 %v2398
        %v3577 = vunpack.c.h.b16 %v2398
        %v3578 = vunpack.c.l.b16 %v2399
        %v3579 = vunpack.c.h.b16 %v2399
        %v3580 = vunpack.c.l.b16 %v2400
        %v3581 = vunpack.c.h.b16 %v2400
        %v3582 = vunpack.c.l.b16 %v2401
        %v3583 = vunpack.c.h.b16 %v2401
        %v3584 = vunpack.c.l.b16 %v2402
        %v3585 = vunpack.c.h.b16 %v2402
        %v3586 = vunpack.c.l.b16 %v2403
        %v3587 = vunpack.c.h.b16 %v2403
        %v3588 = vunpack.c.l.b16 %v2404
        %v3589 = vunpack.c.h.b16 %v2404
        %v3590 = vunpack.c.l.b16 %v2405
        %v3591 = vunpack.c.h.b16 %v2405
        %v3592 = vunpack.c.l.b16 %v2406
        %v3593 = vunpack.c.h.b16 %v2406
        %v3594 = vunpack.c.l.b16 %v2407
        %v3595 = vunpack.c.h.b16 %v2407
        %v3596 = vunpack.c.l.b16 %v2408
        %v3597 = vunpack.c.h.b16 %v2408
        %v3598 = vunpack.c.l.b16 %v2409
        %v3599 = vunpack.c.h.b16 %v2409
        %v3600 = vunpack.c.l.b16 %v2410
        %v3601 = vunpack.c.h.b16 %v2410
        %v3602 = vunpack.c.l.b16 %v2411
        %v3603 = vunpack.c.h.b16 %v2411
        %v3604 = vunpack.c.l.b16 %v2412
        %v3605 = vunpack.c.h.b16 %v2412
        %v3606 = vunpack.c.l.b16 %v2413
        %v3607 = vunpack.c.h.b16 %v2413
        %v3608 = vunpack.c.l.b16 %v2414
        %v3609 = vunpack.c.h.b16 %v2414
        %v3610 = vunpack.c.l.b16 %v2415
        %v3611 = vunpack.c.h.b16 %v2415
        %v3612 = vunpack.c.l.b16 %v2416
        %v3613 = vunpack.c.h.b16 %v2416
        %v3614 = vunpack.c.l.b16 %v2417
        %v3615 = vunpack.c.h.b16 %v2417
        %v3616 = vunpack.c.l.b16 %v2418
        %v3617 = vunpack.c.h.b16 %v2418
        %v3618 = vunpack.c.l.b16 %v2419
        %v3619 = vunpack.c.h.b16 %v2419
        %v3620 = vunpack.c.l.b16 %v2420
        %v3621 = vunpack.c.h.b16 %v2420
        %v3622 = vunpack.c.l.b16 %v2421
        %v3623 = vunpack.c.h.b16 %v2421
        %v3624 = vunpack.c.l.b16 %v2422
        %v3625 = vunpack.c.h.b16 %v2422
        %v3626 = vunpack.c.l.b16 %v2423
        %v3627 = vunpack.c.h.b16 %v2423
        %v3628 = vunpack.c.l.b16 %v2424
        %v3629 = vunpack.c.h.b16 %v2424
        %v3630 = vunpack.c.l.b16 %v2425
        %v3631 = vunpack.c.h.b16 %v2425
        %v3632 = vunpack.c.l.b16 %v2426
        %v3633 = vunpack.c.h.b16 %v2426
        %v3634 = vunpack.c.l.b16 %v2427
        %v3635 = vunpack.c.h.b16 %v2427
        %v3636 = vunpack.c.l.b16 %v2428
        %v3637 = vunpack.c.h.b16 %v2428
        %v3638 = vunpack.c.l.b16 %v2429
        %v3639 = vunpack.c.h.b16 %v2429
        %v3640 = vunpack.c.l.b16 %v2430
        %v3641 = vunpack.c.h.b16 %v2430
        %v3642 = vunpack.c.l.b16 %v2431
        %v3643 = vunpack.c.h.b16 %v2431
        %v3644 = vunpack.c.l.b16 %v2432
        %v3645 = vunpack.c.h.b16 %v2432
        %v3646 = vunpack.c.l.b16 %v2433
        %v3647 = vunpack.c.h.b16 %v2433
        %v3648 = vunpack.c.l.b16 %v2434
        %v3649 = vunpack.c.h.b16 %v2434
        %v3650 = vunpack.c.l.b16 %v2435
        %v3651 = vunpack.c.h.b16 %v2435
        %v3652 = vunpack.c.l.b16 %v2436
        %v3653 = vunpack.c.h.b16 %v2436
        %v3654 = vunpack.c.l.b16 %v2437
        %v3655 = vunpack.c.h.b16 %v2437
        %v3656 = vunpack.c.l.b16 %v2438
        %v3657 = vunpack.c.h.b16 %v2438
        %v3658 = vunpack.c.l.b16 %v2439
        %v3659 = vunpack.c.h.b16 %v2439
        %v3660 = vunpack.c.l.b16 %v2440
        %v3661 = vunpack.c.h.b16 %v2440
        %v3662 = vunpack.c.l.b16 %v2441
        %v3663 = vunpack.c.h.b16 %v2441
        %v3664 = vunpack.c.l.b16 %v2442
        %v3665 = vunpack.c.h.b16 %v2442
        %v3666 = vunpack.c.l.b16 %v2443
        %v3667 = vunpack.c.h.b16 %v2443
        %v3668 = vunpack.c.l.b16 %v2444
        %v3669 = vunpack.c.h.b16 %v2444
        %v3670 = vunpack.c.l.b16 %v2445
        %v3671 = vunpack.c.h.b16 %v2445
        %v3672 = vunpack.c.l.b16 %v2446
        %v3673 = vunpack.c.h.b16 %v2446
        %v3674 = vunpack.c.l.b16 %v2447
        %v3675 = vunpack.c.h.b16 %v2447
        %v3676 = vunpack.c.l.b16 %v2448
        %v3677 = vunpack.c.h.b16 %v2448
        %v3678 = vunpack.c.l.b16 %v2449
        %v3679 = vunpack.c.h.b16 %v2449
        %v3680 = vunpack.c.l.b16 %v2450
        %v3681 = vunpack.c.h.b16 %v2450
        %v3682 = vunpack.c.l.b16 %v2451
        %v3683 = vunpack.c.h.b16 %v2451
        %v3684 = vunpack.c.l.b16 %v2452
        %v3685 = vunpack.c.h.b16 %v2452
        %v3686 = vunpack.c.l.b16 %v2453
        %v3687 = vunpack.c.h.b16 %v2453
        %v3688 = vunpack.c.l.b16 %v2454
        %v3689 = vunpack.c.h.b16 %v2454
        %v3690 = vunpack.c.l.b16 %v2455
        %v3691 = vunpack.c.h.b16 %v2455
        %v3692 = vunpack.c.l.b16 %v2456
        %v3693 = vunpack.c.h.b16 %v2456
        %v3694 = vunpack.c.l.b16 %v2457
        %v3695 = vunpack.c.h.b16 %v2457
        %v3696 = vunpack.c.l.b16 %v2458
        %v3697 = vunpack.c.h.b16 %v2458
        %v3698 = vunpack.c.l.b16 %v2459
        %v3699 = vunpack.c.h.b16 %v2459
        %v3700 = vunpack.c.l.b16 %v2460
        %v3701 = vunpack.c.h.b16 %v2460
        %v3702 = vunpack.c.l.b16 %v2461
        %v3703 = vunpack.c.h.b16 %v2461
        %v3704 = vunpack.c.l.b16 %v2462
        %v3705 = vunpack.c.h.b16 %v2462
        %v3706 = vunpack.c.l.b16 %v2463
        %v3707 = vunpack.c.h.b16 %v2463
        %v3708 = vunpack.c.l.b16 %v2464
        %v3709 = vunpack.c.h.b16 %v2464
        %v3710 = vunpack.c.l.b16 %v2465
        %v3711 = vunpack.c.h.b16 %v2465
        %v3712 = vunpack.c.l.b16 %v2466
        %v3713 = vunpack.c.h.b16 %v2466
        %v3714 = vunpack.c.l.b16 %v2467
        %v3715 = vunpack.c.h.b16 %v2467
        %v3716 = vunpack.c.l.b16 %v2468
        %v3717 = vunpack.c.h.b16 %v2468
        %v3718 = vunpack.c.l.b16 %v2469
        %v3719 = vunpack.c.h.b16 %v2469
        %v3720 = vunpack.c.l.b16 %v2470
        %v3721 = vunpack.c.h.b16 %v2470
        %v3722 = vunpack.c.l.b16 %v2471
        %v3723 = vunpack.c.h.b16 %v2471
        %v3724 = vunpack.c.l.b16 %v2472
        %v3725 = vunpack.c.h.b16 %v2472
        %v3726 = vunpack.c.l.b16 %v2473
        %v3727 = vunpack.c.h.b16 %v2473
        %v3728 = vunpack.c.l.b16 %v2474
        %v3729 = vunpack.c.h.b16 %v2474
        %v3730 = vunpack.c.l.b16 %v2475
        %v3731 = vunpack.c.h.b16 %v2475
        %v3732 = vunpack.c.l.b16 %v2476
        %v3733 = vunpack.c.h.b16 %v2476
        %v3734 = vunpack.c.l.b16 %v2477
        %v3735 = vunpack.c.h.b16 %v2477
        %v3736 = vunpack.c.l.b16 %v2478
        %v3737 = vunpack.c.h.b16 %v2478
        %v3738 = vunpack.c.l.b16 %v2479
        %v3739 = vunpack.c.h.b16 %v2479
        %v3740 = vunpack.c.l.b16 %v2480
        %v3741 = vunpack.c.h.b16 %v2480
        %v3742 = vunpack.c.l.b16 %v2481
        %v3743 = vunpack.c.h.b16 %v2481
        %v3744 = vunpack.c.l.b16 %v2482
        %v3745 = vunpack.c.h.b16 %v2482
        %v3746 = vunpack.c.l.b16 %v2483
        %v3747 = vunpack.c.h.b16 %v2483
        %v3748 = vunpack.c.l.b16 %v2484
        %v3749 = vunpack.c.h.b16 %v2484
        %v3750 = vunpack.c.l.b16 %v2485
        %v3751 = vunpack.c.h.b16 %v2485
        %v3752 = vunpack.c.l.b16 %v2486
        %v3753 = vunpack.c.h.b16 %v2486
        %v3754 = vunpack.c.l.b16 %v2487
        %v3755 = vunpack.c.h.b16 %v2487
        %v3756 = vunpack.c.l.b16 %v2488
        %v3757 = vunpack.c.h.b16 %v2488
        %v3758 = vunpack.c.l.b16 %v2489
        %v3759 = vunpack.c.h.b16 %v2489
        %v3760 = vunpack.c.l.b16 %v2490
        %v3761 = vunpack.c.h.b16 %v2490
        %v3762 = vunpack.c.l.b16 %v2491
        %v3763 = vunpack.c.h.b16 %v2491
        %v3764 = vunpack.c.l.b16 %v2492
        %v3765 = vunpack.c.h.b16 %v2492
        %v3766 = vunpack.c.l.b16 %v2493
        %v3767 = vunpack.c.h.b16 %v2493
        %v3768 = vunpack.c.l.b16 %v2494
        %v3769 = vunpack.c.h.b16 %v2494
        %v3770 = vunpack.c.l.b16 %v2495
        %v3771 = vunpack.c.h.b16 %v2495
        %v3772 = vunpack.c.l.b16 %v2496
        %v3773 = vunpack.c.h.b16 %v2496
        %v3774 = vunpack.c.l.b16 %v2497
        %v3775 = vunpack.c.h.b16 %v2497
        %v3776 = vunpack.c.l.b16 %v2498
        %v3777 = vunpack.c.h.b16 %v2498
        %v3778 = vunpack.c.l.b16 %v2499
        %v3779 = vunpack.c.h.b16 %v2499
        %v3780 = vunpack.c.l.b16 %v2500
        %v3781 = vunpack.c.h.b16 %v2500
        %v3782 = vunpack.c.l.b16 %v2501
        %v3783 = vunpack.c.h.b16 %v2501
        %v3784 = vunpack.c.l.b16 %v2502
        %v3785 = vunpack.c.h.b16 %v2502
        %v3786 = vunpack.c.l.b16 %v2503
        %v3787 = vunpack.c.h.b16 %v2503
        %v3788 = vunpack.c.l.b16 %v2504
        %v3789 = vunpack.c.h.b16 %v2504
        %v3790 = vunpack.c.l.b16 %v2505
        %v3791 = vunpack.c.h.b16 %v2505
        %v3792 = vunpack.c.l.b16 %v2506
        %v3793 = vunpack.c.h.b16 %v2506
        %v3794 = vunpack.c.l.b16 %v2507
        %v3795 = vunpack.c.h.b16 %v2507
        %v3796 = vunpack.c.l.b16 %v2508
        %v3797 = vunpack.c.h.b16 %v2508
        %v3798 = vunpack.c.l.b16 %v2509
        %v3799 = vunpack.c.h.b16 %v2509
        %v3800 = vunpack.c.l.b16 %v2510
        %v3801 = vunpack.c.h.b16 %v2510
        %v3802 = vunpack.c.l.b16 %v2511
        %v3803 = vunpack.c.h.b16 %v2511
        %v3804 = vunpack.c.l.b16 %v2512
        %v3805 = vunpack.c.h.b16 %v2512
        %v3806 = vunpack.c.l.b16 %v2513
        %v3807 = vunpack.c.h.b16 %v2513
        %v3808 = vunpack.c.l.b16 %v2514
        %v3809 = vunpack.c.h.b16 %v2514
        %v3810 = vunpack.c.l.b16 %v2515
        %v3811 = vunpack.c.h.b16 %v2515
        %v3812 = vunpack.c.l.b16 %v2516
        %v3813 = vunpack.c.h.b16 %v2516
        %v3814 = vunpack.c.l.b16 %v2517
        %v3815 = vunpack.c.h.b16 %v2517
        %v3816 = vunpack.c.l.b16 %v2518
        %v3817 = vunpack.c.h.b16 %v2518
        %v3818 = vunpack.c.l.b16 %v2519
        %v3819 = vunpack.c.h.b16 %v2519
        %v3820 = vunpack.c.l.b16 %v2520
        %v3821 = vunpack.c.h.b16 %v2520
        %v3822 = vunpack.c.l.b16 %v2521
        %v3823 = vunpack.c.h.b16 %v2521
        %v3824 = vunpack.c.l.b16 %v2522
        %v3825 = vunpack.c.h.b16 %v2522
        %v3826 = vunpack.c.l.b16 %v2523
        %v3827 = vunpack.c.h.b16 %v2523
        %v3828 = vunpack.c.l.b16 %v2524
        %v3829 = vunpack.c.h.b16 %v2524
        %v3830 = vunpack.c.l.b16 %v2525
        %v3831 = vunpack.c.h.b16 %v2525
        %v3832 = vunpack.c.l.b16 %v2526
        %v3833 = vunpack.c.h.b16 %v2526
        %v3834 = vunpack.c.l.b16 %v2527
        %v3835 = vunpack.c.h.b16 %v2527
        %v3836 = vunpack.c.l.b16 %v2528
        %v3837 = vunpack.c.h.b16 %v2528
        %v3838 = vunpack.c.l.b16 %v2529
        %v3839 = vunpack.c.h.b16 %v2529
        %v3840 = vunpack.c.l.b16 %v2530
        %v3841 = vunpack.c.h.b16 %v2530
        %v3842 = vunpack.c.l.b16 %v2531
        %v3843 = vunpack.c.h.b16 %v2531
        %v3844 = vunpack.c.l.b16 %v2532
        %v3845 = vunpack.c.h.b16 %v2532
        %v3846 = vunpack.c.l.b16 %v2533
        %v3847 = vunpack.c.h.b16 %v2533
        %v3848 = vunpack.c.l.b16 %v2534
        %v3849 = vunpack.c.h.b16 %v2534
        %v3850 = vunpack.c.l.b16 %v2535
        %v3851 = vunpack.c.h.b16 %v2535
        %v3852 = vunpack.c.l.b16 %v2536
        %v3853 = vunpack.c.h.b16 %v2536
        %v3854 = vunpack.c.l.b16 %v2537
        %v3855 = vunpack.c.h.b16 %v2537
        %v3856 = vunpack.c.l.b16 %v2538
        %v3857 = vunpack.c.h.b16 %v2538
        %v3858 = vunpack.c.l.b16 %v2539
        %v3859 = vunpack.c.h.b16 %v2539
        %v3860 = vunpack.c.l.b16 %v2540
        %v3861 = vunpack.c.h.b16 %v2540
        %v3862 = vunpack.c.l.b16 %v2541
        %v3863 = vunpack.c.h.b16 %v2541
        %v3864 = vunpack.c.l.b16 %v2542
        %v3865 = vunpack.c.h.b16 %v2542
        %v3866 = vunpack.c.l.b16 %v2543
        %v3867 = vunpack.c.h.b16 %v2543
        %v3868 = vunpack.c.l.b16 %v2544
        %v3869 = vunpack.c.h.b16 %v2544
        %v3870 = vunpack.c.l.b16 %v2545
        %v3871 = vunpack.c.h.b16 %v2545
        %v3872 = vunpack.c.l.b16 %v2546
        %v3873 = vunpack.c.h.b16 %v2546
        %v3874 = vunpack.c.l.b16 %v2547
        %v3875 = vunpack.c.h.b16 %v2547
        %v3876 = vunpack.c.l.b16 %v2548
        %v3877 = vunpack.c.h.b16 %v2548
        %v3878 = vunpack.c.l.b16 %v2549
        %v3879 = vunpack.c.h.b16 %v2549
        %v3880 = vunpack.c.l.b16 %v2550
        %v3881 = vunpack.c.h.b16 %v2550
        %v3882 = vunpack.c.l.b16 %v2551
        %v3883 = vunpack.c.h.b16 %v2551
        %v3884 = vunpack.c.l.b16 %v2552
        %v3885 = vunpack.c.h.b16 %v2552
        %v3886 = vunpack.c.l.b16 %v2553
        %v3887 = vunpack.c.h.b16 %v2553
        %v3888 = vunpack.c.l.b16 %v2554
        %v3889 = vunpack.c.h.b16 %v2554
        %v3890 = vunpack.c.l.b16 %v2555
        %v3891 = vunpack.c.h.b16 %v2555
        %v3892 = vunpack.c.l.b16 %v2556
        %v3893 = vunpack.c.h.b16 %v2556
        %v3894 = vunpack.c.l.b16 %v2557
        %v3895 = vunpack.c.h.b16 %v2557
        %v3896 = vunpack.c.l.b16 %v2558
        %v3897 = vunpack.c.h.b16 %v2558
        %v3898 = vunpack.c.l.b16 %v2559
        %v3899 = vunpack.c.h.b16 %v2559
        %v3900 = vunpack.c.l.b16 %v2560
        %v3901 = vunpack.c.h.b16 %v2560
        %v3902 = vunpack.c.l.b16 %v2561
        %v3903 = vunpack.c.h.b16 %v2561
        %v3904 = vunpack.c.l.b16 %v2562
        %v3905 = vunpack.c.h.b16 %v2562
        %v3906 = vunpack.c.l.b16 %v2563
        %v3907 = vunpack.c.h.b16 %v2563
        %v3908 = vunpack.c.l.b16 %v2564
        %v3909 = vunpack.c.h.b16 %v2564
        %v3910 = vunpack.c.l.b16 %v2565
        %v3911 = vunpack.c.h.b16 %v2565
        %v3912 = vunpack.c.l.b16 %v2566
        %v3913 = vunpack.c.h.b16 %v2566
        %v3914 = vunpack.c.l.b16 %v2567
        %v3915 = vunpack.c.h.b16 %v2567
        %v3916 = vunpack.c.l.b16 %v2568
        %v3917 = vunpack.c.h.b16 %v2568
        %v3918 = vunpack.c.l.b16 %v2569
        %v3919 = vunpack.c.h.b16 %v2569
        %v3920 = vunpack.c.l.b16 %v2570
        %v3921 = vunpack.c.h.b16 %v2570
        %v3922 = vunpack.c.l.b16 %v2571
        %v3923 = vunpack.c.h.b16 %v2571
        %v3924 = vunpack.c.l.b16 %v2572
        %v3925 = vunpack.c.h.b16 %v2572
        %v3926 = vunpack.c.l.b16 %v2573
        %v3927 = vunpack.c.h.b16 %v2573
        %v3928 = vunpack.c.l.b16 %v2574
        %v3929 = vunpack.c.h.b16 %v2574
        %v3930 = vunpack.c.l.b16 %v2575
        %v3931 = vunpack.c.h.b16 %v2575
        %v3932 = vunpack.c.l.b16 %v2576
        %v3933 = vunpack.c.h.b16 %v2576
        %v3934 = vunpack.c.l.b16 %v2577
        %v3935 = vunpack.c.h.b16 %v2577
        %v3936 = vunpack.c.l.b16 %v2578
        %v3937 = vunpack.c.h.b16 %v2578
        %v3938 = vunpack.c.l.b16 %v2579
        %v3939 = vunpack.c.h.b16 %v2579
        %v3940 = vunpack.c.l.b16 %v2580
        %v3941 = vunpack.c.h.b16 %v2580
        %v3942 = vunpack.c.l.b16 %v2581
        %v3943 = vunpack.c.h.b16 %v2581
        %v3944 = vunpack.c.l.b16 %v2582
        %v3945 = vunpack.c.h.b16 %v2582
        %v3946 = vunpack.c.l.b16 %v2583
        %v3947 = vunpack.c.h.b16 %v2583
        %v3948 = vunpack.c.l.b16 %v2584
        %v3949 = vunpack.c.h.b16 %v2584
        %v3950 = vunpack.c.l.b16 %v2585
        %v3951 = vunpack.c.h.b16 %v2585
        %v3952 = vunpack.c.l.b16 %v2586
        %v3953 = vunpack.c.h.b16 %v2586
        %v3954 = vunpack.c.l.b16 %v2587
        %v3955 = vunpack.c.h.b16 %v2587
        %v3956 = vunpack.c.l.b16 %v2588
        %v3957 = vunpack.c.h.b16 %v2588
        %v3958 = vunpack.c.l.b16 %v2589
        %v3959 = vunpack.c.h.b16 %v2589
        %v3960 = vunpack.c.l.b16 %v2590
        %v3961 = vunpack.c.h.b16 %v2590
        %v3962 = vunpack.c.l.b16 %v2591
        %v3963 = vunpack.c.h.b16 %v2591
        %v3964 = vunpack.c.l.b16 %v2592
        %v3965 = vunpack.c.h.b16 %v2592
        %v3966 = vunpack.c.l.b16 %v2593
        %v3967 = vunpack.c.h.b16 %v2593
        %v3968 = vunpack.c.l.b16 %v2594
        %v3969 = vunpack.c.h.b16 %v2594
        %v3970 = vunpack.c.l.b16 %v2595
        %v3971 = vunpack.c.h.b16 %v2595
        %v3972 = vunpack.c.l.b16 %v2596
        %v3973 = vunpack.c.h.b16 %v2596
        %v3974 = vunpack.c.l.b16 %v2597
        %v3975 = vunpack.c.h.b16 %v2597
        %v3976 = vunpack.c.l.b16 %v2598
        %v3977 = vunpack.c.h.b16 %v2598
        %v3978 = vunpack.c.l.b16 %v2599
        %v3979 = vunpack.c.h.b16 %v2599
        %v3980 = vunpack.c.l.b16 %v2600
        %v3981 = vunpack.c.h.b16 %v2600
        %v3982 = vunpack.c.l.b16 %v2601
        %v3983 = vunpack.c.h.b16 %v2601
        %v3984 = vunpack.c.l.b16 %v2602
        %v3985 = vunpack.c.h.b16 %v2602
        %v3986 = vunpack.c.l.b16 %v2603
        %v3987 = vunpack.c.h.b16 %v2603
        %v3988 = vunpack.c.l.b16 %v2604
        %v3989 = vunpack.c.h.b16 %v2604
        %v3990 = vunpack.c.l.b16 %v2605
        %v3991 = vunpack.c.h.b16 %v2605
        %v3992 = vunpack.c.l.b16 %v2606
        %v3993 = vunpack.c.h.b16 %v2606
        %v3994 = vunpack.c.l.b16 %v2607
        %v3995 = vunpack.c.h.b16 %v2607
        %v3996 = vunpack.c.l.b16 %v2608
        %v3997 = vunpack.c.h.b16 %v2608
        %v3998 = vunpack.c.l.b16 %v2609
        %v3999 = vunpack.c.h.b16 %v2609
        %v4000 = vunpack.c.l.b16 %v2610
        %v4001 = vunpack.c.h.b16 %v2610
        %v4002 = vunpack.c.l.b16 %v2611
        %v4003 = vunpack.c.h.b16 %v2611
        %v4004 = vunpack.c.l.b16 %v2612
        %v4005 = vunpack.c.h.b16 %v2612
        %v4006 = vunpack.c.l.b16 %v2613
        %v4007 = vunpack.c.h.b16 %v2613
        %v4008 = vunpack.c.l.b16 %v2614
        %v4009 = vunpack.c.h.b16 %v2614
        %v4010 = vunpack.c.l.b16 %v2615
        %v4011 = vunpack.c.h.b16 %v2615
        %v4012 = vunpack.c.l.b16 %v2616
        %v4013 = vunpack.c.h.b16 %v2616
        %v4014 = vunpack.c.l.b16 %v2617
        %v4015 = vunpack.c.h.b16 %v2617
        %v4016 = vunpack.c.l.b16 %v2618
        %v4017 = vunpack.c.h.b16 %v2618
        %v4018 = vunpack.c.l.b16 %v2619
        %v4019 = vunpack.c.h.b16 %v2619
        %v4020 = vunpack.c.l.b16 %v2620
        %v4021 = vunpack.c.h.b16 %v2620
        %v4022 = vunpack.c.l.b16 %v2621
        %v4023 = vunpack.c.h.b16 %v2621
        %v4024 = vunpack.c.l.b16 %v2622
        %v4025 = vunpack.c.h.b16 %v2622
        %v4026 = vunpack.c.l.b16 %v2623
        %v4027 = vunpack.c.h.b16 %v2623
        %v4028 = vunpack.c.l.b16 %v2624
        %v4029 = vunpack.c.h.b16 %v2624
        %v4030 = vunpack.c.l.b16 %v2625
        %v4031 = vunpack.c.h.b16 %v2625
        %v4032 = vunpack.c.l.b16 %v2626
        %v4033 = vunpack.c.h.b16 %v2626
        %v4034 = vunpack.c.l.b16 %v2627
        %v4035 = vunpack.c.h.b16 %v2627
        %v4036 = vunpack.c.l.b16 %v2628
        %v4037 = vunpack.c.h.b16 %v2628
        %v4038 = vunpack.c.l.b16 %v2629
        %v4039 = vunpack.c.h.b16 %v2629
        %v4040 = vunpack.c.l.b16 %v2630
        %v4041 = vunpack.c.h.b16 %v2630
        %v4042 = vunpack.c.l.b16 %v2631
        %v4043 = vunpack.c.h.b16 %v2631
        %v4044 = vunpack.c.l.b16 %v2632
        %v4045 = vunpack.c.h.b16 %v2632
        %v4046 = vunpack.c.l.b16 %v2633
        %v4047 = vunpack.c.h.b16 %v2633
        %v4048 = vunpack.c.l.b16 %v2634
        %v4049 = vunpack.c.h.b16 %v2634
        %v4050 = vunpack.c.l.b16 %v2635
        %v4051 = vunpack.c.h.b16 %v2635
        %v4052 = vunpack.c.l.b16 %v2636
        %v4053 = vunpack.c.h.b16 %v2636
        %v4054 = vunpack.c.l.b16 %v2637
        %v4055 = vunpack.c.h.b16 %v2637
        %v4056 = vunpack.c.l.b16 %v2638
        %v4057 = vunpack.c.h.b16 %v2638
        %v4058 = vunpack.c.l.b16 %v2639
        %v4059 = vunpack.c.h.b16 %v2639
        %v4060 = vunpack.c.l.b16 %v2640
        %v4061 = vunpack.c.h.b16 %v2640
        %v4062 = vunpack.c.l.b16 %v2641
        %v4063 = vunpack.c.h.b16 %v2641
        %v4064 = vunpack.c.l.b16 %v2642
        %v4065 = vunpack.c.h.b16 %v2642
        %v4066 = vunpack.c.l.b16 %v2643
        %v4067 = vunpack.c.h.b16 %v2643
        %v4068 = vunpack.c.l.b16 %v2644
        %v4069 = vunpack.c.h.b16 %v2644
        %v4070 = vunpack.c.l.b16 %v2645
        %v4071 = vunpack.c.h.b16 %v2645
        %v4072 = vunpack.c.l.b16 %v2646
        %v4073 = vunpack.c.h.b16 %v2646
        %v4074 = vunpack.c.l.b16 %v2647
        %v4075 = vunpack.c.h.b16 %v2647
        %v4076 = vunpack.c.l.b16 %v2648
        %v4077 = vunpack.c.h.b16 %v2648
        %v4078 = vunpack.c.l.b16 %v2649
        %v4079 = vunpack.c.h.b16 %v2649
        %v4080 = vunpack.c.l.b16 %v2650
        %v4081 = vunpack.c.h.b16 %v2650
        %v4082 = vunpack.c.l.b16 %v2651
        %v4083 = vunpack.c.h.b16 %v2651
        %v4084 = vunpack.c.l.b16 %v2652
        %v4085 = vunpack.c.h.b16 %v2652
        %v4086 = vunpack.c.l.b16 %v2653
        %v4087 = vunpack.c.h.b16 %v2653
        %v4088 = vunpack.c.l.b16 %v2654
        %v4089 = vunpack.c.h.b16 %v2654
        %v4090 = vunpack.c.l.b16 %v2655
        %v4091 = vunpack.c.h.b16 %v2655
        %v4092 = vunpack.c.l.b16 %v2656
        %v4093 = vunpack.c.h.b16 %v2656
        %v4094 = vunpack.c.l.b16 %v2657
        %v4095 = vunpack.c.h.b16 %v2657
        %v4096 = vunpack.c.l.b16 %v2658
        %v4097 = vunpack.c.h.b16 %v2658
        %v4098 = vunpack.c.l.b16 %v2659
        %v4099 = vunpack.c.h.b16 %v2659
        %v4100 = vunpack.c.l.b16 %v2660
        %v4101 = vunpack.c.h.b16 %v2660
        %v4102 = vunpack.c.l.b16 %v2661
        %v4103 = vunpack.c.h.b16 %v2661
        %v4104 = vunpack.c.l.b16 %v2662
        %v4105 = vunpack.c.h.b16 %v2662
        %v4106 = vunpack.c.l.b16 %v2663
        %v4107 = vunpack.c.h.b16 %v2663
        %v4108 = vunpack.c.l.b16 %v2664
        %v4109 = vunpack.c.h.b16 %v2664
        %v4110 = vunpack.c.l.b16 %v2665
        %v4111 = vunpack.c.h.b16 %v2665
        %v4112 = vunpack.c.l.b16 %v2666
        %v4113 = vunpack.c.h.b16 %v2666
        %v4114 = vunpack.c.l.b16 %v2667
        %v4115 = vunpack.c.h.b16 %v2667
        %v4116 = vunpack.c.l.b16 %v2668
        %v4117 = vunpack.c.h.b16 %v2668
        %v4118 = vunpack.c.l.b16 %v2669
        %v4119 = vunpack.c.h.b16 %v2669
        %v4120 = vunpack.c.l.b16 %v2670
        %v4121 = vunpack.c.h.b16 %v2670
        %v4122 = vunpack.c.l.b16 %v2671
        %v4123 = vunpack.c.h.b16 %v2671
        %v4124 = vunpack.c.l.b16 %v2672
        %v4125 = vunpack.c.h.b16 %v2672
        %v4126 = vunpack.c.l.b16 %v2673
        %v4127 = vunpack.c.h.b16 %v2673
        %v4128 = vunpack.c.l.b16 %v2674
        %v4129 = vunpack.c.h.b16 %v2674
        %v4130 = vunpack.c.l.b16 %v2675
        %v4131 = vunpack.c.h.b16 %v2675
        %v4132 = vunpack.c.l.b16 %v2676
        %v4133 = vunpack.c.h.b16 %v2676
        %v4134 = vunpack.c.l.b16 %v2677
        %v4135 = vunpack.c.h.b16 %v2677
        %v4136 = vunpack.c.l.b16 %v2678
        %v4137 = vunpack.c.h.b16 %v2678
        %v4138 = vunpack.c.l.b16 %v2679
        %v4139 = vunpack.c.h.b16 %v2679
        %v4140 = vunpack.c.l.b16 %v2680
        %v4141 = vunpack.c.h.b16 %v2680
        %v4142 = vunpack.c.l.b16 %v2681
        %v4143 = vunpack.c.h.b16 %v2681
        %v4144 = vunpack.c.l.b16 %v2682
        %v4145 = vunpack.c.h.b16 %v2682
        %v4146 = vunpack.c.l.b16 %v2683
        %v4147 = vunpack.c.h.b16 %v2683
        %v4148 = vunpack.c.l.b16 %v2684
        %v4149 = vunpack.c.h.b16 %v2684
        %v4150 = vunpack.c.l.b16 %v2685
        %v4151 = vunpack.c.h.b16 %v2685
        %v4152 = vunpack.c.l.b16 %v2686
        %v4153 = vunpack.c.h.b16 %v2686
        %v4154 = vunpack.c.l.b16 %v2687
        %v4155 = vunpack.c.h.b16 %v2687
        %v4156 = vunpack.c.l.b16 %v2688
        %v4157 = vunpack.c.h.b16 %v2688
        %v4158 = vunpack.c.l.b16 %v2689
        %v4159 = vunpack.c.h.b16 %v2689
        %v4160 = vunpack.c.l.b16 %v2690
        %v4161 = vunpack.c.h.b16 %v2690
        %v4162 = vunpack.c.l.b16 %v2691
        %v4163 = vunpack.c.h.b16 %v2691
        %v4164 = vunpack.c.l.b16 %v2692
        %v4165 = vunpack.c.h.b16 %v2692
        %v4166 = vunpack.c.l.b16 %v2693
        %v4167 = vunpack.c.h.b16 %v2693
        %v4168 = vunpack.c.l.b16 %v2694
        %v4169 = vunpack.c.h.b16 %v2694
        %v4170 = vunpack.c.l.b16 %v2695
        %v4171 = vunpack.c.h.b16 %v2695
        %v4172 = vunpack.c.l.b16 %v2696
        %v4173 = vunpack.c.h.b16 %v2696
        %v4174 = vunpack.c.l.b16 %v2697
        %v4175 = vunpack.c.h.b16 %v2697
        %v4176 = vunpack.c.l.b16 %v2698
        %v4177 = vunpack.c.h.b16 %v2698
        %v4178 = vunpack.c.l.b16 %v2699
        %v4179 = vunpack.c.h.b16 %v2699
        %v4180 = vunpack.c.l.b16 %v2700
        %v4181 = vunpack.c.h.b16 %v2700
        %v4182 = vunpack.c.l.b16 %v2701
        %v4183 = vunpack.c.h.b16 %v2701
        %v4184 = vunpack.c.l.b16 %v2702
        %v4185 = vunpack.c.h.b16 %v2702
        %v4186 = vunpack.c.l.b16 %v2703
        %v4187 = vunpack.c.h.b16 %v2703
        %v4188 = vunpack.c.l.b16 %v2704
        %v4189 = vunpack.c.h.b16 %v2704
        %v4190 = vunpack.c.l.b16 %v2705
        %v4191 = vunpack.c.h.b16 %v2705
        %v4192 = vunpack.c.l.b16 %v2706
        %v4193 = vunpack.c.h.b16 %v2706
        %v4194 = vunpack.c.l.b16 %v2707
        %v4195 = vunpack.c.h.b16 %v2707
        %v4196 = vunpack.c.l.b16 %v2708
        %v4197 = vunpack.c.h.b16 %v2708
        %v4198 = vunpack.c.l.b16 %v2709
        %v4199 = vunpack.c.h.b16 %v2709
        %v4200 = vunpack.c.l.b16 %v2710
        %v4201 = vunpack.c.h.b16 %v2710
        %v4202 = vunpack.c.l.b16 %v2711
        %v4203 = vunpack.c.h.b16 %v2711
        %v4204 = vunpack.c.l.b16 %v2712
        %v4205 = vunpack.c.h.b16 %v2712
        %v4206 = vunpack.c.l.b16 %v2713
        %v4207 = vunpack.c.h.b16 %v2713
        %v4208 = vunpack.c.l.b16 %v2714
        %v4209 = vunpack.c.h.b16 %v2714
        %v4210 = vunpack.c.l.b16 %v2715
        %v4211 = vunpack.c.h.b16 %v2715
        %v4212 = vunpack.c.l.b16 %v2716
        %v4213 = vunpack.c.h.b16 %v2716
        %v4214 = vunpack.c.l.b16 %v2717
        %v4215 = vunpack.c.h.b16 %v2717
        %v4216 = vunpack.c.l.b16 %v2718
        %v4217 = vunpack.c.h.b16 %v2718
        %v4218 = vunpack.c.l.b16 %v2719
        %v4219 = vunpack.c.h.b16 %v2719
        %v4220 = vunpack.c.l.b16 %v2720
        %v4221 = vunpack.c.h.b16 %v2720
        %v4222 = vunpack.c.l.b16 %v2721
        %v4223 = vunpack.c.h.b16 %v2721
        %v4224 = vunpack.c.l.b16 %v2722
        %v4225 = vunpack.c.h.b16 %v2722
        %v4226 = vunpack.c.l.b16 %v2723
        %v4227 = vunpack.c.h.b16 %v2723
        %v4228 = vunpack.c.l.b16 %v2724
        %v4229 = vunpack.c.h.b16 %v2724
        %v4230 = vunpack.c.l.b16 %v2725
        %v4231 = vunpack.c.h.b16 %v2725
        %v4232 = vunpack.c.l.b16 %v2726
        %v4233 = vunpack.c.h.b16 %v2726
        %v4234 = vunpack.c.l.b16 %v2727
        %v4235 = vunpack.c.h.b16 %v2727
        %v4236 = vunpack.c.l.b16 %v2728
        %v4237 = vunpack.c.h.b16 %v2728
        %v4238 = vunpack.c.l.b16 %v2729
        %v4239 = vunpack.c.h.b16 %v2729
        %v4240 = vunpack.c.l.b16 %v2730
        %v4241 = vunpack.c.h.b16 %v2730
        %v4242 = vunpack.c.l.b16 %v2731
        %v4243 = vunpack.c.h.b16 %v2731
        %v4244 = vunpack.c.l.b16 %v2732
        %v4245 = vunpack.c.h.b16 %v2732
        %v4246 = vunpack.c.l.b16 %v2733
        %v4247 = vunpack.c.h.b16 %v2733
        %v4248 = vunpack.c.l.b16 %v2734
        %v4249 = vunpack.c.h.b16 %v2734
        %v4250 = vunpack.c.l.b16 %v2735
        %v4251 = vunpack.c.h.b16 %v2735
        %v4252 = vunpack.c.l.b16 %v2736
        %v4253 = vunpack.c.h.b16 %v2736
        %v4254 = vunpack.c.l.b16 %v2737
        %v4255 = vunpack.c.h.b16 %v2737
        %v4256 = vunpack.c.l.b16 %v2738
        %v4257 = vunpack.c.h.b16 %v2738
        %v4258 = vunpack.c.l.b16 %v2739
        %v4259 = vunpack.c.h.b16 %v2739
        %v4260 = vunpack.c.l.b16 %v2740
        %v4261 = vunpack.c.h.b16 %v2740
        %v4262 = vunpack.c.l.b16 %v2741
        %v4263 = vunpack.c.h.b16 %v2741
        %v4264 = vunpack.c.l.b16 %v2742
        %v4265 = vunpack.c.h.b16 %v2742
        %v4266 = vunpack.c.l.b16 %v2743
        %v4267 = vunpack.c.h.b16 %v2743
        %v4268 = vunpack.c.l.b16 %v2744
        %v4269 = vunpack.c.h.b16 %v2744
        %v4270 = vunpack.c.l.b16 %v2745
        %v4271 = vunpack.c.h.b16 %v2745
        %v4272 = vunpack.c.l.b16 %v2746
        %v4273 = vunpack.c.h.b16 %v2746
        %v4274 = vunpack.c.l.b16 %v2747
        %v4275 = vunpack.c.h.b16 %v2747
        %v4276 = vunpack.c.l.b16 %v2748
        %v4277 = vunpack.c.h.b16 %v2748
        %v4278 = vunpack.c.l.b16 %v2749
        %v4279 = vunpack.c.h.b16 %v2749
        %v4280 = vunpack.c.l.b16 %v2750
        %v4281 = vunpack.c.h.b16 %v2750
        %v4282 = vunpack.c.l.b16 %v2751
        %v4283 = vunpack.c.h.b16 %v2751
        %v4284 = vunpack.c.l.b16 %v2752
        %v4285 = vunpack.c.h.b16 %v2752
        %v4286 = vunpack.c.l.b16 %v2753
        %v4287 = vunpack.c.h.b16 %v2753
        %v4288 = vunpack.c.l.b16 %v2754
        %v4289 = vunpack.c.h.b16 %v2754
        %v4290 = vunpack.c.l.b16 %v2755
        %v4291 = vunpack.c.h.b16 %v2755
        %v4292 = vunpack.c.l.b16 %v2756
        %v4293 = vunpack.c.h.b16 %v2756
        %v4294 = vunpack.c.l.b16 %v2757
        %v4295 = vunpack.c.h.b16 %v2757
        %v4296 = vunpack.c.l.b16 %v2758
        %v4297 = vunpack.c.h.b16 %v2758
        %v4298 = vunpack.c.l.b16 %v2759
        %v4299 = vunpack.c.h.b16 %v2759
        %v4300 = vunpack.c.l.b16 %v2760
        %v4301 = vunpack.c.h.b16 %v2760
        %v4302 = vunpack.c.l.b16 %v2761
        %v4303 = vunpack.c.h.b16 %v2761
        %v4304 = vunpack.c.l.b16 %v2762
        %v4305 = vunpack.c.h.b16 %v2762
        %v4306 = vunpack.c.l.b16 %v2763
        %v4307 = vunpack.c.h.b16 %v2763
        %v4308 = vunpack.c.l.b16 %v2764
        %v4309 = vunpack.c.h.b16 %v2764
        %v4310 = vunpack.c.l.b16 %v2765
        %v4311 = vunpack.c.h.b16 %v2765
        %v4312 = vunpack.c.l.b16 %v2766
        %v4313 = vunpack.c.h.b16 %v2766
        %v4314 = vunpack.c.l.b16 %v2767
        %v4315 = vunpack.c.h.b16 %v2767
        %v4316 = vunpack.c.l.b16 %v2768
        %v4317 = vunpack.c.h.b16 %v2768
        %v4318 = vunpack.c.l.b16 %v2769
        %v4319 = vunpack.c.h.b16 %v2769
        %v4320 = vunpack.c.l.b16 %v2770
        %v4321 = vunpack.c.h.b16 %v2770
        %v4322 = vunpack.c.l.b16 %v2771
        %v4323 = vunpack.c.h.b16 %v2771
        %v4324 = vunpack.c.l.b16 %v2772
        %v4325 = vunpack.c.h.b16 %v2772
        %v4326 = vunpack.c.l.b16 %v2773
        %v4327 = vunpack.c.h.b16 %v2773
        %v4328 = vunpack.c.l.b16 %v2774
        %v4329 = vunpack.c.h.b16 %v2774
        %v4330 = vunpack.c.l.b16 %v2775
        %v4331 = vunpack.c.h.b16 %v2775
        %v4332 = vunpack.c.l.b16 %v2776
        %v4333 = vunpack.c.h.b16 %v2776
        %v4334 = vunpack.c.l.b16 %v2777
        %v4335 = vunpack.c.h.b16 %v2777
        %v4336 = vunpack.c.l.b16 %v2778
        %v4337 = vunpack.c.h.b16 %v2778
        %v4338 = vunpack.c.l.b16 %v2779
        %v4339 = vunpack.c.h.b16 %v2779
        %v4340 = vunpack.c.l.b16 %v2780
        %v4341 = vunpack.c.h.b16 %v2780
        %v4342 = vunpack.c.l.b16 %v2781
        %v4343 = vunpack.c.h.b16 %v2781
        %v4344 = vunpack.c.l.b16 %v2782
        %v4345 = vunpack.c.h.b16 %v2782
        %v4346 = vunpack.c.l.b16 %v2783
        %v4347 = vunpack.c.h.b16 %v2783
        %v4348 = vunpack.c.l.b16 %v2784
        %v4349 = vunpack.c.h.b16 %v2784
        %v4350 = vunpack.c.l.b16 %v2785
        %v4351 = vunpack.c.h.b16 %v2785
        %v4352 = vunpack.c.l.b16 %v2786
        %v4353 = vunpack.c.h.b16 %v2786
        %v4354 = vunpack.c.l.b16 %v2787
        %v4355 = vunpack.c.h.b16 %v2787
        %v4356 = vunpack.c.l.b16 %v2788
        %v4357 = vunpack.c.h.b16 %v2788
        %v4358 = vunpack.c.l.b16 %v2789
        %v4359 = vunpack.c.h.b16 %v2789
        %v4360 = vunpack.c.l.b16 %v2790
        %v4361 = vunpack.c.h.b16 %v2790
        %v4362 = vunpack.c.l.b16 %v2791
        %v4363 = vunpack.c.h.b16 %v2791
        %v4364 = vunpack.c.l.b16 %v2792
        %v4365 = vunpack.c.h.b16 %v2792
        %v4366 = vunpack.c.l.b16 %v2793
        %v4367 = vunpack.c.h.b16 %v2793
        %v4368 = vunpack.c.l.b16 %v2794
        %v4369 = vunpack.c.h.b16 %v2794
        %v4370 = vunpack.c.l.b16 %v2795
        %v4371 = vunpack.c.h.b16 %v2795
        %v4372 = vunpack.c.l.b16 %v2796
        %v4373 = vunpack.c.h.b16 %v2796
        %v4374 = vunpack.c.l.b16 %v2797
        %v4375 = vunpack.c.h.b16 %v2797
        %v4376 = vpack.c.b16 %v3360, %v3352
        %v4377 = vpack.c.b16 %v3361, %v3353
        %v4378 = vpack.c.b16 %v3362, %v3354
        %v4379 = vpack.c.b16 %v3363, %v3355
        %v4380 = vpack.c.b16 %v3364, %v3356
        %v4381 = vpack.c.b16 %v3365, %v3357
        %v4382 = vpack.c.b16 %v3366, %v3358
        %v4383 = vpack.c.b16 %v3367, %v3359
        %v4384 = vpack.c.b16 %v3376, %v3368
        %v4385 = vpack.c.b16 %v3377, %v3369
        %v4386 = vpack.c.b16 %v3378, %v3370
        %v4387 = vpack.c.b16 %v3379, %v3371
        %v4388 = vpack.c.b16 %v3380, %v3372
        %v4389 = vpack.c.b16 %v3381, %v3373
        %v4390 = vpack.c.b16 %v3382, %v3374
        %v4391 = vpack.c.b16 %v3383, %v3375
        %v4392 = vpack.c.b16 %v3392, %v3384
        %v4393 = vpack.c.b16 %v3393, %v3385
        %v4394 = vpack.c.b16 %v3394, %v3386
        %v4395 = vpack.c.b16 %v3395, %v3387
        %v4396 = vpack.c.b16 %v3396, %v3388
        %v4397 = vpack.c.b16 %v3397, %v3389
        %v4398 = vpack.c.b16 %v3398, %v3390
        %v4399 = vpack.c.b16 %v3399, %v3391
        %v4400 = vpack.c.b16 %v3408, %v3400
        %v4401 = vpack.c.b16 %v3409, %v3401
        %v4402 = vpack.c.b16 %v3410, %v3402
        %v4403 = vpack.c.b16 %v3411, %v3403
        %v4404 = vpack.c.b16 %v3412, %v3404
        %v4405 = vpack.c.b16 %v3413, %v3405
        %v4406 = vpack.c.b16 %v3414, %v3406
        %v4407 = vpack.c.b16 %v3415, %v3407
        %v4408 = vpack.c.b16 %v3424, %v3416
        %v4409 = vpack.c.b16 %v3425, %v3417
        %v4410 = vpack.c.b16 %v3426, %v3418
        %v4411 = vpack.c.b16 %v3427, %v3419
        %v4412 = vpack.c.b16 %v3428, %v3420
        %v4413 = vpack.c.b16 %v3429, %v3421
        %v4414 = vpack.c.b16 %v3430, %v3422
        %v4415 = vpack.c.b16 %v3431, %v3423
        %v4416 = vpack.c.b16 %v3440, %v3432
        %v4417 = vpack.c.b16 %v3441, %v3433
        %v4418 = vpack.c.b16 %v3442, %v3434
        %v4419 = vpack.c.b16 %v3443, %v3435
        %v4420 = vpack.c.b16 %v3444, %v3436
        %v4421 = vpack.c.b16 %v3445, %v3437
        %v4422 = vpack.c.b16 %v3446, %v3438
        %v4423 = vpack.c.b16 %v3447, %v3439
        %v4424 = vpack.c.b16 %v3456, %v3448
        %v4425 = vpack.c.b16 %v3457, %v3449
        %v4426 = vpack.c.b16 %v3458, %v3450
        %v4427 = vpack.c.b16 %v3459, %v3451
        %v4428 = vpack.c.b16 %v3460, %v3452
        %v4429 = vpack.c.b16 %v3461, %v3453
        %v4430 = vpack.c.b16 %v3462, %v3454
        %v4431 = vpack.c.b16 %v3463, %v3455
        %v4432 = vpack.c.b16 %v3472, %v3464
        %v4433 = vpack.c.b16 %v3473, %v3465
        %v4434 = vpack.c.b16 %v3474, %v3466
        %v4435 = vpack.c.b16 %v3475, %v3467
        %v4436 = vpack.c.b16 %v3476, %v3468
        %v4437 = vpack.c.b16 %v3477, %v3469
        %v4438 = vpack.c.b16 %v3478, %v3470
        %v4439 = vpack.c.b16 %v3479, %v3471
        %v4440 = vpack.c.b16 %v3488, %v3480
        %v4441 = vpack.c.b16 %v3489, %v3481
        %v4442 = vpack.c.b16 %v3490, %v3482
        %v4443 = vpack.c.b16 %v3491, %v3483
        %v4444 = vpack.c.b16 %v3492, %v3484
        %v4445 = vpack.c.b16 %v3493, %v3485
        %v4446 = vpack.c.b16 %v3494, %v3486
        %v4447 = vpack.c.b16 %v3495, %v3487
        %v4448 = vpack.c.b16 %v3504, %v3496
        %v4449 = vpack.c.b16 %v3505, %v3497
        %v4450 = vpack.c.b16 %v3506, %v3498
        %v4451 = vpack.c.b16 %v3507, %v3499
        %v4452 = vpack.c.b16 %v3508, %v3500
        %v4453 = vpack.c.b16 %v3509, %v3501
        %v4454 = vpack.c.b16 %v3510, %v3502
        %v4455 = vpack.c.b16 %v3511, %v3503
        %v4456 = vpack.c.b16 %v3520, %v3512
        %v4457 = vpack.c.b16 %v3521, %v3513
        %v4458 = vpack.c.b16 %v3522, %v3514
        %v4459 = vpack.c.b16 %v3523, %v3515
        %v4460 = vpack.c.b16 %v3524, %v3516
        %v4461 = vpack.c.b16 %v3525, %v3517
        %v4462 = vpack.c.b16 %v3526, %v3518
        %v4463 = vpack.c.b16 %v3527, %v3519
        %v4464 = vpack.c.b16 %v3536, %v3528
        %v4465 = vpack.c.b16 %v3537, %v3529
        %v4466 = vpack.c.b16 %v3538, %v3530
        %v4467 = vpack.c.b16 %v3539, %v3531
        %v4468 = vpack.c.b16 %v3540, %v3532
        %v4469 = vpack.c.b16 %v3541, %v3533
        %v4470 = vpack.c.b16 %v3542, %v3534
        %v4471 = vpack.c.b16 %v3543, %v3535
        %v4472 = vpack.c.b16 %v3552, %v3544
        %v4473 = vpack.c.b16 %v3553, %v3545
        %v4474 = vpack.c.b16 %v3554, %v3546
        %v4475 = vpack.c.b16 %v3555, %v3547
        %v4476 = vpack.c.b16 %v3556, %v3548
        %v4477 = vpack.c.b16 %v3557, %v3549
        %v4478 = vpack.c.b16 %v3558, %v3550
        %v4479 = vpack.c.b16 %v3559, %v3551
        %v4480 = vpack.c.b16 %v3568, %v3560
        %v4481 = vpack.c.b16 %v3569, %v3561
        %v4482 = vpack.c.b16 %v3570, %v3562
        %v4483 = vpack.c.b16 %v3571, %v3563
        %v4484 = vpack.c.b16 %v3572, %v3564
        %v4485 = vpack.c.b16 %v3573, %v3565
        %v4486 = vpack.c.b16 %v3574, %v3566
        %v4487 = vpack.c.b16 %v3575, %v3567
        %v4488 = vpack.c.b16 %v3584, %v3576
        %v4489 = vpack.c.b16 %v3585, %v3577
        %v4490 = vpack.c.b16 %v3586, %v3578
        %v4491 = vpack.c.b16 %v3587, %v3579
        %v4492 = vpack.c.b16 %v3588, %v3580
        %v4493 = vpack.c.b16 %v3589, %v3581
        %v4494 = vpack.c.b16 %v3590, %v3582
        %v4495 = vpack.c.b16 %v3591, %v3583
        %v4496 = vpack.c.b16 %v3600, %v3592
        %v4497 = vpack.c.b16 %v3601, %v3593
        %v4498 = vpack.c.b16 %v3602, %v3594
        %v4499 = vpack.c.b16 %v3603, %v3595
        %v4500 = vpack.c.b16 %v3604, %v3596
        %v4501 = vpack.c.b16 %v3605, %v3597
        %v4502 = vpack.c.b16 %v3606, %v3598
        %v4503 = vpack.c.b16 %v3607, %v3599
        %v4504 = vpack.c.b16 %v3616, %v3608
        %v4505 = vpack.c.b16 %v3617, %v3609
        %v4506 = vpack.c.b16 %v3618, %v3610
        %v4507 = vpack.c.b16 %v3619, %v3611
        %v4508 = vpack.c.b16 %v3620, %v3612
        %v4509 = vpack.c.b16 %v3621, %v3613
        %v4510 = vpack.c.b16 %v3622, %v3614
        %v4511 = vpack.c.b16 %v3623, %v3615
        %v4512 = vpack.c.b16 %v3632, %v3624
        %v4513 = vpack.c.b16 %v3633, %v3625
        %v4514 = vpack.c.b16 %v3634, %v3626
        %v4515 = vpack.c.b16 %v3635, %v3627
        %v4516 = vpack.c.b16 %v3636, %v3628
        %v4517 = vpack.c.b16 %v3637, %v3629
        %v4518 = vpack.c.b16 %v3638, %v3630
        %v4519 = vpack.c.b16 %v3639, %v3631
        %v4520 = vpack.c.b16 %v3648, %v3640
        %v4521 = vpack.c.b16 %v3649, %v3641
        %v4522 = vpack.c.b16 %v3650, %v3642
        %v4523 = vpack.c.b16 %v3651, %v3643
        %v4524 = vpack.c.b16 %v3652, %v3644
        %v4525 = vpack.c.b16 %v3653, %v3645
        %v4526 = vpack.c.b16 %v3654, %v3646
        %v4527 = vpack.c.b16 %v3655, %v3647
        %v4528 = vpack.c.b16 %v3664, %v3656
        %v4529 = vpack.c.b16 %v3665, %v3657
        %v4530 = vpack.c.b16 %v3666, %v3658
        %v4531 = vpack.c.b16 %v3667, %v3659
        %v4532 = vpack.c.b16 %v3668, %v3660
        %v4533 = vpack.c.b16 %v3669, %v3661
        %v4534 = vpack.c.b16 %v3670, %v3662
        %v4535 = vpack.c.b16 %v3671, %v3663
        %v4536 = vpack.c.b16 %v3680, %v3672
        %v4537 = vpack.c.b16 %v3681, %v3673
        %v4538 = vpack.c.b16 %v3682, %v3674
        %v4539 = vpack.c.b16 %v3683, %v3675
        %v4540 = vpack.c.b16 %v3684, %v3676
        %v4541 = vpack.c.b16 %v3685, %v3677
        %v4542 = vpack.c.b16 %v3686, %v3678
        %v4543 = vpack.c.b16 %v3687, %v3679
        %v4544 = vpack.c.b16 %v3696, %v3688
        %v4545 = vpack.c.b16 %v3697, %v3689
        %v4546 = vpack.c.b16 %v3698, %v3690
        %v4547 = vpack.c.b16 %v3699, %v3691
        %v4548 = vpack.c.b16 %v3700, %v3692
        %v4549 = vpack.c.b16 %v3701, %v3693
        %v4550 = vpack.c.b16 %v3702, %v3694
        %v4551 = vpack.c.b16 %v3703, %v3695
        %v4552 = vpack.c.b16 %v3712, %v3704
        %v4553 = vpack.c.b16 %v3713, %v3705
        %v4554 = vpack.c.b16 %v3714, %v3706
        %v4555 = vpack.c.b16 %v3715, %v3707
        %v4556 = vpack.c.b16 %v3716, %v3708
        %v4557 = vpack.c.b16 %v3717, %v3709
        %v4558 = vpack.c.b16 %v3718, %v3710
        %v4559 = vpack.c.b16 %v3719, %v3711
        %v4560 = vpack.c.b16 %v3728, %v3720
        %v4561 = vpack.c.b16 %v3729, %v3721
        %v4562 = vpack.c.b16 %v3730, %v3722
        %v4563 = vpack.c.b16 %v3731, %v3723
        %v4564 = vpack.c.b16 %v3732, %v3724
        %v4565 = vpack.c.b16 %v3733, %v3725
        %v4566 = vpack.c.b16 %v3734, %v3726
        %v4567 = vpack.c.b16 %v3735, %v3727
        %v4568 = vpack.c.b16 %v3744, %v3736
        %v4569 = vpack.c.b16 %v3745, %v3737
        %v4570 = vpack.c.b16 %v3746, %v3738
        %v4571 = vpack.c.b16 %v3747, %v3739
        %v4572 = vpack.c.b16 %v3748, %v3740
        %v4573 = vpack.c.b16 %v3749, %v3741
        %v4574 = vpack.c.b16 %v3750, %v3742
        %v4575 = vpack.c.b16 %v3751, %v3743
        %v4576 = vpack.c.b16 %v3760, %v3752
        %v4577 = vpack.c.b16 %v3761, %v3753
        %v4578 = vpack.c.b16 %v3762, %v3754
        %v4579 = vpack.c.b16 %v3763, %v3755
        %v4580 = vpack.c.b16 %v3764, %v3756
        %v4581 = vpack.c.b16 %v3765, %v3757
        %v4582 = vpack.c.b16 %v3766, %v3758
        %v4583 = vpack.c.b16 %v3767, %v3759
        %v4584 = vpack.c.b16 %v3776, %v3768
        %v4585 = vpack.c.b16 %v3777, %v3769
        %v4586 = vpack.c.b16 %v3778, %v3770
        %v4587 = vpack.c.b16 %v3779, %v3771
        %v4588 = vpack.c.b16 %v3780, %v3772
        %v4589 = vpack.c.b16 %v3781, %v3773
        %v4590 = vpack.c.b16 %v3782, %v3774
        %v4591 = vpack.c.b16 %v3783, %v3775
        %v4592 = vpack.c.b16 %v3792, %v3784
        %v4593 = vpack.c.b16 %v3793, %v3785
        %v4594 = vpack.c.b16 %v3794, %v3786
        %v4595 = vpack.c.b16 %v3795, %v3787
        %v4596 = vpack.c.b16 %v3796, %v3788
        %v4597 = vpack.c.b16 %v3797, %v3789
        %v4598 = vpack.c.b16 %v3798, %v3790
        %v4599 = vpack.c.b16 %v3799, %v3791
        %v4600 = vpack.c.b16 %v3808, %v3800
        %v4601 = vpack.c.b16 %v3809, %v3801
        %v4602 = vpack.c.b16 %v3810, %v3802
        %v4603 = vpack.c.b16 %v3811, %v3803
        %v4604 = vpack.c.b16 %v3812, %v3804
        %v4605 = vpack.c.b16 %v3813, %v3805
        %v4606 = vpack.c.b16 %v3814, %v3806
        %v4607 = vpack.c.b16 %v3815, %v3807
        %v4608 = vpack.c.b16 %v3824, %v3816
        %v4609 = vpack.c.b16 %v3825, %v3817
        %v4610 = vpack.c.b16 %v3826, %v3818
        %v4611 = vpack.c.b16 %v3827, %v3819
        %v4612 = vpack.c.b16 %v3828, %v3820
        %v4613 = vpack.c.b16 %v3829, %v3821
        %v4614 = vpack.c.b16 %v3830, %v3822
        %v4615 = vpack.c.b16 %v3831, %v3823
        %v4616 = vpack.c.b16 %v3840, %v3832
        %v4617 = vpack.c.b16 %v3841, %v3833
        %v4618 = vpack.c.b16 %v3842, %v3834
        %v4619 = vpack.c.b16 %v3843, %v3835
        %v4620 = vpack.c.b16 %v3844, %v3836
        %v4621 = vpack.c.b16 %v3845, %v3837
        %v4622 = vpack.c.b16 %v3846, %v3838
        %v4623 = vpack.c.b16 %v3847, %v3839
        %v4624 = vpack.c.b16 %v3856, %v3848
        %v4625 = vpack.c.b16 %v3857, %v3849
        %v4626 = vpack.c.b16 %v3858, %v3850
        %v4627 = vpack.c.b16 %v3859, %v3851
        %v4628 = vpack.c.b16 %v3860, %v3852
        %v4629 = vpack.c.b16 %v3861, %v3853
        %v4630 = vpack.c.b16 %v3862, %v3854
        %v4631 = vpack.c.b16 %v3863, %v3855
        %v4632 = vpack.c.b16 %v3872, %v3864
        %v4633 = vpack.c.b16 %v3873, %v3865
        %v4634 = vpack.c.b16 %v3874, %v3866
        %v4635 = vpack.c.b16 %v3875, %v3867
        %v4636 = vpack.c.b16 %v3876, %v3868
        %v4637 = vpack.c.b16 %v3877, %v3869
        %v4638 = vpack.c.b16 %v3878, %v3870
        %v4639 = vpack.c.b16 %v3879, %v3871
        %v4640 = vpack.c.b16 %v3888, %v3880
        %v4641 = vpack.c.b16 %v3889, %v3881
        %v4642 = vpack.c.b16 %v3890, %v3882
        %v4643 = vpack.c.b16 %v3891, %v3883
        %v4644 = vpack.c.b16 %v3892, %v3884
        %v4645 = vpack.c.b16 %v3893, %v3885
        %v4646 = vpack.c.b16 %v3894, %v3886
        %v4647 = vpack.c.b16 %v3895, %v3887
        %v4648 = vpack.c.b16 %v3904, %v3896
        %v4649 = vpack.c.b16 %v3905, %v3897
        %v4650 = vpack.c.b16 %v3906, %v3898
        %v4651 = vpack.c.b16 %v3907, %v3899
        %v4652 = vpack.c.b16 %v3908, %v3900
        %v4653 = vpack.c.b16 %v3909, %v3901
        %v4654 = vpack.c.b16 %v3910, %v3902
        %v4655 = vpack.c.b16 %v3911, %v3903
        %v4656 = vpack.c.b16 %v3920, %v3912
        %v4657 = vpack.c.b16 %v3921, %v3913
        %v4658 = vpack.c.b16 %v3922, %v3914
        %v4659 = vpack.c.b16 %v3923, %v3915
        %v4660 = vpack.c.b16 %v3924, %v3916
        %v4661 = vpack.c.b16 %v3925, %v3917
        %v4662 = vpack.c.b16 %v3926, %v3918
        %v4663 = vpack.c.b16 %v3927, %v3919
        %v4664 = vpack.c.b16 %v3936, %v3928
        %v4665 = vpack.c.b16 %v3937, %v3929
        %v4666 = vpack.c.b16 %v3938, %v3930
        %v4667 = vpack.c.b16 %v3939, %v3931
        %v4668 = vpack.c.b16 %v3940, %v3932
        %v4669 = vpack.c.b16 %v3941, %v3933
        %v4670 = vpack.c.b16 %v3942, %v3934
        %v4671 = vpack.c.b16 %v3943, %v3935
        %v4672 = vpack.c.b16 %v3952, %v3944
        %v4673 = vpack.c.b16 %v3953, %v3945
        %v4674 = vpack.c.b16 %v3954, %v3946
        %v4675 = vpack.c.b16 %v3955, %v3947
        %v4676 = vpack.c.b16 %v3956, %v3948
        %v4677 = vpack.c.b16 %v3957, %v3949
        %v4678 = vpack.c.b16 %v3958, %v3950
        %v4679 = vpack.c.b16 %v3959, %v3951
        %v4680 = vpack.c.b16 %v3968, %v3960
        %v4681 = vpack.c.b16 %v3969, %v3961
        %v4682 = vpack.c.b16 %v3970, %v3962
        %v4683 = vpack.c.b16 %v3971, %v3963
        %v4684 = vpack.c.b16 %v3972, %v3964
        %v4685 = vpack.c.b16 %v3973, %v3965
        %v4686 = vpack.c.b16 %v3974, %v3966
        %v4687 = vpack.c.b16 %v3975, %v3967
        %v4688 = vpack.c.b16 %v3984, %v3976
        %v4689 = vpack.c.b16 %v3985, %v3977
        %v4690 = vpack.c.b16 %v3986, %v3978
        %v4691 = vpack.c.b16 %v3987, %v3979
        %v4692 = vpack.c.b16 %v3988, %v3980
        %v4693 = vpack.c.b16 %v3989, %v3981
        %v4694 = vpack.c.b16 %v3990, %v3982
        %v4695 = vpack.c.b16 %v3991, %v3983
        %v4696 = vpack.c.b16 %v4000, %v3992
        %v4697 = vpack.c.b16 %v4001, %v3993
        %v4698 = vpack.c.b16 %v4002, %v3994
        %v4699 = vpack.c.b16 %v4003, %v3995
        %v4700 = vpack.c.b16 %v4004, %v3996
        %v4701 = vpack.c.b16 %v4005, %v3997
        %v4702 = vpack.c.b16 %v4006, %v3998
        %v4703 = vpack.c.b16 %v4007, %v3999
        %v4704 = vpack.c.b16 %v4016, %v4008
        %v4705 = vpack.c.b16 %v4017, %v4009
        %v4706 = vpack.c.b16 %v4018, %v4010
        %v4707 = vpack.c.b16 %v4019, %v4011
        %v4708 = vpack.c.b16 %v4020, %v4012
        %v4709 = vpack.c.b16 %v4021, %v4013
        %v4710 = vpack.c.b16 %v4022, %v4014
        %v4711 = vpack.c.b16 %v4023, %v4015
        %v4712 = vpack.c.b16 %v4032, %v4024
        %v4713 = vpack.c.b16 %v4033, %v4025
        %v4714 = vpack.c.b16 %v4034, %v4026
        %v4715 = vpack.c.b16 %v4035, %v4027
        %v4716 = vpack.c.b16 %v4036, %v4028
        %v4717 = vpack.c.b16 %v4037, %v4029
        %v4718 = vpack.c.b16 %v4038, %v4030
        %v4719 = vpack.c.b16 %v4039, %v4031
        %v4720 = vpack.c.b16 %v4048, %v4040
        %v4721 = vpack.c.b16 %v4049, %v4041
        %v4722 = vpack.c.b16 %v4050, %v4042
        %v4723 = vpack.c.b16 %v4051, %v4043
        %v4724 = vpack.c.b16 %v4052, %v4044
        %v4725 = vpack.c.b16 %v4053, %v4045
        %v4726 = vpack.c.b16 %v4054, %v4046
        %v4727 = vpack.c.b16 %v4055, %v4047
        %v4728 = vpack.c.b16 %v4064, %v4056
        %v4729 = vpack.c.b16 %v4065, %v4057
        %v4730 = vpack.c.b16 %v4066, %v4058
        %v4731 = vpack.c.b16 %v4067, %v4059
        %v4732 = vpack.c.b16 %v4068, %v4060
        %v4733 = vpack.c.b16 %v4069, %v4061
        %v4734 = vpack.c.b16 %v4070, %v4062
        %v4735 = vpack.c.b16 %v4071, %v4063
        %v4736 = vpack.c.b16 %v4080, %v4072
        %v4737 = vpack.c.b16 %v4081, %v4073
        %v4738 = vpack.c.b16 %v4082, %v4074
        %v4739 = vpack.c.b16 %v4083, %v4075
        %v4740 = vpack.c.b16 %v4084, %v4076
        %v4741 = vpack.c.b16 %v4085, %v4077
        %v4742 = vpack.c.b16 %v4086, %v4078
        %v4743 = vpack.c.b16 %v4087, %v4079
        %v4744 = vpack.c.b16 %v4096, %v4088
        %v4745 = vpack.c.b16 %v4097, %v4089
        %v4746 = vpack.c.b16 %v4098, %v4090
        %v4747 = vpack.c.b16 %v4099, %v4091
        %v4748 = vpack.c.b16 %v4100, %v4092
        %v4749 = vpack.c.b16 %v4101, %v4093
        %v4750 = vpack.c.b16 %v4102, %v4094
        %v4751 = vpack.c.b16 %v4103, %v4095
        %v4752 = vpack.c.b16 %v4112, %v4104
        %v4753 = vpack.c.b16 %v4113, %v4105
        %v4754 = vpack.c.b16 %v4114, %v4106
        %v4755 = vpack.c.b16 %v4115, %v4107
        %v4756 = vpack.c.b16 %v4116, %v4108
        %v4757 = vpack.c.b16 %v4117, %v4109
        %v4758 = vpack.c.b16 %v4118, %v4110
        %v4759 = vpack.c.b16 %v4119, %v4111
        %v4760 = vpack.c.b16 %v4128, %v4120
        %v4761 = vpack.c.b16 %v4129, %v4121
        %v4762 = vpack.c.b16 %v4130, %v4122
        %v4763 = vpack.c.b16 %v4131, %v4123
        %v4764 = vpack.c.b16 %v4132, %v4124
        %v4765 = vpack.c.b16 %v4133, %v4125
        %v4766 = vpack.c.b16 %v4134, %v4126
        %v4767 = vpack.c.b16 %v4135, %v4127
        %v4768 = vpack.c.b16 %v4144, %v4136
        %v4769 = vpack.c.b16 %v4145, %v4137
        %v4770 = vpack.c.b16 %v4146, %v4138
        %v4771 = vpack.c.b16 %v4147, %v4139
        %v4772 = vpack.c.b16 %v4148, %v4140
        %v4773 = vpack.c.b16 %v4149, %v4141
        %v4774 = vpack.c.b16 %v4150, %v4142
        %v4775 = vpack.c.b16 %v4151, %v4143
        %v4776 = vpack.c.b16 %v4160, %v4152
        %v4777 = vpack.c.b16 %v4161, %v4153
        %v4778 = vpack.c.b16 %v4162, %v4154
        %v4779 = vpack.c.b16 %v4163, %v4155
        %v4780 = vpack.c.b16 %v4164, %v4156
        %v4781 = vpack.c.b16 %v4165, %v4157
        %v4782 = vpack.c.b16 %v4166, %v4158
        %v4783 = vpack.c.b16 %v4167, %v4159
        %v4784 = vpack.c.b16 %v4176, %v4168
        %v4785 = vpack.c.b16 %v4177, %v4169
        %v4786 = vpack.c.b16 %v4178, %v4170
        %v4787 = vpack.c.b16 %v4179, %v4171
        %v4788 = vpack.c.b16 %v4180, %v4172
        %v4789 = vpack.c.b16 %v4181, %v4173
        %v4790 = vpack.c.b16 %v4182, %v4174
        %v4791 = vpack.c.b16 %v4183, %v4175
        %v4792 = vpack.c.b16 %v4192, %v4184
        %v4793 = vpack.c.b16 %v4193, %v4185
        %v4794 = vpack.c.b16 %v4194, %v4186
        %v4795 = vpack.c.b16 %v4195, %v4187
        %v4796 = vpack.c.b16 %v4196, %v4188
        %v4797 = vpack.c.b16 %v4197, %v4189
        %v4798 = vpack.c.b16 %v4198, %v4190
        %v4799 = vpack.c.b16 %v4199, %v4191
        %v4800 = vpack.c.b16 %v4208, %v4200
        %v4801 = vpack.c.b16 %v4209, %v4201
        %v4802 = vpack.c.b16 %v4210, %v4202
        %v4803 = vpack.c.b16 %v4211, %v4203
        %v4804 = vpack.c.b16 %v4212, %v4204
        %v4805 = vpack.c.b16 %v4213, %v4205
        %v4806 = vpack.c.b16 %v4214, %v4206
        %v4807 = vpack.c.b16 %v4215, %v4207
        %v4808 = vpack.c.b16 %v4224, %v4216
        %v4809 = vpack.c.b16 %v4225, %v4217
        %v4810 = vpack.c.b16 %v4226, %v4218
        %v4811 = vpack.c.b16 %v4227, %v4219
        %v4812 = vpack.c.b16 %v4228, %v4220
        %v4813 = vpack.c.b16 %v4229, %v4221
        %v4814 = vpack.c.b16 %v4230, %v4222
        %v4815 = vpack.c.b16 %v4231, %v4223
        %v4816 = vpack.c.b16 %v4240, %v4232
        %v4817 = vpack.c.b16 %v4241, %v4233
        %v4818 = vpack.c.b16 %v4242, %v4234
        %v4819 = vpack.c.b16 %v4243, %v4235
        %v4820 = vpack.c.b16 %v4244, %v4236
        %v4821 = vpack.c.b16 %v4245, %v4237
        %v4822 = vpack.c.b16 %v4246, %v4238
        %v4823 = vpack.c.b16 %v4247, %v4239
        %v4824 = vpack.c.b16 %v4256, %v4248
        %v4825 = vpack.c.b16 %v4257, %v4249
        %v4826 = vpack.c.b16 %v4258, %v4250
        %v4827 = vpack.c.b16 %v4259, %v4251
        %v4828 = vpack.c.b16 %v4260, %v4252
        %v4829 = vpack.c.b16 %v4261, %v4253
        %v4830 = vpack.c.b16 %v4262, %v4254
        %v4831 = vpack.c.b16 %v4263, %v4255
        %v4832 = vpack.c.b16 %v4272, %v4264
        %v4833 = vpack.c.b16 %v4273, %v4265
        %v4834 = vpack.c.b16 %v4274, %v4266
        %v4835 = vpack.c.b16 %v4275, %v4267
        %v4836 = vpack.c.b16 %v4276, %v4268
        %v4837 = vpack.c.b16 %v4277, %v4269
        %v4838 = vpack.c.b16 %v4278, %v4270
        %v4839 = vpack.c.b16 %v4279, %v4271
        %v4840 = vpack.c.b16 %v4288, %v4280
        %v4841 = vpack.c.b16 %v4289, %v4281
        %v4842 = vpack.c.b16 %v4290, %v4282
        %v4843 = vpack.c.b16 %v4291, %v4283
        %v4844 = vpack.c.b16 %v4292, %v4284
        %v4845 = vpack.c.b16 %v4293, %v4285
        %v4846 = vpack.c.b16 %v4294, %v4286
        %v4847 = vpack.c.b16 %v4295, %v4287
        %v4848 = vpack.c.b16 %v4304, %v4296
        %v4849 = vpack.c.b16 %v4305, %v4297
        %v4850 = vpack.c.b16 %v4306, %v4298
        %v4851 = vpack.c.b16 %v4307, %v4299
        %v4852 = vpack.c.b16 %v4308, %v4300
        %v4853 = vpack.c.b16 %v4309, %v4301
        %v4854 = vpack.c.b16 %v4310, %v4302
        %v4855 = vpack.c.b16 %v4311, %v4303
        %v4856 = vpack.c.b16 %v4320, %v4312
        %v4857 = vpack.c.b16 %v4321, %v4313
        %v4858 = vpack.c.b16 %v4322, %v4314
        %v4859 = vpack.c.b16 %v4323, %v4315
        %v4860 = vpack.c.b16 %v4324, %v4316
        %v4861 = vpack.c.b16 %v4325, %v4317
        %v4862 = vpack.c.b16 %v4326, %v4318
        %v4863 = vpack.c.b16 %v4327, %v4319
        %v4864 = vpack.c.b16 %v4336, %v4328
        %v4865 = vpack.c.b16 %v4337, %v4329
        %v4866 = vpack.c.b16 %v4338, %v4330
        %v4867 = vpack.c.b16 %v4339, %v4331
        %v4868 = vpack.c.b16 %v4340, %v4332
        %v4869 = vpack.c.b16 %v4341, %v4333
        %v4870 = vpack.c.b16 %v4342, %v4334
        %v4871 = vpack.c.b16 %v4343, %v4335
        %v4872 = vpack.c.b16 %v4352, %v4344
        %v4873 = vpack.c.b16 %v4353, %v4345
        %v4874 = vpack.c.b16 %v4354, %v4346
        %v4875 = vpack.c.b16 %v4355, %v4347
        %v4876 = vpack.c.b16 %v4356, %v4348
        %v4877 = vpack.c.b16 %v4357, %v4349
        %v4878 = vpack.c.b16 %v4358, %v4350
        %v4879 = vpack.c.b16 %v4359, %v4351
        %v4880 = vpack.c.b16 %v4368, %v4360
        %v4881 = vpack.c.b16 %v4369, %v4361
        %v4882 = vpack.c.b16 %v4370, %v4362
        %v4883 = vpack.c.b16 %v4371, %v4363
        %v4884 = vpack.c.b16 %v4372, %v4364
        %v4885 = vpack.c.b16 %v4373, %v4365
        %v4886 = vpack.c.b16 %v4374, %v4366
        %v4887 = vpack.c.b16 %v4375, %v4367
        %5400 = vmatprep.subr.bf16.mxu0 %v4433
        %5401 = vmatpush1.bf16.msra.mxu0 %v4432
        %5402 = vmatprep.subr.bf16.mxu0 %v4425
        %5403 = vmatpush1.bf16.msra.mxu0 %v4424
        %5404 = vmatprep.subr.bf16.mxu0 %v4417
        %5405 = vmatpush1.bf16.msra.mxu0 %v4416
        %5406 = vmatprep.subr.bf16.mxu0 %v4409
        %5407 = vmatpush1.bf16.msra.mxu0 %v4408
        %5408 = vmatprep.subr.bf16.mxu0 %v4401
        %5409 = vmatpush1.bf16.msra.mxu0 %v4400
        %5410 = vmatprep.subr.bf16.mxu0 %v4393
        %5411 = vmatpush1.bf16.msra.mxu0 %v4392
        %5412 = vmatprep.subr.bf16.mxu0 %v4385
        %5413 = vmatpush1.bf16.msra.mxu0 %v4384
        %5414 = vmatprep.subr.bf16.mxu0 %v4377
        %5415 = vmatpush1.bf16.msra.mxu0 %v4376
        %5416 = vmatprep.subr.bf16.mxu0 %v4497
        %5417 = vmatpush2.bf16.msra.mxu0 %v4496
        %5418 = vmatprep.subr.bf16.mxu0 %v4489
        %5419 = vmatpush2.bf16.msra.mxu0 %v4488
        %5420 = vmatprep.subr.bf16.mxu0 %v4481
        %5421 = vmatpush2.bf16.msra.mxu0 %v4480
        %5422 = vmatprep.subr.bf16.mxu0 %v4473
        %5423 = vmatpush2.bf16.msra.mxu0 %v4472
        %5424 = vmatprep.subr.bf16.mxu0 %v4465
        %5425 = vmatpush2.bf16.msra.mxu0 %v4464
        %5426 = vmatprep.subr.bf16.mxu0 %v4457
        %5427 = vmatpush2.bf16.msra.mxu0 %v4456
        %5428 = vmatprep.subr.bf16.mxu0 %v4449
        %5429 = vmatpush2.bf16.msra.mxu0 %v4448
        %5430 = vmatprep.subr.bf16.mxu0 %v4441
        %5431 = vmatpush2.bf16.msra.mxu0 %v4440
        %5432 = vmatprep.mubr.bf16.mxu0 %v2279
        %5433 = vmatmul.mubr.bf16.gmra.mxu0 %v2278
        %v5434 = vpop.f32.mrf.mxu0
        %v5435 = vadd.f32 %v2803, %v5434
        %v5436 = vpop.f32.mrf.mxu0
        %v5437 = vadd.f32 %v2807, %v5436
        %v5438 = vpop.f32.mrf.mxu0
        %v5439 = vpop.f32.mrf.mxu0
        %5440 = vdwg.mxu0
        %5441 = vmatprep.subr.bf16.mxu0 %v4561
        %5442 = vmatpush1.bf16.msra.mxu0 %v4560
        %5443 = vmatprep.subr.bf16.mxu0 %v4553
        %5444 = vmatpush1.bf16.msra.mxu0 %v4552
        %5445 = vmatprep.subr.bf16.mxu0 %v4545
        %5446 = vmatpush1.bf16.msra.mxu0 %v4544
        %5447 = vmatprep.subr.bf16.mxu0 %v4537
        %5448 = vmatpush1.bf16.msra.mxu0 %v4536
        %5449 = vmatprep.subr.bf16.mxu0 %v4529
        %5450 = vmatpush1.bf16.msra.mxu0 %v4528
        %5451 = vmatprep.subr.bf16.mxu0 %v4521
        %5452 = vmatpush1.bf16.msra.mxu0 %v4520
        %5453 = vmatprep.subr.bf16.mxu0 %v4513
        %5454 = vmatpush1.bf16.msra.mxu0 %v4512
        %5455 = vmatprep.subr.bf16.mxu0 %v4505
        %5456 = vmatpush1.bf16.msra.mxu0 %v4504
        %5457 = vmatprep.subr.bf16.mxu0 %v4625
        %5458 = vmatpush2.bf16.msra.mxu0 %v4624
        %5459 = vmatprep.subr.bf16.mxu0 %v4617
        %5460 = vmatpush2.bf16.msra.mxu0 %v4616
        %5461 = vmatprep.subr.bf16.mxu0 %v4609
        %5462 = vmatpush2.bf16.msra.mxu0 %v4608
        %5463 = vmatprep.subr.bf16.mxu0 %v4601
        %5464 = vmatpush2.bf16.msra.mxu0 %v4600
        %5465 = vmatprep.subr.bf16.mxu0 %v4593
        %5466 = vmatpush2.bf16.msra.mxu0 %v4592
        %5467 = vmatprep.subr.bf16.mxu0 %v4585
        %5468 = vmatpush2.bf16.msra.mxu0 %v4584
        %5469 = vmatprep.subr.bf16.mxu0 %v4577
        %5470 = vmatpush2.bf16.msra.mxu0 %v4576
        %5471 = vmatprep.subr.bf16.mxu0 %v4569
        %5472 = vmatpush2.bf16.msra.mxu0 %v4568
        %5473 = vmatprep.mubr.bf16.mxu0 %v2281
        %5474 = vmatmul.mubr.bf16.gmra.mxu0 %v2280
        %v5475 = vpop.f32.mrf.mxu0
        %v5476 = vadd.f32 %v5435, %v5475
        %v5477 = vpop.f32.mrf.mxu0
        %v5478 = vadd.f32 %v5437, %v5477
        %v5479 = vpop.f32.mrf.mxu0
        %v5480 = vpop.f32.mrf.mxu0
        %5481 = vdwg.mxu0
        %5482 = vmatprep.subr.bf16.mxu0 %v4689
        %5483 = vmatpush1.bf16.msra.mxu0 %v4688
        %5484 = vmatprep.subr.bf16.mxu0 %v4681
        %5485 = vmatpush1.bf16.msra.mxu0 %v4680
        %5486 = vmatprep.subr.bf16.mxu0 %v4673
        %5487 = vmatpush1.bf16.msra.mxu0 %v4672
        %5488 = vmatprep.subr.bf16.mxu0 %v4665
        %5489 = vmatpush1.bf16.msra.mxu0 %v4664
        %5490 = vmatprep.subr.bf16.mxu0 %v4657
        %5491 = vmatpush1.bf16.msra.mxu0 %v4656
        %5492 = vmatprep.subr.bf16.mxu0 %v4649
        %5493 = vmatpush1.bf16.msra.mxu0 %v4648
        %5494 = vmatprep.subr.bf16.mxu0 %v4641
        %5495 = vmatpush1.bf16.msra.mxu0 %v4640
        %5496 = vmatprep.subr.bf16.mxu0 %v4633
        %5497 = vmatpush1.bf16.msra.mxu0 %v4632
        %5498 = vmatprep.subr.bf16.mxu0 %v4753
        %5499 = vmatpush2.bf16.msra.mxu0 %v4752
        %5500 = vmatprep.subr.bf16.mxu0 %v4745
        %5501 = vmatpush2.bf16.msra.mxu0 %v4744
        %5502 = vmatprep.subr.bf16.mxu0 %v4737
        %5503 = vmatpush2.bf16.msra.mxu0 %v4736
        %5504 = vmatprep.subr.bf16.mxu0 %v4729
        %5505 = vmatpush2.bf16.msra.mxu0 %v4728
        %5506 = vmatprep.subr.bf16.mxu0 %v4721
        %5507 = vmatpush2.bf16.msra.mxu0 %v4720
        %5508 = vmatprep.subr.bf16.mxu0 %v4713
        %5509 = vmatpush2.bf16.msra.mxu0 %v4712
        %5510 = vmatprep.subr.bf16.mxu0 %v4705
        %5511 = vmatpush2.bf16.msra.mxu0 %v4704
        %5512 = vmatprep.subr.bf16.mxu0 %v4697
        %5513 = vmatpush2.bf16.msra.mxu0 %v4696
        %5514 = vmatprep.mubr.bf16.mxu0 %v2283
        %5515 = vmatmul.mubr.bf16.gmra.mxu0 %v2282
        %v5516 = vpop.f32.mrf.mxu0
        %v5517 = vadd.f32 %v5476, %v5516
        %v5518 = vpop.f32.mrf.mxu0
        %v5519 = vadd.f32 %v5478, %v5518
        %v5520 = vpop.f32.mrf.mxu0
        %v5521 = vpop.f32.mrf.mxu0
        %5522 = vdwg.mxu0
        %5523 = vmatprep.subr.bf16.mxu0 %v4817
        %5524 = vmatpush1.bf16.msra.mxu0 %v4816
        %5525 = vmatprep.subr.bf16.mxu0 %v4809
        %5526 = vmatpush1.bf16.msra.mxu0 %v4808
        %5527 = vmatprep.subr.bf16.mxu0 %v4801
        %5528 = vmatpush1.bf16.msra.mxu0 %v4800
        %5529 = vmatprep.subr.bf16.mxu0 %v4793
        %5530 = vmatpush1.bf16.msra.mxu0 %v4792
        %5531 = vmatprep.subr.bf16.mxu0 %v4785
        %5532 = vmatpush1.bf16.msra.mxu0 %v4784
        %5533 = vmatprep.subr.bf16.mxu0 %v4777
        %5534 = vmatpush1.bf16.msra.mxu0 %v4776
        %5535 = vmatprep.subr.bf16.mxu0 %v4769
        %5536 = vmatpush1.bf16.msra.mxu0 %v4768
        %5537 = vmatprep.subr.bf16.mxu0 %v4761
        %5538 = vmatpush1.bf16.msra.mxu0 %v4760
        %5539 = vmatprep.subr.bf16.mxu0 %v4881
        %5540 = vmatpush2.bf16.msra.mxu0 %v4880
        %5541 = vmatprep.subr.bf16.mxu0 %v4873
        %5542 = vmatpush2.bf16.msra.mxu0 %v4872
        %5543 = vmatprep.subr.bf16.mxu0 %v4865
        %5544 = vmatpush2.bf16.msra.mxu0 %v4864
        %5545 = vmatprep.subr.bf16.mxu0 %v4857
        %5546 = vmatpush2.bf16.msra.mxu0 %v4856
        %5547 = vmatprep.subr.bf16.mxu0 %v4849
        %5548 = vmatpush2.bf16.msra.mxu0 %v4848
        %5549 = vmatprep.subr.bf16.mxu0 %v4841
        %5550 = vmatpush2.bf16.msra.mxu0 %v4840
        %5551 = vmatprep.subr.bf16.mxu0 %v4833
        %5552 = vmatpush2.bf16.msra.mxu0 %v4832
        %5553 = vmatprep.subr.bf16.mxu0 %v4825
        %5554 = vmatpush2.bf16.msra.mxu0 %v4824
        %5555 = vmatprep.mubr.bf16.mxu0 %v2285
        %5556 = vmatmul.mubr.bf16.gmra.mxu0 %v2284
        %v5557 = vpop.f32.mrf.mxu0
        %v5558 = vadd.f32 %v5517, %v5557
        %v5559 = vpop.f32.mrf.mxu0
        %v5560 = vadd.f32 %v5519, %v5559
        %v5561 = vpop.f32.mrf.mxu0
        %v5562 = vpop.f32.mrf.mxu0
        %5563 = vdwg.mxu0
        %5564 = vmatprep.subr.bf16.mxu0 %v4435
        %5565 = vmatpush1.bf16.msra.mxu0 %v4434
        %5566 = vmatprep.subr.bf16.mxu0 %v4427
        %5567 = vmatpush1.bf16.msra.mxu0 %v4426
        %5568 = vmatprep.subr.bf16.mxu0 %v4419
        %5569 = vmatpush1.bf16.msra.mxu0 %v4418
        %5570 = vmatprep.subr.bf16.mxu0 %v4411
        %5571 = vmatpush1.bf16.msra.mxu0 %v4410
        %5572 = vmatprep.subr.bf16.mxu0 %v4403
        %5573 = vmatpush1.bf16.msra.mxu0 %v4402
        %5574 = vmatprep.subr.bf16.mxu0 %v4395
        %5575 = vmatpush1.bf16.msra.mxu0 %v4394
        %5576 = vmatprep.subr.bf16.mxu0 %v4387
        %5577 = vmatpush1.bf16.msra.mxu0 %v4386
        %5578 = vmatprep.subr.bf16.mxu0 %v4379
        %5579 = vmatpush1.bf16.msra.mxu0 %v4378
        %5580 = vmatprep.subr.bf16.mxu0 %v4499
        %5581 = vmatpush2.bf16.msra.mxu0 %v4498
        %5582 = vmatprep.subr.bf16.mxu0 %v4491
        %5583 = vmatpush2.bf16.msra.mxu0 %v4490
        %5584 = vmatprep.subr.bf16.mxu0 %v4483
        %5585 = vmatpush2.bf16.msra.mxu0 %v4482
        %5586 = vmatprep.subr.bf16.mxu0 %v4475
        %5587 = vmatpush2.bf16.msra.mxu0 %v4474
        %5588 = vmatprep.subr.bf16.mxu0 %v4467
        %5589 = vmatpush2.bf16.msra.mxu0 %v4466
        %5590 = vmatprep.subr.bf16.mxu0 %v4459
        %5591 = vmatpush2.bf16.msra.mxu0 %v4458
        %5592 = vmatprep.subr.bf16.mxu0 %v4451
        %5593 = vmatpush2.bf16.msra.mxu0 %v4450
        %5594 = vmatprep.subr.bf16.mxu0 %v4443
        %5595 = vmatpush2.bf16.msra.mxu0 %v4442
        %5596 = vmatprep.mubr.bf16.mxu0 %v2279
        %5597 = vmatmul.mubr.bf16.gmra.mxu0 %v2278
        %v5598 = vpop.f32.mrf.mxu0
        %v5599 = vadd.f32 %v2811, %v5598
        %v5600 = vpop.f32.mrf.mxu0
        %v5601 = vadd.f32 %v2815, %v5600
        %v5602 = vpop.f32.mrf.mxu0
        %v5603 = vpop.f32.mrf.mxu0
        %5604 = vdwg.mxu0
        %5605 = vmatprep.subr.bf16.mxu0 %v4563
        %5606 = vmatpush1.bf16.msra.mxu0 %v4562
        %5607 = vmatprep.subr.bf16.mxu0 %v4555
        %5608 = vmatpush1.bf16.msra.mxu0 %v4554
        %5609 = vmatprep.subr.bf16.mxu0 %v4547
        %5610 = vmatpush1.bf16.msra.mxu0 %v4546
        %5611 = vmatprep.subr.bf16.mxu0 %v4539
        %5612 = vmatpush1.bf16.msra.mxu0 %v4538
        %5613 = vmatprep.subr.bf16.mxu0 %v4531
        %5614 = vmatpush1.bf16.msra.mxu0 %v4530
        %5615 = vmatprep.subr.bf16.mxu0 %v4523
        %5616 = vmatpush1.bf16.msra.mxu0 %v4522
        %5617 = vmatprep.subr.bf16.mxu0 %v4515
        %5618 = vmatpush1.bf16.msra.mxu0 %v4514
        %5619 = vmatprep.subr.bf16.mxu0 %v4507
        %5620 = vmatpush1.bf16.msra.mxu0 %v4506
        %5621 = vmatprep.subr.bf16.mxu0 %v4627
        %5622 = vmatpush2.bf16.msra.mxu0 %v4626
        %5623 = vmatprep.subr.bf16.mxu0 %v4619
        %5624 = vmatpush2.bf16.msra.mxu0 %v4618
        %5625 = vmatprep.subr.bf16.mxu0 %v4611
        %5626 = vmatpush2.bf16.msra.mxu0 %v4610
        %5627 = vmatprep.subr.bf16.mxu0 %v4603
        %5628 = vmatpush2.bf16.msra.mxu0 %v4602
        %5629 = vmatprep.subr.bf16.mxu0 %v4595
        %5630 = vmatpush2.bf16.msra.mxu0 %v4594
        %5631 = vmatprep.subr.bf16.mxu0 %v4587
        %5632 = vmatpush2.bf16.msra.mxu0 %v4586
        %5633 = vmatprep.subr.bf16.mxu0 %v4579
        %5634 = vmatpush2.bf16.msra.mxu0 %v4578
        %5635 = vmatprep.subr.bf16.mxu0 %v4571
        %5636 = vmatpush2.bf16.msra.mxu0 %v4570
        %5637 = vmatprep.mubr.bf16.mxu0 %v2281
        %5638 = vmatmul.mubr.bf16.gmra.mxu0 %v2280
        %v5639 = vpop.f32.mrf.mxu0
        %v5640 = vadd.f32 %v5599, %v5639
        %v5641 = vpop.f32.mrf.mxu0
        %v5642 = vadd.f32 %v5601, %v5641
        %v5643 = vpop.f32.mrf.mxu0
        %v5644 = vpop.f32.mrf.mxu0
        %5645 = vdwg.mxu0
        %5646 = vmatprep.subr.bf16.mxu0 %v4691
        %5647 = vmatpush1.bf16.msra.mxu0 %v4690
        %5648 = vmatprep.subr.bf16.mxu0 %v4683
        %5649 = vmatpush1.bf16.msra.mxu0 %v4682
        %5650 = vmatprep.subr.bf16.mxu0 %v4675
        %5651 = vmatpush1.bf16.msra.mxu0 %v4674
        %5652 = vmatprep.subr.bf16.mxu0 %v4667
        %5653 = vmatpush1.bf16.msra.mxu0 %v4666
        %5654 = vmatprep.subr.bf16.mxu0 %v4659
        %5655 = vmatpush1.bf16.msra.mxu0 %v4658
        %5656 = vmatprep.subr.bf16.mxu0 %v4651
        %5657 = vmatpush1.bf16.msra.mxu0 %v4650
        %5658 = vmatprep.subr.bf16.mxu0 %v4643
        %5659 = vmatpush1.bf16.msra.mxu0 %v4642
        %5660 = vmatprep.subr.bf16.mxu0 %v4635
        %5661 = vmatpush1.bf16.msra.mxu0 %v4634
        %5662 = vmatprep.subr.bf16.mxu0 %v4755
        %5663 = vmatpush2.bf16.msra.mxu0 %v4754
        %5664 = vmatprep.subr.bf16.mxu0 %v4747
        %5665 = vmatpush2.bf16.msra.mxu0 %v4746
        %5666 = vmatprep.subr.bf16.mxu0 %v4739
        %5667 = vmatpush2.bf16.msra.mxu0 %v4738
        %5668 = vmatprep.subr.bf16.mxu0 %v4731
        %5669 = vmatpush2.bf16.msra.mxu0 %v4730
        %5670 = vmatprep.subr.bf16.mxu0 %v4723
        %5671 = vmatpush2.bf16.msra.mxu0 %v4722
        %5672 = vmatprep.subr.bf16.mxu0 %v4715
        %5673 = vmatpush2.bf16.msra.mxu0 %v4714
        %5674 = vmatprep.subr.bf16.mxu0 %v4707
        %5675 = vmatpush2.bf16.msra.mxu0 %v4706
        %5676 = vmatprep.subr.bf16.mxu0 %v4699
        %5677 = vmatpush2.bf16.msra.mxu0 %v4698
        %5678 = vmatprep.mubr.bf16.mxu0 %v2283
        %5679 = vmatmul.mubr.bf16.gmra.mxu0 %v2282
        %v5680 = vpop.f32.mrf.mxu0
        %v5681 = vadd.f32 %v5640, %v5680
        %v5682 = vpop.f32.mrf.mxu0
        %v5683 = vadd.f32 %v5642, %v5682
        %v5684 = vpop.f32.mrf.mxu0
        %v5685 = vpop.f32.mrf.mxu0
        %5686 = vdwg.mxu0
        %5687 = vmatprep.subr.bf16.mxu0 %v4819
        %5688 = vmatpush1.bf16.msra.mxu0 %v4818
        %5689 = vmatprep.subr.bf16.mxu0 %v4811
        %5690 = vmatpush1.bf16.msra.mxu0 %v4810
        %5691 = vmatprep.subr.bf16.mxu0 %v4803
        %5692 = vmatpush1.bf16.msra.mxu0 %v4802
        %5693 = vmatprep.subr.bf16.mxu0 %v4795
        %5694 = vmatpush1.bf16.msra.mxu0 %v4794
        %5695 = vmatprep.subr.bf16.mxu0 %v4787
        %5696 = vmatpush1.bf16.msra.mxu0 %v4786
        %5697 = vmatprep.subr.bf16.mxu0 %v4779
        %5698 = vmatpush1.bf16.msra.mxu0 %v4778
        %5699 = vmatprep.subr.bf16.mxu0 %v4771
        %5700 = vmatpush1.bf16.msra.mxu0 %v4770
        %5701 = vmatprep.subr.bf16.mxu0 %v4763
        %5702 = vmatpush1.bf16.msra.mxu0 %v4762
        %5703 = vmatprep.subr.bf16.mxu0 %v4883
        %5704 = vmatpush2.bf16.msra.mxu0 %v4882
        %5705 = vmatprep.subr.bf16.mxu0 %v4875
        %5706 = vmatpush2.bf16.msra.mxu0 %v4874
        %5707 = vmatprep.subr.bf16.mxu0 %v4867
        %5708 = vmatpush2.bf16.msra.mxu0 %v4866
        %5709 = vmatprep.subr.bf16.mxu0 %v4859
        %5710 = vmatpush2.bf16.msra.mxu0 %v4858
        %5711 = vmatprep.subr.bf16.mxu0 %v4851
        %5712 = vmatpush2.bf16.msra.mxu0 %v4850
        %5713 = vmatprep.subr.bf16.mxu0 %v4843
        %5714 = vmatpush2.bf16.msra.mxu0 %v4842
        %5715 = vmatprep.subr.bf16.mxu0 %v4835
        %5716 = vmatpush2.bf16.msra.mxu0 %v4834
        %5717 = vmatprep.subr.bf16.mxu0 %v4827
        %5718 = vmatpush2.bf16.msra.mxu0 %v4826
        %5719 = vmatprep.mubr.bf16.mxu0 %v2285
        %5720 = vmatmul.mubr.bf16.gmra.mxu0 %v2284
        %v5721 = vpop.f32.mrf.mxu0
        %v5722 = vadd.f32 %v5681, %v5721
        %v5723 = vpop.f32.mrf.mxu0
        %v5724 = vadd.f32 %v5683, %v5723
        %v5725 = vpop.f32.mrf.mxu0
        %v5726 = vpop.f32.mrf.mxu0
        %5727 = vdwg.mxu0
        %5728 = vmatprep.subr.bf16.mxu0 %v4437
        %5729 = vmatpush1.bf16.msra.mxu0 %v4436
        %5730 = vmatprep.subr.bf16.mxu0 %v4429
        %5731 = vmatpush1.bf16.msra.mxu0 %v4428
        %5732 = vmatprep.subr.bf16.mxu0 %v4421
        %5733 = vmatpush1.bf16.msra.mxu0 %v4420
        %5734 = vmatprep.subr.bf16.mxu0 %v4413
        %5735 = vmatpush1.bf16.msra.mxu0 %v4412
        %5736 = vmatprep.subr.bf16.mxu0 %v4405
        %5737 = vmatpush1.bf16.msra.mxu0 %v4404
        %5738 = vmatprep.subr.bf16.mxu0 %v4397
        %5739 = vmatpush1.bf16.msra.mxu0 %v4396
        %5740 = vmatprep.subr.bf16.mxu0 %v4389
        %5741 = vmatpush1.bf16.msra.mxu0 %v4388
        %5742 = vmatprep.subr.bf16.mxu0 %v4381
        %5743 = vmatpush1.bf16.msra.mxu0 %v4380
        %5744 = vmatprep.subr.bf16.mxu0 %v4501
        %5745 = vmatpush2.bf16.msra.mxu0 %v4500
        %5746 = vmatprep.subr.bf16.mxu0 %v4493
        %5747 = vmatpush2.bf16.msra.mxu0 %v4492
        %5748 = vmatprep.subr.bf16.mxu0 %v4485
        %5749 = vmatpush2.bf16.msra.mxu0 %v4484
        %5750 = vmatprep.subr.bf16.mxu0 %v4477
        %5751 = vmatpush2.bf16.msra.mxu0 %v4476
        %5752 = vmatprep.subr.bf16.mxu0 %v4469
        %5753 = vmatpush2.bf16.msra.mxu0 %v4468
        %5754 = vmatprep.subr.bf16.mxu0 %v4461
        %5755 = vmatpush2.bf16.msra.mxu0 %v4460
        %5756 = vmatprep.subr.bf16.mxu0 %v4453
        %5757 = vmatpush2.bf16.msra.mxu0 %v4452
        %5758 = vmatprep.subr.bf16.mxu0 %v4445
        %5759 = vmatpush2.bf16.msra.mxu0 %v4444
        %5760 = vmatprep.mubr.bf16.mxu0 %v2279
        %5761 = vmatmul.mubr.bf16.gmra.mxu0 %v2278
        %v5762 = vpop.f32.mrf.mxu0
        %v5763 = vadd.f32 %v2819, %v5762
        %v5764 = vpop.f32.mrf.mxu0
        %v5765 = vadd.f32 %v2823, %v5764
        %v5766 = vpop.f32.mrf.mxu0
        %v5767 = vpop.f32.mrf.mxu0
        %5768 = vdwg.mxu0
        %5769 = vmatprep.subr.bf16.mxu0 %v4565
        %5770 = vmatpush1.bf16.msra.mxu0 %v4564
        %5771 = vmatprep.subr.bf16.mxu0 %v4557
        %5772 = vmatpush1.bf16.msra.mxu0 %v4556
        %5773 = vmatprep.subr.bf16.mxu0 %v4549
        %5774 = vmatpush1.bf16.msra.mxu0 %v4548
        %5775 = vmatprep.subr.bf16.mxu0 %v4541
        %5776 = vmatpush1.bf16.msra.mxu0 %v4540
        %5777 = vmatprep.subr.bf16.mxu0 %v4533
        %5778 = vmatpush1.bf16.msra.mxu0 %v4532
        %5779 = vmatprep.subr.bf16.mxu0 %v4525
        %5780 = vmatpush1.bf16.msra.mxu0 %v4524
        %5781 = vmatprep.subr.bf16.mxu0 %v4517
        %5782 = vmatpush1.bf16.msra.mxu0 %v4516
        %5783 = vmatprep.subr.bf16.mxu0 %v4509
        %5784 = vmatpush1.bf16.msra.mxu0 %v4508
        %5785 = vmatprep.subr.bf16.mxu0 %v4629
        %5786 = vmatpush2.bf16.msra.mxu0 %v4628
        %5787 = vmatprep.subr.bf16.mxu0 %v4621
        %5788 = vmatpush2.bf16.msra.mxu0 %v4620
        %5789 = vmatprep.subr.bf16.mxu0 %v4613
        %5790 = vmatpush2.bf16.msra.mxu0 %v4612
        %5791 = vmatprep.subr.bf16.mxu0 %v4605
        %5792 = vmatpush2.bf16.msra.mxu0 %v4604
        %5793 = vmatprep.subr.bf16.mxu0 %v4597
        %5794 = vmatpush2.bf16.msra.mxu0 %v4596
        %5795 = vmatprep.subr.bf16.mxu0 %v4589
        %5796 = vmatpush2.bf16.msra.mxu0 %v4588
        %5797 = vmatprep.subr.bf16.mxu0 %v4581
        %5798 = vmatpush2.bf16.msra.mxu0 %v4580
        %5799 = vmatprep.subr.bf16.mxu0 %v4573
        %5800 = vmatpush2.bf16.msra.mxu0 %v4572
        %5801 = vmatprep.mubr.bf16.mxu0 %v2281
        %5802 = vmatmul.mubr.bf16.gmra.mxu0 %v2280
        %v5803 = vpop.f32.mrf.mxu0
        %v5804 = vadd.f32 %v5763, %v5803
        %v5805 = vpop.f32.mrf.mxu0
        %v5806 = vadd.f32 %v5765, %v5805
        %v5807 = vpop.f32.mrf.mxu0
        %v5808 = vpop.f32.mrf.mxu0
        %5809 = vdwg.mxu0
        %5810 = vmatprep.subr.bf16.mxu0 %v4693
        %5811 = vmatpush1.bf16.msra.mxu0 %v4692
        %5812 = vmatprep.subr.bf16.mxu0 %v4685
        %5813 = vmatpush1.bf16.msra.mxu0 %v4684
        %5814 = vmatprep.subr.bf16.mxu0 %v4677
        %5815 = vmatpush1.bf16.msra.mxu0 %v4676
        %5816 = vmatprep.subr.bf16.mxu0 %v4669
        %5817 = vmatpush1.bf16.msra.mxu0 %v4668
        %5818 = vmatprep.subr.bf16.mxu0 %v4661
        %5819 = vmatpush1.bf16.msra.mxu0 %v4660
        %5820 = vmatprep.subr.bf16.mxu0 %v4653
        %5821 = vmatpush1.bf16.msra.mxu0 %v4652
        %5822 = vmatprep.subr.bf16.mxu0 %v4645
        %5823 = vmatpush1.bf16.msra.mxu0 %v4644
        %5824 = vmatprep.subr.bf16.mxu0 %v4637
        %5825 = vmatpush1.bf16.msra.mxu0 %v4636
        %5826 = vmatprep.subr.bf16.mxu0 %v4757
        %5827 = vmatpush2.bf16.msra.mxu0 %v4756
        %5828 = vmatprep.subr.bf16.mxu0 %v4749
        %5829 = vmatpush2.bf16.msra.mxu0 %v4748
        %5830 = vmatprep.subr.bf16.mxu0 %v4741
        %5831 = vmatpush2.bf16.msra.mxu0 %v4740
        %5832 = vmatprep.subr.bf16.mxu0 %v4733
        %5833 = vmatpush2.bf16.msra.mxu0 %v4732
        %5834 = vmatprep.subr.bf16.mxu0 %v4725
        %5835 = vmatpush2.bf16.msra.mxu0 %v4724
        %5836 = vmatprep.subr.bf16.mxu0 %v4717
        %5837 = vmatpush2.bf16.msra.mxu0 %v4716
        %5838 = vmatprep.subr.bf16.mxu0 %v4709
        %5839 = vmatpush2.bf16.msra.mxu0 %v4708
        %5840 = vmatprep.subr.bf16.mxu0 %v4701
        %5841 = vmatpush2.bf16.msra.mxu0 %v4700
        %5842 = vmatprep.mubr.bf16.mxu0 %v2283
        %5843 = vmatmul.mubr.bf16.gmra.mxu0 %v2282
        %v5844 = vpop.f32.mrf.mxu0
        %v5845 = vadd.f32 %v5804, %v5844
        %v5846 = vpop.f32.mrf.mxu0
        %v5847 = vadd.f32 %v5806, %v5846
        %v5848 = vpop.f32.mrf.mxu0
        %v5849 = vpop.f32.mrf.mxu0
        %5850 = vdwg.mxu0
        %5851 = vmatprep.subr.bf16.mxu0 %v4821
        %5852 = vmatpush1.bf16.msra.mxu0 %v4820
        %5853 = vmatprep.subr.bf16.mxu0 %v4813
        %5854 = vmatpush1.bf16.msra.mxu0 %v4812
        %5855 = vmatprep.subr.bf16.mxu0 %v4805
        %5856 = vmatpush1.bf16.msra.mxu0 %v4804
        %5857 = vmatprep.subr.bf16.mxu0 %v4797
        %5858 = vmatpush1.bf16.msra.mxu0 %v4796
        %5859 = vmatprep.subr.bf16.mxu0 %v4789
        %5860 = vmatpush1.bf16.msra.mxu0 %v4788
        %5861 = vmatprep.subr.bf16.mxu0 %v4781
        %5862 = vmatpush1.bf16.msra.mxu0 %v4780
        %5863 = vmatprep.subr.bf16.mxu0 %v4773
        %5864 = vmatpush1.bf16.msra.mxu0 %v4772
        %5865 = vmatprep.subr.bf16.mxu0 %v4765
        %5866 = vmatpush1.bf16.msra.mxu0 %v4764
        %5867 = vmatprep.subr.bf16.mxu0 %v4885
        %5868 = vmatpush2.bf16.msra.mxu0 %v4884
        %5869 = vmatprep.subr.bf16.mxu0 %v4877
        %5870 = vmatpush2.bf16.msra.mxu0 %v4876
        %5871 = vmatprep.subr.bf16.mxu0 %v4869
        %5872 = vmatpush2.bf16.msra.mxu0 %v4868
        %5873 = vmatprep.subr.bf16.mxu0 %v4861
        %5874 = vmatpush2.bf16.msra.mxu0 %v4860
        %5875 = vmatprep.subr.bf16.mxu0 %v4853
        %5876 = vmatpush2.bf16.msra.mxu0 %v4852
        %5877 = vmatprep.subr.bf16.mxu0 %v4845
        %5878 = vmatpush2.bf16.msra.mxu0 %v4844
        %5879 = vmatprep.subr.bf16.mxu0 %v4837
        %5880 = vmatpush2.bf16.msra.mxu0 %v4836
        %5881 = vmatprep.subr.bf16.mxu0 %v4829
        %5882 = vmatpush2.bf16.msra.mxu0 %v4828
        %5883 = vmatprep.mubr.bf16.mxu0 %v2285
        %5884 = vmatmul.mubr.bf16.gmra.mxu0 %v2284
        %v5885 = vpop.f32.mrf.mxu0
        %v5886 = vadd.f32 %v5845, %v5885
        %v5887 = vpop.f32.mrf.mxu0
        %v5888 = vadd.f32 %v5847, %v5887
        %v5889 = vpop.f32.mrf.mxu0
        %v5890 = vpop.f32.mrf.mxu0
        %5891 = vdwg.mxu0
        %5892 = vmatprep.subr.bf16.mxu0 %v4439
        %5893 = vmatpush1.bf16.msra.mxu0 %v4438
        %5894 = vmatprep.subr.bf16.mxu0 %v4431
        %5895 = vmatpush1.bf16.msra.mxu0 %v4430
        %5896 = vmatprep.subr.bf16.mxu0 %v4423
        %5897 = vmatpush1.bf16.msra.mxu0 %v4422
        %5898 = vmatprep.subr.bf16.mxu0 %v4415
        %5899 = vmatpush1.bf16.msra.mxu0 %v4414
        %5900 = vmatprep.subr.bf16.mxu0 %v4407
        %5901 = vmatpush1.bf16.msra.mxu0 %v4406
        %5902 = vmatprep.subr.bf16.mxu0 %v4399
        %5903 = vmatpush1.bf16.msra.mxu0 %v4398
        %5904 = vmatprep.subr.bf16.mxu0 %v4391
        %5905 = vmatpush1.bf16.msra.mxu0 %v4390
        %5906 = vmatprep.subr.bf16.mxu0 %v4383
        %5907 = vmatpush1.bf16.msra.mxu0 %v4382
        %5908 = vmatprep.subr.bf16.mxu0 %v4503
        %5909 = vmatpush2.bf16.msra.mxu0 %v4502
        %5910 = vmatprep.subr.bf16.mxu0 %v4495
        %5911 = vmatpush2.bf16.msra.mxu0 %v4494
        %5912 = vmatprep.subr.bf16.mxu0 %v4487
        %5913 = vmatpush2.bf16.msra.mxu0 %v4486
        %5914 = vmatprep.subr.bf16.mxu0 %v4479
        %5915 = vmatpush2.bf16.msra.mxu0 %v4478
        %5916 = vmatprep.subr.bf16.mxu0 %v4471
        %5917 = vmatpush2.bf16.msra.mxu0 %v4470
        %5918 = vmatprep.subr.bf16.mxu0 %v4463
        %5919 = vmatpush2.bf16.msra.mxu0 %v4462
        %5920 = vmatprep.subr.bf16.mxu0 %v4455
        %5921 = vmatpush2.bf16.msra.mxu0 %v4454
        %5922 = vmatprep.subr.bf16.mxu0 %v4447
        %5923 = vmatpush2.bf16.msra.mxu0 %v4446
        %5924 = vmatprep.mubr.bf16.mxu0 %v2279
        %5925 = vmatmul.mubr.bf16.gmra.mxu0 %v2278
        %v5926 = vpop.f32.mrf.mxu0
        %v5927 = vadd.f32 %v2827, %v5926
        %v5928 = vpop.f32.mrf.mxu0
        %v5929 = vadd.f32 %v2831, %v5928
        %v5930 = vpop.f32.mrf.mxu0
        %v5931 = vpop.f32.mrf.mxu0
        %5932 = vdwg.mxu0
        %5933 = vmatprep.subr.bf16.mxu0 %v4567
        %5934 = vmatpush1.bf16.msra.mxu0 %v4566
        %5935 = vmatprep.subr.bf16.mxu0 %v4559
        %5936 = vmatpush1.bf16.msra.mxu0 %v4558
        %5937 = vmatprep.subr.bf16.mxu0 %v4551
        %5938 = vmatpush1.bf16.msra.mxu0 %v4550
        %5939 = vmatprep.subr.bf16.mxu0 %v4543
        %5940 = vmatpush1.bf16.msra.mxu0 %v4542
        %5941 = vmatprep.subr.bf16.mxu0 %v4535
        %5942 = vmatpush1.bf16.msra.mxu0 %v4534
        %5943 = vmatprep.subr.bf16.mxu0 %v4527
        %5944 = vmatpush1.bf16.msra.mxu0 %v4526
        %5945 = vmatprep.subr.bf16.mxu0 %v4519
        %5946 = vmatpush1.bf16.msra.mxu0 %v4518
        %5947 = vmatprep.subr.bf16.mxu0 %v4511
        %5948 = vmatpush1.bf16.msra.mxu0 %v4510
        %5949 = vmatprep.subr.bf16.mxu0 %v4631
        %5950 = vmatpush2.bf16.msra.mxu0 %v4630
        %5951 = vmatprep.subr.bf16.mxu0 %v4623
        %5952 = vmatpush2.bf16.msra.mxu0 %v4622
        %5953 = vmatprep.subr.bf16.mxu0 %v4615
        %5954 = vmatpush2.bf16.msra.mxu0 %v4614
        %5955 = vmatprep.subr.bf16.mxu0 %v4607
        %5956 = vmatpush2.bf16.msra.mxu0 %v4606
        %5957 = vmatprep.subr.bf16.mxu0 %v4599
        %5958 = vmatpush2.bf16.msra.mxu0 %v4598
        %5959 = vmatprep.subr.bf16.mxu0 %v4591
        %5960 = vmatpush2.bf16.msra.mxu0 %v4590
        %5961 = vmatprep.subr.bf16.mxu0 %v4583
        %5962 = vmatpush2.bf16.msra.mxu0 %v4582
        %5963 = vmatprep.subr.bf16.mxu0 %v4575
        %5964 = vmatpush2.bf16.msra.mxu0 %v4574
        %5965 = vmatprep.mubr.bf16.mxu0 %v2281
        %5966 = vmatmul.mubr.bf16.gmra.mxu0 %v2280
        %v5967 = vpop.f32.mrf.mxu0
        %v5968 = vadd.f32 %v5927, %v5967
        %v5969 = vpop.f32.mrf.mxu0
        %v5970 = vadd.f32 %v5929, %v5969
        %v5971 = vpop.f32.mrf.mxu0
        %v5972 = vpop.f32.mrf.mxu0
        %5973 = vdwg.mxu0
        %5974 = vmatprep.subr.bf16.mxu0 %v4695
        %5975 = vmatpush1.bf16.msra.mxu0 %v4694
        %5976 = vmatprep.subr.bf16.mxu0 %v4687
        %5977 = vmatpush1.bf16.msra.mxu0 %v4686
        %5978 = vmatprep.subr.bf16.mxu0 %v4679
        %5979 = vmatpush1.bf16.msra.mxu0 %v4678
        %5980 = vmatprep.subr.bf16.mxu0 %v4671
        %5981 = vmatpush1.bf16.msra.mxu0 %v4670
        %5982 = vmatprep.subr.bf16.mxu0 %v4663
        %5983 = vmatpush1.bf16.msra.mxu0 %v4662
        %5984 = vmatprep.subr.bf16.mxu0 %v4655
        %5985 = vmatpush1.bf16.msra.mxu0 %v4654
        %5986 = vmatprep.subr.bf16.mxu0 %v4647
        %5987 = vmatpush1.bf16.msra.mxu0 %v4646
        %5988 = vmatprep.subr.bf16.mxu0 %v4639
        %5989 = vmatpush1.bf16.msra.mxu0 %v4638
        %5990 = vmatprep.subr.bf16.mxu0 %v4759
        %5991 = vmatpush2.bf16.msra.mxu0 %v4758
        %5992 = vmatprep.subr.bf16.mxu0 %v4751
        %5993 = vmatpush2.bf16.msra.mxu0 %v4750
        %5994 = vmatprep.subr.bf16.mxu0 %v4743
        %5995 = vmatpush2.bf16.msra.mxu0 %v4742
        %5996 = vmatprep.subr.bf16.mxu0 %v4735
        %5997 = vmatpush2.bf16.msra.mxu0 %v4734
        %5998 = vmatprep.subr.bf16.mxu0 %v4727
        %5999 = vmatpush2.bf16.msra.mxu0 %v4726
        %6000 = vmatprep.subr.bf16.mxu0 %v4719
        %6001 = vmatpush2.bf16.msra.mxu0 %v4718
        %6002 = vmatprep.subr.bf16.mxu0 %v4711
        %6003 = vmatpush2.bf16.msra.mxu0 %v4710
        %6004 = vmatprep.subr.bf16.mxu0 %v4703
        %6005 = vmatpush2.bf16.msra.mxu0 %v4702
        %6006 = vmatprep.mubr.bf16.mxu0 %v2283
        %6007 = vmatmul.mubr.bf16.gmra.mxu0 %v2282
        %v6008 = vpop.f32.mrf.mxu0
        %v6009 = vadd.f32 %v5968, %v6008
        %v6010 = vpop.f32.mrf.mxu0
        %v6011 = vadd.f32 %v5970, %v6010
        %v6012 = vpop.f32.mrf.mxu0
        %v6013 = vpop.f32.mrf.mxu0
        %6014 = vdwg.mxu0
        %6015 = vmatprep.subr.bf16.mxu0 %v4823
        %6016 = vmatpush1.bf16.msra.mxu0 %v4822
        %6017 = vmatprep.subr.bf16.mxu0 %v4815
        %6018 = vmatpush1.bf16.msra.mxu0 %v4814
        %6019 = vmatprep.subr.bf16.mxu0 %v4807
        %6020 = vmatpush1.bf16.msra.mxu0 %v4806
        %6021 = vmatprep.subr.bf16.mxu0 %v4799
        %6022 = vmatpush1.bf16.msra.mxu0 %v4798
        %6023 = vmatprep.subr.bf16.mxu0 %v4791
        %6024 = vmatpush1.bf16.msra.mxu0 %v4790
        %6025 = vmatprep.subr.bf16.mxu0 %v4783
        %6026 = vmatpush1.bf16.msra.mxu0 %v4782
        %6027 = vmatprep.subr.bf16.mxu0 %v4775
        %6028 = vmatpush1.bf16.msra.mxu0 %v4774
        %6029 = vmatprep.subr.bf16.mxu0 %v4767
        %6030 = vmatpush1.bf16.msra.mxu0 %v4766
        %6031 = vmatprep.subr.bf16.mxu0 %v4887
        %6032 = vmatpush2.bf16.msra.mxu0 %v4886
        %6033 = vmatprep.subr.bf16.mxu0 %v4879
        %6034 = vmatpush2.bf16.msra.mxu0 %v4878
        %6035 = vmatprep.subr.bf16.mxu0 %v4871
        %6036 = vmatpush2.bf16.msra.mxu0 %v4870
        %6037 = vmatprep.subr.bf16.mxu0 %v4863
        %6038 = vmatpush2.bf16.msra.mxu0 %v4862
        %6039 = vmatprep.subr.bf16.mxu0 %v4855
        %6040 = vmatpush2.bf16.msra.mxu0 %v4854
        %6041 = vmatprep.subr.bf16.mxu0 %v4847
        %6042 = vmatpush2.bf16.msra.mxu0 %v4846
        %6043 = vmatprep.subr.bf16.mxu0 %v4839
        %6044 = vmatpush2.bf16.msra.mxu0 %v4838
        %6045 = vmatprep.subr.bf16.mxu0 %v4831
        %6046 = vmatpush2.bf16.msra.mxu0 %v4830
        %6047 = vmatprep.mubr.bf16.mxu0 %v2285
        %6048 = vmatmul.mubr.bf16.gmra.mxu0 %v2284
        %v6049 = vpop.f32.mrf.mxu0
        %v6050 = vadd.f32 %v6009, %v6049
        %v6051 = vpop.f32.mrf.mxu0
        %v6052 = vadd.f32 %v6011, %v6051
        %v6053 = vpop.f32.mrf.mxu0
        %v6054 = vpop.f32.mrf.mxu0
        %6055 = vdwg.mxu0
        %v6056 = vmax.f32 %v5558, 0.0
        %v6057 = vmax.f32 %v5560, 0.0
        %v6058 = vmax.f32 %v5722, 0.0
        %v6059 = vmax.f32 %v5724, 0.0
        %v6060 = vmax.f32 %v5886, 0.0
        %v6061 = vmax.f32 %v5888, 0.0
        %v6062 = vmax.f32 %v6050, 0.0
        %v6063 = vmax.f32 %v6052, 0.0
        %v6064 = vpack.c.bf16 %v6056, %v6056
        %v6065 = vpack.c.bf16 %v6057, %v6057
        %v6066 = vpack.c.bf16 %v6058, %v6058
        %v6067 = vpack.c.bf16 %v6059, %v6059
        %v6068 = vpack.c.bf16 %v6060, %v6060
        %v6069 = vpack.c.bf16 %v6061, %v6061
        %v6070 = vpack.c.bf16 %v6062, %v6062
        %v6071 = vpack.c.bf16 %v6063, %v6063
        %v6072 = vld [vmem:[%s5] sm:$0xf]
        %v6073 = vld [vmem:[%s5 + $0x4] sm:$0xf]
        %v6074 = vld [vmem:[%s5 + $0x8] sm:$0xf]
        %v6075 = vld [vmem:[%s5 + $0xc] sm:$0xf]
        %v6076 = vld [vmem:[%s5 + $0x10] sm:$0xf]
        %v6077 = vld [vmem:[%s5 + $0x14] sm:$0xf]
        %v6078 = vld [vmem:[%s5 + $0x18] sm:$0xf]
        %v6079 = vld [vmem:[%s5 + $0x1c] sm:$0xf]
        %v6080 = vld [vmem:[%s5 + $0x20] sm:$0xf]
        %v6081 = vld [vmem:[%s5 + $0x24] sm:$0xf]
        %v6082 = vld [vmem:[%s5 + $0x28] sm:$0xf]
        %v6083 = vld [vmem:[%s5 + $0x2c] sm:$0xf]
        %v6084 = vld [vmem:[%s5 + $0x30] sm:$0xf]
        %v6085 = vld [vmem:[%s5 + $0x34] sm:$0xf]
        %v6086 = vld [vmem:[%s5 + $0x38] sm:$0xf]
        %v6087 = vld [vmem:[%s5 + $0x3c] sm:$0xf]
        %v6088 = vld [vmem:[%s5 + $0x40] sm:$0xf]
        %v6089 = vld [vmem:[%s5 + $0x44] sm:$0xf]
        %v6090 = vld [vmem:[%s5 + $0x48] sm:$0xf]
        %v6091 = vld [vmem:[%s5 + $0x4c] sm:$0xf]
        %v6092 = vld [vmem:[%s5 + $0x50] sm:$0xf]
        %v6093 = vld [vmem:[%s5 + $0x54] sm:$0xf]
        %v6094 = vld [vmem:[%s5 + $0x58] sm:$0xf]
        %v6095 = vld [vmem:[%s5 + $0x5c] sm:$0xf]
        %v6096 = vld [vmem:[%s5 + $0x60] sm:$0xf]
        %v6097 = vld [vmem:[%s5 + $0x64] sm:$0xf]
        %v6098 = vld [vmem:[%s5 + $0x68] sm:$0xf]
        %v6099 = vld [vmem:[%s5 + $0x6c] sm:$0xf]
        %v6100 = vld [vmem:[%s5 + $0x70] sm:$0xf]
        %v6101 = vld [vmem:[%s5 + $0x74] sm:$0xf]
        %v6102 = vld [vmem:[%s5 + $0x78] sm:$0xf]
        %v6103 = vld [vmem:[%s5 + $0x7c] sm:$0xf]
        %v6104 = vld [vmem:[%s5 + $0x80] sm:$0xf]
        %v6105 = vld [vmem:[%s5 + $0x84] sm:$0xf]
        %v6106 = vld [vmem:[%s5 + $0x88] sm:$0xf]
        %v6107 = vld [vmem:[%s5 + $0x8c] sm:$0xf]
        %v6108 = vld [vmem:[%s5 + $0x90] sm:$0xf]
        %v6109 = vld [vmem:[%s5 + $0x94] sm:$0xf]
        %v6110 = vld [vmem:[%s5 + $0x98] sm:$0xf]
        %v6111 = vld [vmem:[%s5 + $0x9c] sm:$0xf]
        %v6112 = vld [vmem:[%s5 + $0xa0] sm:$0xf]
        %v6113 = vld [vmem:[%s5 + $0xa4] sm:$0xf]
        %v6114 = vld [vmem:[%s5 + $0xa8] sm:$0xf]
        %v6115 = vld [vmem:[%s5 + $0xac] sm:$0xf]
        %v6116 = vld [vmem:[%s5 + $0xb0] sm:$0xf]
        %v6117 = vld [vmem:[%s5 + $0xb4] sm:$0xf]
        %v6118 = vld [vmem:[%s5 + $0xb8] sm:$0xf]
        %v6119 = vld [vmem:[%s5 + $0xbc] sm:$0xf]
        %v6120 = vld [vmem:[%s5 + $0xc0] sm:$0xf]
        %v6121 = vld [vmem:[%s5 + $0xc4] sm:$0xf]
        %v6122 = vld [vmem:[%s5 + $0xc8] sm:$0xf]
        %v6123 = vld [vmem:[%s5 + $0xcc] sm:$0xf]
        %v6124 = vld [vmem:[%s5 + $0xd0] sm:$0xf]
        %v6125 = vld [vmem:[%s5 + $0xd4] sm:$0xf]
        %v6126 = vld [vmem:[%s5 + $0xd8] sm:$0xf]
        %v6127 = vld [vmem:[%s5 + $0xdc] sm:$0xf]
        %v6128 = vld [vmem:[%s5 + $0xe0] sm:$0xf]
        %v6129 = vld [vmem:[%s5 + $0xe4] sm:$0xf]
        %v6130 = vld [vmem:[%s5 + $0xe8] sm:$0xf]
        %v6131 = vld [vmem:[%s5 + $0xec] sm:$0xf]
        %v6132 = vld [vmem:[%s5 + $0xf0] sm:$0xf]
        %v6133 = vld [vmem:[%s5 + $0xf4] sm:$0xf]
        %v6134 = vld [vmem:[%s5 + $0xf8] sm:$0xf]
        %v6135 = vld [vmem:[%s5 + $0xfc] sm:$0xf]
        %v6136 = vld [vmem:[%s5 + $0x100] sm:$0xf]
        %v6137 = vld [vmem:[%s5 + $0x104] sm:$0xf]
        %v6138 = vld [vmem:[%s5 + $0x108] sm:$0xf]
        %v6139 = vld [vmem:[%s5 + $0x10c] sm:$0xf]
        %v6140 = vld [vmem:[%s5 + $0x110] sm:$0xf]
        %v6141 = vld [vmem:[%s5 + $0x114] sm:$0xf]
        %v6142 = vld [vmem:[%s5 + $0x118] sm:$0xf]
        %v6143 = vld [vmem:[%s5 + $0x11c] sm:$0xf]
        %v6144 = vld [vmem:[%s5 + $0x120] sm:$0xf]
        %v6145 = vld [vmem:[%s5 + $0x124] sm:$0xf]
        %v6146 = vld [vmem:[%s5 + $0x128] sm:$0xf]
        %v6147 = vld [vmem:[%s5 + $0x12c] sm:$0xf]
        %v6148 = vld [vmem:[%s5 + $0x130] sm:$0xf]
        %v6149 = vld [vmem:[%s5 + $0x134] sm:$0xf]
        %v6150 = vld [vmem:[%s5 + $0x138] sm:$0xf]
        %v6151 = vld [vmem:[%s5 + $0x13c] sm:$0xf]
        %v6152 = vld [vmem:[%s5 + $0x140] sm:$0xf]
        %v6153 = vld [vmem:[%s5 + $0x144] sm:$0xf]
        %v6154 = vld [vmem:[%s5 + $0x148] sm:$0xf]
        %v6155 = vld [vmem:[%s5 + $0x14c] sm:$0xf]
        %v6156 = vld [vmem:[%s5 + $0x150] sm:$0xf]
        %v6157 = vld [vmem:[%s5 + $0x154] sm:$0xf]
        %v6158 = vld [vmem:[%s5 + $0x158] sm:$0xf]
        %v6159 = vld [vmem:[%s5 + $0x15c] sm:$0xf]
        %v6160 = vld [vmem:[%s5 + $0x160] sm:$0xf]
        %v6161 = vld [vmem:[%s5 + $0x164] sm:$0xf]
        %v6162 = vld [vmem:[%s5 + $0x168] sm:$0xf]
        %v6163 = vld [vmem:[%s5 + $0x16c] sm:$0xf]
        %v6164 = vld [vmem:[%s5 + $0x170] sm:$0xf]
        %v6165 = vld [vmem:[%s5 + $0x174] sm:$0xf]
        %v6166 = vld [vmem:[%s5 + $0x178] sm:$0xf]
        %v6167 = vld [vmem:[%s5 + $0x17c] sm:$0xf]
        %v6168 = vld [vmem:[%s5 + $0x180] sm:$0xf]
        %v6169 = vld [vmem:[%s5 + $0x184] sm:$0xf]
        %v6170 = vld [vmem:[%s5 + $0x188] sm:$0xf]
        %v6171 = vld [vmem:[%s5 + $0x18c] sm:$0xf]
        %v6172 = vld [vmem:[%s5 + $0x190] sm:$0xf]
        %v6173 = vld [vmem:[%s5 + $0x194] sm:$0xf]
        %v6174 = vld [vmem:[%s5 + $0x198] sm:$0xf]
        %v6175 = vld [vmem:[%s5 + $0x19c] sm:$0xf]
        %v6176 = vld [vmem:[%s5 + $0x1a0] sm:$0xf]
        %v6177 = vld [vmem:[%s5 + $0x1a4] sm:$0xf]
        %v6178 = vld [vmem:[%s5 + $0x1a8] sm:$0xf]
        %v6179 = vld [vmem:[%s5 + $0x1ac] sm:$0xf]
        %v6180 = vld [vmem:[%s5 + $0x1b0] sm:$0xf]
        %v6181 = vld [vmem:[%s5 + $0x1b4] sm:$0xf]
        %v6182 = vld [vmem:[%s5 + $0x1b8] sm:$0xf]
        %v6183 = vld [vmem:[%s5 + $0x1bc] sm:$0xf]
        %v6184 = vld [vmem:[%s5 + $0x1c0] sm:$0xf]
        %v6185 = vld [vmem:[%s5 + $0x1c4] sm:$0xf]
        %v6186 = vld [vmem:[%s5 + $0x1c8] sm:$0xf]
        %v6187 = vld [vmem:[%s5 + $0x1cc] sm:$0xf]
        %v6188 = vld [vmem:[%s5 + $0x1d0] sm:$0xf]
        %v6189 = vld [vmem:[%s5 + $0x1d4] sm:$0xf]
        %v6190 = vld [vmem:[%s5 + $0x1d8] sm:$0xf]
        %v6191 = vld [vmem:[%s5 + $0x1dc] sm:$0xf]
        %v6192 = vld [vmem:[%s5 + $0x1e0] sm:$0xf]
        %v6193 = vld [vmem:[%s5 + $0x1e4] sm:$0xf]
        %v6194 = vld [vmem:[%s5 + $0x1e8] sm:$0xf]
        %v6195 = vld [vmem:[%s5 + $0x1ec] sm:$0xf]
        %v6196 = vld [vmem:[%s5 + $0x1f0] sm:$0xf]
        %v6197 = vld [vmem:[%s5 + $0x1f4] sm:$0xf]
        %v6198 = vld [vmem:[%s5 + $0x1f8] sm:$0xf]
        %v6199 = vld [vmem:[%s5 + $0x1fc] sm:$0xf]
        %v6200 = vld [vmem:[%s6] sm:$0x1]
        %v6202 = vlaneseq
        %v6203 = vshrl.u32 %v6202, 7
        %v6204 = vsub.s32 0, %v6203
        %v6205 = vrot.slane %v6200, %v6204
        %v6335 = vunpack.c.l.b16 %v6072
        %v6336 = vunpack.c.l.b16 %v6073
        %v6337 = vunpack.c.l.b16 %v6074
        %v6338 = vunpack.c.l.b16 %v6075
        %v6339 = vunpack.c.l.b16 %v6076
        %v6340 = vunpack.c.l.b16 %v6077
        %v6341 = vunpack.c.l.b16 %v6078
        %v6342 = vunpack.c.l.b16 %v6079
        %v6343 = vunpack.c.l.b16 %v6080
        %v6344 = vunpack.c.l.b16 %v6081
        %v6345 = vunpack.c.l.b16 %v6082
        %v6346 = vunpack.c.l.b16 %v6083
        %v6347 = vunpack.c.l.b16 %v6084
        %v6348 = vunpack.c.l.b16 %v6085
        %v6349 = vunpack.c.l.b16 %v6086
        %v6350 = vunpack.c.l.b16 %v6087
        %v6351 = vunpack.c.l.b16 %v6088
        %v6352 = vunpack.c.l.b16 %v6089
        %v6353 = vunpack.c.l.b16 %v6090
        %v6354 = vunpack.c.l.b16 %v6091
        %v6355 = vunpack.c.l.b16 %v6092
        %v6356 = vunpack.c.l.b16 %v6093
        %v6357 = vunpack.c.l.b16 %v6094
        %v6358 = vunpack.c.l.b16 %v6095
        %v6359 = vunpack.c.l.b16 %v6096
        %v6360 = vunpack.c.l.b16 %v6097
        %v6361 = vunpack.c.l.b16 %v6098
        %v6362 = vunpack.c.l.b16 %v6099
        %v6363 = vunpack.c.l.b16 %v6100
        %v6364 = vunpack.c.l.b16 %v6101
        %v6365 = vunpack.c.l.b16 %v6102
        %v6366 = vunpack.c.l.b16 %v6103
        %v6367 = vunpack.c.l.b16 %v6104
        %v6368 = vunpack.c.l.b16 %v6105
        %v6369 = vunpack.c.l.b16 %v6106
        %v6370 = vunpack.c.l.b16 %v6107
        %v6371 = vunpack.c.l.b16 %v6108
        %v6372 = vunpack.c.l.b16 %v6109
        %v6373 = vunpack.c.l.b16 %v6110
        %v6374 = vunpack.c.l.b16 %v6111
        %v6375 = vunpack.c.l.b16 %v6112
        %v6376 = vunpack.c.l.b16 %v6113
        %v6377 = vunpack.c.l.b16 %v6114
        %v6378 = vunpack.c.l.b16 %v6115
        %v6379 = vunpack.c.l.b16 %v6116
        %v6380 = vunpack.c.l.b16 %v6117
        %v6381 = vunpack.c.l.b16 %v6118
        %v6382 = vunpack.c.l.b16 %v6119
        %v6383 = vunpack.c.l.b16 %v6120
        %v6384 = vunpack.c.l.b16 %v6121
        %v6385 = vunpack.c.l.b16 %v6122
        %v6386 = vunpack.c.l.b16 %v6123
        %v6387 = vunpack.c.l.b16 %v6124
        %v6388 = vunpack.c.l.b16 %v6125
        %v6389 = vunpack.c.l.b16 %v6126
        %v6390 = vunpack.c.l.b16 %v6127
        %v6391 = vunpack.c.l.b16 %v6128
        %v6392 = vunpack.c.l.b16 %v6129
        %v6393 = vunpack.c.l.b16 %v6130
        %v6394 = vunpack.c.l.b16 %v6131
        %v6395 = vunpack.c.l.b16 %v6132
        %v6396 = vunpack.c.l.b16 %v6133
        %v6397 = vunpack.c.l.b16 %v6134
        %v6398 = vunpack.c.l.b16 %v6135
        %v6399 = vunpack.c.l.b16 %v6136
        %v6400 = vunpack.c.l.b16 %v6137
        %v6401 = vunpack.c.l.b16 %v6138
        %v6402 = vunpack.c.l.b16 %v6139
        %v6403 = vunpack.c.l.b16 %v6140
        %v6404 = vunpack.c.l.b16 %v6141
        %v6405 = vunpack.c.l.b16 %v6142
        %v6406 = vunpack.c.l.b16 %v6143
        %v6407 = vunpack.c.l.b16 %v6144
        %v6408 = vunpack.c.l.b16 %v6145
        %v6409 = vunpack.c.l.b16 %v6146
        %v6410 = vunpack.c.l.b16 %v6147
        %v6411 = vunpack.c.l.b16 %v6148
        %v6412 = vunpack.c.l.b16 %v6149
        %v6413 = vunpack.c.l.b16 %v6150
        %v6414 = vunpack.c.l.b16 %v6151
        %v6415 = vunpack.c.l.b16 %v6152
        %v6416 = vunpack.c.l.b16 %v6153
        %v6417 = vunpack.c.l.b16 %v6154
        %v6418 = vunpack.c.l.b16 %v6155
        %v6419 = vunpack.c.l.b16 %v6156
        %v6420 = vunpack.c.l.b16 %v6157
        %v6421 = vunpack.c.l.b16 %v6158
        %v6422 = vunpack.c.l.b16 %v6159
        %v6423 = vunpack.c.l.b16 %v6160
        %v6424 = vunpack.c.l.b16 %v6161
        %v6425 = vunpack.c.l.b16 %v6162
        %v6426 = vunpack.c.l.b16 %v6163
        %v6427 = vunpack.c.l.b16 %v6164
        %v6428 = vunpack.c.l.b16 %v6165
        %v6429 = vunpack.c.l.b16 %v6166
        %v6430 = vunpack.c.l.b16 %v6167
        %v6431 = vunpack.c.l.b16 %v6168
        %v6432 = vunpack.c.l.b16 %v6169
        %v6433 = vunpack.c.l.b16 %v6170
        %v6434 = vunpack.c.l.b16 %v6171
        %v6435 = vunpack.c.l.b16 %v6172
        %v6436 = vunpack.c.l.b16 %v6173
        %v6437 = vunpack.c.l.b16 %v6174
        %v6438 = vunpack.c.l.b16 %v6175
        %v6439 = vunpack.c.l.b16 %v6176
        %v6440 = vunpack.c.l.b16 %v6177
        %v6441 = vunpack.c.l.b16 %v6178
        %v6442 = vunpack.c.l.b16 %v6179
        %v6443 = vunpack.c.l.b16 %v6180
        %v6444 = vunpack.c.l.b16 %v6181
        %v6445 = vunpack.c.l.b16 %v6182
        %v6446 = vunpack.c.l.b16 %v6183
        %v6447 = vunpack.c.l.b16 %v6184
        %v6448 = vunpack.c.l.b16 %v6185
        %v6449 = vunpack.c.l.b16 %v6186
        %v6450 = vunpack.c.l.b16 %v6187
        %v6451 = vunpack.c.l.b16 %v6188
        %v6452 = vunpack.c.l.b16 %v6189
        %v6453 = vunpack.c.l.b16 %v6190
        %v6454 = vunpack.c.l.b16 %v6191
        %v6455 = vunpack.c.l.b16 %v6192
        %v6456 = vunpack.c.l.b16 %v6193
        %v6457 = vunpack.c.l.b16 %v6194
        %v6458 = vunpack.c.l.b16 %v6195
        %v6459 = vunpack.c.l.b16 %v6196
        %v6460 = vunpack.c.l.b16 %v6197
        %v6461 = vunpack.c.l.b16 %v6198
        %v6462 = vunpack.c.l.b16 %v6199
        %v6463 = vpack.c.b16 %v6336, %v6335
        %v6464 = vpack.c.b16 %v6338, %v6337
        %v6465 = vpack.c.b16 %v6340, %v6339
        %v6466 = vpack.c.b16 %v6342, %v6341
        %v6467 = vpack.c.b16 %v6344, %v6343
        %v6468 = vpack.c.b16 %v6346, %v6345
        %v6469 = vpack.c.b16 %v6348, %v6347
        %v6470 = vpack.c.b16 %v6350, %v6349
        %v6471 = vpack.c.b16 %v6352, %v6351
        %v6472 = vpack.c.b16 %v6354, %v6353
        %v6473 = vpack.c.b16 %v6356, %v6355
        %v6474 = vpack.c.b16 %v6358, %v6357
        %v6475 = vpack.c.b16 %v6360, %v6359
        %v6476 = vpack.c.b16 %v6362, %v6361
        %v6477 = vpack.c.b16 %v6364, %v6363
        %v6478 = vpack.c.b16 %v6366, %v6365
        %v6479 = vpack.c.b16 %v6368, %v6367
        %v6480 = vpack.c.b16 %v6370, %v6369
        %v6481 = vpack.c.b16 %v6372, %v6371
        %v6482 = vpack.c.b16 %v6374, %v6373
        %v6483 = vpack.c.b16 %v6376, %v6375
        %v6484 = vpack.c.b16 %v6378, %v6377
        %v6485 = vpack.c.b16 %v6380, %v6379
        %v6486 = vpack.c.b16 %v6382, %v6381
        %v6487 = vpack.c.b16 %v6384, %v6383
        %v6488 = vpack.c.b16 %v6386, %v6385
        %v6489 = vpack.c.b16 %v6388, %v6387
        %v6490 = vpack.c.b16 %v6390, %v6389
        %v6491 = vpack.c.b16 %v6392, %v6391
        %v6492 = vpack.c.b16 %v6394, %v6393
        %v6493 = vpack.c.b16 %v6396, %v6395
        %v6494 = vpack.c.b16 %v6398, %v6397
        %v6495 = vpack.c.b16 %v6400, %v6399
        %v6496 = vpack.c.b16 %v6402, %v6401
        %v6497 = vpack.c.b16 %v6404, %v6403
        %v6498 = vpack.c.b16 %v6406, %v6405
        %v6499 = vpack.c.b16 %v6408, %v6407
        %v6500 = vpack.c.b16 %v6410, %v6409
        %v6501 = vpack.c.b16 %v6412, %v6411
        %v6502 = vpack.c.b16 %v6414, %v6413
        %v6503 = vpack.c.b16 %v6416, %v6415
        %v6504 = vpack.c.b16 %v6418, %v6417
        %v6505 = vpack.c.b16 %v6420, %v6419
        %v6506 = vpack.c.b16 %v6422, %v6421
        %v6507 = vpack.c.b16 %v6424, %v6423
        %v6508 = vpack.c.b16 %v6426, %v6425
        %v6509 = vpack.c.b16 %v6428, %v6427
        %v6510 = vpack.c.b16 %v6430, %v6429
        %v6511 = vpack.c.b16 %v6432, %v6431
        %v6512 = vpack.c.b16 %v6434, %v6433
        %v6513 = vpack.c.b16 %v6436, %v6435
        %v6514 = vpack.c.b16 %v6438, %v6437
        %v6515 = vpack.c.b16 %v6440, %v6439
        %v6516 = vpack.c.b16 %v6442, %v6441
        %v6517 = vpack.c.b16 %v6444, %v6443
        %v6518 = vpack.c.b16 %v6446, %v6445
        %v6519 = vpack.c.b16 %v6448, %v6447
        %v6520 = vpack.c.b16 %v6450, %v6449
        %v6521 = vpack.c.b16 %v6452, %v6451
        %v6522 = vpack.c.b16 %v6454, %v6453
        %v6523 = vpack.c.b16 %v6456, %v6455
        %v6524 = vpack.c.b16 %v6458, %v6457
        %v6525 = vpack.c.b16 %v6460, %v6459
        %v6526 = vpack.c.b16 %v6462, %v6461
        %6591 = vmatprep.subr.bf16.mxu0 0
        %6592 = vmatpush1.bf16.msra.mxu0 %v6470
        %6593 = vmatprep.subr.bf16.mxu0 0
        %6594 = vmatpush1.bf16.msra.mxu0 %v6469
        %6595 = vmatprep.subr.bf16.mxu0 0
        %6596 = vmatpush1.bf16.msra.mxu0 %v6468
        %6597 = vmatprep.subr.bf16.mxu0 0
        %6598 = vmatpush1.bf16.msra.mxu0 %v6467
        %6599 = vmatprep.subr.bf16.mxu0 0
        %6600 = vmatpush1.bf16.msra.mxu0 %v6466
        %6601 = vmatprep.subr.bf16.mxu0 0
        %6602 = vmatpush1.bf16.msra.mxu0 %v6465
        %6603 = vmatprep.subr.bf16.mxu0 0
        %6604 = vmatpush1.bf16.msra.mxu0 %v6464
        %6605 = vmatprep.subr.bf16.mxu0 0
        %6606 = vmatpush1.bf16.msra.mxu0 %v6463
        %6607 = vmatprep.subr.bf16.mxu0 0
        %6608 = vmatpush2.bf16.msra.mxu0 %v6478
        %6609 = vmatprep.subr.bf16.mxu0 0
        %6610 = vmatpush2.bf16.msra.mxu0 %v6477
        %6611 = vmatprep.subr.bf16.mxu0 0
        %6612 = vmatpush2.bf16.msra.mxu0 %v6476
        %6613 = vmatprep.subr.bf16.mxu0 0
        %6614 = vmatpush2.bf16.msra.mxu0 %v6475
        %6615 = vmatprep.subr.bf16.mxu0 0
        %6616 = vmatpush2.bf16.msra.mxu0 %v6474
        %6617 = vmatprep.subr.bf16.mxu0 0
        %6618 = vmatpush2.bf16.msra.mxu0 %v6473
        %6619 = vmatprep.subr.bf16.mxu0 0
        %6620 = vmatpush2.bf16.msra.mxu0 %v6472
        %6621 = vmatprep.subr.bf16.mxu0 0
        %6622 = vmatpush2.bf16.msra.mxu0 %v6471
        %6623 = vmatprep.mubr.bf16.mxu0 %v6065
        %6624 = vmatmul.mubr.bf16.gmra.mxu0 %v6064
        %v6625 = vpop.f32.mrf.mxu0
        %v6626 = vadd.f32 %v6205, %v6625
        %v6627 = vpop.f32.mrf.mxu0
        %v6628 = vpop.f32.mrf.mxu0
        %v6629 = vpop.f32.mrf.mxu0
        %6630 = vdwg.mxu0
        %6631 = vmatprep.subr.bf16.mxu0 0
        %6632 = vmatpush1.bf16.msra.mxu0 %v6486
        %6633 = vmatprep.subr.bf16.mxu0 0
        %6634 = vmatpush1.bf16.msra.mxu0 %v6485
        %6635 = vmatprep.subr.bf16.mxu0 0
        %6636 = vmatpush1.bf16.msra.mxu0 %v6484
        %6637 = vmatprep.subr.bf16.mxu0 0
        %6638 = vmatpush1.bf16.msra.mxu0 %v6483
        %6639 = vmatprep.subr.bf16.mxu0 0
        %6640 = vmatpush1.bf16.msra.mxu0 %v6482
        %6641 = vmatprep.subr.bf16.mxu0 0
        %6642 = vmatpush1.bf16.msra.mxu0 %v6481
        %6643 = vmatprep.subr.bf16.mxu0 0
        %6644 = vmatpush1.bf16.msra.mxu0 %v6480
        %6645 = vmatprep.subr.bf16.mxu0 0
        %6646 = vmatpush1.bf16.msra.mxu0 %v6479
        %6647 = vmatprep.subr.bf16.mxu0 0
        %6648 = vmatpush2.bf16.msra.mxu0 %v6494
        %6649 = vmatprep.subr.bf16.mxu0 0
        %6650 = vmatpush2.bf16.msra.mxu0 %v6493
        %6651 = vmatprep.subr.bf16.mxu0 0
        %6652 = vmatpush2.bf16.msra.mxu0 %v6492
        %6653 = vmatprep.subr.bf16.mxu0 0
        %6654 = vmatpush2.bf16.msra.mxu0 %v6491
        %6655 = vmatprep.subr.bf16.mxu0 0
        %6656 = vmatpush2.bf16.msra.mxu0 %v6490
        %6657 = vmatprep.subr.bf16.mxu0 0
        %6658 = vmatpush2.bf16.msra.mxu0 %v6489
        %6659 = vmatprep.subr.bf16.mxu0 0
        %6660 = vmatpush2.bf16.msra.mxu0 %v6488
        %6661 = vmatprep.subr.bf16.mxu0 0
        %6662 = vmatpush2.bf16.msra.mxu0 %v6487
        %6663 = vmatprep.mubr.bf16.mxu0 %v6067
        %6664 = vmatmul.mubr.bf16.gmra.mxu0 %v6066
        %v6665 = vpop.f32.mrf.mxu0
        %v6666 = vadd.f32 %v6626, %v6665
        %v6667 = vpop.f32.mrf.mxu0
        %v6668 = vpop.f32.mrf.mxu0
        %v6669 = vpop.f32.mrf.mxu0
        %6670 = vdwg.mxu0
        %6671 = vmatprep.subr.bf16.mxu0 0
        %6672 = vmatpush1.bf16.msra.mxu0 %v6502
        %6673 = vmatprep.subr.bf16.mxu0 0
        %6674 = vmatpush1.bf16.msra.mxu0 %v6501
        %6675 = vmatprep.subr.bf16.mxu0 0
        %6676 = vmatpush1.bf16.msra.mxu0 %v6500
        %6677 = vmatprep.subr.bf16.mxu0 0
        %6678 = vmatpush1.bf16.msra.mxu0 %v6499
        %6679 = vmatprep.subr.bf16.mxu0 0
        %6680 = vmatpush1.bf16.msra.mxu0 %v6498
        %6681 = vmatprep.subr.bf16.mxu0 0
        %6682 = vmatpush1.bf16.msra.mxu0 %v6497
        %6683 = vmatprep.subr.bf16.mxu0 0
        %6684 = vmatpush1.bf16.msra.mxu0 %v6496
        %6685 = vmatprep.subr.bf16.mxu0 0
        %6686 = vmatpush1.bf16.msra.mxu0 %v6495
        %6687 = vmatprep.subr.bf16.mxu0 0
        %6688 = vmatpush2.bf16.msra.mxu0 %v6510
        %6689 = vmatprep.subr.bf16.mxu0 0
        %6690 = vmatpush2.bf16.msra.mxu0 %v6509
        %6691 = vmatprep.subr.bf16.mxu0 0
        %6692 = vmatpush2.bf16.msra.mxu0 %v6508
        %6693 = vmatprep.subr.bf16.mxu0 0
        %6694 = vmatpush2.bf16.msra.mxu0 %v6507
        %6695 = vmatprep.subr.bf16.mxu0 0
        %6696 = vmatpush2.bf16.msra.mxu0 %v6506
        %6697 = vmatprep.subr.bf16.mxu0 0
        %6698 = vmatpush2.bf16.msra.mxu0 %v6505
        %6699 = vmatprep.subr.bf16.mxu0 0
        %6700 = vmatpush2.bf16.msra.mxu0 %v6504
        %6701 = vmatprep.subr.bf16.mxu0 0
        %6702 = vmatpush2.bf16.msra.mxu0 %v6503
        %6703 = vmatprep.mubr.bf16.mxu0 %v6069
        %6704 = vmatmul.mubr.bf16.gmra.mxu0 %v6068
        %v6705 = vpop.f32.mrf.mxu0
        %v6706 = vadd.f32 %v6666, %v6705
        %v6707 = vpop.f32.mrf.mxu0
        %v6708 = vpop.f32.mrf.mxu0
        %v6709 = vpop.f32.mrf.mxu0
        %6710 = vdwg.mxu0
        %6711 = vmatprep.subr.bf16.mxu0 0
        %6712 = vmatpush1.bf16.msra.mxu0 %v6518
        %6713 = vmatprep.subr.bf16.mxu0 0
        %6714 = vmatpush1.bf16.msra.mxu0 %v6517
        %6715 = vmatprep.subr.bf16.mxu0 0
        %6716 = vmatpush1.bf16.msra.mxu0 %v6516
        %6717 = vmatprep.subr.bf16.mxu0 0
        %6718 = vmatpush1.bf16.msra.mxu0 %v6515
        %6719 = vmatprep.subr.bf16.mxu0 0
        %6720 = vmatpush1.bf16.msra.mxu0 %v6514
        %6721 = vmatprep.subr.bf16.mxu0 0
        %6722 = vmatpush1.bf16.msra.mxu0 %v6513
        %6723 = vmatprep.subr.bf16.mxu0 0
        %6724 = vmatpush1.bf16.msra.mxu0 %v6512
        %6725 = vmatprep.subr.bf16.mxu0 0
        %6726 = vmatpush1.bf16.msra.mxu0 %v6511
        %6727 = vmatprep.subr.bf16.mxu0 0
        %6728 = vmatpush2.bf16.msra.mxu0 %v6526
        %6729 = vmatprep.subr.bf16.mxu0 0
        %6730 = vmatpush2.bf16.msra.mxu0 %v6525
        %6731 = vmatprep.subr.bf16.mxu0 0
        %6732 = vmatpush2.bf16.msra.mxu0 %v6524
        %6733 = vmatprep.subr.bf16.mxu0 0
        %6734 = vmatpush2.bf16.msra.mxu0 %v6523
        %6735 = vmatprep.subr.bf16.mxu0 0
        %6736 = vmatpush2.bf16.msra.mxu0 %v6522
        %6737 = vmatprep.subr.bf16.mxu0 0
        %6738 = vmatpush2.bf16.msra.mxu0 %v6521
        %6739 = vmatprep.subr.bf16.mxu0 0
        %6740 = vmatpush2.bf16.msra.mxu0 %v6520
        %6741 = vmatprep.subr.bf16.mxu0 0
        %6742 = vmatpush2.bf16.msra.mxu0 %v6519
        %6743 = vmatprep.mubr.bf16.mxu0 %v6071
        %6744 = vmatmul.mubr.bf16.gmra.mxu0 %v6070
        %v6745 = vpop.f32.mrf.mxu0
        %v6746 = vadd.f32 %v6706, %v6745
        %v6747 = vpop.f32.mrf.mxu0
        %v6748 = vpop.f32.mrf.mxu0
        %v6749 = vpop.f32.mrf.mxu0
        %6750 = vdwg.mxu0
        %6751 = vst [vmem:[%s7] sm:$0xff] %v6746
      $region56: #{cnn_forward.5} parent=47 // pred_fallthru
        _
      // Predicated region
      $region57: #{cnn_forward.5} parent=47 // pred_check
        %p6752 = pneg %p188
      $region58: #{cnn_forward.5} parent=47 // pred_check_branch
        %6754 = sbr.rel (%p6752) target = $region60
      $region59: #{cnn_forward.5} parent=47 // pred_region
        _
      $region60: #{cnn_forward.5} parent=47 // pred_fallthru
        _
      // Predicated region
      $region61: #{cnn_forward.5} parent=47 // pred_check
        %p6755 = pneg %p188
      $region62: #{cnn_forward.5} parent=47 // pred_check_branch
        %6757 = sbr.rel (%p6755) target = $region64
      $region63: #{cnn_forward.5} parent=47 // pred_region
        _
      $region64: #{cnn_forward.5} parent=47 // pred_fallthru
        _
    $region48: #{cnn_forward.5} parent=5 // pred_fallthru
      _
    %p6758 = scmp.le.s32.totalorder 2, %s13
    // Predicated region
    $region65: #{cnn_forward.5} parent=5 // pred_check
      %p6759 = pneg %p6758
    $region66: #{cnn_forward.5} parent=5 // pred_check_branch
      %6761 = sbr.rel (%p6759) target = $region68
    $region67: #{cnn_forward.5} parent=5 // pred_region
      %s6762 = ssub.s32 %s13, 2
    $region68: #{cnn_forward.5} parent=5 // pred_fallthru
      _
  $region6: #{cnn_forward.5} parent=0 // loop_footer
    %s17 = sadd.s32 1, %s13
  $region7: #{cnn_forward.5} parent=0 // loop_footer_branch
    %12 = sbr.rel target = $region3
  $region8: #{cnn_forward.5} parent=0 // loop_exit
    _

</llo_original>
